<compile_context>
chip_gen: v7x
topology: tpu7x:2x2x1
jax: 0.10.0
libtpu: 0.0.40
codegen_flags: <defaults>
</compile_context>

<pallas_src>
import functools

import jax
import jax.numpy as jnp
from jax.experimental import pallas as pl
from jax.experimental.pallas import tpu as pltpu


# ----------------------------------------------------------------------------
# Tiled matmul + bias kernel:  (M, K) @ (K, N) + b   (bf16 operands, f32 acc)
# Used for the hoisted layer-0 input projection and for the FC head.
# ----------------------------------------------------------------------------
def _matmul_bias_kernel(x_ref, w_ref, b_ref, o_ref):
    o_ref[...] = (jnp.dot(x_ref[...], w_ref[...],
                          preferred_element_type=jnp.float32)
                  + b_ref[...]).astype(o_ref.dtype)


def matmul_bias(x2d, w_t, b_row, *, out_dtype=jnp.float32, tm=256, tn=512):
    """x2d:(M,K) @ w_t:(K,N) + b_row:(1,N) -> (M,N). MXU operands cast to bf16."""
    M, K = x2d.shape
    Kw, N = w_t.shape
    assert K == Kw
    x2d = x2d.astype(jnp.bfloat16)

    # Tile sizes: full dim if small, else 8/128-multiple tiles (ragged last block
    # is handled by Pallas OOB masking).
    tm = tm if M >= tm else M
    tn = tn if N >= tn else N
    grid = (pl.cdiv(M, tm), pl.cdiv(N, tn))

    # TODO(synk): tile the contraction (K) axis too for very large vocabularies.
    return pl.pallas_call(
        _matmul_bias_kernel,
        out_shape=jax.ShapeDtypeStruct((M, N), out_dtype),
        grid_spec=pltpu.PrefetchScalarGridSpec(
            num_scalar_prefetch=0,
            grid=grid,
            in_specs=[
                pl.BlockSpec((tm, K), lambda i, j: (i, 0)),
                pl.BlockSpec((K, tn), lambda i, j: (0, j)),
                pl.BlockSpec((1, tn), lambda i, j: (0, j)),
            ],
            out_specs=pl.BlockSpec((tm, tn), lambda i, j: (i, j)),
        ),
        compiler_params=pltpu.CompilerParams(
            dimension_semantics=("parallel", "parallel"),
            vmem_limit_bytes=48 * 1024 * 1024),
    )(x2d, w_t, b_row)


# ----------------------------------------------------------------------------
# Fused 2-layer LSTM recurrence. One grid step == one chunk of timesteps.
# Layer-0 input gates are precomputed (gx1); only the recurrent matmuls run here.
# Gate order (i, f, g, o) matches PyTorch's weight layout.
# ----------------------------------------------------------------------------
def _fused_lstm2_kernel(gx1_ref, h0_ref, c0_ref, whh1_ref, wih2_ref, whh2_ref,
                        b2_ref, out_ref, hn_ref, cn_ref,
                        h1_sc, c1_sc, h2_sc, c2_sc, *, seq_len, needs_mask):
    chunk = pl.program_id(0)
    t_chunk = out_ref.shape[0]
    H = h1_sc.shape[-1]

    @pl.when(chunk == 0)
    def _():
        h1_sc[...] = h0_ref[0]
        c1_sc[...] = c0_ref[0]
        h2_sc[...] = h0_ref[1]
        c2_sc[...] = c0_ref[1]

    def cell(gates, c):
        # Slices are lane-aligned when H is a multiple of 128 (e.g. hidden=128/256).
        i_g = jax.nn.sigmoid(gates[:, 0 * H:1 * H])
        f_g = jax.nn.sigmoid(gates[:, 1 * H:2 * H])
        g_g = jnp.tanh(gates[:, 2 * H:3 * H])
        o_g = jax.nn.sigmoid(gates[:, 3 * H:4 * H])
        c_new = f_g * c + i_g * g_g
        h_new = o_g * jnp.tanh(c_new)
        return h_new, c_new

    def step(t, carry):
        h1, c1, h2, c2 = carry
        # Layer 0: x @ W_ih + bias was hoisted; only h @ W_hh remains per step.
        gates1 = gx1_ref[t] + jnp.dot(h1.astype(jnp.bfloat16), whh1_ref[...],
                                      preferred_element_type=jnp.float32)
        h1n, c1n = cell(gates1, c1)
        h1b = h1n.astype(jnp.bfloat16)
        # Layer 1: both matmuls depend on recurrent state -> computed in-kernel,
        # layer-0 output never leaves VMEM.
        gates2 = (jnp.dot(h1b, wih2_ref[...], preferred_element_type=jnp.float32)
                  + jnp.dot(h2.astype(jnp.bfloat16), whh2_ref[...],
                            preferred_element_type=jnp.float32)
                  + b2_ref[...])
        h2n, c2n = cell(gates2, c2)
        out_ref[t] = h2n.astype(out_ref.dtype)
        if needs_mask:
            # Ragged last chunk: don't advance the state past seq_len.
            valid = (chunk * t_chunk + t) < seq_len
            h1n = jnp.where(valid, h1n, h1)
            c1n = jnp.where(valid, c1n, c1)
            h2n = jnp.where(valid, h2n, h2)
            c2n = jnp.where(valid, c2n, c2)
        return h1n, c1n, h2n, c2n

    carry = (h1_sc[...], c1_sc[...], h2_sc[...], c2_sc[...])
    h1, c1, h2, c2 = jax.lax.fori_loop(0, t_chunk, step, carry, unroll=True)
    h1_sc[...] = h1
    c1_sc[...] = c1
    h2_sc[...] = h2
    c2_sc[...] = c2

    # Write final states only once, on the last grid step.
    @pl.when(chunk == pl.num_programs(0) - 1)
    def _():
        hn_ref[0] = h1
        hn_ref[1] = h2
        cn_ref[0] = c1
        cn_ref[1] = c2


def fused_lstm2(gx1, h0, c0, whh1_t, wih2_t, whh2_t, b2, *, t_chunk=8):
    """gx1:(S,B,4H) precomputed layer-0 gates; h0/c0:(2,B,H). Returns
    (out:(S,B,H) bf16, hn:(2,B,H) f32, cn:(2,B,H) f32)."""
    S, B, H4 = gx1.shape
    H = H4 // 4
    tc = min(t_chunk, S)
    n_chunks = pl.cdiv(S, tc)
    needs_mask = (S % tc) != 0

    kernel = functools.partial(_fused_lstm2_kernel, seq_len=S,
                               needs_mask=needs_mask)

    out, hn, cn = pl.pallas_call(
        kernel,
        out_shape=(jax.ShapeDtypeStruct((S, B, H), jnp.bfloat16),
                   jax.ShapeDtypeStruct((2, B, H), jnp.float32),
                   jax.ShapeDtypeStruct((2, B, H), jnp.float32)),
        grid_spec=pltpu.PrefetchScalarGridSpec(
            num_scalar_prefetch=0,
            grid=(n_chunks,),
            in_specs=[
                pl.BlockSpec((tc, B, H4), lambda s: (s, 0, 0)),  # gx1 chunk
                pl.BlockSpec((2, B, H), lambda s: (0, 0, 0)),    # h0
                pl.BlockSpec((2, B, H), lambda s: (0, 0, 0)),    # c0
                pl.BlockSpec((H, H4), lambda s: (0, 0)),         # W_hh (layer 0)
                pl.BlockSpec((H, H4), lambda s: (0, 0)),         # W_ih (layer 1)
                pl.BlockSpec((H, H4), lambda s: (0, 0)),         # W_hh (layer 1)
                pl.BlockSpec((1, H4), lambda s: (0, 0)),         # bias (layer 1)
            ],
            out_specs=(
                pl.BlockSpec((tc, B, H), lambda s: (s, 0, 0)),
                pl.BlockSpec((2, B, H), lambda s: (0, 0, 0)),
                pl.BlockSpec((2, B, H), lambda s: (0, 0, 0)),
            ),
            scratch_shapes=[
                pltpu.VMEM((B, H), jnp.float32),   # h (layer 0)
                pltpu.VMEM((B, H), jnp.float32),   # c (layer 0)
                pltpu.VMEM((B, H), jnp.float32),   # h (layer 1)
                pltpu.VMEM((B, H), jnp.float32),   # c (layer 1)
            ],
        ),
        compiler_params=pltpu.CompilerParams(
            dimension_semantics=("arbitrary",),
            vmem_limit_bytes=48 * 1024 * 1024),
    )(gx1, h0, c0, whh1_t, wih2_t, whh2_t, b2)
    return out, hn, cn


# ----------------------------------------------------------------------------
# Parameter construction (PyTorch layout) + one-time prep for the kernels.
# ----------------------------------------------------------------------------
def init_params(key, vocab_size, hidden, num_layers):
    k = 1.0 / jnp.sqrt(hidden)
    params = {"lstm": [], "fc": None}
    for layer in range(num_layers):
        in_dim = vocab_size if layer == 0 else hidden
        key, k1, k2, k3, k4 = jax.random.split(key, 5)
        params["lstm"].append({
            "w_ih": jax.random.uniform(k1, (4 * hidden, in_dim), jnp.float32, -k, k),
            "w_hh": jax.random.uniform(k2, (4 * hidden, hidden), jnp.float32, -k, k),
            "b_ih": jax.random.uniform(k3, (4 * hidden,), jnp.float32, -k, k),
            "b_hh": jax.random.uniform(k4, (4 * hidden,), jnp.float32, -k, k),
        })
    key, k5, k6 = jax.random.split(key, 3)
    kf = 1.0 / jnp.sqrt(hidden)
    params["fc"] = {
        "w": jax.random.uniform(k5, (vocab_size, hidden), jnp.float32, -kf, kf),
        "b": jax.random.uniform(k6, (vocab_size,), jnp.float32, -kf, kf),
    }
    return params


def prepare_params(params):
    """One-time weight prep: pre-transpose to (in, 4H), combine biases, and cast
    MXU operands to bf16. Done once, outside the per-forward path."""
    assert len(params["lstm"]) == 2, "fused kernel implements the 2-layer default"
    l0, l1 = params["lstm"][0], params["lstm"][1]
    return {
        "wih1_t": l0["w_ih"].T.astype(jnp.bfloat16),                    # (V, 4H)
        "b1": (l0["b_ih"] + l0["b_hh"]).reshape(1, -1).astype(jnp.float32),
        "whh1_t": l0["w_hh"].T.astype(jnp.bfloat16),                    # (H, 4H)
        "wih2_t": l1["w_ih"].T.astype(jnp.bfloat16),                    # (H, 4H)
        "whh2_t": l1["w_hh"].T.astype(jnp.bfloat16),                    # (H, 4H)
        "b2": (l1["b_ih"] + l1["b_hh"]).reshape(1, -1).astype(jnp.float32),
        "fc_w_t": params["fc"]["w"].T.astype(jnp.bfloat16),             # (H, V)
        "fc_b": params["fc"]["b"].reshape(1, -1).astype(jnp.float32),
    }


# ----------------------------------------------------------------------------
# Full model forward (== TextGenerationModel.forward, dropout=0)
# ----------------------------------------------------------------------------
@jax.jit
def text_generation_forward(x, h0, c0, prep):
    """x:(S,B,V), h0/c0:(2,B,H) -> (out:(S,B,V), hn:(2,B,H), cn:(2,B,H))."""
    S, B, V = x.shape
    H = prep["whh1_t"].shape[0]

    # 1) Hoisted layer-0 input projection: one big tiled MXU matmul over all rows.
    gx1 = matmul_bias(x.reshape(S * B, V), prep["wih1_t"], prep["b1"])
    gx1 = gx1.reshape(S, B, 4 * H)

    # 2) Fused 2-layer recurrence (layer-0 hidden state stays in VMEM).
    out_h2, hn, cn = fused_lstm2(gx1, h0, c0, prep["whh1_t"], prep["wih2_t"],
                                 prep["whh2_t"], prep["b2"])

    # 3) FC head as one tiled matmul over all (S*B) rows.
    logits = matmul_bias(out_h2.reshape(S * B, H), prep["fc_w_t"], prep["fc_b"])
    return logits.reshape(S, B, V), hn, cn


# ----------------------------------------------------------------------------
# Pure-JAX f32 reference (PyTorch semantics) for verification
# ----------------------------------------------------------------------------
def _ref_forward(x, h0, c0, params):
    S, B, V = x.shape
    L = h0.shape[0]
    layer_in = x
    hns, cns = [], []
    for l in range(L):
        p = params["lstm"][l]
        H = p["w_hh"].shape[1]
        h, c = h0[l], c0[l]
        outs = []
        for t in range(S):
            gates = (layer_in[t] @ p["w_ih"].T + h @ p["w_hh"].T
                     + p["b_ih"] + p["b_hh"])
            i = jax.nn.sigmoid(gates[:, 0 * H:1 * H])
            f = jax.nn.sigmoid(gates[:, 1 * H:2 * H])
            g = jnp.tanh(gates[:, 2 * H:3 * H])
            o = jax.nn.sigmoid(gates[:, 3 * H:4 * H])
            c = f * c + i * g
            h = o * jnp.tanh(c)
            outs.append(h)
        layer_in = jnp.stack(outs, axis=0)
        hns.append(h)
        cns.append(c)
    out = layer_in @ params["fc"]["w"].T + params["fc"]["b"]
    return out, jnp.stack(hns, 0), jnp.stack(cns, 0)


if __name__ == "__main__":
    # Small, layout-friendly shapes: batch multiple of 8, hidden/vocab multiples of 128.
    SEQ, BATCH, VOCAB, HIDDEN, LAYERS = 16, 8, 128, 128, 2

    key = jax.random.PRNGKey(0)
    kx, kh, kc, kp = jax.random.split(key, 4)
    x = jax.random.normal(kx, (SEQ, BATCH, VOCAB), jnp.float32)
    h0 = jax.random.normal(kh, (LAYERS, BATCH, HIDDEN), jnp.float32)
    c0 = jax.random.normal(kc, (LAYERS, BATCH, HIDDEN), jnp.float32)
    params = init_params(kp, VOCAB, HIDDEN, LAYERS)
    prep = prepare_params(params)   # one-time: transpose / bias-combine / bf16 cast

    out, hn, cn = text_generation_forward(x, h0, c0, prep)
    jax.block_until_ready((out, hn, cn))

    ref_out, ref_hn, ref_cn = _ref_forward(x, h0, c0, params)
    assert out.shape == (SEQ, BATCH, VOCAB)
    assert hn.shape == (LAYERS, BATCH, HIDDEN) and cn.shape == (LAYERS, BATCH, HIDDEN)
    # bf16 MXU operands (f32 accumulation) -> relaxed tolerance vs the f32 reference.
    assert jnp.allclose(out, ref_out, atol=5e-2, rtol=5e-2)
    assert jnp.allclose(hn, ref_hn, atol=5e-2, rtol=5e-2)
    assert jnp.allclose(cn, ref_cn, atol=5e-2, rtol=5e-2)

    print("KERNEL_OK")
</pallas_src>

<mosaic_0001>
module attributes {stable_mosaic.version = 11 : i64} {
  func.func @_matmul_bias_kernel(%arg0: i32, %arg1: i32, %arg2: memref<128x128xbf16, #tpu.memory_space<vmem>>, %arg3: memref<128x512xbf16, #tpu.memory_space<vmem>>, %arg4: memref<1x512xf32, #tpu.memory_space<vmem>>, %arg5: memref<128x512xf32, #tpu.memory_space<vmem>>) attributes {dimension_semantics = [#tpu.dimension_semantics<parallel>, #tpu.dimension_semantics<parallel>], iteration_bounds = array<i64: 1, 1>, scalar_prefetch = 0 : i64, scratch_operands = 0 : i64, tpu.core_type = #tpu.core_type<tc>, window_params = [{transform_indices = @transform_0, window_bounds = array<i64: 128, 128>}, {transform_indices = @transform_1, window_bounds = array<i64: 128, 512>}, {transform_indices = @transform_2, window_bounds = array<i64: 1, 512>}, {transform_indices = @transform_3, window_bounds = array<i64: 128, 512>}]} {
    %c0 = arith.constant 0 : index
    %c0_0 = arith.constant 0 : index
    %0 = vector.load %arg2[%c0, %c0_0] : memref<128x128xbf16, #tpu.memory_space<vmem>>, vector<128x128xbf16>
    %c0_1 = arith.constant 0 : index
    %c0_2 = arith.constant 0 : index
    %1 = vector.load %arg3[%c0_1, %c0_2] : memref<128x512xbf16, #tpu.memory_space<vmem>>, vector<128x512xbf16>
    %cst = arith.constant dense<0.000000e+00> : vector<128x512xf32>
    %2 = tpu.matmul %0, %1, %cst {dimension_numbers = #tpu.dot_dimension_numbers<[1], [0], [0], [1], [0, 0, 1, 1], [], []>} : vector<128x128xbf16>, vector<128x512xbf16>, vector<128x512xf32> -> vector<128x512xf32>
    %c0_3 = arith.constant 0 : index
    %c0_4 = arith.constant 0 : index
    %3 = vector.load %arg4[%c0_3, %c0_4] : memref<1x512xf32, #tpu.memory_space<vmem>>, vector<1x512xf32>
    %4 = vector.broadcast %3 : vector<1x512xf32> to vector<128x512xf32>
    %5 = arith.addf %2, %4 : vector<128x512xf32>
    %c0_5 = arith.constant 0 : index
    %c0_6 = arith.constant 0 : index
    %6 = vector.load %arg5[%c0_5, %c0_6] : memref<128x512xf32, #tpu.memory_space<vmem>>, vector<128x512xf32>
    tpu.vector_store %arg5[%c0_5, %c0_6], %5 {strides = array<i32>} : memref<128x512xf32, #tpu.memory_space<vmem>>, vector<128x512xf32>,
    return
  }
  func.func @transform_0(%arg0: i32, %arg1: i32) -> (i32, i32) {
    %c0_i32 = arith.constant 0 : i32
    %c0_i32_0 = arith.constant 0 : i32
    return %arg0, %c0_i32 : i32, i32
  }
  func.func @transform_1(%arg0: i32, %arg1: i32) -> (i32, i32) {
    %c0_i32 = arith.constant 0 : i32
    %c0_i32_0 = arith.constant 0 : i32
    return %c0_i32, %arg1 : i32, i32
  }
  func.func @transform_2(%arg0: i32, %arg1: i32) -> (i32, i32) {
    %c0_i32 = arith.constant 0 : i32
    %c0_i32_0 = arith.constant 0 : i32
    return %c0_i32, %arg1 : i32, i32
  }
  func.func @transform_3(%arg0: i32, %arg1: i32) -> (i32, i32) {
    %c0_i32 = arith.constant 0 : i32
    return %arg0, %arg1 : i32, i32
  }
}

module attributes {stable_mosaic.version = 11 : i64} {
  func.func @_matmul_bias_kernel(%arg0: i32, %arg1: i32, %arg2: memref<128x128xbf16, #tpu.memory_space<vmem>>, %arg3: memref<128x128xbf16, #tpu.memory_space<vmem>>, %arg4: memref<1x128xf32, #tpu.memory_space<vmem>>, %arg5: memref<128x128xf32, #tpu.memory_space<vmem>>) attributes {dimension_semantics = [#tpu.dimension_semantics<parallel>, #tpu.dimension_semantics<parallel>], iteration_bounds = array<i64: 1, 1>, scalar_prefetch = 0 : i64, scratch_operands = 0 : i64, tpu.core_type = #tpu.core_type<tc>, window_params = [{transform_indices = @transform_0, window_bounds = array<i64: 128, 128>}, {transform_indices = @transform_1, window_bounds = array<i64: 128, 128>}, {transform_indices = @transform_2, window_bounds = array<i64: 1, 128>}, {transform_indices = @transform_3, window_bounds = array<i64: 128, 128>}]} {
    %c0 = arith.constant 0 : index
    %c0_0 = arith.constant 0 : index
    %0 = vector.load %arg2[%c0, %c0_0] : memref<128x128xbf16, #tpu.memory_space<vmem>>, vector<128x128xbf16>
    %c0_1 = arith.constant 0 : index
    %c0_2 = arith.constant 0 : index
    %1 = vector.load %arg3[%c0_1, %c0_2] : memref<128x128xbf16, #tpu.memory_space<vmem>>, vector<128x128xbf16>
    %cst = arith.constant dense<0.000000e+00> : vector<128x128xf32>
    %2 = tpu.matmul %0, %1, %cst {dimension_numbers = #tpu.dot_dimension_numbers<[1], [0], [0], [1], [0, 0, 1, 1], [], []>} : vector<128x128xbf16>, vector<128x128xbf16>, vector<128x128xf32> -> vector<128x128xf32>
    %c0_3 = arith.constant 0 : index
    %c0_4 = arith.constant 0 : index
    %3 = vector.load %arg4[%c0_3, %c0_4] : memref<1x128xf32, #tpu.memory_space<vmem>>, vector<1x128xf32>
    %4 = vector.broadcast %3 : vector<1x128xf32> to vector<128x128xf32>
    %5 = arith.addf %2, %4 : vector<128x128xf32>
    %c0_5 = arith.constant 0 : index
    %c0_6 = arith.constant 0 : index
    %6 = vector.load %arg5[%c0_5, %c0_6] : memref<128x128xf32, #tpu.memory_space<vmem>>, vector<128x128xf32>
    tpu.vector_store %arg5[%c0_5, %c0_6], %5 {strides = array<i32>} : memref<128x128xf32, #tpu.memory_space<vmem>>, vector<128x128xf32>,
    return
  }
  func.func @transform_0(%arg0: i32, %arg1: i32) -> (i32, i32) {
    %c0_i32 = arith.constant 0 : i32
    %c0_i32_0 = arith.constant 0 : i32
    return %arg0, %c0_i32 : i32, i32
  }
  func.func @transform_1(%arg0: i32, %arg1: i32) -> (i32, i32) {
    %c0_i32 = arith.constant 0 : i32
    %c0_i32_0 = arith.constant 0 : i32
    return %c0_i32, %arg1 : i32, i32
  }
  func.func @transform_2(%arg0: i32, %arg1: i32) -> (i32, i32) {
    %c0_i32 = arith.constant 0 : i32
    %c0_i32_0 = arith.constant 0 : i32
    return %c0_i32, %arg1 : i32, i32
  }
  func.func @transform_3(%arg0: i32, %arg1: i32) -> (i32, i32) {
    %c0_i32 = arith.constant 0 : i32
    return %arg0, %arg1 : i32, i32
  }
}

module attributes {stable_mosaic.version = 11 : i64} {
  func.func @_fused_lstm2_kernel(%arg0: i32, %arg1: memref<8x8x512xf32, #tpu.memory_space<vmem>>, %arg2: memref<2x8x128xf32, #tpu.memory_space<vmem>>, %arg3: memref<2x8x128xf32, #tpu.memory_space<vmem>>, %arg4: memref<128x512xbf16, #tpu.memory_space<vmem>>, %arg5: memref<128x512xbf16, #tpu.memory_space<vmem>>, %arg6: memref<128x512xbf16, #tpu.memory_space<vmem>>, %arg7: memref<1x512xf32, #tpu.memory_space<vmem>>, %arg8: memref<8x8x128xbf16, #tpu.memory_space<vmem>>, %arg9: memref<2x8x128xf32, #tpu.memory_space<vmem>>, %arg10: memref<2x8x128xf32, #tpu.memory_space<vmem>>, %arg11: memref<8x128xf32, #tpu.memory_space<vmem>>, %arg12: memref<8x128xf32, #tpu.memory_space<vmem>>, %arg13: memref<8x128xf32, #tpu.memory_space<vmem>>, %arg14: memref<8x128xf32, #tpu.memory_space<vmem>>) attributes {dimension_semantics = [#tpu.dimension_semantics<arbitrary>], iteration_bounds = array<i64: 2>, scalar_prefetch = 0 : i64, scratch_operands = 4 : i64, tpu.core_type = #tpu.core_type<tc>, window_params = [{transform_indices = @transform_0, window_bounds = array<i64: 8, 8, 512>}, {pipeline_mode = #tpu.pipeline_mode<synchronous>, transform_indices = @transform_1, window_bounds = array<i64: 2, 8, 128>}, {pipeline_mode = #tpu.pipeline_mode<synchronous>, transform_indices = @transform_2, window_bounds = array<i64: 2, 8, 128>}, {pipeline_mode = #tpu.pipeline_mode<synchronous>, transform_indices = @transform_3, window_bounds = array<i64: 128, 512>}, {pipeline_mode = #tpu.pipeline_mode<synchronous>, transform_indices = @transform_4, window_bounds = array<i64: 128, 512>}, {pipeline_mode = #tpu.pipeline_mode<synchronous>, transform_indices = @transform_5, window_bounds = array<i64: 128, 512>}, {pipeline_mode = #tpu.pipeline_mode<synchronous>, transform_indices = @transform_6, window_bounds = array<i64: 1, 512>}, {transform_indices = @transform_7, window_bounds = array<i64: 8, 8, 128>}, {pipeline_mode = #tpu.pipeline_mode<synchronous>, transform_indices = @transform_8, window_bounds = array<i64: 2, 8, 128>}, {pipeline_mode = #tpu.pipeline_mode<synchronous>, transform_indices = @transform_9, window_bounds = array<i64: 2, 8, 128>}]} {
    %c0_i32 = arith.constant 0 : i32
    %0 = arith.cmpi eq, %arg0, %c0_i32 : i32
    %1 = arith.extui %0 : i1 to i32
    %c0_i32_0 = arith.constant 0 : i32
    %2 = arith.cmpi ne, %1, %c0_i32_0 : i32
    scf.if %2 {
      %c0_186 = arith.constant 0 : index
      %c0_187 = arith.constant 0 : index
      %c0_188 = arith.constant 0 : index
      %590 = vector.load %arg2[%c0_186, %c0_187, %c0_188] : memref<2x8x128xf32, #tpu.memory_space<vmem>>, vector<1x8x128xf32>
      %591 = vector.shape_cast %590 : vector<1x8x128xf32> to vector<8x128xf32>
      %c0_189 = arith.constant 0 : index
      %c0_190 = arith.constant 0 : index
      %592 = vector.load %arg11[%c0_189, %c0_190] : memref<8x128xf32, #tpu.memory_space<vmem>>, vector<8x128xf32>
      tpu.vector_store %arg11[%c0_189, %c0_190], %591 {strides = array<i32>} : memref<8x128xf32, #tpu.memory_space<vmem>>, vector<8x128xf32>,
      %c0_191 = arith.constant 0 : index
      %c0_192 = arith.constant 0 : index
      %c0_193 = arith.constant 0 : index
      %593 = vector.load %arg3[%c0_191, %c0_192, %c0_193] : memref<2x8x128xf32, #tpu.memory_space<vmem>>, vector<1x8x128xf32>
      %594 = vector.shape_cast %593 : vector<1x8x128xf32> to vector<8x128xf32>
      %c0_194 = arith.constant 0 : index
      %c0_195 = arith.constant 0 : index
      %595 = vector.load %arg12[%c0_194, %c0_195] : memref<8x128xf32, #tpu.memory_space<vmem>>, vector<8x128xf32>
      tpu.vector_store %arg12[%c0_194, %c0_195], %594 {strides = array<i32>} : memref<8x128xf32, #tpu.memory_space<vmem>>, vector<8x128xf32>,
      %c1 = arith.constant 1 : index
      %c0_196 = arith.constant 0 : index
      %c0_197 = arith.constant 0 : index
      %596 = vector.load %arg2[%c1, %c0_196, %c0_197] : memref<2x8x128xf32, #tpu.memory_space<vmem>>, vector<1x8x128xf32>
      %597 = vector.shape_cast %596 : vector<1x8x128xf32> to vector<8x128xf32>
      %c0_198 = arith.constant 0 : index
      %c0_199 = arith.constant 0 : index
      %598 = vector.load %arg13[%c0_198, %c0_199] : memref<8x128xf32, #tpu.memory_space<vmem>>, vector<8x128xf32>
      tpu.vector_store %arg13[%c0_198, %c0_199], %597 {strides = array<i32>} : memref<8x128xf32, #tpu.memory_space<vmem>>, vector<8x128xf32>,
      %c1_200 = arith.constant 1 : index
      %c0_201 = arith.constant 0 : index
      %c0_202 = arith.constant 0 : index
      %599 = vector.load %arg3[%c1_200, %c0_201, %c0_202] : memref<2x8x128xf32, #tpu.memory_space<vmem>>, vector<1x8x128xf32>
      %600 = vector.shape_cast %599 : vector<1x8x128xf32> to vector<8x128xf32>
      %c0_203 = arith.constant 0 : index
      %c0_204 = arith.constant 0 : index
      %601 = vector.load %arg14[%c0_203, %c0_204] : memref<8x128xf32, #tpu.memory_space<vmem>>, vector<8x128xf32>
      tpu.vector_store %arg14[%c0_203, %c0_204], %600 {strides = array<i32>} : memref<8x128xf32, #tpu.memory_space<vmem>>, vector<8x128xf32>,
    } else {
    }
    %c0 = arith.constant 0 : index
    %c0_1 = arith.constant 0 : index
    %3 = vector.load %arg11[%c0, %c0_1] : memref<8x128xf32, #tpu.memory_space<vmem>>, vector<8x128xf32>
    %c0_2 = arith.constant 0 : index
    %c0_3 = arith.constant 0 : index
    %4 = vector.load %arg12[%c0_2, %c0_3] : memref<8x128xf32, #tpu.memory_space<vmem>>, vector<8x128xf32>
    %c0_4 = arith.constant 0 : index
    %c0_5 = arith.constant 0 : index
    %5 = vector.load %arg13[%c0_4, %c0_5] : memref<8x128xf32, #tpu.memory_space<vmem>>, vector<8x128xf32>
    %c0_6 = arith.constant 0 : index
    %c0_7 = arith.constant 0 : index
    %6 = vector.load %arg14[%c0_6, %c0_7] : memref<8x128xf32, #tpu.memory_space<vmem>>, vector<8x128xf32>
    %c0_i32_8 = arith.constant 0 : i32
    %7 = arith.index_cast %c0_i32_8 : i32 to index
    %c0_9 = arith.constant 0 : index
    %c0_10 = arith.constant 0 : index
    %8 = vector.load %arg1[%7, %c0_9, %c0_10] : memref<8x8x512xf32, #tpu.memory_space<vmem>>, vector<1x8x512xf32>
    %9 = vector.shape_cast %8 : vector<1x8x512xf32> to vector<8x512xf32>
    %10 = arith.truncf %3 : vector<8x128xf32> to vector<8x128xbf16>
    %c0_11 = arith.constant 0 : index
    %c0_12 = arith.constant 0 : index
    %11 = vector.load %arg4[%c0_11, %c0_12] : memref<128x512xbf16, #tpu.memory_space<vmem>>, vector<128x512xbf16>
    %cst = arith.constant dense<0.000000e+00> : vector<8x512xf32>
    %12 = tpu.matmul %10, %11, %cst {dimension_numbers = #tpu.dot_dimension_numbers<[1], [0], [0], [1], [0, 0, 1, 1], [], []>} : vector<8x128xbf16>, vector<128x512xbf16>, vector<8x512xf32> -> vector<8x512xf32>
    %13 = arith.addf %9, %12 : vector<8x512xf32>
    %14 = vector.extract_strided_slice %13 {offsets = [0, 0], sizes = [8, 128], strides = [1, 1]} : vector<8x512xf32> to vector<8x128xf32>
    %15 = arith.negf %14 : vector<8x128xf32>
    %16 = math.exp %15 : vector<8x128xf32>
    %cst_13 = arith.constant 1.000000e+00 : f32
    %17 = vector.broadcast %cst_13 : f32 to vector<8x128xf32>
    %18 = arith.addf %17, %16 : vector<8x128xf32>
    %19 = arith.divf %17, %18 : vector<8x128xf32>
    %20 = vector.extract_strided_slice %13 {offsets = [0, 128], sizes = [8, 128], strides = [1, 1]} : vector<8x512xf32> to vector<8x128xf32>
    %21 = arith.negf %20 : vector<8x128xf32>
    %22 = math.exp %21 : vector<8x128xf32>
    %cst_14 = arith.constant 1.000000e+00 : f32
    %23 = vector.broadcast %cst_14 : f32 to vector<8x128xf32>
    %24 = arith.addf %23, %22 : vector<8x128xf32>
    %25 = arith.divf %23, %24 : vector<8x128xf32>
    %26 = vector.extract_strided_slice %13 {offsets = [0, 256], sizes = [8, 128], strides = [1, 1]} : vector<8x512xf32> to vector<8x128xf32>
    %27 = math.tanh %26 : vector<8x128xf32>
    %28 = vector.extract_strided_slice %13 {offsets = [0, 384], sizes = [8, 128], strides = [1, 1]} : vector<8x512xf32> to vector<8x128xf32>
    %29 = arith.negf %28 : vector<8x128xf32>
    %30 = math.exp %29 : vector<8x128xf32>
    %cst_15 = arith.constant 1.000000e+00 : f32
    %31 = vector.broadcast %cst_15 : f32 to vector<8x128xf32>
    %32 = arith.addf %31, %30 : vector<8x128xf32>
    %33 = arith.divf %31, %32 : vector<8x128xf32>
    %34 = arith.mulf %25, %4 : vector<8x128xf32>
    %35 = arith.mulf %19, %27 : vector<8x128xf32>
    %36 = arith.addf %34, %35 : vector<8x128xf32>
    %37 = math.tanh %36 : vector<8x128xf32>
    %38 = arith.mulf %33, %37 : vector<8x128xf32>
    %39 = arith.truncf %38 : vector<8x128xf32> to vector<8x128xbf16>
    %c0_16 = arith.constant 0 : index
    %c0_17 = arith.constant 0 : index
    %40 = vector.load %arg5[%c0_16, %c0_17] : memref<128x512xbf16, #tpu.memory_space<vmem>>, vector<128x512xbf16>
    %cst_18 = arith.constant dense<0.000000e+00> : vector<8x512xf32>
    %41 = tpu.matmul %39, %40, %cst_18 {dimension_numbers = #tpu.dot_dimension_numbers<[1], [0], [0], [1], [0, 0, 1, 1], [], []>} : vector<8x128xbf16>, vector<128x512xbf16>, vector<8x512xf32> -> vector<8x512xf32>
    %42 = arith.truncf %5 : vector<8x128xf32> to vector<8x128xbf16>
    %c0_19 = arith.constant 0 : index
    %c0_20 = arith.constant 0 : index
    %43 = vector.load %arg6[%c0_19, %c0_20] : memref<128x512xbf16, #tpu.memory_space<vmem>>, vector<128x512xbf16>
    %cst_21 = arith.constant dense<0.000000e+00> : vector<8x512xf32>
    %44 = tpu.matmul %42, %43, %cst_21 {dimension_numbers = #tpu.dot_dimension_numbers<[1], [0], [0], [1], [0, 0, 1, 1], [], []>} : vector<8x128xbf16>, vector<128x512xbf16>, vector<8x512xf32> -> vector<8x512xf32>
    %45 = arith.addf %41, %44 : vector<8x512xf32>
    %c0_22 = arith.constant 0 : index
    %c0_23 = arith.constant 0 : index
    %46 = vector.load %arg7[%c0_22, %c0_23] : memref<1x512xf32, #tpu.memory_space<vmem>>, vector<1x512xf32>
    %47 = vector.broadcast %46 : vector<1x512xf32> to vector<8x512xf32>
    %48 = arith.addf %45, %47 : vector<8x512xf32>
    %49 = vector.extract_strided_slice %48 {offsets = [0, 0], sizes = [8, 128], strides = [1, 1]} : vector<8x512xf32> to vector<8x128xf32>
    %50 = arith.negf %49 : vector<8x128xf32>
    %51 = math.exp %50 : vector<8x128xf32>
    %cst_24 = arith.constant 1.000000e+00 : f32
    %52 = vector.broadcast %cst_24 : f32 to vector<8x128xf32>
    %53 = arith.addf %52, %51 : vector<8x128xf32>
    %54 = arith.divf %52, %53 : vector<8x128xf32>
    %55 = vector.extract_strided_slice %48 {offsets = [0, 128], sizes = [8, 128], strides = [1, 1]} : vector<8x512xf32> to vector<8x128xf32>
    %56 = arith.negf %55 : vector<8x128xf32>
    %57 = math.exp %56 : vector<8x128xf32>
    %cst_25 = arith.constant 1.000000e+00 : f32
    %58 = vector.broadcast %cst_25 : f32 to vector<8x128xf32>
    %59 = arith.addf %58, %57 : vector<8x128xf32>
    %60 = arith.divf %58, %59 : vector<8x128xf32>
    %61 = vector.extract_strided_slice %48 {offsets = [0, 256], sizes = [8, 128], strides = [1, 1]} : vector<8x512xf32> to vector<8x128xf32>
    %62 = math.tanh %61 : vector<8x128xf32>
    %63 = vector.extract_strided_slice %48 {offsets = [0, 384], sizes = [8, 128], strides = [1, 1]} : vector<8x512xf32> to vector<8x128xf32>
    %64 = arith.negf %63 : vector<8x128xf32>
    %65 = math.exp %64 : vector<8x128xf32>
    %cst_26 = arith.constant 1.000000e+00 : f32
    %66 = vector.broadcast %cst_26 : f32 to vector<8x128xf32>
    %67 = arith.addf %66, %65 : vector<8x128xf32>
    %68 = arith.divf %66, %67 : vector<8x128xf32>
    %69 = arith.mulf %60, %6 : vector<8x128xf32>
    %70 = arith.mulf %54, %62 : vector<8x128xf32>
    %71 = arith.addf %69, %70 : vector<8x128xf32>
    %72 = math.tanh %71 : vector<8x128xf32>
    %73 = arith.mulf %68, %72 : vector<8x128xf32>
    %74 = arith.truncf %73 : vector<8x128xf32> to vector<8x128xbf16>
    %75 = arith.index_cast %c0_i32_8 : i32 to index
    %c0_27 = arith.constant 0 : index
    %c0_28 = arith.constant 0 : index
    %76 = vector.load %arg8[%75, %c0_27, %c0_28] : memref<8x8x128xbf16, #tpu.memory_space<vmem>>, vector<1x8x128xbf16>
    %77 = vector.shape_cast %76 : vector<1x8x128xbf16> to vector<8x128xbf16>
    %78 = vector.shape_cast %74 : vector<8x128xbf16> to vector<1x8x128xbf16>
    tpu.vector_store %arg8[%75, %c0_27, %c0_28], %78 {strides = array<i32>} : memref<8x8x128xbf16, #tpu.memory_space<vmem>>, vector<1x8x128xbf16>,
    %c1_i32 = arith.constant 1 : i32
    %79 = arith.index_cast %c1_i32 : i32 to index
    %c0_29 = arith.constant 0 : index
    %c0_30 = arith.constant 0 : index
    %80 = vector.load %arg1[%79, %c0_29, %c0_30] : memref<8x8x512xf32, #tpu.memory_space<vmem>>, vector<1x8x512xf32>
    %81 = vector.shape_cast %80 : vector<1x8x512xf32> to vector<8x512xf32>
    %82 = arith.truncf %38 : vector<8x128xf32> to vector<8x128xbf16>
    %c0_31 = arith.constant 0 : index
    %c0_32 = arith.constant 0 : index
    %83 = vector.load %arg4[%c0_31, %c0_32] : memref<128x512xbf16, #tpu.memory_space<vmem>>, vector<128x512xbf16>
    %cst_33 = arith.constant dense<0.000000e+00> : vector<8x512xf32>
    %84 = tpu.matmul %82, %83, %cst_33 {dimension_numbers = #tpu.dot_dimension_numbers<[1], [0], [0], [1], [0, 0, 1, 1], [], []>} : vector<8x128xbf16>, vector<128x512xbf16>, vector<8x512xf32> -> vector<8x512xf32>
    %85 = arith.addf %81, %84 : vector<8x512xf32>
    %86 = vector.extract_strided_slice %85 {offsets = [0, 0], sizes = [8, 128], strides = [1, 1]} : vector<8x512xf32> to vector<8x128xf32>
    %87 = arith.negf %86 : vector<8x128xf32>
    %88 = math.exp %87 : vector<8x128xf32>
    %cst_34 = arith.constant 1.000000e+00 : f32
    %89 = vector.broadcast %cst_34 : f32 to vector<8x128xf32>
    %90 = arith.addf %89, %88 : vector<8x128xf32>
    %91 = arith.divf %89, %90 : vector<8x128xf32>
    %92 = vector.extract_strided_slice %85 {offsets = [0, 128], sizes = [8, 128], strides = [1, 1]} : vector<8x512xf32> to vector<8x128xf32>
    %93 = arith.negf %92 : vector<8x128xf32>
    %94 = math.exp %93 : vector<8x128xf32>
    %cst_35 = arith.constant 1.000000e+00 : f32
    %95 = vector.broadcast %cst_35 : f32 to vector<8x128xf32>
    %96 = arith.addf %95, %94 : vector<8x128xf32>
    %97 = arith.divf %95, %96 : vector<8x128xf32>
    %98 = vector.extract_strided_slice %85 {offsets = [0, 256], sizes = [8, 128], strides = [1, 1]} : vector<8x512xf32> to vector<8x128xf32>
    %99 = math.tanh %98 : vector<8x128xf32>
    %100 = vector.extract_strided_slice %85 {offsets = [0, 384], sizes = [8, 128], strides = [1, 1]} : vector<8x512xf32> to vector<8x128xf32>
    %101 = arith.negf %100 : vector<8x128xf32>
    %102 = math.exp %101 : vector<8x128xf32>
    %cst_36 = arith.constant 1.000000e+00 : f32
    %103 = vector.broadcast %cst_36 : f32 to vector<8x128xf32>
    %104 = arith.addf %103, %102 : vector<8x128xf32>
    %105 = arith.divf %103, %104 : vector<8x128xf32>
    %106 = arith.mulf %97, %36 : vector<8x128xf32>
    %107 = arith.mulf %91, %99 : vector<8x128xf32>
    %108 = arith.addf %106, %107 : vector<8x128xf32>
    %109 = math.tanh %108 : vector<8x128xf32>
    %110 = arith.mulf %105, %109 : vector<8x128xf32>
    %111 = arith.truncf %110 : vector<8x128xf32> to vector<8x128xbf16>
    %c0_37 = arith.constant 0 : index
    %c0_38 = arith.constant 0 : index
    %112 = vector.load %arg5[%c0_37, %c0_38] : memref<128x512xbf16, #tpu.memory_space<vmem>>, vector<128x512xbf16>
    %cst_39 = arith.constant dense<0.000000e+00> : vector<8x512xf32>
    %113 = tpu.matmul %111, %112, %cst_39 {dimension_numbers = #tpu.dot_dimension_numbers<[1], [0], [0], [1], [0, 0, 1, 1], [], []>} : vector<8x128xbf16>, vector<128x512xbf16>, vector<8x512xf32> -> vector<8x512xf32>
    %114 = arith.truncf %73 : vector<8x128xf32> to vector<8x128xbf16>
    %c0_40 = arith.constant 0 : index
    %c0_41 = arith.constant 0 : index
    %115 = vector.load %arg6[%c0_40, %c0_41] : memref<128x512xbf16, #tpu.memory_space<vmem>>, vector<128x512xbf16>
    %cst_42 = arith.constant dense<0.000000e+00> : vector<8x512xf32>
    %116 = tpu.matmul %114, %115, %cst_42 {dimension_numbers = #tpu.dot_dimension_numbers<[1], [0], [0], [1], [0, 0, 1, 1], [], []>} : vector<8x128xbf16>, vector<128x512xbf16>, vector<8x512xf32> -> vector<8x512xf32>
    %117 = arith.addf %113, %116 : vector<8x512xf32>
    %c0_43 = arith.constant 0 : index
    %c0_44 = arith.constant 0 : index
    %118 = vector.load %arg7[%c0_43, %c0_44] : memref<1x512xf32, #tpu.memory_space<vmem>>, vector<1x512xf32>
    %119 = vector.broadcast %118 : vector<1x512xf32> to vector<8x512xf32>
    %120 = arith.addf %117, %119 : vector<8x512xf32>
    %121 = vector.extract_strided_slice %120 {offsets = [0, 0], sizes = [8, 128], strides = [1, 1]} : vector<8x512xf32> to vector<8x128xf32>
    %122 = arith.negf %121 : vector<8x128xf32>
    %123 = math.exp %122 : vector<8x128xf32>
    %cst_45 = arith.constant 1.000000e+00 : f32
    %124 = vector.broadcast %cst_45 : f32 to vector<8x128xf32>
    %125 = arith.addf %124, %123 : vector<8x128xf32>
    %126 = arith.divf %124, %125 : vector<8x128xf32>
    %127 = vector.extract_strided_slice %120 {offsets = [0, 128], sizes = [8, 128], strides = [1, 1]} : vector<8x512xf32> to vector<8x128xf32>
    %128 = arith.negf %127 : vector<8x128xf32>
    %129 = math.exp %128 : vector<8x128xf32>
    %cst_46 = arith.constant 1.000000e+00 : f32
    %130 = vector.broadcast %cst_46 : f32 to vector<8x128xf32>
    %131 = arith.addf %130, %129 : vector<8x128xf32>
    %132 = arith.divf %130, %131 : vector<8x128xf32>
    %133 = vector.extract_strided_slice %120 {offsets = [0, 256], sizes = [8, 128], strides = [1, 1]} : vector<8x512xf32> to vector<8x128xf32>
    %134 = math.tanh %133 : vector<8x128xf32>
    %135 = vector.extract_strided_slice %120 {offsets = [0, 384], sizes = [8, 128], strides = [1, 1]} : vector<8x512xf32> to vector<8x128xf32>
    %136 = arith.negf %135 : vector<8x128xf32>
    %137 = math.exp %136 : vector<8x128xf32>
    %cst_47 = arith.constant 1.000000e+00 : f32
    %138 = vector.broadcast %cst_47 : f32 to vector<8x128xf32>
    %139 = arith.addf %138, %137 : vector<8x128xf32>
    %140 = arith.divf %138, %139 : vector<8x128xf32>
    %141 = arith.mulf %132, %71 : vector<8x128xf32>
    %142 = arith.mulf %126, %134 : vector<8x128xf32>
    %143 = arith.addf %141, %142 : vector<8x128xf32>
    %144 = math.tanh %143 : vector<8x128xf32>
    %145 = arith.mulf %140, %144 : vector<8x128xf32>
    %146 = arith.truncf %145 : vector<8x128xf32> to vector<8x128xbf16>
    %147 = arith.index_cast %c1_i32 : i32 to index
    %c0_48 = arith.constant 0 : index
    %c0_49 = arith.constant 0 : index
    %148 = vector.load %arg8[%147, %c0_48, %c0_49] : memref<8x8x128xbf16, #tpu.memory_space<vmem>>, vector<1x8x128xbf16>
    %149 = vector.shape_cast %148 : vector<1x8x128xbf16> to vector<8x128xbf16>
    %150 = vector.shape_cast %146 : vector<8x128xbf16> to vector<1x8x128xbf16>
    tpu.vector_store %arg8[%147, %c0_48, %c0_49], %150 {strides = array<i32>} : memref<8x8x128xbf16, #tpu.memory_space<vmem>>, vector<1x8x128xbf16>,
    %c2_i32 = arith.constant 2 : i32
    %151 = arith.index_cast %c2_i32 : i32 to index
    %c0_50 = arith.constant 0 : index
    %c0_51 = arith.constant 0 : index
    %152 = vector.load %arg1[%151, %c0_50, %c0_51] : memref<8x8x512xf32, #tpu.memory_space<vmem>>, vector<1x8x512xf32>
    %153 = vector.shape_cast %152 : vector<1x8x512xf32> to vector<8x512xf32>
    %154 = arith.truncf %110 : vector<8x128xf32> to vector<8x128xbf16>
    %c0_52 = arith.constant 0 : index
    %c0_53 = arith.constant 0 : index
    %155 = vector.load %arg4[%c0_52, %c0_53] : memref<128x512xbf16, #tpu.memory_space<vmem>>, vector<128x512xbf16>
    %cst_54 = arith.constant dense<0.000000e+00> : vector<8x512xf32>
    %156 = tpu.matmul %154, %155, %cst_54 {dimension_numbers = #tpu.dot_dimension_numbers<[1], [0], [0], [1], [0, 0, 1, 1], [], []>} : vector<8x128xbf16>, vector<128x512xbf16>, vector<8x512xf32> -> vector<8x512xf32>
    %157 = arith.addf %153, %156 : vector<8x512xf32>
    %158 = vector.extract_strided_slice %157 {offsets = [0, 0], sizes = [8, 128], strides = [1, 1]} : vector<8x512xf32> to vector<8x128xf32>
    %159 = arith.negf %158 : vector<8x128xf32>
    %160 = math.exp %159 : vector<8x128xf32>
    %cst_55 = arith.constant 1.000000e+00 : f32
    %161 = vector.broadcast %cst_55 : f32 to vector<8x128xf32>
    %162 = arith.addf %161, %160 : vector<8x128xf32>
    %163 = arith.divf %161, %162 : vector<8x128xf32>
    %164 = vector.extract_strided_slice %157 {offsets = [0, 128], sizes = [8, 128], strides = [1, 1]} : vector<8x512xf32> to vector<8x128xf32>
    %165 = arith.negf %164 : vector<8x128xf32>
    %166 = math.exp %165 : vector<8x128xf32>
    %cst_56 = arith.constant 1.000000e+00 : f32
    %167 = vector.broadcast %cst_56 : f32 to vector<8x128xf32>
    %168 = arith.addf %167, %166 : vector<8x128xf32>
    %169 = arith.divf %167, %168 : vector<8x128xf32>
    %170 = vector.extract_strided_slice %157 {offsets = [0, 256], sizes = [8, 128], strides = [1, 1]} : vector<8x512xf32> to vector<8x128xf32>
    %171 = math.tanh %170 : vector<8x128xf32>
    %172 = vector.extract_strided_slice %157 {offsets = [0, 384], sizes = [8, 128], strides = [1, 1]} : vector<8x512xf32> to vector<8x128xf32>
    %173 = arith.negf %172 : vector<8x128xf32>
    %174 = math.exp %173 : vector<8x128xf32>
    %cst_57 = arith.constant 1.000000e+00 : f32
    %175 = vector.broadcast %cst_57 : f32 to vector<8x128xf32>
    %176 = arith.addf %175, %174 : vector<8x128xf32>
    %177 = arith.divf %175, %176 : vector<8x128xf32>
    %178 = arith.mulf %169, %108 : vector<8x128xf32>
    %179 = arith.mulf %163, %171 : vector<8x128xf32>
    %180 = arith.addf %178, %179 : vector<8x128xf32>
    %181 = math.tanh %180 : vector<8x128xf32>
    %182 = arith.mulf %177, %181 : vector<8x128xf32>
    %183 = arith.truncf %182 : vector<8x128xf32> to vector<8x128xbf16>
    %c0_58 = arith.constant 0 : index
    %c0_59 = arith.constant 0 : index
    %184 = vector.load %arg5[%c0_58, %c0_59] : memref<128x512xbf16, #tpu.memory_space<vmem>>, vector<128x512xbf16>
    %cst_60 = arith.constant dense<0.000000e+00> : vector<8x512xf32>
    %185 = tpu.matmul %183, %184, %cst_60 {dimension_numbers = #tpu.dot_dimension_numbers<[1], [0], [0], [1], [0, 0, 1, 1], [], []>} : vector<8x128xbf16>, vector<128x512xbf16>, vector<8x512xf32> -> vector<8x512xf32>
    %186 = arith.truncf %145 : vector<8x128xf32> to vector<8x128xbf16>
    %c0_61 = arith.constant 0 : index
    %c0_62 = arith.constant 0 : index
    %187 = vector.load %arg6[%c0_61, %c0_62] : memref<128x512xbf16, #tpu.memory_space<vmem>>, vector<128x512xbf16>
    %cst_63 = arith.constant dense<0.000000e+00> : vector<8x512xf32>
    %188 = tpu.matmul %186, %187, %cst_63 {dimension_numbers = #tpu.dot_dimension_numbers<[1], [0], [0], [1], [0, 0, 1, 1], [], []>} : vector<8x128xbf16>, vector<128x512xbf16>, vector<8x512xf32> -> vector<8x512xf32>
    %189 = arith.addf %185, %188 : vector<8x512xf32>
    %c0_64 = arith.constant 0 : index
    %c0_65 = arith.constant 0 : index
    %190 = vector.load %arg7[%c0_64, %c0_65] : memref<1x512xf32, #tpu.memory_space<vmem>>, vector<1x512xf32>
    %191 = vector.broadcast %190 : vector<1x512xf32> to vector<8x512xf32>
    %192 = arith.addf %189, %191 : vector<8x512xf32>
    %193 = vector.extract_strided_slice %192 {offsets = [0, 0], sizes = [8, 128], strides = [1, 1]} : vector<8x512xf32> to vector<8x128xf32>
    %194 = arith.negf %193 : vector<8x128xf32>
    %195 = math.exp %194 : vector<8x128xf32>
    %cst_66 = arith.constant 1.000000e+00 : f32
    %196 = vector.broadcast %cst_66 : f32 to vector<8x128xf32>
    %197 = arith.addf %196, %195 : vector<8x128xf32>
    %198 = arith.divf %196, %197 : vector<8x128xf32>
    %199 = vector.extract_strided_slice %192 {offsets = [0, 128], sizes = [8, 128], strides = [1, 1]} : vector<8x512xf32> to vector<8x128xf32>
    %200 = arith.negf %199 : vector<8x128xf32>
    %201 = math.exp %200 : vector<8x128xf32>
    %cst_67 = arith.constant 1.000000e+00 : f32
    %202 = vector.broadcast %cst_67 : f32 to vector<8x128xf32>
    %203 = arith.addf %202, %201 : vector<8x128xf32>
    %204 = arith.divf %202, %203 : vector<8x128xf32>
    %205 = vector.extract_strided_slice %192 {offsets = [0, 256], sizes = [8, 128], strides = [1, 1]} : vector<8x512xf32> to vector<8x128xf32>
    %206 = math.tanh %205 : vector<8x128xf32>
    %207 = vector.extract_strided_slice %192 {offsets = [0, 384], sizes = [8, 128], strides = [1, 1]} : vector<8x512xf32> to vector<8x128xf32>
    %208 = arith.negf %207 : vector<8x128xf32>
    %209 = math.exp %208 : vector<8x128xf32>
    %cst_68 = arith.constant 1.000000e+00 : f32
    %210 = vector.broadcast %cst_68 : f32 to vector<8x128xf32>
    %211 = arith.addf %210, %209 : vector<8x128xf32>
    %212 = arith.divf %210, %211 : vector<8x128xf32>
    %213 = arith.mulf %204, %143 : vector<8x128xf32>
    %214 = arith.mulf %198, %206 : vector<8x128xf32>
    %215 = arith.addf %213, %214 : vector<8x128xf32>
    %216 = math.tanh %215 : vector<8x128xf32>
    %217 = arith.mulf %212, %216 : vector<8x128xf32>
    %218 = arith.truncf %217 : vector<8x128xf32> to vector<8x128xbf16>
    %219 = arith.index_cast %c2_i32 : i32 to index
    %c0_69 = arith.constant 0 : index
    %c0_70 = arith.constant 0 : index
    %220 = vector.load %arg8[%219, %c0_69, %c0_70] : memref<8x8x128xbf16, #tpu.memory_space<vmem>>, vector<1x8x128xbf16>
    %221 = vector.shape_cast %220 : vector<1x8x128xbf16> to vector<8x128xbf16>
    %222 = vector.shape_cast %218 : vector<8x128xbf16> to vector<1x8x128xbf16>
    tpu.vector_store %arg8[%219, %c0_69, %c0_70], %222 {strides = array<i32>} : memref<8x8x128xbf16, #tpu.memory_space<vmem>>, vector<1x8x128xbf16>,
    %c3_i32 = arith.constant 3 : i32
    %223 = arith.index_cast %c3_i32 : i32 to index
    %c0_71 = arith.constant 0 : index
    %c0_72 = arith.constant 0 : index
    %224 = vector.load %arg1[%223, %c0_71, %c0_72] : memref<8x8x512xf32, #tpu.memory_space<vmem>>, vector<1x8x512xf32>
    %225 = vector.shape_cast %224 : vector<1x8x512xf32> to vector<8x512xf32>
    %226 = arith.truncf %182 : vector<8x128xf32> to vector<8x128xbf16>
    %c0_73 = arith.constant 0 : index
    %c0_74 = arith.constant 0 : index
    %227 = vector.load %arg4[%c0_73, %c0_74] : memref<128x512xbf16, #tpu.memory_space<vmem>>, vector<128x512xbf16>
    %cst_75 = arith.constant dense<0.000000e+00> : vector<8x512xf32>
    %228 = tpu.matmul %226, %227, %cst_75 {dimension_numbers = #tpu.dot_dimension_numbers<[1], [0], [0], [1], [0, 0, 1, 1], [], []>} : vector<8x128xbf16>, vector<128x512xbf16>, vector<8x512xf32> -> vector<8x512xf32>
    %229 = arith.addf %225, %228 : vector<8x512xf32>
    %230 = vector.extract_strided_slice %229 {offsets = [0, 0], sizes = [8, 128], strides = [1, 1]} : vector<8x512xf32> to vector<8x128xf32>
    %231 = arith.negf %230 : vector<8x128xf32>
    %232 = math.exp %231 : vector<8x128xf32>
    %cst_76 = arith.constant 1.000000e+00 : f32
    %233 = vector.broadcast %cst_76 : f32 to vector<8x128xf32>
    %234 = arith.addf %233, %232 : vector<8x128xf32>
    %235 = arith.divf %233, %234 : vector<8x128xf32>
    %236 = vector.extract_strided_slice %229 {offsets = [0, 128], sizes = [8, 128], strides = [1, 1]} : vector<8x512xf32> to vector<8x128xf32>
    %237 = arith.negf %236 : vector<8x128xf32>
    %238 = math.exp %237 : vector<8x128xf32>
    %cst_77 = arith.constant 1.000000e+00 : f32
    %239 = vector.broadcast %cst_77 : f32 to vector<8x128xf32>
    %240 = arith.addf %239, %238 : vector<8x128xf32>
    %241 = arith.divf %239, %240 : vector<8x128xf32>
    %242 = vector.extract_strided_slice %229 {offsets = [0, 256], sizes = [8, 128], strides = [1, 1]} : vector<8x512xf32> to vector<8x128xf32>
    %243 = math.tanh %242 : vector<8x128xf32>
    %244 = vector.extract_strided_slice %229 {offsets = [0, 384], sizes = [8, 128], strides = [1, 1]} : vector<8x512xf32> to vector<8x128xf32>
    %245 = arith.negf %244 : vector<8x128xf32>
    %246 = math.exp %245 : vector<8x128xf32>
    %cst_78 = arith.constant 1.000000e+00 : f32
    %247 = vector.broadcast %cst_78 : f32 to vector<8x128xf32>
    %248 = arith.addf %247, %246 : vector<8x128xf32>
    %249 = arith.divf %247, %248 : vector<8x128xf32>
    %250 = arith.mulf %241, %180 : vector<8x128xf32>
    %251 = arith.mulf %235, %243 : vector<8x128xf32>
    %252 = arith.addf %250, %251 : vector<8x128xf32>
    %253 = math.tanh %252 : vector<8x128xf32>
    %254 = arith.mulf %249, %253 : vector<8x128xf32>
    %255 = arith.truncf %254 : vector<8x128xf32> to vector<8x128xbf16>
    %c0_79 = arith.constant 0 : index
    %c0_80 = arith.constant 0 : index
    %256 = vector.load %arg5[%c0_79, %c0_80] : memref<128x512xbf16, #tpu.memory_space<vmem>>, vector<128x512xbf16>
    %cst_81 = arith.constant dense<0.000000e+00> : vector<8x512xf32>
    %257 = tpu.matmul %255, %256, %cst_81 {dimension_numbers = #tpu.dot_dimension_numbers<[1], [0], [0], [1], [0, 0, 1, 1], [], []>} : vector<8x128xbf16>, vector<128x512xbf16>, vector<8x512xf32> -> vector<8x512xf32>
    %258 = arith.truncf %217 : vector<8x128xf32> to vector<8x128xbf16>
    %c0_82 = arith.constant 0 : index
    %c0_83 = arith.constant 0 : index
    %259 = vector.load %arg6[%c0_82, %c0_83] : memref<128x512xbf16, #tpu.memory_space<vmem>>, vector<128x512xbf16>
    %cst_84 = arith.constant dense<0.000000e+00> : vector<8x512xf32>
    %260 = tpu.matmul %258, %259, %cst_84 {dimension_numbers = #tpu.dot_dimension_numbers<[1], [0], [0], [1], [0, 0, 1, 1], [], []>} : vector<8x128xbf16>, vector<128x512xbf16>, vector<8x512xf32> -> vector<8x512xf32>
    %261 = arith.addf %257, %260 : vector<8x512xf32>
    %c0_85 = arith.constant 0 : index
    %c0_86 = arith.constant 0 : index
    %262 = vector.load %arg7[%c0_85, %c0_86] : memref<1x512xf32, #tpu.memory_space<vmem>>, vector<1x512xf32>
    %263 = vector.broadcast %262 : vector<1x512xf32> to vector<8x512xf32>
    %264 = arith.addf %261, %263 : vector<8x512xf32>
    %265 = vector.extract_strided_slice %264 {offsets = [0, 0], sizes = [8, 128], strides = [1, 1]} : vector<8x512xf32> to vector<8x128xf32>
    %266 = arith.negf %265 : vector<8x128xf32>
    %267 = math.exp %266 : vector<8x128xf32>
    %cst_87 = arith.constant 1.000000e+00 : f32
    %268 = vector.broadcast %cst_87 : f32 to vector<8x128xf32>
    %269 = arith.addf %268, %267 : vector<8x128xf32>
    %270 = arith.divf %268, %269 : vector<8x128xf32>
    %271 = vector.extract_strided_slice %264 {offsets = [0, 128], sizes = [8, 128], strides = [1, 1]} : vector<8x512xf32> to vector<8x128xf32>
    %272 = arith.negf %271 : vector<8x128xf32>
    %273 = math.exp %272 : vector<8x128xf32>
    %cst_88 = arith.constant 1.000000e+00 : f32
    %274 = vector.broadcast %cst_88 : f32 to vector<8x128xf32>
    %275 = arith.addf %274, %273 : vector<8x128xf32>
    %276 = arith.divf %274, %275 : vector<8x128xf32>
    %277 = vector.extract_strided_slice %264 {offsets = [0, 256], sizes = [8, 128], strides = [1, 1]} : vector<8x512xf32> to vector<8x128xf32>
    %278 = math.tanh %277 : vector<8x128xf32>
    %279 = vector.extract_strided_slice %264 {offsets = [0, 384], sizes = [8, 128], strides = [1, 1]} : vector<8x512xf32> to vector<8x128xf32>
    %280 = arith.negf %279 : vector<8x128xf32>
    %281 = math.exp %280 : vector<8x128xf32>
    %cst_89 = arith.constant 1.000000e+00 : f32
    %282 = vector.broadcast %cst_89 : f32 to vector<8x128xf32>
    %283 = arith.addf %282, %281 : vector<8x128xf32>
    %284 = arith.divf %282, %283 : vector<8x128xf32>
    %285 = arith.mulf %276, %215 : vector<8x128xf32>
    %286 = arith.mulf %270, %278 : vector<8x128xf32>
    %287 = arith.addf %285, %286 : vector<8x128xf32>
    %288 = math.tanh %287 : vector<8x128xf32>
    %289 = arith.mulf %284, %288 : vector<8x128xf32>
    %290 = arith.truncf %289 : vector<8x128xf32> to vector<8x128xbf16>
    %291 = arith.index_cast %c3_i32 : i32 to index
    %c0_90 = arith.constant 0 : index
    %c0_91 = arith.constant 0 : index
    %292 = vector.load %arg8[%291, %c0_90, %c0_91] : memref<8x8x128xbf16, #tpu.memory_space<vmem>>, vector<1x8x128xbf16>
    %293 = vector.shape_cast %292 : vector<1x8x128xbf16> to vector<8x128xbf16>
    %294 = vector.shape_cast %290 : vector<8x128xbf16> to vector<1x8x128xbf16>
    tpu.vector_store %arg8[%291, %c0_90, %c0_91], %294 {strides = array<i32>} : memref<8x8x128xbf16, #tpu.memory_space<vmem>>, vector<1x8x128xbf16>,
    %c4_i32 = arith.constant 4 : i32
    %295 = arith.index_cast %c4_i32 : i32 to index
    %c0_92 = arith.constant 0 : index
    %c0_93 = arith.constant 0 : index
    %296 = vector.load %arg1[%295, %c0_92, %c0_93] : memref<8x8x512xf32, #tpu.memory_space<vmem>>, vector<1x8x512xf32>
    %297 = vector.shape_cast %296 : vector<1x8x512xf32> to vector<8x512xf32>
    %298 = arith.truncf %254 : vector<8x128xf32> to vector<8x128xbf16>
    %c0_94 = arith.constant 0 : index
    %c0_95 = arith.constant 0 : index
    %299 = vector.load %arg4[%c0_94, %c0_95] : memref<128x512xbf16, #tpu.memory_space<vmem>>, vector<128x512xbf16>
    %cst_96 = arith.constant dense<0.000000e+00> : vector<8x512xf32>
    %300 = tpu.matmul %298, %299, %cst_96 {dimension_numbers = #tpu.dot_dimension_numbers<[1], [0], [0], [1], [0, 0, 1, 1], [], []>} : vector<8x128xbf16>, vector<128x512xbf16>, vector<8x512xf32> -> vector<8x512xf32>
    %301 = arith.addf %297, %300 : vector<8x512xf32>
    %302 = vector.extract_strided_slice %301 {offsets = [0, 0], sizes = [8, 128], strides = [1, 1]} : vector<8x512xf32> to vector<8x128xf32>
    %303 = arith.negf %302 : vector<8x128xf32>
    %304 = math.exp %303 : vector<8x128xf32>
    %cst_97 = arith.constant 1.000000e+00 : f32
    %305 = vector.broadcast %cst_97 : f32 to vector<8x128xf32>
    %306 = arith.addf %305, %304 : vector<8x128xf32>
    %307 = arith.divf %305, %306 : vector<8x128xf32>
    %308 = vector.extract_strided_slice %301 {offsets = [0, 128], sizes = [8, 128], strides = [1, 1]} : vector<8x512xf32> to vector<8x128xf32>
    %309 = arith.negf %308 : vector<8x128xf32>
    %310 = math.exp %309 : vector<8x128xf32>
    %cst_98 = arith.constant 1.000000e+00 : f32
    %311 = vector.broadcast %cst_98 : f32 to vector<8x128xf32>
    %312 = arith.addf %311, %310 : vector<8x128xf32>
    %313 = arith.divf %311, %312 : vector<8x128xf32>
    %314 = vector.extract_strided_slice %301 {offsets = [0, 256], sizes = [8, 128], strides = [1, 1]} : vector<8x512xf32> to vector<8x128xf32>
    %315 = math.tanh %314 : vector<8x128xf32>
    %316 = vector.extract_strided_slice %301 {offsets = [0, 384], sizes = [8, 128], strides = [1, 1]} : vector<8x512xf32> to vector<8x128xf32>
    %317 = arith.negf %316 : vector<8x128xf32>
    %318 = math.exp %317 : vector<8x128xf32>
    %cst_99 = arith.constant 1.000000e+00 : f32
    %319 = vector.broadcast %cst_99 : f32 to vector<8x128xf32>
    %320 = arith.addf %319, %318 : vector<8x128xf32>
    %321 = arith.divf %319, %320 : vector<8x128xf32>
    %322 = arith.mulf %313, %252 : vector<8x128xf32>
    %323 = arith.mulf %307, %315 : vector<8x128xf32>
    %324 = arith.addf %322, %323 : vector<8x128xf32>
    %325 = math.tanh %324 : vector<8x128xf32>
    %326 = arith.mulf %321, %325 : vector<8x128xf32>
    %327 = arith.truncf %326 : vector<8x128xf32> to vector<8x128xbf16>
    %c0_100 = arith.constant 0 : index
    %c0_101 = arith.constant 0 : index
    %328 = vector.load %arg5[%c0_100, %c0_101] : memref<128x512xbf16, #tpu.memory_space<vmem>>, vector<128x512xbf16>
    %cst_102 = arith.constant dense<0.000000e+00> : vector<8x512xf32>
    %329 = tpu.matmul %327, %328, %cst_102 {dimension_numbers = #tpu.dot_dimension_numbers<[1], [0], [0], [1], [0, 0, 1, 1], [], []>} : vector<8x128xbf16>, vector<128x512xbf16>, vector<8x512xf32> -> vector<8x512xf32>
    %330 = arith.truncf %289 : vector<8x128xf32> to vector<8x128xbf16>
    %c0_103 = arith.constant 0 : index
    %c0_104 = arith.constant 0 : index
    %331 = vector.load %arg6[%c0_103, %c0_104] : memref<128x512xbf16, #tpu.memory_space<vmem>>, vector<128x512xbf16>
    %cst_105 = arith.constant dense<0.000000e+00> : vector<8x512xf32>
    %332 = tpu.matmul %330, %331, %cst_105 {dimension_numbers = #tpu.dot_dimension_numbers<[1], [0], [0], [1], [0, 0, 1, 1], [], []>} : vector<8x128xbf16>, vector<128x512xbf16>, vector<8x512xf32> -> vector<8x512xf32>
    %333 = arith.addf %329, %332 : vector<8x512xf32>
    %c0_106 = arith.constant 0 : index
    %c0_107 = arith.constant 0 : index
    %334 = vector.load %arg7[%c0_106, %c0_107] : memref<1x512xf32, #tpu.memory_space<vmem>>, vector<1x512xf32>
    %335 = vector.broadcast %334 : vector<1x512xf32> to vector<8x512xf32>
    %336 = arith.addf %333, %335 : vector<8x512xf32>
    %337 = vector.extract_strided_slice %336 {offsets = [0, 0], sizes = [8, 128], strides = [1, 1]} : vector<8x512xf32> to vector<8x128xf32>
    %338 = arith.negf %337 : vector<8x128xf32>
    %339 = math.exp %338 : vector<8x128xf32>
    %cst_108 = arith.constant 1.000000e+00 : f32
    %340 = vector.broadcast %cst_108 : f32 to vector<8x128xf32>
    %341 = arith.addf %340, %339 : vector<8x128xf32>
    %342 = arith.divf %340, %341 : vector<8x128xf32>
    %343 = vector.extract_strided_slice %336 {offsets = [0, 128], sizes = [8, 128], strides = [1, 1]} : vector<8x512xf32> to vector<8x128xf32>
    %344 = arith.negf %343 : vector<8x128xf32>
    %345 = math.exp %344 : vector<8x128xf32>
    %cst_109 = arith.constant 1.000000e+00 : f32
    %346 = vector.broadcast %cst_109 : f32 to vector<8x128xf32>
    %347 = arith.addf %346, %345 : vector<8x128xf32>
    %348 = arith.divf %346, %347 : vector<8x128xf32>
    %349 = vector.extract_strided_slice %336 {offsets = [0, 256], sizes = [8, 128], strides = [1, 1]} : vector<8x512xf32> to vector<8x128xf32>
    %350 = math.tanh %349 : vector<8x128xf32>
    %351 = vector.extract_strided_slice %336 {offsets = [0, 384], sizes = [8, 128], strides = [1, 1]} : vector<8x512xf32> to vector<8x128xf32>
    %352 = arith.negf %351 : vector<8x128xf32>
    %353 = math.exp %352 : vector<8x128xf32>
    %cst_110 = arith.constant 1.000000e+00 : f32
    %354 = vector.broadcast %cst_110 : f32 to vector<8x128xf32>
    %355 = arith.addf %354, %353 : vector<8x128xf32>
    %356 = arith.divf %354, %355 : vector<8x128xf32>
    %357 = arith.mulf %348, %287 : vector<8x128xf32>
    %358 = arith.mulf %342, %350 : vector<8x128xf32>
    %359 = arith.addf %357, %358 : vector<8x128xf32>
    %360 = math.tanh %359 : vector<8x128xf32>
    %361 = arith.mulf %356, %360 : vector<8x128xf32>
    %362 = arith.truncf %361 : vector<8x128xf32> to vector<8x128xbf16>
    %363 = arith.index_cast %c4_i32 : i32 to index
    %c0_111 = arith.constant 0 : index
    %c0_112 = arith.constant 0 : index
    %364 = vector.load %arg8[%363, %c0_111, %c0_112] : memref<8x8x128xbf16, #tpu.memory_space<vmem>>, vector<1x8x128xbf16>
    %365 = vector.shape_cast %364 : vector<1x8x128xbf16> to vector<8x128xbf16>
    %366 = vector.shape_cast %362 : vector<8x128xbf16> to vector<1x8x128xbf16>
    tpu.vector_store %arg8[%363, %c0_111, %c0_112], %366 {strides = array<i32>} : memref<8x8x128xbf16, #tpu.memory_space<vmem>>, vector<1x8x128xbf16>,
    %c5_i32 = arith.constant 5 : i32
    %367 = arith.index_cast %c5_i32 : i32 to index
    %c0_113 = arith.constant 0 : index
    %c0_114 = arith.constant 0 : index
    %368 = vector.load %arg1[%367, %c0_113, %c0_114] : memref<8x8x512xf32, #tpu.memory_space<vmem>>, vector<1x8x512xf32>
    %369 = vector.shape_cast %368 : vector<1x8x512xf32> to vector<8x512xf32>
    %370 = arith.truncf %326 : vector<8x128xf32> to vector<8x128xbf16>
    %c0_115 = arith.constant 0 : index
    %c0_116 = arith.constant 0 : index
    %371 = vector.load %arg4[%c0_115, %c0_116] : memref<128x512xbf16, #tpu.memory_space<vmem>>, vector<128x512xbf16>
    %cst_117 = arith.constant dense<0.000000e+00> : vector<8x512xf32>
    %372 = tpu.matmul %370, %371, %cst_117 {dimension_numbers = #tpu.dot_dimension_numbers<[1], [0], [0], [1], [0, 0, 1, 1], [], []>} : vector<8x128xbf16>, vector<128x512xbf16>, vector<8x512xf32> -> vector<8x512xf32>
    %373 = arith.addf %369, %372 : vector<8x512xf32>
    %374 = vector.extract_strided_slice %373 {offsets = [0, 0], sizes = [8, 128], strides = [1, 1]} : vector<8x512xf32> to vector<8x128xf32>
    %375 = arith.negf %374 : vector<8x128xf32>
    %376 = math.exp %375 : vector<8x128xf32>
    %cst_118 = arith.constant 1.000000e+00 : f32
    %377 = vector.broadcast %cst_118 : f32 to vector<8x128xf32>
    %378 = arith.addf %377, %376 : vector<8x128xf32>
    %379 = arith.divf %377, %378 : vector<8x128xf32>
    %380 = vector.extract_strided_slice %373 {offsets = [0, 128], sizes = [8, 128], strides = [1, 1]} : vector<8x512xf32> to vector<8x128xf32>
    %381 = arith.negf %380 : vector<8x128xf32>
    %382 = math.exp %381 : vector<8x128xf32>
    %cst_119 = arith.constant 1.000000e+00 : f32
    %383 = vector.broadcast %cst_119 : f32 to vector<8x128xf32>
    %384 = arith.addf %383, %382 : vector<8x128xf32>
    %385 = arith.divf %383, %384 : vector<8x128xf32>
    %386 = vector.extract_strided_slice %373 {offsets = [0, 256], sizes = [8, 128], strides = [1, 1]} : vector<8x512xf32> to vector<8x128xf32>
    %387 = math.tanh %386 : vector<8x128xf32>
    %388 = vector.extract_strided_slice %373 {offsets = [0, 384], sizes = [8, 128], strides = [1, 1]} : vector<8x512xf32> to vector<8x128xf32>
    %389 = arith.negf %388 : vector<8x128xf32>
    %390 = math.exp %389 : vector<8x128xf32>
    %cst_120 = arith.constant 1.000000e+00 : f32
    %391 = vector.broadcast %cst_120 : f32 to vector<8x128xf32>
    %392 = arith.addf %391, %390 : vector<8x128xf32>
    %393 = arith.divf %391, %392 : vector<8x128xf32>
    %394 = arith.mulf %385, %324 : vector<8x128xf32>
    %395 = arith.mulf %379, %387 : vector<8x128xf32>
    %396 = arith.addf %394, %395 : vector<8x128xf32>
    %397 = math.tanh %396 : vector<8x128xf32>
    %398 = arith.mulf %393, %397 : vector<8x128xf32>
    %399 = arith.truncf %398 : vector<8x128xf32> to vector<8x128xbf16>
    %c0_121 = arith.constant 0 : index
    %c0_122 = arith.constant 0 : index
    %400 = vector.load %arg5[%c0_121, %c0_122] : memref<128x512xbf16, #tpu.memory_space<vmem>>, vector<128x512xbf16>
    %cst_123 = arith.constant dense<0.000000e+00> : vector<8x512xf32>
    %401 = tpu.matmul %399, %400, %cst_123 {dimension_numbers = #tpu.dot_dimension_numbers<[1], [0], [0], [1], [0, 0, 1, 1], [], []>} : vector<8x128xbf16>, vector<128x512xbf16>, vector<8x512xf32> -> vector<8x512xf32>
    %402 = arith.truncf %361 : vector<8x128xf32> to vector<8x128xbf16>
    %c0_124 = arith.constant 0 : index
    %c0_125 = arith.constant 0 : index
    %403 = vector.load %arg6[%c0_124, %c0_125] : memref<128x512xbf16, #tpu.memory_space<vmem>>, vector<128x512xbf16>
    %cst_126 = arith.constant dense<0.000000e+00> : vector<8x512xf32>
    %404 = tpu.matmul %402, %403, %cst_126 {dimension_numbers = #tpu.dot_dimension_numbers<[1], [0], [0], [1], [0, 0, 1, 1], [], []>} : vector<8x128xbf16>, vector<128x512xbf16>, vector<8x512xf32> -> vector<8x512xf32>
    %405 = arith.addf %401, %404 : vector<8x512xf32>
    %c0_127 = arith.constant 0 : index
    %c0_128 = arith.constant 0 : index
    %406 = vector.load %arg7[%c0_127, %c0_128] : memref<1x512xf32, #tpu.memory_space<vmem>>, vector<1x512xf32>
    %407 = vector.broadcast %406 : vector<1x512xf32> to vector<8x512xf32>
    %408 = arith.addf %405, %407 : vector<8x512xf32>
    %409 = vector.extract_strided_slice %408 {offsets = [0, 0], sizes = [8, 128], strides = [1, 1]} : vector<8x512xf32> to vector<8x128xf32>
    %410 = arith.negf %409 : vector<8x128xf32>
    %411 = math.exp %410 : vector<8x128xf32>
    %cst_129 = arith.constant 1.000000e+00 : f32
    %412 = vector.broadcast %cst_129 : f32 to vector<8x128xf32>
    %413 = arith.addf %412, %411 : vector<8x128xf32>
    %414 = arith.divf %412, %413 : vector<8x128xf32>
    %415 = vector.extract_strided_slice %408 {offsets = [0, 128], sizes = [8, 128], strides = [1, 1]} : vector<8x512xf32> to vector<8x128xf32>
    %416 = arith.negf %415 : vector<8x128xf32>
    %417 = math.exp %416 : vector<8x128xf32>
    %cst_130 = arith.constant 1.000000e+00 : f32
    %418 = vector.broadcast %cst_130 : f32 to vector<8x128xf32>
    %419 = arith.addf %418, %417 : vector<8x128xf32>
    %420 = arith.divf %418, %419 : vector<8x128xf32>
    %421 = vector.extract_strided_slice %408 {offsets = [0, 256], sizes = [8, 128], strides = [1, 1]} : vector<8x512xf32> to vector<8x128xf32>
    %422 = math.tanh %421 : vector<8x128xf32>
    %423 = vector.extract_strided_slice %408 {offsets = [0, 384], sizes = [8, 128], strides = [1, 1]} : vector<8x512xf32> to vector<8x128xf32>
    %424 = arith.negf %423 : vector<8x128xf32>
    %425 = math.exp %424 : vector<8x128xf32>
    %cst_131 = arith.constant 1.000000e+00 : f32
    %426 = vector.broadcast %cst_131 : f32 to vector<8x128xf32>
    %427 = arith.addf %426, %425 : vector<8x128xf32>
    %428 = arith.divf %426, %427 : vector<8x128xf32>
    %429 = arith.mulf %420, %359 : vector<8x128xf32>
    %430 = arith.mulf %414, %422 : vector<8x128xf32>
    %431 = arith.addf %429, %430 : vector<8x128xf32>
    %432 = math.tanh %431 : vector<8x128xf32>
    %433 = arith.mulf %428, %432 : vector<8x128xf32>
    %434 = arith.truncf %433 : vector<8x128xf32> to vector<8x128xbf16>
    %435 = arith.index_cast %c5_i32 : i32 to index
    %c0_132 = arith.constant 0 : index
    %c0_133 = arith.constant 0 : index
    %436 = vector.load %arg8[%435, %c0_132, %c0_133] : memref<8x8x128xbf16, #tpu.memory_space<vmem>>, vector<1x8x128xbf16>
    %437 = vector.shape_cast %436 : vector<1x8x128xbf16> to vector<8x128xbf16>
    %438 = vector.shape_cast %434 : vector<8x128xbf16> to vector<1x8x128xbf16>
    tpu.vector_store %arg8[%435, %c0_132, %c0_133], %438 {strides = array<i32>} : memref<8x8x128xbf16, #tpu.memory_space<vmem>>, vector<1x8x128xbf16>,
    %c6_i32 = arith.constant 6 : i32
    %439 = arith.index_cast %c6_i32 : i32 to index
    %c0_134 = arith.constant 0 : index
    %c0_135 = arith.constant 0 : index
    %440 = vector.load %arg1[%439, %c0_134, %c0_135] : memref<8x8x512xf32, #tpu.memory_space<vmem>>, vector<1x8x512xf32>
    %441 = vector.shape_cast %440 : vector<1x8x512xf32> to vector<8x512xf32>
    %442 = arith.truncf %398 : vector<8x128xf32> to vector<8x128xbf16>
    %c0_136 = arith.constant 0 : index
    %c0_137 = arith.constant 0 : index
    %443 = vector.load %arg4[%c0_136, %c0_137] : memref<128x512xbf16, #tpu.memory_space<vmem>>, vector<128x512xbf16>
    %cst_138 = arith.constant dense<0.000000e+00> : vector<8x512xf32>
    %444 = tpu.matmul %442, %443, %cst_138 {dimension_numbers = #tpu.dot_dimension_numbers<[1], [0], [0], [1], [0, 0, 1, 1], [], []>} : vector<8x128xbf16>, vector<128x512xbf16>, vector<8x512xf32> -> vector<8x512xf32>
    %445 = arith.addf %441, %444 : vector<8x512xf32>
    %446 = vector.extract_strided_slice %445 {offsets = [0, 0], sizes = [8, 128], strides = [1, 1]} : vector<8x512xf32> to vector<8x128xf32>
    %447 = arith.negf %446 : vector<8x128xf32>
    %448 = math.exp %447 : vector<8x128xf32>
    %cst_139 = arith.constant 1.000000e+00 : f32
    %449 = vector.broadcast %cst_139 : f32 to vector<8x128xf32>
    %450 = arith.addf %449, %448 : vector<8x128xf32>
    %451 = arith.divf %449, %450 : vector<8x128xf32>
    %452 = vector.extract_strided_slice %445 {offsets = [0, 128], sizes = [8, 128], strides = [1, 1]} : vector<8x512xf32> to vector<8x128xf32>
    %453 = arith.negf %452 : vector<8x128xf32>
    %454 = math.exp %453 : vector<8x128xf32>
    %cst_140 = arith.constant 1.000000e+00 : f32
    %455 = vector.broadcast %cst_140 : f32 to vector<8x128xf32>
    %456 = arith.addf %455, %454 : vector<8x128xf32>
    %457 = arith.divf %455, %456 : vector<8x128xf32>
    %458 = vector.extract_strided_slice %445 {offsets = [0, 256], sizes = [8, 128], strides = [1, 1]} : vector<8x512xf32> to vector<8x128xf32>
    %459 = math.tanh %458 : vector<8x128xf32>
    %460 = vector.extract_strided_slice %445 {offsets = [0, 384], sizes = [8, 128], strides = [1, 1]} : vector<8x512xf32> to vector<8x128xf32>
    %461 = arith.negf %460 : vector<8x128xf32>
    %462 = math.exp %461 : vector<8x128xf32>
    %cst_141 = arith.constant 1.000000e+00 : f32
    %463 = vector.broadcast %cst_141 : f32 to vector<8x128xf32>
    %464 = arith.addf %463, %462 : vector<8x128xf32>
    %465 = arith.divf %463, %464 : vector<8x128xf32>
    %466 = arith.mulf %457, %396 : vector<8x128xf32>
    %467 = arith.mulf %451, %459 : vector<8x128xf32>
    %468 = arith.addf %466, %467 : vector<8x128xf32>
    %469 = math.tanh %468 : vector<8x128xf32>
    %470 = arith.mulf %465, %469 : vector<8x128xf32>
    %471 = arith.truncf %470 : vector<8x128xf32> to vector<8x128xbf16>
    %c0_142 = arith.constant 0 : index
    %c0_143 = arith.constant 0 : index
    %472 = vector.load %arg5[%c0_142, %c0_143] : memref<128x512xbf16, #tpu.memory_space<vmem>>, vector<128x512xbf16>
    %cst_144 = arith.constant dense<0.000000e+00> : vector<8x512xf32>
    %473 = tpu.matmul %471, %472, %cst_144 {dimension_numbers = #tpu.dot_dimension_numbers<[1], [0], [0], [1], [0, 0, 1, 1], [], []>} : vector<8x128xbf16>, vector<128x512xbf16>, vector<8x512xf32> -> vector<8x512xf32>
    %474 = arith.truncf %433 : vector<8x128xf32> to vector<8x128xbf16>
    %c0_145 = arith.constant 0 : index
    %c0_146 = arith.constant 0 : index
    %475 = vector.load %arg6[%c0_145, %c0_146] : memref<128x512xbf16, #tpu.memory_space<vmem>>, vector<128x512xbf16>
    %cst_147 = arith.constant dense<0.000000e+00> : vector<8x512xf32>
    %476 = tpu.matmul %474, %475, %cst_147 {dimension_numbers = #tpu.dot_dimension_numbers<[1], [0], [0], [1], [0, 0, 1, 1], [], []>} : vector<8x128xbf16>, vector<128x512xbf16>, vector<8x512xf32> -> vector<8x512xf32>
    %477 = arith.addf %473, %476 : vector<8x512xf32>
    %c0_148 = arith.constant 0 : index
    %c0_149 = arith.constant 0 : index
    %478 = vector.load %arg7[%c0_148, %c0_149] : memref<1x512xf32, #tpu.memory_space<vmem>>, vector<1x512xf32>
    %479 = vector.broadcast %478 : vector<1x512xf32> to vector<8x512xf32>
    %480 = arith.addf %477, %479 : vector<8x512xf32>
    %481 = vector.extract_strided_slice %480 {offsets = [0, 0], sizes = [8, 128], strides = [1, 1]} : vector<8x512xf32> to vector<8x128xf32>
    %482 = arith.negf %481 : vector<8x128xf32>
    %483 = math.exp %482 : vector<8x128xf32>
    %cst_150 = arith.constant 1.000000e+00 : f32
    %484 = vector.broadcast %cst_150 : f32 to vector<8x128xf32>
    %485 = arith.addf %484, %483 : vector<8x128xf32>
    %486 = arith.divf %484, %485 : vector<8x128xf32>
    %487 = vector.extract_strided_slice %480 {offsets = [0, 128], sizes = [8, 128], strides = [1, 1]} : vector<8x512xf32> to vector<8x128xf32>
    %488 = arith.negf %487 : vector<8x128xf32>
    %489 = math.exp %488 : vector<8x128xf32>
    %cst_151 = arith.constant 1.000000e+00 : f32
    %490 = vector.broadcast %cst_151 : f32 to vector<8x128xf32>
    %491 = arith.addf %490, %489 : vector<8x128xf32>
    %492 = arith.divf %490, %491 : vector<8x128xf32>
    %493 = vector.extract_strided_slice %480 {offsets = [0, 256], sizes = [8, 128], strides = [1, 1]} : vector<8x512xf32> to vector<8x128xf32>
    %494 = math.tanh %493 : vector<8x128xf32>
    %495 = vector.extract_strided_slice %480 {offsets = [0, 384], sizes = [8, 128], strides = [1, 1]} : vector<8x512xf32> to vector<8x128xf32>
    %496 = arith.negf %495 : vector<8x128xf32>
    %497 = math.exp %496 : vector<8x128xf32>
    %cst_152 = arith.constant 1.000000e+00 : f32
    %498 = vector.broadcast %cst_152 : f32 to vector<8x128xf32>
    %499 = arith.addf %498, %497 : vector<8x128xf32>
    %500 = arith.divf %498, %499 : vector<8x128xf32>
    %501 = arith.mulf %492, %431 : vector<8x128xf32>
    %502 = arith.mulf %486, %494 : vector<8x128xf32>
    %503 = arith.addf %501, %502 : vector<8x128xf32>
    %504 = math.tanh %503 : vector<8x128xf32>
    %505 = arith.mulf %500, %504 : vector<8x128xf32>
    %506 = arith.truncf %505 : vector<8x128xf32> to vector<8x128xbf16>
    %507 = arith.index_cast %c6_i32 : i32 to index
    %c0_153 = arith.constant 0 : index
    %c0_154 = arith.constant 0 : index
    %508 = vector.load %arg8[%507, %c0_153, %c0_154] : memref<8x8x128xbf16, #tpu.memory_space<vmem>>, vector<1x8x128xbf16>
    %509 = vector.shape_cast %508 : vector<1x8x128xbf16> to vector<8x128xbf16>
    %510 = vector.shape_cast %506 : vector<8x128xbf16> to vector<1x8x128xbf16>
    tpu.vector_store %arg8[%507, %c0_153, %c0_154], %510 {strides = array<i32>} : memref<8x8x128xbf16, #tpu.memory_space<vmem>>, vector<1x8x128xbf16>,
    %c7_i32 = arith.constant 7 : i32
    %511 = arith.index_cast %c7_i32 : i32 to index
    %c0_155 = arith.constant 0 : index
    %c0_156 = arith.constant 0 : index
    %512 = vector.load %arg1[%511, %c0_155, %c0_156] : memref<8x8x512xf32, #tpu.memory_space<vmem>>, vector<1x8x512xf32>
    %513 = vector.shape_cast %512 : vector<1x8x512xf32> to vector<8x512xf32>
    %514 = arith.truncf %470 : vector<8x128xf32> to vector<8x128xbf16>
    %c0_157 = arith.constant 0 : index
    %c0_158 = arith.constant 0 : index
    %515 = vector.load %arg4[%c0_157, %c0_158] : memref<128x512xbf16, #tpu.memory_space<vmem>>, vector<128x512xbf16>
    %cst_159 = arith.constant dense<0.000000e+00> : vector<8x512xf32>
    %516 = tpu.matmul %514, %515, %cst_159 {dimension_numbers = #tpu.dot_dimension_numbers<[1], [0], [0], [1], [0, 0, 1, 1], [], []>} : vector<8x128xbf16>, vector<128x512xbf16>, vector<8x512xf32> -> vector<8x512xf32>
    %517 = arith.addf %513, %516 : vector<8x512xf32>
    %518 = vector.extract_strided_slice %517 {offsets = [0, 0], sizes = [8, 128], strides = [1, 1]} : vector<8x512xf32> to vector<8x128xf32>
    %519 = arith.negf %518 : vector<8x128xf32>
    %520 = math.exp %519 : vector<8x128xf32>
    %cst_160 = arith.constant 1.000000e+00 : f32
    %521 = vector.broadcast %cst_160 : f32 to vector<8x128xf32>
    %522 = arith.addf %521, %520 : vector<8x128xf32>
    %523 = arith.divf %521, %522 : vector<8x128xf32>
    %524 = vector.extract_strided_slice %517 {offsets = [0, 128], sizes = [8, 128], strides = [1, 1]} : vector<8x512xf32> to vector<8x128xf32>
    %525 = arith.negf %524 : vector<8x128xf32>
    %526 = math.exp %525 : vector<8x128xf32>
    %cst_161 = arith.constant 1.000000e+00 : f32
    %527 = vector.broadcast %cst_161 : f32 to vector<8x128xf32>
    %528 = arith.addf %527, %526 : vector<8x128xf32>
    %529 = arith.divf %527, %528 : vector<8x128xf32>
    %530 = vector.extract_strided_slice %517 {offsets = [0, 256], sizes = [8, 128], strides = [1, 1]} : vector<8x512xf32> to vector<8x128xf32>
    %531 = math.tanh %530 : vector<8x128xf32>
    %532 = vector.extract_strided_slice %517 {offsets = [0, 384], sizes = [8, 128], strides = [1, 1]} : vector<8x512xf32> to vector<8x128xf32>
    %533 = arith.negf %532 : vector<8x128xf32>
    %534 = math.exp %533 : vector<8x128xf32>
    %cst_162 = arith.constant 1.000000e+00 : f32
    %535 = vector.broadcast %cst_162 : f32 to vector<8x128xf32>
    %536 = arith.addf %535, %534 : vector<8x128xf32>
    %537 = arith.divf %535, %536 : vector<8x128xf32>
    %538 = arith.mulf %529, %468 : vector<8x128xf32>
    %539 = arith.mulf %523, %531 : vector<8x128xf32>
    %540 = arith.addf %538, %539 : vector<8x128xf32>
    %541 = math.tanh %540 : vector<8x128xf32>
    %542 = arith.mulf %537, %541 : vector<8x128xf32>
    %543 = arith.truncf %542 : vector<8x128xf32> to vector<8x128xbf16>
    %c0_163 = arith.constant 0 : index
    %c0_164 = arith.constant 0 : index
    %544 = vector.load %arg5[%c0_163, %c0_164] : memref<128x512xbf16, #tpu.memory_space<vmem>>, vector<128x512xbf16>
    %cst_165 = arith.constant dense<0.000000e+00> : vector<8x512xf32>
    %545 = tpu.matmul %543, %544, %cst_165 {dimension_numbers = #tpu.dot_dimension_numbers<[1], [0], [0], [1], [0, 0, 1, 1], [], []>} : vector<8x128xbf16>, vector<128x512xbf16>, vector<8x512xf32> -> vector<8x512xf32>
    %546 = arith.truncf %505 : vector<8x128xf32> to vector<8x128xbf16>
    %c0_166 = arith.constant 0 : index
    %c0_167 = arith.constant 0 : index
    %547 = vector.load %arg6[%c0_166, %c0_167] : memref<128x512xbf16, #tpu.memory_space<vmem>>, vector<128x512xbf16>
    %cst_168 = arith.constant dense<0.000000e+00> : vector<8x512xf32>
    %548 = tpu.matmul %546, %547, %cst_168 {dimension_numbers = #tpu.dot_dimension_numbers<[1], [0], [0], [1], [0, 0, 1, 1], [], []>} : vector<8x128xbf16>, vector<128x512xbf16>, vector<8x512xf32> -> vector<8x512xf32>
    %549 = arith.addf %545, %548 : vector<8x512xf32>
    %c0_169 = arith.constant 0 : index
    %c0_170 = arith.constant 0 : index
    %550 = vector.load %arg7[%c0_169, %c0_170] : memref<1x512xf32, #tpu.memory_space<vmem>>, vector<1x512xf32>
    %551 = vector.broadcast %550 : vector<1x512xf32> to vector<8x512xf32>
    %552 = arith.addf %549, %551 : vector<8x512xf32>
    %553 = vector.extract_strided_slice %552 {offsets = [0, 0], sizes = [8, 128], strides = [1, 1]} : vector<8x512xf32> to vector<8x128xf32>
    %554 = arith.negf %553 : vector<8x128xf32>
    %555 = math.exp %554 : vector<8x128xf32>
    %cst_171 = arith.constant 1.000000e+00 : f32
    %556 = vector.broadcast %cst_171 : f32 to vector<8x128xf32>
    %557 = arith.addf %556, %555 : vector<8x128xf32>
    %558 = arith.divf %556, %557 : vector<8x128xf32>
    %559 = vector.extract_strided_slice %552 {offsets = [0, 128], sizes = [8, 128], strides = [1, 1]} : vector<8x512xf32> to vector<8x128xf32>
    %560 = arith.negf %559 : vector<8x128xf32>
    %561 = math.exp %560 : vector<8x128xf32>
    %cst_172 = arith.constant 1.000000e+00 : f32
    %562 = vector.broadcast %cst_172 : f32 to vector<8x128xf32>
    %563 = arith.addf %562, %561 : vector<8x128xf32>
    %564 = arith.divf %562, %563 : vector<8x128xf32>
    %565 = vector.extract_strided_slice %552 {offsets = [0, 256], sizes = [8, 128], strides = [1, 1]} : vector<8x512xf32> to vector<8x128xf32>
    %566 = math.tanh %565 : vector<8x128xf32>
    %567 = vector.extract_strided_slice %552 {offsets = [0, 384], sizes = [8, 128], strides = [1, 1]} : vector<8x512xf32> to vector<8x128xf32>
    %568 = arith.negf %567 : vector<8x128xf32>
    %569 = math.exp %568 : vector<8x128xf32>
    %cst_173 = arith.constant 1.000000e+00 : f32
    %570 = vector.broadcast %cst_173 : f32 to vector<8x128xf32>
    %571 = arith.addf %570, %569 : vector<8x128xf32>
    %572 = arith.divf %570, %571 : vector<8x128xf32>
    %573 = arith.mulf %564, %503 : vector<8x128xf32>
    %574 = arith.mulf %558, %566 : vector<8x128xf32>
    %575 = arith.addf %573, %574 : vector<8x128xf32>
    %576 = math.tanh %575 : vector<8x128xf32>
    %577 = arith.mulf %572, %576 : vector<8x128xf32>
    %578 = arith.truncf %577 : vector<8x128xf32> to vector<8x128xbf16>
    %579 = arith.index_cast %c7_i32 : i32 to index
    %c0_174 = arith.constant 0 : index
    %c0_175 = arith.constant 0 : index
    %580 = vector.load %arg8[%579, %c0_174, %c0_175] : memref<8x8x128xbf16, #tpu.memory_space<vmem>>, vector<1x8x128xbf16>
    %581 = vector.shape_cast %580 : vector<1x8x128xbf16> to vector<8x128xbf16>
    %582 = vector.shape_cast %578 : vector<8x128xbf16> to vector<1x8x128xbf16>
    tpu.vector_store %arg8[%579, %c0_174, %c0_175], %582 {strides = array<i32>} : memref<8x8x128xbf16, #tpu.memory_space<vmem>>, vector<1x8x128xbf16>,
    %c8_i32 = arith.constant 8 : i32
    %c0_176 = arith.constant 0 : index
    %c0_177 = arith.constant 0 : index
    %583 = vector.load %arg11[%c0_176, %c0_177] : memref<8x128xf32, #tpu.memory_space<vmem>>, vector<8x128xf32>
    tpu.vector_store %arg11[%c0_176, %c0_177], %542 {strides = array<i32>} : memref<8x128xf32, #tpu.memory_space<vmem>>, vector<8x128xf32>,
    %c0_178 = arith.constant 0 : index
    %c0_179 = arith.constant 0 : index
    %584 = vector.load %arg12[%c0_178, %c0_179] : memref<8x128xf32, #tpu.memory_space<vmem>>, vector<8x128xf32>
    tpu.vector_store %arg12[%c0_178, %c0_179], %540 {strides = array<i32>} : memref<8x128xf32, #tpu.memory_space<vmem>>, vector<8x128xf32>,
    %c0_180 = arith.constant 0 : index
    %c0_181 = arith.constant 0 : index
    %585 = vector.load %arg13[%c0_180, %c0_181] : memref<8x128xf32, #tpu.memory_space<vmem>>, vector<8x128xf32>
    tpu.vector_store %arg13[%c0_180, %c0_181], %577 {strides = array<i32>} : memref<8x128xf32, #tpu.memory_space<vmem>>, vector<8x128xf32>,
    %c0_182 = arith.constant 0 : index
    %c0_183 = arith.constant 0 : index
    %586 = vector.load %arg14[%c0_182, %c0_183] : memref<8x128xf32, #tpu.memory_space<vmem>>, vector<8x128xf32>
    tpu.vector_store %arg14[%c0_182, %c0_183], %575 {strides = array<i32>} : memref<8x128xf32, #tpu.memory_space<vmem>>, vector<8x128xf32>,
    %c1_i32_184 = arith.constant 1 : i32
    %587 = arith.cmpi eq, %arg0, %c1_i32_184 : i32
    %588 = arith.extui %587 : i1 to i32
    %c0_i32_185 = arith.constant 0 : i32
    %589 = arith.cmpi ne, %588, %c0_i32_185 : i32
    scf.if %589 {
      %c0_186 = arith.constant 0 : index
      %c0_187 = arith.constant 0 : index
      %c0_188 = arith.constant 0 : index
      %590 = vector.load %arg9[%c0_186, %c0_187, %c0_188] : memref<2x8x128xf32, #tpu.memory_space<vmem>>, vector<1x8x128xf32>
      %591 = vector.shape_cast %590 : vector<1x8x128xf32> to vector<8x128xf32>
      %592 = vector.shape_cast %542 : vector<8x128xf32> to vector<1x8x128xf32>
      tpu.vector_store %arg9[%c0_186, %c0_187, %c0_188], %592 {strides = array<i32>} : memref<2x8x128xf32, #tpu.memory_space<vmem>>, vector<1x8x128xf32>,
      %c1 = arith.constant 1 : index
      %c0_189 = arith.constant 0 : index
      %c0_190 = arith.constant 0 : index
      %593 = vector.load %arg9[%c1, %c0_189, %c0_190] : memref<2x8x128xf32, #tpu.memory_space<vmem>>, vector<1x8x128xf32>
      %594 = vector.shape_cast %593 : vector<1x8x128xf32> to vector<8x128xf32>
      %595 = vector.shape_cast %577 : vector<8x128xf32> to vector<1x8x128xf32>
      tpu.vector_store %arg9[%c1, %c0_189, %c0_190], %595 {strides = array<i32>} : memref<2x8x128xf32, #tpu.memory_space<vmem>>, vector<1x8x128xf32>,
      %c0_191 = arith.constant 0 : index
      %c0_192 = arith.constant 0 : index
      %c0_193 = arith.constant 0 : index
      %596 = vector.load %arg10[%c0_191, %c0_192, %c0_193] : memref<2x8x128xf32, #tpu.memory_space<vmem>>, vector<1x8x128xf32>
      %597 = vector.shape_cast %596 : vector<1x8x128xf32> to vector<8x128xf32>
      %598 = vector.shape_cast %540 : vector<8x128xf32> to vector<1x8x128xf32>
      tpu.vector_store %arg10[%c0_191, %c0_192, %c0_193], %598 {strides = array<i32>} : memref<2x8x128xf32, #tpu.memory_space<vmem>>, vector<1x8x128xf32>,
      %c1_194 = arith.constant 1 : index
      %c0_195 = arith.constant 0 : index
      %c0_196 = arith.constant 0 : index
      %599 = vector.load %arg10[%c1_194, %c0_195, %c0_196] : memref<2x8x128xf32, #tpu.memory_space<vmem>>, vector<1x8x128xf32>
      %600 = vector.shape_cast %599 : vector<1x8x128xf32> to vector<8x128xf32>
      %601 = vector.shape_cast %575 : vector<8x128xf32> to vector<1x8x128xf32>
      tpu.vector_store %arg10[%c1_194, %c0_195, %c0_196], %601 {strides = array<i32>} : memref<2x8x128xf32, #tpu.memory_space<vmem>>, vector<1x8x128xf32>,
    } else {
    }
    return
  }
  func.func @transform_0(%arg0: i32) -> (i32, i32, i32) {
    %c0_i32 = arith.constant 0 : i32
    %c0_i32_0 = arith.constant 0 : i32
    %c0_i32_1 = arith.constant 0 : i32
    return %arg0, %c0_i32, %c0_i32_0 : i32, i32, i32
  }
  func.func @transform_1(%arg0: i32) -> (i32, i32, i32) {
    %c0_i32 = arith.constant 0 : i32
    %c0_i32_0 = arith.constant 0 : i32
    %c0_i32_1 = arith.constant 0 : i32
    %c0_i32_2 = arith.constant 0 : i32
    return %c0_i32, %c0_i32_0, %c0_i32_1 : i32, i32, i32
  }
  func.func @transform_2(%arg0: i32) -> (i32, i32, i32) {
    %c0_i32 = arith.constant 0 : i32
    %c0_i32_0 = arith.constant 0 : i32
    %c0_i32_1 = arith.constant 0 : i32
    %c0_i32_2 = arith.constant 0 : i32
    return %c0_i32, %c0_i32_0, %c0_i32_1 : i32, i32, i32
  }
  func.func @transform_3(%arg0: i32) -> (i32, i32) {
    %c0_i32 = arith.constant 0 : i32
    %c0_i32_0 = arith.constant 0 : i32
    %c0_i32_1 = arith.constant 0 : i32
    return %c0_i32, %c0_i32_0 : i32, i32
  }
  func.func @transform_4(%arg0: i32) -> (i32, i32) {
    %c0_i32 = arith.constant 0 : i32
    %c0_i32_0 = arith.constant 0 : i32
    %c0_i32_1 = arith.constant 0 : i32
    return %c0_i32, %c0_i32_0 : i32, i32
  }
  func.func @transform_5(%arg0: i32) -> (i32, i32) {
    %c0_i32 = arith.constant 0 : i32
    %c0_i32_0 = arith.constant 0 : i32
    %c0_i32_1 = arith.constant 0 : i32
    return %c0_i32, %c0_i32_0 : i32, i32
  }
  func.func @transform_6(%arg0: i32) -> (i32, i32) {
    %c0_i32 = arith.constant 0 : i32
    %c0_i32_0 = arith.constant 0 : i32
    %c0_i32_1 = arith.constant 0 : i32
    return %c0_i32, %c0_i32_0 : i32, i32
  }
  func.func @transform_7(%arg0: i32) -> (i32, i32, i32) {
    %c0_i32 = arith.constant 0 : i32
    %c0_i32_0 = arith.constant 0 : i32
    %c0_i32_1 = arith.constant 0 : i32
    return %arg0, %c0_i32, %c0_i32_0 : i32, i32, i32
  }
  func.func @transform_8(%arg0: i32) -> (i32, i32, i32) {
    %c0_i32 = arith.constant 0 : i32
    %c0_i32_0 = arith.constant 0 : i32
    %c0_i32_1 = arith.constant 0 : i32
    %c0_i32_2 = arith.constant 0 : i32
    return %c0_i32, %c0_i32_0, %c0_i32_1 : i32, i32, i32
  }
  func.func @transform_9(%arg0: i32) -> (i32, i32, i32) {
    %c0_i32 = arith.constant 0 : i32
    %c0_i32_0 = arith.constant 0 : i32
    %c0_i32_1 = arith.constant 0 : i32
    %c0_i32_2 = arith.constant 0 : i32
    return %c0_i32, %c0_i32_0, %c0_i32_1 : i32, i32, i32
  }
}

</mosaic_0001>

<llo_original>
// kernel: text_generation_forward.5
$region0: #{text_generation_forward.5}
  #allocation0 [shape = 'u32[]', space=smem, size = 0x4, offset = 0x4, fixed_abs, tag = 'smem constant byte address 0x4 - core index']
  #allocation1 [shape = 'u32[144,128]{1,0:T(1,128)}', space=vmem, size = 0x12000, scoped, tag = 'internal scratch']
  %s0 = inlined_call_operand.vmem [shape: bf16[128,128], index: 0, kind: input, shape index: {}]
  %s1 = inlined_call_operand.vmem [shape: bf16[128,128], index: 1, kind: input, shape index: {}]
  %s2 = inlined_call_operand.vmem [shape: f32[1,128], index: 2, kind: input, shape index: {}]
  %s3 = inlined_call_operand.hbm [shape: f32[128,128], index: 3, kind: output, shape index: {}]
  %s4 = sld [smem:[#allocation0]]
  $region22: #{text_generation_forward.5} parent=0
    _
  %s6 = ssub.s32 1, %s4
  %s7 = scalar_select 0, %s6, %s4
  $region1: #{text_generation_forward.5} parent=0
    #allocation2 [shape = 'u8[65536]{0}', space=vmem, size = 0x10000, scoped, tag = 'output window, operand 0, single buffered']
    #allocation3 [shape = 's32[1]{0}', space=sflag, size = 0x4, scoped, tag = 'scoped memory for text_generation_forward.5']
    %8 = vsyncpa [#allocation3], 0
    // Predicated region
    $region2: #{text_generation_forward.5} parent=1 // pred_check
      _
    $region3: #{text_generation_forward.5} parent=1 // pred_check_branch
      %10 = sbr.rel (0) target = $region5
    $region4: #{text_generation_forward.5} parent=1 // pred_region
      _
    $region5: #{text_generation_forward.5} parent=1 // pred_fallthru
      _
    // Predicated region
    $region6: #{text_generation_forward.5} parent=1 // pred_check
      _
    $region7: #{text_generation_forward.5} parent=1 // pred_check_branch
      %12 = sbr.rel (0) target = $region9
    $region8: #{text_generation_forward.5} parent=1 // pred_region
      _
    $region9: #{text_generation_forward.5} parent=1 // pred_fallthru
      _
    // Predicated region
    $region10: #{text_generation_forward.5} parent=1 // pred_check
      _
    $region11: #{text_generation_forward.5} parent=1 // pred_check_branch
      %14 = sbr.rel (0) target = $region13
    $region12: #{text_generation_forward.5} parent=1 // pred_region
      _
    $region13: #{text_generation_forward.5} parent=1 // pred_fallthru
      _
    %v16 = vld [vmem:[%s0] sm:$0xf]
    %v17 = vld [vmem:[%s0 + $0x4] sm:$0xf]
    %v18 = vld [vmem:[%s0 + $0x8] sm:$0xf]
    %v19 = vld [vmem:[%s0 + $0xc] sm:$0xf]
    %v20 = vld [vmem:[%s0 + $0x10] sm:$0xf]
    %v21 = vld [vmem:[%s0 + $0x14] sm:$0xf]
    %v22 = vld [vmem:[%s0 + $0x18] sm:$0xf]
    %v23 = vld [vmem:[%s0 + $0x1c] sm:$0xf]
    %v24 = vld [vmem:[%s0 + $0x20] sm:$0xf]
    %v25 = vld [vmem:[%s0 + $0x24] sm:$0xf]
    %v26 = vld [vmem:[%s0 + $0x28] sm:$0xf]
    %v27 = vld [vmem:[%s0 + $0x2c] sm:$0xf]
    %v28 = vld [vmem:[%s0 + $0x30] sm:$0xf]
    %v29 = vld [vmem:[%s0 + $0x34] sm:$0xf]
    %v30 = vld [vmem:[%s0 + $0x38] sm:$0xf]
    %v31 = vld [vmem:[%s0 + $0x3c] sm:$0xf]
    %v32 = vld [vmem:[%s1] sm:$0xf]
    %v33 = vld [vmem:[%s1 + $0x4] sm:$0xf]
    %v34 = vld [vmem:[%s1 + $0x8] sm:$0xf]
    %v35 = vld [vmem:[%s1 + $0xc] sm:$0xf]
    %v36 = vld [vmem:[%s1 + $0x10] sm:$0xf]
    %v37 = vld [vmem:[%s1 + $0x14] sm:$0xf]
    %v38 = vld [vmem:[%s1 + $0x18] sm:$0xf]
    %v39 = vld [vmem:[%s1 + $0x1c] sm:$0xf]
    %v40 = vld [vmem:[%s1 + $0x20] sm:$0xf]
    %v41 = vld [vmem:[%s1 + $0x24] sm:$0xf]
    %v42 = vld [vmem:[%s1 + $0x28] sm:$0xf]
    %v43 = vld [vmem:[%s1 + $0x2c] sm:$0xf]
    %v44 = vld [vmem:[%s1 + $0x30] sm:$0xf]
    %v45 = vld [vmem:[%s1 + $0x34] sm:$0xf]
    %v46 = vld [vmem:[%s1 + $0x38] sm:$0xf]
    %v47 = vld [vmem:[%s1 + $0x3c] sm:$0xf]
    %v48 = vld [vmem:[%s2] sm:$0x1]
    %v50 = vlaneseq
    %v51 = vshrl.u32 %v50, 7
    %v52 = vsub.s32 0, %v51
    %v53 = vrot.slane %v48, %v52
    %v71 = vunpack.c.l.b16 %v16
    %v72 = vunpack.c.l.b16 %v17
    %v73 = vunpack.c.l.b16 %v18
    %v74 = vunpack.c.l.b16 %v19
    %v75 = vunpack.c.l.b16 %v20
    %v76 = vunpack.c.l.b16 %v21
    %v77 = vunpack.c.l.b16 %v22
    %v78 = vunpack.c.l.b16 %v23
    %v79 = vunpack.c.l.b16 %v24
    %v80 = vunpack.c.l.b16 %v25
    %v81 = vunpack.c.l.b16 %v26
    %v82 = vunpack.c.l.b16 %v27
    %v83 = vunpack.c.l.b16 %v28
    %v84 = vunpack.c.l.b16 %v29
    %v85 = vunpack.c.l.b16 %v30
    %v86 = vunpack.c.l.b16 %v31
    %v87 = vpack.c.b16 %v72, %v71
    %v88 = vpack.c.b16 %v74, %v73
    %v89 = vpack.c.b16 %v76, %v75
    %v90 = vpack.c.b16 %v78, %v77
    %v91 = vpack.c.b16 %v80, %v79
    %v92 = vpack.c.b16 %v82, %v81
    %v93 = vpack.c.b16 %v84, %v83
    %v94 = vpack.c.b16 %v86, %v85
    %v119 = vunpack.c.l.b16 %v32
    %v120 = vunpack.c.l.b16 %v33
    %v121 = vunpack.c.l.b16 %v34
    %v122 = vunpack.c.l.b16 %v35
    %v123 = vunpack.c.l.b16 %v36
    %v124 = vunpack.c.l.b16 %v37
    %v125 = vunpack.c.l.b16 %v38
    %v126 = vunpack.c.l.b16 %v39
    %v127 = vunpack.c.l.b16 %v40
    %v128 = vunpack.c.l.b16 %v41
    %v129 = vunpack.c.l.b16 %v42
    %v130 = vunpack.c.l.b16 %v43
    %v131 = vunpack.c.l.b16 %v44
    %v132 = vunpack.c.l.b16 %v45
    %v133 = vunpack.c.l.b16 %v46
    %v134 = vunpack.c.l.b16 %v47
    %v135 = vpack.c.b16 %v120, %v119
    %v136 = vpack.c.b16 %v122, %v121
    %v137 = vpack.c.b16 %v124, %v123
    %v138 = vpack.c.b16 %v126, %v125
    %v139 = vpack.c.b16 %v128, %v127
    %v140 = vpack.c.b16 %v130, %v129
    %v141 = vpack.c.b16 %v132, %v131
    %v142 = vpack.c.b16 %v134, %v133
    %151 = vmatprep.subr.bf16.mxu0 0
    %152 = vmatpush1.bf16.msra.mxu0 %v135
    %153 = vmatprep.subr.bf16.mxu0 0
    %154 = vmatpush1.bf16.msra.mxu0 %v136
    %155 = vmatprep.subr.bf16.mxu0 0
    %156 = vmatpush1.bf16.msra.mxu0 %v137
    %157 = vmatprep.subr.bf16.mxu0 0
    %158 = vmatpush1.bf16.msra.mxu0 %v138
    %159 = vmatprep.subr.bf16.mxu0 0
    %160 = vmatpush1.bf16.msra.mxu0 %v139
    %161 = vmatprep.subr.bf16.mxu0 0
    %162 = vmatpush1.bf16.msra.mxu0 %v140
    %163 = vmatprep.subr.bf16.mxu0 0
    %164 = vmatpush1.bf16.msra.mxu0 %v141
    %165 = vmatprep.subr.bf16.mxu0 0
    %166 = vmatpush1.bf16.msra.mxu0 %v142
    %167 = vmatprep.subr.bf16.mxu0 0
    %168 = vmatpush1.bf16.msra.mxu0 0
    %169 = vmatprep.subr.bf16.mxu0 0
    %170 = vmatpush1.bf16.msra.mxu0 0
    %171 = vmatprep.subr.bf16.mxu0 0
    %172 = vmatpush1.bf16.msra.mxu0 0
    %173 = vmatprep.subr.bf16.mxu0 0
    %174 = vmatpush1.bf16.msra.mxu0 0
    %175 = vmatprep.subr.bf16.mxu0 0
    %176 = vmatpush1.bf16.msra.mxu0 0
    %177 = vmatprep.subr.bf16.mxu0 0
    %178 = vmatpush1.bf16.msra.mxu0 0
    %179 = vmatprep.subr.bf16.mxu0 0
    %180 = vmatpush1.bf16.msra.mxu0 0
    %181 = vmatprep.subr.bf16.mxu0 0
    %182 = vmatpush1.bf16.msra.mxu0 0
    %183 = vmatprep.mubr.bf16.mxu0 0
    %184 = vmatmul.mubr.bf16.gmra.mrb[0].mxu0 %v87
    %v185 = vpop.f32.mrb[0].mxu0
    %v186 = vadd.f32 %v53, %v185
    %v187 = vpop.f32.mrb[0].mxu0
    %v188 = vpop.f32.mrb[0].mxu0
    %v189 = vadd.f32 %v53, %v188
    %v190 = vpop.f32.mrb[0].mxu0
    %191 = vmatprep.mubr.bf16.mxu0 0
    %192 = vmatmul.mubr.bf16.gmra.mrb[0].mxu0 %v88
    %v193 = vpop.f32.mrb[0].mxu0
    %v194 = vadd.f32 %v53, %v193
    %v195 = vpop.f32.mrb[0].mxu0
    %v196 = vpop.f32.mrb[0].mxu0
    %v197 = vadd.f32 %v53, %v196
    %v198 = vpop.f32.mrb[0].mxu0
    %199 = vmatprep.mubr.bf16.mxu0 0
    %200 = vmatmul.mubr.bf16.gmra.mrb[0].mxu0 %v89
    %v201 = vpop.f32.mrb[0].mxu0
    %v202 = vadd.f32 %v53, %v201
    %v203 = vpop.f32.mrb[0].mxu0
    %v204 = vpop.f32.mrb[0].mxu0
    %v205 = vadd.f32 %v53, %v204
    %v206 = vpop.f32.mrb[0].mxu0
    %207 = vmatprep.mubr.bf16.mxu0 0
    %208 = vmatmul.mubr.bf16.gmra.mrb[0].mxu0 %v90
    %v209 = vpop.f32.mrb[0].mxu0
    %v210 = vadd.f32 %v53, %v209
    %v211 = vpop.f32.mrb[0].mxu0
    %v212 = vpop.f32.mrb[0].mxu0
    %v213 = vadd.f32 %v53, %v212
    %v214 = vpop.f32.mrb[0].mxu0
    %215 = vmatprep.mubr.bf16.mxu0 0
    %216 = vmatmul.mubr.bf16.gmra.mrb[0].mxu0 %v91
    %v217 = vpop.f32.mrb[0].mxu0
    %v218 = vadd.f32 %v53, %v217
    %v219 = vpop.f32.mrb[0].mxu0
    %v220 = vpop.f32.mrb[0].mxu0
    %v221 = vadd.f32 %v53, %v220
    %v222 = vpop.f32.mrb[0].mxu0
    %223 = vmatprep.mubr.bf16.mxu0 0
    %224 = vmatmul.mubr.bf16.gmra.mrb[0].mxu0 %v92
    %v225 = vpop.f32.mrb[0].mxu0
    %v226 = vadd.f32 %v53, %v225
    %v227 = vpop.f32.mrb[0].mxu0
    %v228 = vpop.f32.mrb[0].mxu0
    %v229 = vadd.f32 %v53, %v228
    %v230 = vpop.f32.mrb[0].mxu0
    %231 = vmatprep.mubr.bf16.mxu0 0
    %232 = vmatmul.mubr.bf16.gmra.mrb[0].mxu0 %v93
    %v233 = vpop.f32.mrb[0].mxu0
    %v234 = vadd.f32 %v53, %v233
    %v235 = vpop.f32.mrb[0].mxu0
    %v236 = vpop.f32.mrb[0].mxu0
    %v237 = vadd.f32 %v53, %v236
    %v238 = vpop.f32.mrb[0].mxu0
    %239 = vmatprep.mubr.bf16.mxu0 0
    %240 = vmatmul.mubr.bf16.gmra.mrb[0].mxu0 %v94
    %v241 = vpop.f32.mrb[0].mxu0
    %v242 = vadd.f32 %v53, %v241
    %v243 = vpop.f32.mrb[0].mxu0
    %v244 = vpop.f32.mrb[0].mxu0
    %v245 = vadd.f32 %v53, %v244
    %v246 = vpop.f32.mrb[0].mxu0
    %247 = vdwg.mxu0
    %248 = vst [vmem:[#allocation2] sm:$0xff] %v186
    %249 = vst [vmem:[#allocation2 + $0x8] sm:$0xff] %v189
    %250 = vst [vmem:[#allocation2 + $0x10] sm:$0xff] %v194
    %251 = vst [vmem:[#allocation2 + $0x18] sm:$0xff] %v197
    %252 = vst [vmem:[#allocation2 + $0x20] sm:$0xff] %v202
    %253 = vst [vmem:[#allocation2 + $0x28] sm:$0xff] %v205
    %254 = vst [vmem:[#allocation2 + $0x30] sm:$0xff] %v210
    %255 = vst [vmem:[#allocation2 + $0x38] sm:$0xff] %v213
    %256 = vst [vmem:[#allocation2 + $0x40] sm:$0xff] %v218
    %257 = vst [vmem:[#allocation2 + $0x48] sm:$0xff] %v221
    %258 = vst [vmem:[#allocation2 + $0x50] sm:$0xff] %v226
    %259 = vst [vmem:[#allocation2 + $0x58] sm:$0xff] %v229
    %260 = vst [vmem:[#allocation2 + $0x60] sm:$0xff] %v234
    %261 = vst [vmem:[#allocation2 + $0x68] sm:$0xff] %v237
    %262 = vst [vmem:[#allocation2 + $0x70] sm:$0xff] %v242
    %263 = vst [vmem:[#allocation2 + $0x78] sm:$0xff] %v245
    // Predicated region
    $region14: #{text_generation_forward.5} parent=1 // pred_check
      _
    $region15: #{text_generation_forward.5} parent=1 // pred_check_branch
      %265 = sbr.rel (0) target = $region17
    $region16: #{text_generation_forward.5} parent=1 // pred_region
      %s267 = ssub.s32 2048, 2048
      %268 = vsyncadd [#allocation3], %s267
      %s269 = sshll.u32 [#allocation2], 4
      %s270 = int_to_ptr.vmem [resolvable:$true] %s269
      %275 = dma.vmem_to_hbm [thread:$0]  %s270, 2048, %s3, [#allocation3], 128, 128, 8
    $region17: #{text_generation_forward.5} parent=1 // pred_fallthru
      _
    // Predicated region
    $region18: #{text_generation_forward.5} parent=1 // pred_check
      _
    $region19: #{text_generation_forward.5} parent=1 // pred_check_branch
      %277 = sbr.rel (0) target = $region21
    $region20: #{text_generation_forward.5} parent=1 // pred_region
      %278 = dma.done [#allocation3], 2048
    $region21: #{text_generation_forward.5} parent=1 // pred_fallthru
      _
    %279 = vsyncpa [#allocation3], 1

// kernel: text_generation_forward.3
$region0: #{text_generation_forward.3}
  #allocation0 [shape = 'u32[]', space=smem, size = 0x4, offset = 0x4, fixed_abs, tag = 'smem constant byte address 0x4 - core index']
  #allocation1 [shape = 'u32[144,128]{1,0:T(1,128)}', space=vmem, size = 0x12000, scoped, tag = 'internal scratch']
  %s0 = inlined_call_operand.vmem [shape: bf16[128,128], index: 0, kind: input, shape index: {}]
  %s1 = inlined_call_operand.hbm [shape: bf16[128,512], index: 1, kind: input, shape index: {}]
  %s2 = inlined_call_operand.vmem [shape: f32[1,512], index: 2, kind: input, shape index: {}]
  %s3 = inlined_call_operand.vmem [shape: f32[128,512], index: 3, kind: output, shape index: {}]
  %s4 = sld [smem:[#allocation0]]
  $region26: #{text_generation_forward.3} parent=0
    _
  %s6 = ssub.s32 1, %s4
  %s7 = scalar_select 0, %s6, %s4
  $region1: #{text_generation_forward.3} parent=0
    #allocation2 [shape = 'u8[131072]{0}', space=vmem, size = 0x20000, scoped, tag = 'input window, operand 1, single buffered']
    #allocation3 [shape = 's32[1]{0}', space=sflag, size = 0x4, scoped, tag = 'scoped memory for text_generation_forward.3']
    %8 = vsyncpa [#allocation3], 0
    // Predicated region
    $region2: #{text_generation_forward.3} parent=1 // pred_check
      _
    $region3: #{text_generation_forward.3} parent=1 // pred_check_branch
      %10 = sbr.rel (0) target = $region5
    $region4: #{text_generation_forward.3} parent=1 // pred_region
      _
    $region5: #{text_generation_forward.3} parent=1 // pred_fallthru
      _
    // Predicated region
    $region6: #{text_generation_forward.3} parent=1 // pred_check
      _
    $region7: #{text_generation_forward.3} parent=1 // pred_check_branch
      %12 = sbr.rel (0) target = $region9
    $region8: #{text_generation_forward.3} parent=1 // pred_region
      %s14 = ssub.s32 4096, 4096
      %15 = vsyncadd [#allocation3], %s14
      %s16 = sshll.u32 [#allocation2], 4
      %s17 = int_to_ptr.vmem [resolvable:$true] %s16
      %22 = dma.hbm_to_vmem [thread:$0]  %s1, 4096, %s17, [#allocation3], 256, 256, 16
    $region9: #{text_generation_forward.3} parent=1 // pred_fallthru
      _
    // Predicated region
    $region10: #{text_generation_forward.3} parent=1 // pred_check
      _
    $region11: #{text_generation_forward.3} parent=1 // pred_check_branch
      %24 = sbr.rel (0) target = $region13
    $region12: #{text_generation_forward.3} parent=1 // pred_region
      _
    $region13: #{text_generation_forward.3} parent=1 // pred_fallthru
      _
    // Predicated region
    $region14: #{text_generation_forward.3} parent=1 // pred_check
      _
    $region15: #{text_generation_forward.3} parent=1 // pred_check_branch
      %26 = sbr.rel (0) target = $region17
    $region16: #{text_generation_forward.3} parent=1 // pred_region
      %27 = dma.done [#allocation3], 4096
    $region17: #{text_generation_forward.3} parent=1 // pred_fallthru
      _
    %v29 = vld [vmem:[%s0] sm:$0xf]
    %v30 = vld [vmem:[%s0 + $0x4] sm:$0xf]
    %v31 = vld [vmem:[%s0 + $0x8] sm:$0xf]
    %v32 = vld [vmem:[%s0 + $0xc] sm:$0xf]
    %v33 = vld [vmem:[%s0 + $0x10] sm:$0xf]
    %v34 = vld [vmem:[%s0 + $0x14] sm:$0xf]
    %v35 = vld [vmem:[%s0 + $0x18] sm:$0xf]
    %v36 = vld [vmem:[%s0 + $0x1c] sm:$0xf]
    %v37 = vld [vmem:[%s0 + $0x20] sm:$0xf]
    %v38 = vld [vmem:[%s0 + $0x24] sm:$0xf]
    %v39 = vld [vmem:[%s0 + $0x28] sm:$0xf]
    %v40 = vld [vmem:[%s0 + $0x2c] sm:$0xf]
    %v41 = vld [vmem:[%s0 + $0x30] sm:$0xf]
    %v42 = vld [vmem:[%s0 + $0x34] sm:$0xf]
    %v43 = vld [vmem:[%s0 + $0x38] sm:$0xf]
    %v44 = vld [vmem:[%s0 + $0x3c] sm:$0xf]
    %v45 = vld [vmem:[#allocation2] sm:$0xff]
    %v46 = vld [vmem:[#allocation2 + $0x8] sm:$0xff]
    %v47 = vld [vmem:[#allocation2 + $0x10] sm:$0xff]
    %v48 = vld [vmem:[#allocation2 + $0x18] sm:$0xff]
    %v49 = vld [vmem:[#allocation2 + $0x20] sm:$0xff]
    %v50 = vld [vmem:[#allocation2 + $0x28] sm:$0xff]
    %v51 = vld [vmem:[#allocation2 + $0x30] sm:$0xff]
    %v52 = vld [vmem:[#allocation2 + $0x38] sm:$0xff]
    %v53 = vld [vmem:[#allocation2 + $0x40] sm:$0xff]
    %v54 = vld [vmem:[#allocation2 + $0x48] sm:$0xff]
    %v55 = vld [vmem:[#allocation2 + $0x50] sm:$0xff]
    %v56 = vld [vmem:[#allocation2 + $0x58] sm:$0xff]
    %v57 = vld [vmem:[#allocation2 + $0x60] sm:$0xff]
    %v58 = vld [vmem:[#allocation2 + $0x68] sm:$0xff]
    %v59 = vld [vmem:[#allocation2 + $0x70] sm:$0xff]
    %v60 = vld [vmem:[#allocation2 + $0x78] sm:$0xff]
    %v61 = vld [vmem:[#allocation2 + $0x80] sm:$0xff]
    %v62 = vld [vmem:[#allocation2 + $0x88] sm:$0xff]
    %v63 = vld [vmem:[#allocation2 + $0x90] sm:$0xff]
    %v64 = vld [vmem:[#allocation2 + $0x98] sm:$0xff]
    %v65 = vld [vmem:[#allocation2 + $0xa0] sm:$0xff]
    %v66 = vld [vmem:[#allocation2 + $0xa8] sm:$0xff]
    %v67 = vld [vmem:[#allocation2 + $0xb0] sm:$0xff]
    %v68 = vld [vmem:[#allocation2 + $0xb8] sm:$0xff]
    %v69 = vld [vmem:[#allocation2 + $0xc0] sm:$0xff]
    %v70 = vld [vmem:[#allocation2 + $0xc8] sm:$0xff]
    %v71 = vld [vmem:[#allocation2 + $0xd0] sm:$0xff]
    %v72 = vld [vmem:[#allocation2 + $0xd8] sm:$0xff]
    %v73 = vld [vmem:[#allocation2 + $0xe0] sm:$0xff]
    %v74 = vld [vmem:[#allocation2 + $0xe8] sm:$0xff]
    %v75 = vld [vmem:[#allocation2 + $0xf0] sm:$0xff]
    %v76 = vld [vmem:[#allocation2 + $0xf8] sm:$0xff]
    %v77 = vld [vmem:[%s2] sm:$0xf]
    %v79 = vlaneseq
    %v80 = vshrl.u32 %v79, 7
    %v81 = vsub.s32 0, %v80
    %v82 = vrot.slane %v77, %v81
    %v83 = vlaneseq
    %v84 = vshrl.u32 %v83, 7
    %v85 = vsub.s32 1, %v84
    %v86 = vrot.slane %v77, %v85
    %v87 = vlaneseq
    %v88 = vshrl.u32 %v87, 7
    %v89 = vsub.s32 2, %v88
    %v90 = vrot.slane %v77, %v89
    %v91 = vlaneseq
    %v92 = vshrl.u32 %v91, 7
    %v93 = vsub.s32 3, %v92
    %v94 = vrot.slane %v77, %v93
    %v115 = vunpack.c.l.b16 %v29
    %v116 = vunpack.c.l.b16 %v30
    %v117 = vunpack.c.l.b16 %v31
    %v118 = vunpack.c.l.b16 %v32
    %v119 = vunpack.c.l.b16 %v33
    %v120 = vunpack.c.l.b16 %v34
    %v121 = vunpack.c.l.b16 %v35
    %v122 = vunpack.c.l.b16 %v36
    %v123 = vunpack.c.l.b16 %v37
    %v124 = vunpack.c.l.b16 %v38
    %v125 = vunpack.c.l.b16 %v39
    %v126 = vunpack.c.l.b16 %v40
    %v127 = vunpack.c.l.b16 %v41
    %v128 = vunpack.c.l.b16 %v42
    %v129 = vunpack.c.l.b16 %v43
    %v130 = vunpack.c.l.b16 %v44
    %v131 = vpack.c.b16 %v116, %v115
    %v132 = vpack.c.b16 %v118, %v117
    %v133 = vpack.c.b16 %v120, %v119
    %v134 = vpack.c.b16 %v122, %v121
    %v135 = vpack.c.b16 %v124, %v123
    %v136 = vpack.c.b16 %v126, %v125
    %v137 = vpack.c.b16 %v128, %v127
    %v138 = vpack.c.b16 %v130, %v129
    %v179 = vunpack.c.l.b16 %v45
    %v180 = vunpack.c.h.b16 %v45
    %v181 = vunpack.c.l.b16 %v46
    %v182 = vunpack.c.h.b16 %v46
    %v183 = vunpack.c.l.b16 %v47
    %v184 = vunpack.c.h.b16 %v47
    %v185 = vunpack.c.l.b16 %v48
    %v186 = vunpack.c.h.b16 %v48
    %v187 = vunpack.c.l.b16 %v49
    %v188 = vunpack.c.h.b16 %v49
    %v189 = vunpack.c.l.b16 %v50
    %v190 = vunpack.c.h.b16 %v50
    %v191 = vunpack.c.l.b16 %v51
    %v192 = vunpack.c.h.b16 %v51
    %v193 = vunpack.c.l.b16 %v52
    %v194 = vunpack.c.h.b16 %v52
    %v195 = vunpack.c.l.b16 %v53
    %v196 = vunpack.c.h.b16 %v53
    %v197 = vunpack.c.l.b16 %v54
    %v198 = vunpack.c.h.b16 %v54
    %v199 = vunpack.c.l.b16 %v55
    %v200 = vunpack.c.h.b16 %v55
    %v201 = vunpack.c.l.b16 %v56
    %v202 = vunpack.c.h.b16 %v56
    %v203 = vunpack.c.l.b16 %v57
    %v204 = vunpack.c.h.b16 %v57
    %v205 = vunpack.c.l.b16 %v58
    %v206 = vunpack.c.h.b16 %v58
    %v207 = vunpack.c.l.b16 %v59
    %v208 = vunpack.c.h.b16 %v59
    %v209 = vunpack.c.l.b16 %v60
    %v210 = vunpack.c.h.b16 %v60
    %v211 = vunpack.c.l.b16 %v61
    %v212 = vunpack.c.h.b16 %v61
    %v213 = vunpack.c.l.b16 %v62
    %v214 = vunpack.c.h.b16 %v62
    %v215 = vunpack.c.l.b16 %v63
    %v216 = vunpack.c.h.b16 %v63
    %v217 = vunpack.c.l.b16 %v64
    %v218 = vunpack.c.h.b16 %v64
    %v219 = vunpack.c.l.b16 %v65
    %v220 = vunpack.c.h.b16 %v65
    %v221 = vunpack.c.l.b16 %v66
    %v222 = vunpack.c.h.b16 %v66
    %v223 = vunpack.c.l.b16 %v67
    %v224 = vunpack.c.h.b16 %v67
    %v225 = vunpack.c.l.b16 %v68
    %v226 = vunpack.c.h.b16 %v68
    %v227 = vunpack.c.l.b16 %v69
    %v228 = vunpack.c.h.b16 %v69
    %v229 = vunpack.c.l.b16 %v70
    %v230 = vunpack.c.h.b16 %v70
    %v231 = vunpack.c.l.b16 %v71
    %v232 = vunpack.c.h.b16 %v71
    %v233 = vunpack.c.l.b16 %v72
    %v234 = vunpack.c.h.b16 %v72
    %v235 = vunpack.c.l.b16 %v73
    %v236 = vunpack.c.h.b16 %v73
    %v237 = vunpack.c.l.b16 %v74
    %v238 = vunpack.c.h.b16 %v74
    %v239 = vunpack.c.l.b16 %v75
    %v240 = vunpack.c.h.b16 %v75
    %v241 = vunpack.c.l.b16 %v76
    %v242 = vunpack.c.h.b16 %v76
    %v243 = vpack.c.b16 %v183, %v179
    %v244 = vpack.c.b16 %v184, %v180
    %v245 = vpack.c.b16 %v185, %v181
    %v246 = vpack.c.b16 %v186, %v182
    %v247 = vpack.c.b16 %v191, %v187
    %v248 = vpack.c.b16 %v192, %v188
    %v249 = vpack.c.b16 %v193, %v189
    %v250 = vpack.c.b16 %v194, %v190
    %v251 = vpack.c.b16 %v199, %v195
    %v252 = vpack.c.b16 %v200, %v196
    %v253 = vpack.c.b16 %v201, %v197
    %v254 = vpack.c.b16 %v202, %v198
    %v255 = vpack.c.b16 %v207, %v203
    %v256 = vpack.c.b16 %v208, %v204
    %v257 = vpack.c.b16 %v209, %v205
    %v258 = vpack.c.b16 %v210, %v206
    %v259 = vpack.c.b16 %v215, %v211
    %v260 = vpack.c.b16 %v216, %v212
    %v261 = vpack.c.b16 %v217, %v213
    %v262 = vpack.c.b16 %v218, %v214
    %v263 = vpack.c.b16 %v223, %v219
    %v264 = vpack.c.b16 %v224, %v220
    %v265 = vpack.c.b16 %v225, %v221
    %v266 = vpack.c.b16 %v226, %v222
    %v267 = vpack.c.b16 %v231, %v227
    %v268 = vpack.c.b16 %v232, %v228
    %v269 = vpack.c.b16 %v233, %v229
    %v270 = vpack.c.b16 %v234, %v230
    %v271 = vpack.c.b16 %v239, %v235
    %v272 = vpack.c.b16 %v240, %v236
    %v273 = vpack.c.b16 %v241, %v237
    %v274 = vpack.c.b16 %v242, %v238
    %307 = vmatprep.subr.bf16.mxu0 %v244
    %308 = vmatpush1.bf16.msra.mxu0 %v243
    %309 = vmatprep.subr.bf16.mxu0 %v248
    %310 = vmatpush1.bf16.msra.mxu0 %v247
    %311 = vmatprep.subr.bf16.mxu0 %v252
    %312 = vmatpush1.bf16.msra.mxu0 %v251
    %313 = vmatprep.subr.bf16.mxu0 %v256
    %314 = vmatpush1.bf16.msra.mxu0 %v255
    %315 = vmatprep.subr.bf16.mxu0 %v260
    %316 = vmatpush1.bf16.msra.mxu0 %v259
    %317 = vmatprep.subr.bf16.mxu0 %v264
    %318 = vmatpush1.bf16.msra.mxu0 %v263
    %319 = vmatprep.subr.bf16.mxu0 %v268
    %320 = vmatpush1.bf16.msra.mxu0 %v267
    %321 = vmatprep.subr.bf16.mxu0 %v272
    %322 = vmatpush1.bf16.msra.mxu0 %v271
    %323 = vmatprep.subr.bf16.mxu0 0
    %324 = vmatpush1.bf16.msra.mxu0 0
    %325 = vmatprep.subr.bf16.mxu0 0
    %326 = vmatpush1.bf16.msra.mxu0 0
    %327 = vmatprep.subr.bf16.mxu0 0
    %328 = vmatpush1.bf16.msra.mxu0 0
    %329 = vmatprep.subr.bf16.mxu0 0
    %330 = vmatpush1.bf16.msra.mxu0 0
    %331 = vmatprep.subr.bf16.mxu0 0
    %332 = vmatpush1.bf16.msra.mxu0 0
    %333 = vmatprep.subr.bf16.mxu0 0
    %334 = vmatpush1.bf16.msra.mxu0 0
    %335 = vmatprep.subr.bf16.mxu0 0
    %336 = vmatpush1.bf16.msra.mxu0 0
    %337 = vmatprep.subr.bf16.mxu0 0
    %338 = vmatpush1.bf16.msra.mxu0 0
    %339 = vmatprep.mubr.bf16.mxu0 0
    %340 = vmatmul.mubr.bf16.gmra.mrb[0].mxu0 %v131
    %v341 = vpop.f32.mrb[0].mxu0
    %v342 = vadd.f32 %v82, %v341
    %v343 = vpop.f32.mrb[0].mxu0
    %v344 = vadd.f32 %v86, %v343
    %v345 = vpop.f32.mrb[0].mxu0
    %v346 = vadd.f32 %v82, %v345
    %v347 = vpop.f32.mrb[0].mxu0
    %v348 = vadd.f32 %v86, %v347
    %349 = vmatprep.mubr.bf16.mxu0 0
    %350 = vmatmul.mubr.bf16.gmra.mrb[0].mxu0 %v132
    %v351 = vpop.f32.mrb[0].mxu0
    %v352 = vadd.f32 %v82, %v351
    %v353 = vpop.f32.mrb[0].mxu0
    %v354 = vadd.f32 %v86, %v353
    %v355 = vpop.f32.mrb[0].mxu0
    %v356 = vadd.f32 %v82, %v355
    %v357 = vpop.f32.mrb[0].mxu0
    %v358 = vadd.f32 %v86, %v357
    %359 = vmatprep.mubr.bf16.mxu0 0
    %360 = vmatmul.mubr.bf16.gmra.mrb[0].mxu0 %v133
    %v361 = vpop.f32.mrb[0].mxu0
    %v362 = vadd.f32 %v82, %v361
    %v363 = vpop.f32.mrb[0].mxu0
    %v364 = vadd.f32 %v86, %v363
    %v365 = vpop.f32.mrb[0].mxu0
    %v366 = vadd.f32 %v82, %v365
    %v367 = vpop.f32.mrb[0].mxu0
    %v368 = vadd.f32 %v86, %v367
    %369 = vmatprep.mubr.bf16.mxu0 0
    %370 = vmatmul.mubr.bf16.gmra.mrb[0].mxu0 %v134
    %v371 = vpop.f32.mrb[0].mxu0
    %v372 = vadd.f32 %v82, %v371
    %v373 = vpop.f32.mrb[0].mxu0
    %v374 = vadd.f32 %v86, %v373
    %v375 = vpop.f32.mrb[0].mxu0
    %v376 = vadd.f32 %v82, %v375
    %v377 = vpop.f32.mrb[0].mxu0
    %v378 = vadd.f32 %v86, %v377
    %379 = vmatprep.mubr.bf16.mxu0 0
    %380 = vmatmul.mubr.bf16.gmra.mrb[0].mxu0 %v135
    %v381 = vpop.f32.mrb[0].mxu0
    %v382 = vadd.f32 %v82, %v381
    %v383 = vpop.f32.mrb[0].mxu0
    %v384 = vadd.f32 %v86, %v383
    %v385 = vpop.f32.mrb[0].mxu0
    %v386 = vadd.f32 %v82, %v385
    %v387 = vpop.f32.mrb[0].mxu0
    %v388 = vadd.f32 %v86, %v387
    %389 = vmatprep.mubr.bf16.mxu0 0
    %390 = vmatmul.mubr.bf16.gmra.mrb[0].mxu0 %v136
    %v391 = vpop.f32.mrb[0].mxu0
    %v392 = vadd.f32 %v82, %v391
    %v393 = vpop.f32.mrb[0].mxu0
    %v394 = vadd.f32 %v86, %v393
    %v395 = vpop.f32.mrb[0].mxu0
    %v396 = vadd.f32 %v82, %v395
    %v397 = vpop.f32.mrb[0].mxu0
    %v398 = vadd.f32 %v86, %v397
    %399 = vmatprep.mubr.bf16.mxu0 0
    %400 = vmatmul.mubr.bf16.gmra.mrb[0].mxu0 %v137
    %v401 = vpop.f32.mrb[0].mxu0
    %v402 = vadd.f32 %v82, %v401
    %v403 = vpop.f32.mrb[0].mxu0
    %v404 = vadd.f32 %v86, %v403
    %v405 = vpop.f32.mrb[0].mxu0
    %v406 = vadd.f32 %v82, %v405
    %v407 = vpop.f32.mrb[0].mxu0
    %v408 = vadd.f32 %v86, %v407
    %409 = vmatprep.mubr.bf16.mxu0 0
    %410 = vmatmul.mubr.bf16.gmra.mrb[0].mxu0 %v138
    %v411 = vpop.f32.mrb[0].mxu0
    %v412 = vadd.f32 %v82, %v411
    %v413 = vpop.f32.mrb[0].mxu0
    %v414 = vadd.f32 %v86, %v413
    %v415 = vpop.f32.mrb[0].mxu0
    %v416 = vadd.f32 %v82, %v415
    %v417 = vpop.f32.mrb[0].mxu0
    %v418 = vadd.f32 %v86, %v417
    %419 = vdwg.mxu0
    %420 = vmatprep.subr.bf16.mxu0 %v246
    %421 = vmatpush1.bf16.msra.mxu0 %v245
    %422 = vmatprep.subr.bf16.mxu0 %v250
    %423 = vmatpush1.bf16.msra.mxu0 %v249
    %424 = vmatprep.subr.bf16.mxu0 %v254
    %425 = vmatpush1.bf16.msra.mxu0 %v253
    %426 = vmatprep.subr.bf16.mxu0 %v258
    %427 = vmatpush1.bf16.msra.mxu0 %v257
    %428 = vmatprep.subr.bf16.mxu0 %v262
    %429 = vmatpush1.bf16.msra.mxu0 %v261
    %430 = vmatprep.subr.bf16.mxu0 %v266
    %431 = vmatpush1.bf16.msra.mxu0 %v265
    %432 = vmatprep.subr.bf16.mxu0 %v270
    %433 = vmatpush1.bf16.msra.mxu0 %v269
    %434 = vmatprep.subr.bf16.mxu0 %v274
    %435 = vmatpush1.bf16.msra.mxu0 %v273
    %436 = vmatprep.subr.bf16.mxu0 0
    %437 = vmatpush1.bf16.msra.mxu0 0
    %438 = vmatprep.subr.bf16.mxu0 0
    %439 = vmatpush1.bf16.msra.mxu0 0
    %440 = vmatprep.subr.bf16.mxu0 0
    %441 = vmatpush1.bf16.msra.mxu0 0
    %442 = vmatprep.subr.bf16.mxu0 0
    %443 = vmatpush1.bf16.msra.mxu0 0
    %444 = vmatprep.subr.bf16.mxu0 0
    %445 = vmatpush1.bf16.msra.mxu0 0
    %446 = vmatprep.subr.bf16.mxu0 0
    %447 = vmatpush1.bf16.msra.mxu0 0
    %448 = vmatprep.subr.bf16.mxu0 0
    %449 = vmatpush1.bf16.msra.mxu0 0
    %450 = vmatprep.subr.bf16.mxu0 0
    %451 = vmatpush1.bf16.msra.mxu0 0
    %452 = vmatprep.mubr.bf16.mxu0 0
    %453 = vmatmul.mubr.bf16.gmra.mrb[0].mxu0 %v131
    %v454 = vpop.f32.mrb[0].mxu0
    %v455 = vadd.f32 %v90, %v454
    %v456 = vpop.f32.mrb[0].mxu0
    %v457 = vadd.f32 %v94, %v456
    %v458 = vpop.f32.mrb[0].mxu0
    %v459 = vadd.f32 %v90, %v458
    %v460 = vpop.f32.mrb[0].mxu0
    %v461 = vadd.f32 %v94, %v460
    %462 = vmatprep.mubr.bf16.mxu0 0
    %463 = vmatmul.mubr.bf16.gmra.mrb[0].mxu0 %v132
    %v464 = vpop.f32.mrb[0].mxu0
    %v465 = vadd.f32 %v90, %v464
    %v466 = vpop.f32.mrb[0].mxu0
    %v467 = vadd.f32 %v94, %v466
    %v468 = vpop.f32.mrb[0].mxu0
    %v469 = vadd.f32 %v90, %v468
    %v470 = vpop.f32.mrb[0].mxu0
    %v471 = vadd.f32 %v94, %v470
    %472 = vmatprep.mubr.bf16.mxu0 0
    %473 = vmatmul.mubr.bf16.gmra.mrb[0].mxu0 %v133
    %v474 = vpop.f32.mrb[0].mxu0
    %v475 = vadd.f32 %v90, %v474
    %v476 = vpop.f32.mrb[0].mxu0
    %v477 = vadd.f32 %v94, %v476
    %v478 = vpop.f32.mrb[0].mxu0
    %v479 = vadd.f32 %v90, %v478
    %v480 = vpop.f32.mrb[0].mxu0
    %v481 = vadd.f32 %v94, %v480
    %482 = vmatprep.mubr.bf16.mxu0 0
    %483 = vmatmul.mubr.bf16.gmra.mrb[0].mxu0 %v134
    %v484 = vpop.f32.mrb[0].mxu0
    %v485 = vadd.f32 %v90, %v484
    %v486 = vpop.f32.mrb[0].mxu0
    %v487 = vadd.f32 %v94, %v486
    %v488 = vpop.f32.mrb[0].mxu0
    %v489 = vadd.f32 %v90, %v488
    %v490 = vpop.f32.mrb[0].mxu0
    %v491 = vadd.f32 %v94, %v490
    %492 = vmatprep.mubr.bf16.mxu0 0
    %493 = vmatmul.mubr.bf16.gmra.mrb[0].mxu0 %v135
    %v494 = vpop.f32.mrb[0].mxu0
    %v495 = vadd.f32 %v90, %v494
    %v496 = vpop.f32.mrb[0].mxu0
    %v497 = vadd.f32 %v94, %v496
    %v498 = vpop.f32.mrb[0].mxu0
    %v499 = vadd.f32 %v90, %v498
    %v500 = vpop.f32.mrb[0].mxu0
    %v501 = vadd.f32 %v94, %v500
    %502 = vmatprep.mubr.bf16.mxu0 0
    %503 = vmatmul.mubr.bf16.gmra.mrb[0].mxu0 %v136
    %v504 = vpop.f32.mrb[0].mxu0
    %v505 = vadd.f32 %v90, %v504
    %v506 = vpop.f32.mrb[0].mxu0
    %v507 = vadd.f32 %v94, %v506
    %v508 = vpop.f32.mrb[0].mxu0
    %v509 = vadd.f32 %v90, %v508
    %v510 = vpop.f32.mrb[0].mxu0
    %v511 = vadd.f32 %v94, %v510
    %512 = vmatprep.mubr.bf16.mxu0 0
    %513 = vmatmul.mubr.bf16.gmra.mrb[0].mxu0 %v137
    %v514 = vpop.f32.mrb[0].mxu0
    %v515 = vadd.f32 %v90, %v514
    %v516 = vpop.f32.mrb[0].mxu0
    %v517 = vadd.f32 %v94, %v516
    %v518 = vpop.f32.mrb[0].mxu0
    %v519 = vadd.f32 %v90, %v518
    %v520 = vpop.f32.mrb[0].mxu0
    %v521 = vadd.f32 %v94, %v520
    %522 = vmatprep.mubr.bf16.mxu0 0
    %523 = vmatmul.mubr.bf16.gmra.mrb[0].mxu0 %v138
    %v524 = vpop.f32.mrb[0].mxu0
    %v525 = vadd.f32 %v90, %v524
    %v526 = vpop.f32.mrb[0].mxu0
    %v527 = vadd.f32 %v94, %v526
    %v528 = vpop.f32.mrb[0].mxu0
    %v529 = vadd.f32 %v90, %v528
    %v530 = vpop.f32.mrb[0].mxu0
    %v531 = vadd.f32 %v94, %v530
    %532 = vdwg.mxu0
    %533 = vst [vmem:[%s3] sm:$0xff] %v342
    %534 = vst [vmem:[%s3 + $0x8] sm:$0xff] %v344
    %535 = vst [vmem:[%s3 + $0x10] sm:$0xff] %v455
    %536 = vst [vmem:[%s3 + $0x18] sm:$0xff] %v457
    %537 = vst [vmem:[%s3 + $0x20] sm:$0xff] %v346
    %538 = vst [vmem:[%s3 + $0x28] sm:$0xff] %v348
    %539 = vst [vmem:[%s3 + $0x30] sm:$0xff] %v459
    %540 = vst [vmem:[%s3 + $0x38] sm:$0xff] %v461
    %541 = vst [vmem:[%s3 + $0x40] sm:$0xff] %v352
    %542 = vst [vmem:[%s3 + $0x48] sm:$0xff] %v354
    %543 = vst [vmem:[%s3 + $0x50] sm:$0xff] %v465
    %544 = vst [vmem:[%s3 + $0x58] sm:$0xff] %v467
    %545 = vst [vmem:[%s3 + $0x60] sm:$0xff] %v356
    %546 = vst [vmem:[%s3 + $0x68] sm:$0xff] %v358
    %547 = vst [vmem:[%s3 + $0x70] sm:$0xff] %v469
    %548 = vst [vmem:[%s3 + $0x78] sm:$0xff] %v471
    %549 = vst [vmem:[%s3 + $0x80] sm:$0xff] %v362
    %550 = vst [vmem:[%s3 + $0x88] sm:$0xff] %v364
    %551 = vst [vmem:[%s3 + $0x90] sm:$0xff] %v475
    %552 = vst [vmem:[%s3 + $0x98] sm:$0xff] %v477
    %553 = vst [vmem:[%s3 + $0xa0] sm:$0xff] %v366
    %554 = vst [vmem:[%s3 + $0xa8] sm:$0xff] %v368
    %555 = vst [vmem:[%s3 + $0xb0] sm:$0xff] %v479
    %556 = vst [vmem:[%s3 + $0xb8] sm:$0xff] %v481
    %557 = vst [vmem:[%s3 + $0xc0] sm:$0xff] %v372
    %558 = vst [vmem:[%s3 + $0xc8] sm:$0xff] %v374
    %559 = vst [vmem:[%s3 + $0xd0] sm:$0xff] %v485
    %560 = vst [vmem:[%s3 + $0xd8] sm:$0xff] %v487
    %561 = vst [vmem:[%s3 + $0xe0] sm:$0xff] %v376
    %562 = vst [vmem:[%s3 + $0xe8] sm:$0xff] %v378
    %563 = vst [vmem:[%s3 + $0xf0] sm:$0xff] %v489
    %564 = vst [vmem:[%s3 + $0xf8] sm:$0xff] %v491
    %565 = vst [vmem:[%s3 + $0x100] sm:$0xff] %v382
    %566 = vst [vmem:[%s3 + $0x108] sm:$0xff] %v384
    %567 = vst [vmem:[%s3 + $0x110] sm:$0xff] %v495
    %568 = vst [vmem:[%s3 + $0x118] sm:$0xff] %v497
    %569 = vst [vmem:[%s3 + $0x120] sm:$0xff] %v386
    %570 = vst [vmem:[%s3 + $0x128] sm:$0xff] %v388
    %571 = vst [vmem:[%s3 + $0x130] sm:$0xff] %v499
    %572 = vst [vmem:[%s3 + $0x138] sm:$0xff] %v501
    %573 = vst [vmem:[%s3 + $0x140] sm:$0xff] %v392
    %574 = vst [vmem:[%s3 + $0x148] sm:$0xff] %v394
    %575 = vst [vmem:[%s3 + $0x150] sm:$0xff] %v505
    %576 = vst [vmem:[%s3 + $0x158] sm:$0xff] %v507
    %577 = vst [vmem:[%s3 + $0x160] sm:$0xff] %v396
    %578 = vst [vmem:[%s3 + $0x168] sm:$0xff] %v398
    %579 = vst [vmem:[%s3 + $0x170] sm:$0xff] %v509
    %580 = vst [vmem:[%s3 + $0x178] sm:$0xff] %v511
    %581 = vst [vmem:[%s3 + $0x180] sm:$0xff] %v402
    %582 = vst [vmem:[%s3 + $0x188] sm:$0xff] %v404
    %583 = vst [vmem:[%s3 + $0x190] sm:$0xff] %v515
    %584 = vst [vmem:[%s3 + $0x198] sm:$0xff] %v517
    %585 = vst [vmem:[%s3 + $0x1a0] sm:$0xff] %v406
    %586 = vst [vmem:[%s3 + $0x1a8] sm:$0xff] %v408
    %587 = vst [vmem:[%s3 + $0x1b0] sm:$0xff] %v519
    %588 = vst [vmem:[%s3 + $0x1b8] sm:$0xff] %v521
    %589 = vst [vmem:[%s3 + $0x1c0] sm:$0xff] %v412
    %590 = vst [vmem:[%s3 + $0x1c8] sm:$0xff] %v414
    %591 = vst [vmem:[%s3 + $0x1d0] sm:$0xff] %v525
    %592 = vst [vmem:[%s3 + $0x1d8] sm:$0xff] %v527
    %593 = vst [vmem:[%s3 + $0x1e0] sm:$0xff] %v416
    %594 = vst [vmem:[%s3 + $0x1e8] sm:$0xff] %v418
    %595 = vst [vmem:[%s3 + $0x1f0] sm:$0xff] %v529
    %596 = vst [vmem:[%s3 + $0x1f8] sm:$0xff] %v531
    // Predicated region
    $region18: #{text_generation_forward.3} parent=1 // pred_check
      _
    $region19: #{text_generation_forward.3} parent=1 // pred_check_branch
      %598 = sbr.rel (0) target = $region21
    $region20: #{text_generation_forward.3} parent=1 // pred_region
      _
    $region21: #{text_generation_forward.3} parent=1 // pred_fallthru
      _
    // Predicated region
    $region22: #{text_generation_forward.3} parent=1 // pred_check
      _
    $region23: #{text_generation_forward.3} parent=1 // pred_check_branch
      %600 = sbr.rel (0) target = $region25
    $region24: #{text_generation_forward.3} parent=1 // pred_region
      _
    $region25: #{text_generation_forward.3} parent=1 // pred_fallthru
      _
    %601 = vsyncpa [#allocation3], 1

// kernel: text_generation_forward.4
$region0: #{text_generation_forward.4}
  #allocation0 [shape = 'u32[]', space=smem, size = 0x4, offset = 0x4, fixed_abs, tag = 'smem constant byte address 0x4 - core index']
  #allocation1 [shape = 'u32[144,128]{1,0:T(1,128)}', space=vmem, size = 0x12000, scoped, tag = 'internal scratch']
  #allocation2 [shape = 'f32[8,128]{1,0:T(8,128)}', space=vmem, size = 0x1000, scoped, tag = 'scratch operand']
  #allocation3 [shape = 'f32[8,128]{1,0:T(8,128)}', space=vmem, size = 0x1000, scoped, tag = 'scratch operand']
  #allocation4 [shape = 'f32[8,128]{1,0:T(8,128)}', space=vmem, size = 0x1000, scoped, tag = 'scratch operand']
  #allocation5 [shape = 'f32[8,128]{1,0:T(8,128)}', space=vmem, size = 0x1000, scoped, tag = 'scratch operand']
  %s0 = inlined_call_operand.vmem [shape: f32[16,8,512], index: 0, kind: input, shape index: {}]
  %s1 = inlined_call_operand.vmem [shape: f32[2,8,128], index: 1, kind: input, shape index: {}]
  %s2 = inlined_call_operand.vmem [shape: f32[2,8,128], index: 2, kind: input, shape index: {}]
  %s3 = inlined_call_operand.vmem [shape: bf16[128,512], index: 3, kind: input, shape index: {}]
  %s4 = inlined_call_operand.vmem [shape: bf16[128,512], index: 4, kind: input, shape index: {}]
  %s5 = inlined_call_operand.vmem [shape: bf16[128,512], index: 5, kind: input, shape index: {}]
  %s6 = inlined_call_operand.vmem [shape: f32[1,512], index: 6, kind: input, shape index: {}]
  %s7 = inlined_call_operand.vmem [shape: bf16[16,8,128], index: 7, kind: output, shape index: {0}]
  %s8 = inlined_call_operand.hbm [shape: f32[2,8,128], index: 8, kind: output, shape index: {1}]
  %s9 = inlined_call_operand.hbm [shape: f32[2,8,128], index: 9, kind: output, shape index: {2}]
  %10 = xla_tuple %s7, %s8, %s9
  %s11 = sld [smem:[#allocation0]]
  $region85: #{text_generation_forward.4} parent=0
    _
  %s13 = ssub.s32 1, %s11
  %s14 = scalar_select 0, %s13, %s11
  $region1: #{text_generation_forward.4} parent=0
    #allocation6 [shape = 'u8[8192]{0}', space=vmem, size = 0x2000, scoped, tag = 'output window, operand 1, single buffered']
    #allocation7 [shape = 's32[2]{0}', space=sflag, size = 0x8, scoped, tag = 'scoped memory for text_generation_forward.4']
    #allocation8 [shape = 'u8[8192]{0}', space=vmem, size = 0x2000, scoped, tag = 'output window, operand 2, single buffered']
    #allocation9 [shape = 's32[1]{0}', space=sflag, size = 0x4, scoped, tag = 'scoped memory for text_generation_forward.4']
    %15 = vsyncpa [#allocation7], 0
    %16 = vsyncpa [#allocation9], 0
    loop: start=0, step=1, limit=4
    $region2: #{text_generation_forward.4} parent=1 // loop_pre_header
      _
    $region3: #{text_generation_forward.4} parent=1 // loop_header
      %s18 = sphi 0, %s22
      %p19 = scmp.ge.s32.totalorder %s18, 4
      %s28 = sphi 0, %s30
      %s31 = sphi 0, %s28
      %s32 = sphi 0, %s31
      %s48 = sphi 0, %s32
      %s52 = sphi 0, %s52
      %s54 = sphi 0, %s52
      %s55 = sphi 0, %s54
      %s69 = sphi 0, %s55
      %s73 = sphi 0, %s73
      %s75 = sphi 0, %s73
      %s76 = sphi 0, %s75
      %s90 = sphi 0, %s76
      %s94 = sphi 0, %s94
      %s96 = sphi 0, %s94
      %s97 = sphi 0, %s96
      %s111 = sphi 0, %s97
      %s115 = sphi 0, %s115
      %s117 = sphi 0, %s115
      %s118 = sphi 0, %s117
      %s132 = sphi 0, %s118
      %s136 = sphi 0, %s136
      %s138 = sphi 0, %s136
      %s139 = sphi 0, %s138
      %s153 = sphi 0, %s139
      %s157 = sphi 0, %s157
      %s159 = sphi 0, %s157
      %s160 = sphi 0, %s159
      %s174 = sphi 0, %s160
      %s180 = sphi 0, %s182
      %s183 = sphi 0, %s180
      %s184 = sphi 0, %s183
      %s200 = sphi 0, %s184
      %s204 = sphi 0, %s204
      %s206 = sphi 0, %s204
      %s207 = sphi 0, %s206
      %s221 = sphi 0, %s207
      %s225 = sphi 0, %s225
      %s227 = sphi 0, %s225
      %s228 = sphi 0, %s227
      %s242 = sphi 0, %s228
    $region4: #{text_generation_forward.4} parent=1 // loop_header_branch
      %21 = sbr.rel (%p19) target = $region8
    $region5: #{text_generation_forward.4} parent=1 // loop_body
      %s23 = ssub.s32 %s18, 1
      %s24 = ssub.s32 %s18, 2
      %s25 = sadd.s32 %s18, 1
      %s26 = ssub.s32 %s18, %s25
      %p27 = scmp.eq.s32.totalorder %s26, 0
      %s29 = sadd.s32 %s28, 1
      %s30 = scalar_select %p27, %s28, %s29
      %p33 = pneg %p27
      %p34 = scmp.eq.s32.totalorder %s18, 1
      %p35 = por %p33, %p34
      %p36 = scmp.ne.s32.totalorder %s28, %s31
      %p37 = scmp.eq.s32.totalorder %s18, 0
      %p38 = por %p36, %p37
      %p39 = scmp.ne.s32.totalorder %s28, %s31
      %p40 = scmp.eq.s32.totalorder %s23, 1
      %p41 = por %p39, %p40
      %p42 = scmp.ne.s32.totalorder %s31, %s32
      %p43 = scmp.eq.s32.totalorder %s23, 0
      %p44 = por %p42, %p43
      %p45 = scmp.ne.s32.totalorder %s31, %s32
      %p46 = scmp.eq.s32.totalorder %s24, 1
      %p47 = por %p45, %p46
      %p49 = scmp.ne.s32.totalorder %s32, %s48
      %p50 = scmp.eq.s32.totalorder %s24, 0
      %p51 = por %p49, %p50
      %s53 = sadd.s32 %s52, 1
      %p56 = scmp.eq.s32.totalorder %s18, 1
      %p57 = scmp.ne.s32.totalorder %s52, %s54
      %p58 = scmp.eq.s32.totalorder %s18, 0
      %p59 = por %p57, %p58
      %p60 = scmp.ne.s32.totalorder %s52, %s54
      %p61 = scmp.eq.s32.totalorder %s23, 1
      %p62 = por %p60, %p61
      %p63 = scmp.ne.s32.totalorder %s54, %s55
      %p64 = scmp.eq.s32.totalorder %s23, 0
      %p65 = por %p63, %p64
      %p66 = scmp.ne.s32.totalorder %s54, %s55
      %p67 = scmp.eq.s32.totalorder %s24, 1
      %p68 = por %p66, %p67
      %p70 = scmp.ne.s32.totalorder %s55, %s69
      %p71 = scmp.eq.s32.totalorder %s24, 0
      %p72 = por %p70, %p71
      %s74 = sadd.s32 %s73, 1
      %p77 = scmp.eq.s32.totalorder %s18, 1
      %p78 = scmp.ne.s32.totalorder %s73, %s75
      %p79 = scmp.eq.s32.totalorder %s18, 0
      %p80 = por %p78, %p79
      %p81 = scmp.ne.s32.totalorder %s73, %s75
      %p82 = scmp.eq.s32.totalorder %s23, 1
      %p83 = por %p81, %p82
      %p84 = scmp.ne.s32.totalorder %s75, %s76
      %p85 = scmp.eq.s32.totalorder %s23, 0
      %p86 = por %p84, %p85
      %p87 = scmp.ne.s32.totalorder %s75, %s76
      %p88 = scmp.eq.s32.totalorder %s24, 1
      %p89 = por %p87, %p88
      %p91 = scmp.ne.s32.totalorder %s76, %s90
      %p92 = scmp.eq.s32.totalorder %s24, 0
      %p93 = por %p91, %p92
      %s95 = sadd.s32 %s94, 1
      %p98 = scmp.eq.s32.totalorder %s18, 1
      %p99 = scmp.ne.s32.totalorder %s94, %s96
      %p100 = scmp.eq.s32.totalorder %s18, 0
      %p101 = por %p99, %p100
      %p102 = scmp.ne.s32.totalorder %s94, %s96
      %p103 = scmp.eq.s32.totalorder %s23, 1
      %p104 = por %p102, %p103
      %p105 = scmp.ne.s32.totalorder %s96, %s97
      %p106 = scmp.eq.s32.totalorder %s23, 0
      %p107 = por %p105, %p106
      %p108 = scmp.ne.s32.totalorder %s96, %s97
      %p109 = scmp.eq.s32.totalorder %s24, 1
      %p110 = por %p108, %p109
      %p112 = scmp.ne.s32.totalorder %s97, %s111
      %p113 = scmp.eq.s32.totalorder %s24, 0
      %p114 = por %p112, %p113
      %s116 = sadd.s32 %s115, 1
      %p119 = scmp.eq.s32.totalorder %s18, 1
      %p120 = scmp.ne.s32.totalorder %s115, %s117
      %p121 = scmp.eq.s32.totalorder %s18, 0
      %p122 = por %p120, %p121
      %p123 = scmp.ne.s32.totalorder %s115, %s117
      %p124 = scmp.eq.s32.totalorder %s23, 1
      %p125 = por %p123, %p124
      %p126 = scmp.ne.s32.totalorder %s117, %s118
      %p127 = scmp.eq.s32.totalorder %s23, 0
      %p128 = por %p126, %p127
      %p129 = scmp.ne.s32.totalorder %s117, %s118
      %p130 = scmp.eq.s32.totalorder %s24, 1
      %p131 = por %p129, %p130
      %p133 = scmp.ne.s32.totalorder %s118, %s132
      %p134 = scmp.eq.s32.totalorder %s24, 0
      %p135 = por %p133, %p134
      %s137 = sadd.s32 %s136, 1
      %p140 = scmp.eq.s32.totalorder %s18, 1
      %p141 = scmp.ne.s32.totalorder %s136, %s138
      %p142 = scmp.eq.s32.totalorder %s18, 0
      %p143 = por %p141, %p142
      %p144 = scmp.ne.s32.totalorder %s136, %s138
      %p145 = scmp.eq.s32.totalorder %s23, 1
      %p146 = por %p144, %p145
      %p147 = scmp.ne.s32.totalorder %s138, %s139
      %p148 = scmp.eq.s32.totalorder %s23, 0
      %p149 = por %p147, %p148
      %p150 = scmp.ne.s32.totalorder %s138, %s139
      %p151 = scmp.eq.s32.totalorder %s24, 1
      %p152 = por %p150, %p151
      %p154 = scmp.ne.s32.totalorder %s139, %s153
      %p155 = scmp.eq.s32.totalorder %s24, 0
      %p156 = por %p154, %p155
      %s158 = sadd.s32 %s157, 1
      %p161 = scmp.eq.s32.totalorder %s18, 1
      %p162 = scmp.ne.s32.totalorder %s157, %s159
      %p163 = scmp.eq.s32.totalorder %s18, 0
      %p164 = por %p162, %p163
      %p165 = scmp.ne.s32.totalorder %s157, %s159
      %p166 = scmp.eq.s32.totalorder %s23, 1
      %p167 = por %p165, %p166
      %p168 = scmp.ne.s32.totalorder %s159, %s160
      %p169 = scmp.eq.s32.totalorder %s23, 0
      %p170 = por %p168, %p169
      %p171 = scmp.ne.s32.totalorder %s159, %s160
      %p172 = scmp.eq.s32.totalorder %s24, 1
      %p173 = por %p171, %p172
      %p175 = scmp.ne.s32.totalorder %s160, %s174
      %p176 = scmp.eq.s32.totalorder %s24, 0
      %p177 = por %p175, %p176
      %s178 = ssub.s32 %s18, %s25
      %p179 = scmp.eq.s32.totalorder %s178, 0
      %s181 = sadd.s32 %s180, 1
      %s182 = scalar_select %p179, %s180, %s181
      %p185 = pneg %p179
      %p186 = scmp.eq.s32.totalorder %s18, 1
      %p187 = por %p185, %p186
      %p188 = scmp.ne.s32.totalorder %s180, %s183
      %p189 = scmp.eq.s32.totalorder %s18, 0
      %p190 = por %p188, %p189
      %p191 = scmp.ne.s32.totalorder %s180, %s183
      %p192 = scmp.eq.s32.totalorder %s23, 1
      %p193 = por %p191, %p192
      %p194 = scmp.ne.s32.totalorder %s183, %s184
      %p195 = scmp.eq.s32.totalorder %s23, 0
      %p196 = por %p194, %p195
      %p197 = scmp.ne.s32.totalorder %s183, %s184
      %p198 = scmp.eq.s32.totalorder %s24, 1
      %p199 = por %p197, %p198
      %p201 = scmp.ne.s32.totalorder %s184, %s200
      %p202 = scmp.eq.s32.totalorder %s24, 0
      %p203 = por %p201, %p202
      %s205 = sadd.s32 %s204, 1
      %p208 = scmp.eq.s32.totalorder %s18, 1
      %p209 = scmp.ne.s32.totalorder %s204, %s206
      %p210 = scmp.eq.s32.totalorder %s18, 0
      %p211 = por %p209, %p210
      %p212 = scmp.ne.s32.totalorder %s204, %s206
      %p213 = scmp.eq.s32.totalorder %s23, 1
      %p214 = por %p212, %p213
      %p215 = scmp.ne.s32.totalorder %s206, %s207
      %p216 = scmp.eq.s32.totalorder %s23, 0
      %p217 = por %p215, %p216
      %p218 = scmp.ne.s32.totalorder %s206, %s207
      %p219 = scmp.eq.s32.totalorder %s24, 1
      %p220 = por %p218, %p219
      %p222 = scmp.ne.s32.totalorder %s207, %s221
      %p223 = scmp.eq.s32.totalorder %s24, 0
      %p224 = por %p222, %p223
      %s226 = sadd.s32 %s225, 1
      %p229 = scmp.eq.s32.totalorder %s18, 1
      %p230 = scmp.ne.s32.totalorder %s225, %s227
      %p231 = scmp.eq.s32.totalorder %s18, 0
      %p232 = por %p230, %p231
      %p233 = scmp.ne.s32.totalorder %s225, %s227
      %p234 = scmp.eq.s32.totalorder %s23, 1
      %p235 = por %p233, %p234
      %p236 = scmp.ne.s32.totalorder %s227, %s228
      %p237 = scmp.eq.s32.totalorder %s23, 0
      %p238 = por %p236, %p237
      %p239 = scmp.ne.s32.totalorder %s227, %s228
      %p240 = scmp.eq.s32.totalorder %s24, 1
      %p241 = por %p239, %p240
      %p243 = scmp.ne.s32.totalorder %s228, %s242
      %p244 = scmp.eq.s32.totalorder %s24, 0
      %p245 = por %p243, %p244
      %p246 = scmp.le.s32.totalorder 1, %s18
      %p247 = scmp.lt.s32.totalorder %s18, 3
      %p248 = pnand %p246, %p247
      %p249 = pneg %p248
      // Predicated region
      $region9: #{text_generation_forward.4} parent=5 // pred_check
        _
      $region10: #{text_generation_forward.4} parent=5 // pred_check_branch
        %251 = sbr.rel (%p248) target = $region12
      $region11: #{text_generation_forward.4} parent=5 // pred_region
        %s252 = ssub.s32 %s18, 1
        // Predicated region
        $region13: #{text_generation_forward.4} parent=11 // pred_check
          %p253 = pneg %p65
        $region14: #{text_generation_forward.4} parent=11 // pred_check_branch
          %255 = sbr.rel (%p253) target = $region16
        $region15: #{text_generation_forward.4} parent=11 // pred_region
          _
        $region16: #{text_generation_forward.4} parent=11 // pred_fallthru
          _
        // Predicated region
        $region17: #{text_generation_forward.4} parent=11 // pred_check
          %p256 = pneg %p86
        $region18: #{text_generation_forward.4} parent=11 // pred_check_branch
          %258 = sbr.rel (%p256) target = $region20
        $region19: #{text_generation_forward.4} parent=11 // pred_region
          _
        $region20: #{text_generation_forward.4} parent=11 // pred_fallthru
          _
        // Predicated region
        $region21: #{text_generation_forward.4} parent=11 // pred_check
          %p259 = pneg %p107
        $region22: #{text_generation_forward.4} parent=11 // pred_check_branch
          %261 = sbr.rel (%p259) target = $region24
        $region23: #{text_generation_forward.4} parent=11 // pred_region
          _
        $region24: #{text_generation_forward.4} parent=11 // pred_fallthru
          _
        // Predicated region
        $region25: #{text_generation_forward.4} parent=11 // pred_check
          %p262 = pneg %p128
        $region26: #{text_generation_forward.4} parent=11 // pred_check_branch
          %264 = sbr.rel (%p262) target = $region28
        $region27: #{text_generation_forward.4} parent=11 // pred_region
          _
        $region28: #{text_generation_forward.4} parent=11 // pred_fallthru
          _
        // Predicated region
        $region29: #{text_generation_forward.4} parent=11 // pred_check
          %p265 = pneg %p149
        $region30: #{text_generation_forward.4} parent=11 // pred_check_branch
          %267 = sbr.rel (%p265) target = $region32
        $region31: #{text_generation_forward.4} parent=11 // pred_region
          _
        $region32: #{text_generation_forward.4} parent=11 // pred_fallthru
          _
        // Predicated region
        $region33: #{text_generation_forward.4} parent=11 // pred_check
          %p268 = pneg %p170
        $region34: #{text_generation_forward.4} parent=11 // pred_check_branch
          %270 = sbr.rel (%p268) target = $region36
        $region35: #{text_generation_forward.4} parent=11 // pred_region
          _
        $region36: #{text_generation_forward.4} parent=11 // pred_fallthru
          _
      $region12: #{text_generation_forward.4} parent=5 // pred_fallthru
        _
      %p271 = scmp.lt.s32.totalorder %s18, 2
      // Predicated region
      $region37: #{text_generation_forward.4} parent=5 // pred_check
        %p272 = pneg %p271
      $region38: #{text_generation_forward.4} parent=5 // pred_check_branch
        %274 = sbr.rel (%p272) target = $region40
      $region39: #{text_generation_forward.4} parent=5 // pred_region
        // Predicated region
        $region41: #{text_generation_forward.4} parent=39 // pred_check
          %p275 = pneg %p38
        $region42: #{text_generation_forward.4} parent=39 // pred_check_branch
          %277 = sbr.rel (%p275) target = $region44
        $region43: #{text_generation_forward.4} parent=39 // pred_region
          %s278 = smul.u32 8, %s18
          %p279 = scmp.lt.s32.totalorder %s278, 15
          %s280 = scalar_select %p279, %s278, 15
          %s281 = smul.addr %s280, 4
          %s282 = smul.addr %s281, 8
          %s283 = scalar_lea.vmem %s0, %s282
          %s284 = smul.u32 8, %s18
        $region44: #{text_generation_forward.4} parent=39 // pred_fallthru
          _
      $region40: #{text_generation_forward.4} parent=5 // pred_fallthru
        _
      %p285 = scmp.le.s32.totalorder 1, %s18
      %p286 = scmp.lt.s32.totalorder %s18, 3
      %p287 = pnand %p285, %p286
      %p288 = pneg %p287
      // Predicated region
      $region45: #{text_generation_forward.4} parent=5 // pred_check
        _
      $region46: #{text_generation_forward.4} parent=5 // pred_check_branch
        %290 = sbr.rel (%p287) target = $region48
      $region47: #{text_generation_forward.4} parent=5 // pred_region
        %s291 = ssub.s32 %s18, 1
        %s292 = smul.u32 8, %s23
        %p293 = scmp.lt.s32.totalorder %s292, 15
        %s294 = scalar_select %p293, %s292, 15
        %s295 = smul.addr %s294, 4
        %s296 = smul.addr %s295, 8
        %s297 = scalar_lea.vmem %s0, %s296
        %p298 = pneg %p44
        %p299 = pneg %p41
        %p300 = pneg %p65
        %p301 = pneg %p62
        %p302 = pneg %p86
        %p303 = pneg %p83
        %p304 = pneg %p107
        %p305 = pneg %p104
        %p306 = pneg %p128
        %p307 = pneg %p125
        %p308 = pneg %p149
        %p309 = pneg %p146
        %p310 = pneg %p170
        %p311 = pneg %p167
        %p312 = pneg %p196
        %p313 = pneg %p193
        %s314 = smul.u32 8, %s23
        %p315 = scmp.lt.s32.totalorder %s314, 15
        %s316 = scalar_select %p315, %s314, 15
        %s317 = smul.addr %s316, 4
        %s318 = scalar_lea.vmem %s7, %s317
        %p319 = pneg %p217
        %p320 = pneg %p214
        %p321 = pneg %p238
        %p322 = pneg %p235
        %s323 = smul.u32 8, %s23
        %p324 = scmp.lt.s32.totalorder %s323, 15
        %s325 = scalar_select %p324, %s323, 15
        %s326 = smul.addr %s325, 4
        %s327 = smul.addr %s326, 8
        %s328 = scalar_lea.vmem %s0, %s327
        %s329 = smul.u32 8, %s23
        %s330 = smul.u32 8, %s23
        %p331 = scmp.lt.s32.totalorder %s330, 15
        %s332 = scalar_select %p331, %s330, 15
        %s333 = smul.addr %s332, 4
        %s334 = scalar_lea.vmem %s7, %s333
        %s335 = smul.u32 8, %s23
        %p337 = scmp.eq.s32.totalorder %s23, 0
        // Predicated region
        $region49: #{text_generation_forward.4} parent=47 // pred_check
          %p338 = pneg %p337
        $region50: #{text_generation_forward.4} parent=47 // pred_check_branch
          %340 = sbr.rel (%p338) target = $region52
        $region51: #{text_generation_forward.4} parent=47 // pred_region
          %v341 = vld [vmem:[%s1] sm:$0xff]
          %342 = vst [vmem:[#allocation2] sm:$0xff] %v341
          %v343 = vld [vmem:[%s2] sm:$0xff]
          %344 = vst [vmem:[#allocation3] sm:$0xff] %v343
          %s345 = scalar_lea.vmem %s1, 8
          %v346 = vld [vmem:[%s345] sm:$0xff]
          %347 = vst [vmem:[#allocation4] sm:$0xff] %v346
          %s348 = scalar_lea.vmem %s2, 8
          %v349 = vld [vmem:[%s348] sm:$0xff]
          %350 = vst [vmem:[#allocation5] sm:$0xff] %v349
        $region52: #{text_generation_forward.4} parent=47 // pred_fallthru
          _
        %v351 = vld [vmem:[#allocation2] sm:$0xff]
        %v352 = vld [vmem:[#allocation3] sm:$0xff]
        %v353 = vld [vmem:[#allocation4] sm:$0xff]
        %v354 = vld [vmem:[#allocation5] sm:$0xff]
        %v355 = vld [vmem:[%s328] sm:$0xff]
        %v356 = vld [vmem:[%s328 + $0x8] sm:$0xff]
        %v357 = vld [vmem:[%s328 + $0x10] sm:$0xff]
        %v358 = vld [vmem:[%s328 + $0x18] sm:$0xff]
        %v359 = vpack.c.bf16 %v351, %v351
        %v360 = vld [vmem:[%s3] sm:$0xff]
        %v361 = vld [vmem:[%s3 + $0x8] sm:$0xff]
        %v362 = vld [vmem:[%s3 + $0x10] sm:$0xff]
        %v363 = vld [vmem:[%s3 + $0x18] sm:$0xff]
        %v364 = vld [vmem:[%s3 + $0x20] sm:$0xff]
        %v365 = vld [vmem:[%s3 + $0x28] sm:$0xff]
        %v366 = vld [vmem:[%s3 + $0x30] sm:$0xff]
        %v367 = vld [vmem:[%s3 + $0x38] sm:$0xff]
        %v368 = vld [vmem:[%s3 + $0x40] sm:$0xff]
        %v369 = vld [vmem:[%s3 + $0x48] sm:$0xff]
        %v370 = vld [vmem:[%s3 + $0x50] sm:$0xff]
        %v371 = vld [vmem:[%s3 + $0x58] sm:$0xff]
        %v372 = vld [vmem:[%s3 + $0x60] sm:$0xff]
        %v373 = vld [vmem:[%s3 + $0x68] sm:$0xff]
        %v374 = vld [vmem:[%s3 + $0x70] sm:$0xff]
        %v375 = vld [vmem:[%s3 + $0x78] sm:$0xff]
        %v376 = vld [vmem:[%s3 + $0x80] sm:$0xff]
        %v377 = vld [vmem:[%s3 + $0x88] sm:$0xff]
        %v378 = vld [vmem:[%s3 + $0x90] sm:$0xff]
        %v379 = vld [vmem:[%s3 + $0x98] sm:$0xff]
        %v380 = vld [vmem:[%s3 + $0xa0] sm:$0xff]
        %v381 = vld [vmem:[%s3 + $0xa8] sm:$0xff]
        %v382 = vld [vmem:[%s3 + $0xb0] sm:$0xff]
        %v383 = vld [vmem:[%s3 + $0xb8] sm:$0xff]
        %v384 = vld [vmem:[%s3 + $0xc0] sm:$0xff]
        %v385 = vld [vmem:[%s3 + $0xc8] sm:$0xff]
        %v386 = vld [vmem:[%s3 + $0xd0] sm:$0xff]
        %v387 = vld [vmem:[%s3 + $0xd8] sm:$0xff]
        %v388 = vld [vmem:[%s3 + $0xe0] sm:$0xff]
        %v389 = vld [vmem:[%s3 + $0xe8] sm:$0xff]
        %v390 = vld [vmem:[%s3 + $0xf0] sm:$0xff]
        %v391 = vld [vmem:[%s3 + $0xf8] sm:$0xff]
        %v424 = vunpack.c.l.b16 %v360
        %v425 = vunpack.c.h.b16 %v360
        %v426 = vunpack.c.l.b16 %v361
        %v427 = vunpack.c.h.b16 %v361
        %v428 = vunpack.c.l.b16 %v362
        %v429 = vunpack.c.h.b16 %v362
        %v430 = vunpack.c.l.b16 %v363
        %v431 = vunpack.c.h.b16 %v363
        %v432 = vunpack.c.l.b16 %v364
        %v433 = vunpack.c.h.b16 %v364
        %v434 = vunpack.c.l.b16 %v365
        %v435 = vunpack.c.h.b16 %v365
        %v436 = vunpack.c.l.b16 %v366
        %v437 = vunpack.c.h.b16 %v366
        %v438 = vunpack.c.l.b16 %v367
        %v439 = vunpack.c.h.b16 %v367
        %v440 = vunpack.c.l.b16 %v368
        %v441 = vunpack.c.h.b16 %v368
        %v442 = vunpack.c.l.b16 %v369
        %v443 = vunpack.c.h.b16 %v369
        %v444 = vunpack.c.l.b16 %v370
        %v445 = vunpack.c.h.b16 %v370
        %v446 = vunpack.c.l.b16 %v371
        %v447 = vunpack.c.h.b16 %v371
        %v448 = vunpack.c.l.b16 %v372
        %v449 = vunpack.c.h.b16 %v372
        %v450 = vunpack.c.l.b16 %v373
        %v451 = vunpack.c.h.b16 %v373
        %v452 = vunpack.c.l.b16 %v374
        %v453 = vunpack.c.h.b16 %v374
        %v454 = vunpack.c.l.b16 %v375
        %v455 = vunpack.c.h.b16 %v375
        %v456 = vunpack.c.l.b16 %v376
        %v457 = vunpack.c.h.b16 %v376
        %v458 = vunpack.c.l.b16 %v377
        %v459 = vunpack.c.h.b16 %v377
        %v460 = vunpack.c.l.b16 %v378
        %v461 = vunpack.c.h.b16 %v378
        %v462 = vunpack.c.l.b16 %v379
        %v463 = vunpack.c.h.b16 %v379
        %v464 = vunpack.c.l.b16 %v380
        %v465 = vunpack.c.h.b16 %v380
        %v466 = vunpack.c.l.b16 %v381
        %v467 = vunpack.c.h.b16 %v381
        %v468 = vunpack.c.l.b16 %v382
        %v469 = vunpack.c.h.b16 %v382
        %v470 = vunpack.c.l.b16 %v383
        %v471 = vunpack.c.h.b16 %v383
        %v472 = vunpack.c.l.b16 %v384
        %v473 = vunpack.c.h.b16 %v384
        %v474 = vunpack.c.l.b16 %v385
        %v475 = vunpack.c.h.b16 %v385
        %v476 = vunpack.c.l.b16 %v386
        %v477 = vunpack.c.h.b16 %v386
        %v478 = vunpack.c.l.b16 %v387
        %v479 = vunpack.c.h.b16 %v387
        %v480 = vunpack.c.l.b16 %v388
        %v481 = vunpack.c.h.b16 %v388
        %v482 = vunpack.c.l.b16 %v389
        %v483 = vunpack.c.h.b16 %v389
        %v484 = vunpack.c.l.b16 %v390
        %v485 = vunpack.c.h.b16 %v390
        %v486 = vunpack.c.l.b16 %v391
        %v487 = vunpack.c.h.b16 %v391
        %v488 = vpack.c.b16 %v428, %v424
        %v489 = vpack.c.b16 %v429, %v425
        %v490 = vpack.c.b16 %v430, %v426
        %v491 = vpack.c.b16 %v431, %v427
        %v492 = vpack.c.b16 %v436, %v432
        %v493 = vpack.c.b16 %v437, %v433
        %v494 = vpack.c.b16 %v438, %v434
        %v495 = vpack.c.b16 %v439, %v435
        %v496 = vpack.c.b16 %v444, %v440
        %v497 = vpack.c.b16 %v445, %v441
        %v498 = vpack.c.b16 %v446, %v442
        %v499 = vpack.c.b16 %v447, %v443
        %v500 = vpack.c.b16 %v452, %v448
        %v501 = vpack.c.b16 %v453, %v449
        %v502 = vpack.c.b16 %v454, %v450
        %v503 = vpack.c.b16 %v455, %v451
        %v504 = vpack.c.b16 %v460, %v456
        %v505 = vpack.c.b16 %v461, %v457
        %v506 = vpack.c.b16 %v462, %v458
        %v507 = vpack.c.b16 %v463, %v459
        %v508 = vpack.c.b16 %v468, %v464
        %v509 = vpack.c.b16 %v469, %v465
        %v510 = vpack.c.b16 %v470, %v466
        %v511 = vpack.c.b16 %v471, %v467
        %v512 = vpack.c.b16 %v476, %v472
        %v513 = vpack.c.b16 %v477, %v473
        %v514 = vpack.c.b16 %v478, %v474
        %v515 = vpack.c.b16 %v479, %v475
        %v516 = vpack.c.b16 %v484, %v480
        %v517 = vpack.c.b16 %v485, %v481
        %v518 = vpack.c.b16 %v486, %v482
        %v519 = vpack.c.b16 %v487, %v483
        %552 = vmatprep.subr.bf16.mxu0 %v489
        %553 = vmatpush1.bf16.msra.mxu0 %v488
        %554 = vmatprep.subr.bf16.mxu0 %v493
        %555 = vmatpush1.bf16.msra.mxu0 %v492
        %556 = vmatprep.subr.bf16.mxu0 %v497
        %557 = vmatpush1.bf16.msra.mxu0 %v496
        %558 = vmatprep.subr.bf16.mxu0 %v501
        %559 = vmatpush1.bf16.msra.mxu0 %v500
        %560 = vmatprep.subr.bf16.mxu0 %v505
        %561 = vmatpush1.bf16.msra.mxu0 %v504
        %562 = vmatprep.subr.bf16.mxu0 %v509
        %563 = vmatpush1.bf16.msra.mxu0 %v508
        %564 = vmatprep.subr.bf16.mxu0 %v513
        %565 = vmatpush1.bf16.msra.mxu0 %v512
        %566 = vmatprep.subr.bf16.mxu0 %v517
        %567 = vmatpush1.bf16.msra.mxu0 %v516
        %568 = vmatprep.subr.bf16.mxu0 0
        %569 = vmatpush1.bf16.msra.mxu0 0
        %570 = vmatprep.subr.bf16.mxu0 0
        %571 = vmatpush1.bf16.msra.mxu0 0
        %572 = vmatprep.subr.bf16.mxu0 0
        %573 = vmatpush1.bf16.msra.mxu0 0
        %574 = vmatprep.subr.bf16.mxu0 0
        %575 = vmatpush1.bf16.msra.mxu0 0
        %576 = vmatprep.subr.bf16.mxu0 0
        %577 = vmatpush1.bf16.msra.mxu0 0
        %578 = vmatprep.subr.bf16.mxu0 0
        %579 = vmatpush1.bf16.msra.mxu0 0
        %580 = vmatprep.subr.bf16.mxu0 0
        %581 = vmatpush1.bf16.msra.mxu0 0
        %582 = vmatprep.subr.bf16.mxu0 0
        %583 = vmatpush1.bf16.msra.mxu0 0
        %584 = vmatprep.mubr.bf16.mxu0 0
        %585 = vmatmul.mubr.bf16.gmra.mrb[0].mxu0 %v359
        %v586 = vpop.f32.mrb[0].mxu0
        %v587 = vadd.f32 0.0, %v586
        %v588 = vpop.f32.mrb[0].mxu0
        %v589 = vadd.f32 0.0, %v588
        %v590 = vpop.f32.mrb[0].mxu0
        %v591 = vpop.f32.mrb[0].mxu0
        %592 = vdwg.mxu0
        %593 = vmatprep.subr.bf16.mxu0 %v491
        %594 = vmatpush1.bf16.msra.mxu0 %v490
        %595 = vmatprep.subr.bf16.mxu0 %v495
        %596 = vmatpush1.bf16.msra.mxu0 %v494
        %597 = vmatprep.subr.bf16.mxu0 %v499
        %598 = vmatpush1.bf16.msra.mxu0 %v498
        %599 = vmatprep.subr.bf16.mxu0 %v503
        %600 = vmatpush1.bf16.msra.mxu0 %v502
        %601 = vmatprep.subr.bf16.mxu0 %v507
        %602 = vmatpush1.bf16.msra.mxu0 %v506
        %603 = vmatprep.subr.bf16.mxu0 %v511
        %604 = vmatpush1.bf16.msra.mxu0 %v510
        %605 = vmatprep.subr.bf16.mxu0 %v515
        %606 = vmatpush1.bf16.msra.mxu0 %v514
        %607 = vmatprep.subr.bf16.mxu0 %v519
        %608 = vmatpush1.bf16.msra.mxu0 %v518
        %609 = vmatprep.subr.bf16.mxu0 0
        %610 = vmatpush1.bf16.msra.mxu0 0
        %611 = vmatprep.subr.bf16.mxu0 0
        %612 = vmatpush1.bf16.msra.mxu0 0
        %613 = vmatprep.subr.bf16.mxu0 0
        %614 = vmatpush1.bf16.msra.mxu0 0
        %615 = vmatprep.subr.bf16.mxu0 0
        %616 = vmatpush1.bf16.msra.mxu0 0
        %617 = vmatprep.subr.bf16.mxu0 0
        %618 = vmatpush1.bf16.msra.mxu0 0
        %619 = vmatprep.subr.bf16.mxu0 0
        %620 = vmatpush1.bf16.msra.mxu0 0
        %621 = vmatprep.subr.bf16.mxu0 0
        %622 = vmatpush1.bf16.msra.mxu0 0
        %623 = vmatprep.subr.bf16.mxu0 0
        %624 = vmatpush1.bf16.msra.mxu0 0
        %625 = vmatprep.mubr.bf16.mxu0 0
        %626 = vmatmul.mubr.bf16.gmra.mrb[0].mxu0 %v359
        %v627 = vpop.f32.mrb[0].mxu0
        %v628 = vadd.f32 0.0, %v627
        %v629 = vpop.f32.mrb[0].mxu0
        %v630 = vadd.f32 0.0, %v629
        %v631 = vpop.f32.mrb[0].mxu0
        %v632 = vpop.f32.mrb[0].mxu0
        %633 = vdwg.mxu0
        %v634 = vadd.f32 %v355, %v587
        %v635 = vadd.f32 %v356, %v589
        %v636 = vadd.f32 %v357, %v628
        %v637 = vadd.f32 %v358, %v630
        %v638 = vxor.u32 %v634, 2147483648
        %v639 = vmul.f32 %v638, 1.442695
        %v640 = vpow.pop %v639
        %v641 = vadd.f32 %v640, 1.0
        %v642 = vrcp.pop %v641
        %v643 = vmul.f32 1.0, %v642
        %v644 = vxor.u32 %v635, 2147483648
        %v645 = vmul.f32 %v644, 1.442695
        %v646 = vpow.pop %v645
        %v647 = vadd.f32 %v646, 1.0
        %v648 = vrcp.pop %v647
        %v649 = vmul.f32 1.0, %v648
        %v650 = vtanh.pop %v636
        %v651 = vxor.u32 %v637, 2147483648
        %v652 = vmul.f32 %v651, 1.442695
        %v653 = vpow.pop %v652
        %v654 = vadd.f32 %v653, 1.0
        %v655 = vrcp.pop %v654
        %v656 = vmul.f32 1.0, %v655
        %v657 = vmul.f32 %v649, %v352
        %v658 = vmul.f32 %v643, %v650
        %v659 = vadd.f32 %v657, %v658
        %v660 = vtanh.pop %v659
        %v661 = vmul.f32 %v656, %v660
        %v662 = vpack.c.bf16 %v661, %v661
        %v663 = vld [vmem:[%s4] sm:$0xff]
        %v664 = vld [vmem:[%s4 + $0x8] sm:$0xff]
        %v665 = vld [vmem:[%s4 + $0x10] sm:$0xff]
        %v666 = vld [vmem:[%s4 + $0x18] sm:$0xff]
        %v667 = vld [vmem:[%s4 + $0x20] sm:$0xff]
        %v668 = vld [vmem:[%s4 + $0x28] sm:$0xff]
        %v669 = vld [vmem:[%s4 + $0x30] sm:$0xff]
        %v670 = vld [vmem:[%s4 + $0x38] sm:$0xff]
        %v671 = vld [vmem:[%s4 + $0x40] sm:$0xff]
        %v672 = vld [vmem:[%s4 + $0x48] sm:$0xff]
        %v673 = vld [vmem:[%s4 + $0x50] sm:$0xff]
        %v674 = vld [vmem:[%s4 + $0x58] sm:$0xff]
        %v675 = vld [vmem:[%s4 + $0x60] sm:$0xff]
        %v676 = vld [vmem:[%s4 + $0x68] sm:$0xff]
        %v677 = vld [vmem:[%s4 + $0x70] sm:$0xff]
        %v678 = vld [vmem:[%s4 + $0x78] sm:$0xff]
        %v679 = vld [vmem:[%s4 + $0x80] sm:$0xff]
        %v680 = vld [vmem:[%s4 + $0x88] sm:$0xff]
        %v681 = vld [vmem:[%s4 + $0x90] sm:$0xff]
        %v682 = vld [vmem:[%s4 + $0x98] sm:$0xff]
        %v683 = vld [vmem:[%s4 + $0xa0] sm:$0xff]
        %v684 = vld [vmem:[%s4 + $0xa8] sm:$0xff]
        %v685 = vld [vmem:[%s4 + $0xb0] sm:$0xff]
        %v686 = vld [vmem:[%s4 + $0xb8] sm:$0xff]
        %v687 = vld [vmem:[%s4 + $0xc0] sm:$0xff]
        %v688 = vld [vmem:[%s4 + $0xc8] sm:$0xff]
        %v689 = vld [vmem:[%s4 + $0xd0] sm:$0xff]
        %v690 = vld [vmem:[%s4 + $0xd8] sm:$0xff]
        %v691 = vld [vmem:[%s4 + $0xe0] sm:$0xff]
        %v692 = vld [vmem:[%s4 + $0xe8] sm:$0xff]
        %v693 = vld [vmem:[%s4 + $0xf0] sm:$0xff]
        %v694 = vld [vmem:[%s4 + $0xf8] sm:$0xff]
        %v695 = vpack.c.bf16 %v353, %v353
        %v696 = vld [vmem:[%s5] sm:$0xff]
        %v697 = vld [vmem:[%s5 + $0x8] sm:$0xff]
        %v698 = vld [vmem:[%s5 + $0x10] sm:$0xff]
        %v699 = vld [vmem:[%s5 + $0x18] sm:$0xff]
        %v700 = vld [vmem:[%s5 + $0x20] sm:$0xff]
        %v701 = vld [vmem:[%s5 + $0x28] sm:$0xff]
        %v702 = vld [vmem:[%s5 + $0x30] sm:$0xff]
        %v703 = vld [vmem:[%s5 + $0x38] sm:$0xff]
        %v704 = vld [vmem:[%s5 + $0x40] sm:$0xff]
        %v705 = vld [vmem:[%s5 + $0x48] sm:$0xff]
        %v706 = vld [vmem:[%s5 + $0x50] sm:$0xff]
        %v707 = vld [vmem:[%s5 + $0x58] sm:$0xff]
        %v708 = vld [vmem:[%s5 + $0x60] sm:$0xff]
        %v709 = vld [vmem:[%s5 + $0x68] sm:$0xff]
        %v710 = vld [vmem:[%s5 + $0x70] sm:$0xff]
        %v711 = vld [vmem:[%s5 + $0x78] sm:$0xff]
        %v712 = vld [vmem:[%s5 + $0x80] sm:$0xff]
        %v713 = vld [vmem:[%s5 + $0x88] sm:$0xff]
        %v714 = vld [vmem:[%s5 + $0x90] sm:$0xff]
        %v715 = vld [vmem:[%s5 + $0x98] sm:$0xff]
        %v716 = vld [vmem:[%s5 + $0xa0] sm:$0xff]
        %v717 = vld [vmem:[%s5 + $0xa8] sm:$0xff]
        %v718 = vld [vmem:[%s5 + $0xb0] sm:$0xff]
        %v719 = vld [vmem:[%s5 + $0xb8] sm:$0xff]
        %v720 = vld [vmem:[%s5 + $0xc0] sm:$0xff]
        %v721 = vld [vmem:[%s5 + $0xc8] sm:$0xff]
        %v722 = vld [vmem:[%s5 + $0xd0] sm:$0xff]
        %v723 = vld [vmem:[%s5 + $0xd8] sm:$0xff]
        %v724 = vld [vmem:[%s5 + $0xe0] sm:$0xff]
        %v725 = vld [vmem:[%s5 + $0xe8] sm:$0xff]
        %v726 = vld [vmem:[%s5 + $0xf0] sm:$0xff]
        %v727 = vld [vmem:[%s5 + $0xf8] sm:$0xff]
        %v760 = vunpack.c.l.b16 %v696
        %v761 = vunpack.c.h.b16 %v696
        %v762 = vunpack.c.l.b16 %v697
        %v763 = vunpack.c.h.b16 %v697
        %v764 = vunpack.c.l.b16 %v698
        %v765 = vunpack.c.h.b16 %v698
        %v766 = vunpack.c.l.b16 %v699
        %v767 = vunpack.c.h.b16 %v699
        %v768 = vunpack.c.l.b16 %v700
        %v769 = vunpack.c.h.b16 %v700
        %v770 = vunpack.c.l.b16 %v701
        %v771 = vunpack.c.h.b16 %v701
        %v772 = vunpack.c.l.b16 %v702
        %v773 = vunpack.c.h.b16 %v702
        %v774 = vunpack.c.l.b16 %v703
        %v775 = vunpack.c.h.b16 %v703
        %v776 = vunpack.c.l.b16 %v704
        %v777 = vunpack.c.h.b16 %v704
        %v778 = vunpack.c.l.b16 %v705
        %v779 = vunpack.c.h.b16 %v705
        %v780 = vunpack.c.l.b16 %v706
        %v781 = vunpack.c.h.b16 %v706
        %v782 = vunpack.c.l.b16 %v707
        %v783 = vunpack.c.h.b16 %v707
        %v784 = vunpack.c.l.b16 %v708
        %v785 = vunpack.c.h.b16 %v708
        %v786 = vunpack.c.l.b16 %v709
        %v787 = vunpack.c.h.b16 %v709
        %v788 = vunpack.c.l.b16 %v710
        %v789 = vunpack.c.h.b16 %v710
        %v790 = vunpack.c.l.b16 %v711
        %v791 = vunpack.c.h.b16 %v711
        %v792 = vunpack.c.l.b16 %v712
        %v793 = vunpack.c.h.b16 %v712
        %v794 = vunpack.c.l.b16 %v713
        %v795 = vunpack.c.h.b16 %v713
        %v796 = vunpack.c.l.b16 %v714
        %v797 = vunpack.c.h.b16 %v714
        %v798 = vunpack.c.l.b16 %v715
        %v799 = vunpack.c.h.b16 %v715
        %v800 = vunpack.c.l.b16 %v716
        %v801 = vunpack.c.h.b16 %v716
        %v802 = vunpack.c.l.b16 %v717
        %v803 = vunpack.c.h.b16 %v717
        %v804 = vunpack.c.l.b16 %v718
        %v805 = vunpack.c.h.b16 %v718
        %v806 = vunpack.c.l.b16 %v719
        %v807 = vunpack.c.h.b16 %v719
        %v808 = vunpack.c.l.b16 %v720
        %v809 = vunpack.c.h.b16 %v720
        %v810 = vunpack.c.l.b16 %v721
        %v811 = vunpack.c.h.b16 %v721
        %v812 = vunpack.c.l.b16 %v722
        %v813 = vunpack.c.h.b16 %v722
        %v814 = vunpack.c.l.b16 %v723
        %v815 = vunpack.c.h.b16 %v723
        %v816 = vunpack.c.l.b16 %v724
        %v817 = vunpack.c.h.b16 %v724
        %v818 = vunpack.c.l.b16 %v725
        %v819 = vunpack.c.h.b16 %v725
        %v820 = vunpack.c.l.b16 %v726
        %v821 = vunpack.c.h.b16 %v726
        %v822 = vunpack.c.l.b16 %v727
        %v823 = vunpack.c.h.b16 %v727
        %v824 = vpack.c.b16 %v764, %v760
        %v825 = vpack.c.b16 %v765, %v761
        %v826 = vpack.c.b16 %v766, %v762
        %v827 = vpack.c.b16 %v767, %v763
        %v828 = vpack.c.b16 %v772, %v768
        %v829 = vpack.c.b16 %v773, %v769
        %v830 = vpack.c.b16 %v774, %v770
        %v831 = vpack.c.b16 %v775, %v771
        %v832 = vpack.c.b16 %v780, %v776
        %v833 = vpack.c.b16 %v781, %v777
        %v834 = vpack.c.b16 %v782, %v778
        %v835 = vpack.c.b16 %v783, %v779
        %v836 = vpack.c.b16 %v788, %v784
        %v837 = vpack.c.b16 %v789, %v785
        %v838 = vpack.c.b16 %v790, %v786
        %v839 = vpack.c.b16 %v791, %v787
        %v840 = vpack.c.b16 %v796, %v792
        %v841 = vpack.c.b16 %v797, %v793
        %v842 = vpack.c.b16 %v798, %v794
        %v843 = vpack.c.b16 %v799, %v795
        %v844 = vpack.c.b16 %v804, %v800
        %v845 = vpack.c.b16 %v805, %v801
        %v846 = vpack.c.b16 %v806, %v802
        %v847 = vpack.c.b16 %v807, %v803
        %v848 = vpack.c.b16 %v812, %v808
        %v849 = vpack.c.b16 %v813, %v809
        %v850 = vpack.c.b16 %v814, %v810
        %v851 = vpack.c.b16 %v815, %v811
        %v852 = vpack.c.b16 %v820, %v816
        %v853 = vpack.c.b16 %v821, %v817
        %v854 = vpack.c.b16 %v822, %v818
        %v855 = vpack.c.b16 %v823, %v819
        %888 = vmatprep.subr.bf16.mxu0 %v825
        %889 = vmatpush1.bf16.msra.mxu0 %v824
        %890 = vmatprep.subr.bf16.mxu0 %v829
        %891 = vmatpush1.bf16.msra.mxu0 %v828
        %892 = vmatprep.subr.bf16.mxu0 %v833
        %893 = vmatpush1.bf16.msra.mxu0 %v832
        %894 = vmatprep.subr.bf16.mxu0 %v837
        %895 = vmatpush1.bf16.msra.mxu0 %v836
        %896 = vmatprep.subr.bf16.mxu0 %v841
        %897 = vmatpush1.bf16.msra.mxu0 %v840
        %898 = vmatprep.subr.bf16.mxu0 %v845
        %899 = vmatpush1.bf16.msra.mxu0 %v844
        %900 = vmatprep.subr.bf16.mxu0 %v849
        %901 = vmatpush1.bf16.msra.mxu0 %v848
        %902 = vmatprep.subr.bf16.mxu0 %v853
        %903 = vmatpush1.bf16.msra.mxu0 %v852
        %904 = vmatprep.subr.bf16.mxu0 0
        %905 = vmatpush1.bf16.msra.mxu0 0
        %906 = vmatprep.subr.bf16.mxu0 0
        %907 = vmatpush1.bf16.msra.mxu0 0
        %908 = vmatprep.subr.bf16.mxu0 0
        %909 = vmatpush1.bf16.msra.mxu0 0
        %910 = vmatprep.subr.bf16.mxu0 0
        %911 = vmatpush1.bf16.msra.mxu0 0
        %912 = vmatprep.subr.bf16.mxu0 0
        %913 = vmatpush1.bf16.msra.mxu0 0
        %914 = vmatprep.subr.bf16.mxu0 0
        %915 = vmatpush1.bf16.msra.mxu0 0
        %916 = vmatprep.subr.bf16.mxu0 0
        %917 = vmatpush1.bf16.msra.mxu0 0
        %918 = vmatprep.subr.bf16.mxu0 0
        %919 = vmatpush1.bf16.msra.mxu0 0
        %920 = vmatprep.mubr.bf16.mxu0 0
        %921 = vmatmul.mubr.bf16.gmra.mrb[0].mxu0 %v695
        %v922 = vpop.f32.mrb[0].mxu0
        %v923 = vadd.f32 0.0, %v922
        %v924 = vpop.f32.mrb[0].mxu0
        %v925 = vadd.f32 0.0, %v924
        %v926 = vpop.f32.mrb[0].mxu0
        %v927 = vpop.f32.mrb[0].mxu0
        %928 = vdwg.mxu0
        %929 = vmatprep.subr.bf16.mxu0 %v827
        %930 = vmatpush1.bf16.msra.mxu0 %v826
        %931 = vmatprep.subr.bf16.mxu0 %v831
        %932 = vmatpush1.bf16.msra.mxu0 %v830
        %933 = vmatprep.subr.bf16.mxu0 %v835
        %934 = vmatpush1.bf16.msra.mxu0 %v834
        %935 = vmatprep.subr.bf16.mxu0 %v839
        %936 = vmatpush1.bf16.msra.mxu0 %v838
        %937 = vmatprep.subr.bf16.mxu0 %v843
        %938 = vmatpush1.bf16.msra.mxu0 %v842
        %939 = vmatprep.subr.bf16.mxu0 %v847
        %940 = vmatpush1.bf16.msra.mxu0 %v846
        %941 = vmatprep.subr.bf16.mxu0 %v851
        %942 = vmatpush1.bf16.msra.mxu0 %v850
        %943 = vmatprep.subr.bf16.mxu0 %v855
        %944 = vmatpush1.bf16.msra.mxu0 %v854
        %945 = vmatprep.subr.bf16.mxu0 0
        %946 = vmatpush1.bf16.msra.mxu0 0
        %947 = vmatprep.subr.bf16.mxu0 0
        %948 = vmatpush1.bf16.msra.mxu0 0
        %949 = vmatprep.subr.bf16.mxu0 0
        %950 = vmatpush1.bf16.msra.mxu0 0
        %951 = vmatprep.subr.bf16.mxu0 0
        %952 = vmatpush1.bf16.msra.mxu0 0
        %953 = vmatprep.subr.bf16.mxu0 0
        %954 = vmatpush1.bf16.msra.mxu0 0
        %955 = vmatprep.subr.bf16.mxu0 0
        %956 = vmatpush1.bf16.msra.mxu0 0
        %957 = vmatprep.subr.bf16.mxu0 0
        %958 = vmatpush1.bf16.msra.mxu0 0
        %959 = vmatprep.subr.bf16.mxu0 0
        %960 = vmatpush1.bf16.msra.mxu0 0
        %961 = vmatprep.mubr.bf16.mxu0 0
        %962 = vmatmul.mubr.bf16.gmra.mrb[0].mxu0 %v695
        %v963 = vpop.f32.mrb[0].mxu0
        %v964 = vadd.f32 0.0, %v963
        %v965 = vpop.f32.mrb[0].mxu0
        %v966 = vadd.f32 0.0, %v965
        %v967 = vpop.f32.mrb[0].mxu0
        %v968 = vpop.f32.mrb[0].mxu0
        %969 = vdwg.mxu0
        %v1002 = vunpack.c.l.b16 %v663
        %v1003 = vunpack.c.h.b16 %v663
        %v1004 = vunpack.c.l.b16 %v664
        %v1005 = vunpack.c.h.b16 %v664
        %v1006 = vunpack.c.l.b16 %v665
        %v1007 = vunpack.c.h.b16 %v665
        %v1008 = vunpack.c.l.b16 %v666
        %v1009 = vunpack.c.h.b16 %v666
        %v1010 = vunpack.c.l.b16 %v667
        %v1011 = vunpack.c.h.b16 %v667
        %v1012 = vunpack.c.l.b16 %v668
        %v1013 = vunpack.c.h.b16 %v668
        %v1014 = vunpack.c.l.b16 %v669
        %v1015 = vunpack.c.h.b16 %v669
        %v1016 = vunpack.c.l.b16 %v670
        %v1017 = vunpack.c.h.b16 %v670
        %v1018 = vunpack.c.l.b16 %v671
        %v1019 = vunpack.c.h.b16 %v671
        %v1020 = vunpack.c.l.b16 %v672
        %v1021 = vunpack.c.h.b16 %v672
        %v1022 = vunpack.c.l.b16 %v673
        %v1023 = vunpack.c.h.b16 %v673
        %v1024 = vunpack.c.l.b16 %v674
        %v1025 = vunpack.c.h.b16 %v674
        %v1026 = vunpack.c.l.b16 %v675
        %v1027 = vunpack.c.h.b16 %v675
        %v1028 = vunpack.c.l.b16 %v676
        %v1029 = vunpack.c.h.b16 %v676
        %v1030 = vunpack.c.l.b16 %v677
        %v1031 = vunpack.c.h.b16 %v677
        %v1032 = vunpack.c.l.b16 %v678
        %v1033 = vunpack.c.h.b16 %v678
        %v1034 = vunpack.c.l.b16 %v679
        %v1035 = vunpack.c.h.b16 %v679
        %v1036 = vunpack.c.l.b16 %v680
        %v1037 = vunpack.c.h.b16 %v680
        %v1038 = vunpack.c.l.b16 %v681
        %v1039 = vunpack.c.h.b16 %v681
        %v1040 = vunpack.c.l.b16 %v682
        %v1041 = vunpack.c.h.b16 %v682
        %v1042 = vunpack.c.l.b16 %v683
        %v1043 = vunpack.c.h.b16 %v683
        %v1044 = vunpack.c.l.b16 %v684
        %v1045 = vunpack.c.h.b16 %v684
        %v1046 = vunpack.c.l.b16 %v685
        %v1047 = vunpack.c.h.b16 %v685
        %v1048 = vunpack.c.l.b16 %v686
        %v1049 = vunpack.c.h.b16 %v686
        %v1050 = vunpack.c.l.b16 %v687
        %v1051 = vunpack.c.h.b16 %v687
        %v1052 = vunpack.c.l.b16 %v688
        %v1053 = vunpack.c.h.b16 %v688
        %v1054 = vunpack.c.l.b16 %v689
        %v1055 = vunpack.c.h.b16 %v689
        %v1056 = vunpack.c.l.b16 %v690
        %v1057 = vunpack.c.h.b16 %v690
        %v1058 = vunpack.c.l.b16 %v691
        %v1059 = vunpack.c.h.b16 %v691
        %v1060 = vunpack.c.l.b16 %v692
        %v1061 = vunpack.c.h.b16 %v692
        %v1062 = vunpack.c.l.b16 %v693
        %v1063 = vunpack.c.h.b16 %v693
        %v1064 = vunpack.c.l.b16 %v694
        %v1065 = vunpack.c.h.b16 %v694
        %v1066 = vpack.c.b16 %v1006, %v1002
        %v1067 = vpack.c.b16 %v1007, %v1003
        %v1068 = vpack.c.b16 %v1008, %v1004
        %v1069 = vpack.c.b16 %v1009, %v1005
        %v1070 = vpack.c.b16 %v1014, %v1010
        %v1071 = vpack.c.b16 %v1015, %v1011
        %v1072 = vpack.c.b16 %v1016, %v1012
        %v1073 = vpack.c.b16 %v1017, %v1013
        %v1074 = vpack.c.b16 %v1022, %v1018
        %v1075 = vpack.c.b16 %v1023, %v1019
        %v1076 = vpack.c.b16 %v1024, %v1020
        %v1077 = vpack.c.b16 %v1025, %v1021
        %v1078 = vpack.c.b16 %v1030, %v1026
        %v1079 = vpack.c.b16 %v1031, %v1027
        %v1080 = vpack.c.b16 %v1032, %v1028
        %v1081 = vpack.c.b16 %v1033, %v1029
        %v1082 = vpack.c.b16 %v1038, %v1034
        %v1083 = vpack.c.b16 %v1039, %v1035
        %v1084 = vpack.c.b16 %v1040, %v1036
        %v1085 = vpack.c.b16 %v1041, %v1037
        %v1086 = vpack.c.b16 %v1046, %v1042
        %v1087 = vpack.c.b16 %v1047, %v1043
        %v1088 = vpack.c.b16 %v1048, %v1044
        %v1089 = vpack.c.b16 %v1049, %v1045
        %v1090 = vpack.c.b16 %v1054, %v1050
        %v1091 = vpack.c.b16 %v1055, %v1051
        %v1092 = vpack.c.b16 %v1056, %v1052
        %v1093 = vpack.c.b16 %v1057, %v1053
        %v1094 = vpack.c.b16 %v1062, %v1058
        %v1095 = vpack.c.b16 %v1063, %v1059
        %v1096 = vpack.c.b16 %v1064, %v1060
        %v1097 = vpack.c.b16 %v1065, %v1061
        %1130 = vmatprep.subr.bf16.mxu0 %v1067
        %1131 = vmatpush1.bf16.msra.mxu0 %v1066
        %1132 = vmatprep.subr.bf16.mxu0 %v1071
        %1133 = vmatpush1.bf16.msra.mxu0 %v1070
        %1134 = vmatprep.subr.bf16.mxu0 %v1075
        %1135 = vmatpush1.bf16.msra.mxu0 %v1074
        %1136 = vmatprep.subr.bf16.mxu0 %v1079
        %1137 = vmatpush1.bf16.msra.mxu0 %v1078
        %1138 = vmatprep.subr.bf16.mxu0 %v1083
        %1139 = vmatpush1.bf16.msra.mxu0 %v1082
        %1140 = vmatprep.subr.bf16.mxu0 %v1087
        %1141 = vmatpush1.bf16.msra.mxu0 %v1086
        %1142 = vmatprep.subr.bf16.mxu0 %v1091
        %1143 = vmatpush1.bf16.msra.mxu0 %v1090
        %1144 = vmatprep.subr.bf16.mxu0 %v1095
        %1145 = vmatpush1.bf16.msra.mxu0 %v1094
        %1146 = vmatprep.subr.bf16.mxu0 0
        %1147 = vmatpush1.bf16.msra.mxu0 0
        %1148 = vmatprep.subr.bf16.mxu0 0
        %1149 = vmatpush1.bf16.msra.mxu0 0
        %1150 = vmatprep.subr.bf16.mxu0 0
        %1151 = vmatpush1.bf16.msra.mxu0 0
        %1152 = vmatprep.subr.bf16.mxu0 0
        %1153 = vmatpush1.bf16.msra.mxu0 0
        %1154 = vmatprep.subr.bf16.mxu0 0
        %1155 = vmatpush1.bf16.msra.mxu0 0
        %1156 = vmatprep.subr.bf16.mxu0 0
        %1157 = vmatpush1.bf16.msra.mxu0 0
        %1158 = vmatprep.subr.bf16.mxu0 0
        %1159 = vmatpush1.bf16.msra.mxu0 0
        %1160 = vmatprep.subr.bf16.mxu0 0
        %1161 = vmatpush1.bf16.msra.mxu0 0
        %1162 = vmatprep.mubr.bf16.mxu0 0
        %1163 = vmatmul.mubr.bf16.gmra.mrb[0].mxu0 %v662
        %v1164 = vpop.f32.mrb[0].mxu0
        %v1165 = vadd.f32 %v923, %v1164
        %v1166 = vpop.f32.mrb[0].mxu0
        %v1167 = vadd.f32 %v925, %v1166
        %v1168 = vpop.f32.mrb[0].mxu0
        %v1169 = vpop.f32.mrb[0].mxu0
        %1170 = vdwg.mxu0
        %1171 = vmatprep.subr.bf16.mxu0 %v1069
        %1172 = vmatpush1.bf16.msra.mxu0 %v1068
        %1173 = vmatprep.subr.bf16.mxu0 %v1073
        %1174 = vmatpush1.bf16.msra.mxu0 %v1072
        %1175 = vmatprep.subr.bf16.mxu0 %v1077
        %1176 = vmatpush1.bf16.msra.mxu0 %v1076
        %1177 = vmatprep.subr.bf16.mxu0 %v1081
        %1178 = vmatpush1.bf16.msra.mxu0 %v1080
        %1179 = vmatprep.subr.bf16.mxu0 %v1085
        %1180 = vmatpush1.bf16.msra.mxu0 %v1084
        %1181 = vmatprep.subr.bf16.mxu0 %v1089
        %1182 = vmatpush1.bf16.msra.mxu0 %v1088
        %1183 = vmatprep.subr.bf16.mxu0 %v1093
        %1184 = vmatpush1.bf16.msra.mxu0 %v1092
        %1185 = vmatprep.subr.bf16.mxu0 %v1097
        %1186 = vmatpush1.bf16.msra.mxu0 %v1096
        %1187 = vmatprep.subr.bf16.mxu0 0
        %1188 = vmatpush1.bf16.msra.mxu0 0
        %1189 = vmatprep.subr.bf16.mxu0 0
        %1190 = vmatpush1.bf16.msra.mxu0 0
        %1191 = vmatprep.subr.bf16.mxu0 0
        %1192 = vmatpush1.bf16.msra.mxu0 0
        %1193 = vmatprep.subr.bf16.mxu0 0
        %1194 = vmatpush1.bf16.msra.mxu0 0
        %1195 = vmatprep.subr.bf16.mxu0 0
        %1196 = vmatpush1.bf16.msra.mxu0 0
        %1197 = vmatprep.subr.bf16.mxu0 0
        %1198 = vmatpush1.bf16.msra.mxu0 0
        %1199 = vmatprep.subr.bf16.mxu0 0
        %1200 = vmatpush1.bf16.msra.mxu0 0
        %1201 = vmatprep.subr.bf16.mxu0 0
        %1202 = vmatpush1.bf16.msra.mxu0 0
        %1203 = vmatprep.mubr.bf16.mxu0 0
        %1204 = vmatmul.mubr.bf16.gmra.mrb[0].mxu0 %v662
        %v1205 = vpop.f32.mrb[0].mxu0
        %v1206 = vadd.f32 %v964, %v1205
        %v1207 = vpop.f32.mrb[0].mxu0
        %v1208 = vadd.f32 %v966, %v1207
        %v1209 = vpop.f32.mrb[0].mxu0
        %v1210 = vpop.f32.mrb[0].mxu0
        %1211 = vdwg.mxu0
        %v1212 = vld [vmem:[%s6] sm:$0xf]
        %v1214 = vlaneseq
        %v1215 = vshrl.u32 %v1214, 7
        %v1216 = vsub.s32 0, %v1215
        %v1217 = vrot.slane %v1212, %v1216
        %v1218 = vlaneseq
        %v1219 = vshrl.u32 %v1218, 7
        %v1220 = vsub.s32 1, %v1219
        %v1221 = vrot.slane %v1212, %v1220
        %v1222 = vlaneseq
        %v1223 = vshrl.u32 %v1222, 7
        %v1224 = vsub.s32 2, %v1223
        %v1225 = vrot.slane %v1212, %v1224
        %v1226 = vlaneseq
        %v1227 = vshrl.u32 %v1226, 7
        %v1228 = vsub.s32 3, %v1227
        %v1229 = vrot.slane %v1212, %v1228
        %v1234 = vadd.f32 %v1165, %v1217
        %v1235 = vadd.f32 %v1167, %v1221
        %v1236 = vadd.f32 %v1206, %v1225
        %v1237 = vadd.f32 %v1208, %v1229
        %v1238 = vxor.u32 %v1234, 2147483648
        %v1239 = vmul.f32 %v1238, 1.442695
        %v1240 = vpow.pop %v1239
        %v1241 = vadd.f32 %v1240, 1.0
        %v1242 = vrcp.pop %v1241
        %v1243 = vmul.f32 1.0, %v1242
        %v1244 = vxor.u32 %v1235, 2147483648
        %v1245 = vmul.f32 %v1244, 1.442695
        %v1246 = vpow.pop %v1245
        %v1247 = vadd.f32 %v1246, 1.0
        %v1248 = vrcp.pop %v1247
        %v1249 = vmul.f32 1.0, %v1248
        %v1250 = vtanh.pop %v1236
        %v1251 = vxor.u32 %v1237, 2147483648
        %v1252 = vmul.f32 %v1251, 1.442695
        %v1253 = vpow.pop %v1252
        %v1254 = vadd.f32 %v1253, 1.0
        %v1255 = vrcp.pop %v1254
        %v1256 = vmul.f32 1.0, %v1255
        %v1257 = vmul.f32 %v1249, %v354
        %v1258 = vmul.f32 %v1243, %v1250
        %v1259 = vadd.f32 %v1257, %v1258
        %v1260 = vtanh.pop %v1259
        %v1261 = vmul.f32 %v1256, %v1260
        %v1262 = vpack.c.bf16 %v1261, %v1261
        %1263 = vst [vmem:[%s334] sm:$0xf] %v1262
        %s1264 = scalar_lea.vmem %s328, 32
        %v1265 = vld [vmem:[%s1264] sm:$0xff]
        %v1266 = vld [vmem:[%s1264 + $0x8] sm:$0xff]
        %v1267 = vld [vmem:[%s1264 + $0x10] sm:$0xff]
        %v1268 = vld [vmem:[%s1264 + $0x18] sm:$0xff]
        %v1269 = vld [vmem:[%s3] sm:$0xff]
        %v1270 = vld [vmem:[%s3 + $0x8] sm:$0xff]
        %v1271 = vld [vmem:[%s3 + $0x10] sm:$0xff]
        %v1272 = vld [vmem:[%s3 + $0x18] sm:$0xff]
        %v1273 = vld [vmem:[%s3 + $0x20] sm:$0xff]
        %v1274 = vld [vmem:[%s3 + $0x28] sm:$0xff]
        %v1275 = vld [vmem:[%s3 + $0x30] sm:$0xff]
        %v1276 = vld [vmem:[%s3 + $0x38] sm:$0xff]
        %v1277 = vld [vmem:[%s3 + $0x40] sm:$0xff]
        %v1278 = vld [vmem:[%s3 + $0x48] sm:$0xff]
        %v1279 = vld [vmem:[%s3 + $0x50] sm:$0xff]
        %v1280 = vld [vmem:[%s3 + $0x58] sm:$0xff]
        %v1281 = vld [vmem:[%s3 + $0x60] sm:$0xff]
        %v1282 = vld [vmem:[%s3 + $0x68] sm:$0xff]
        %v1283 = vld [vmem:[%s3 + $0x70] sm:$0xff]
        %v1284 = vld [vmem:[%s3 + $0x78] sm:$0xff]
        %v1285 = vld [vmem:[%s3 + $0x80] sm:$0xff]
        %v1286 = vld [vmem:[%s3 + $0x88] sm:$0xff]
        %v1287 = vld [vmem:[%s3 + $0x90] sm:$0xff]
        %v1288 = vld [vmem:[%s3 + $0x98] sm:$0xff]
        %v1289 = vld [vmem:[%s3 + $0xa0] sm:$0xff]
        %v1290 = vld [vmem:[%s3 + $0xa8] sm:$0xff]
        %v1291 = vld [vmem:[%s3 + $0xb0] sm:$0xff]
        %v1292 = vld [vmem:[%s3 + $0xb8] sm:$0xff]
        %v1293 = vld [vmem:[%s3 + $0xc0] sm:$0xff]
        %v1294 = vld [vmem:[%s3 + $0xc8] sm:$0xff]
        %v1295 = vld [vmem:[%s3 + $0xd0] sm:$0xff]
        %v1296 = vld [vmem:[%s3 + $0xd8] sm:$0xff]
        %v1297 = vld [vmem:[%s3 + $0xe0] sm:$0xff]
        %v1298 = vld [vmem:[%s3 + $0xe8] sm:$0xff]
        %v1299 = vld [vmem:[%s3 + $0xf0] sm:$0xff]
        %v1300 = vld [vmem:[%s3 + $0xf8] sm:$0xff]
        %v1333 = vunpack.c.l.b16 %v1269
        %v1334 = vunpack.c.h.b16 %v1269
        %v1335 = vunpack.c.l.b16 %v1270
        %v1336 = vunpack.c.h.b16 %v1270
        %v1337 = vunpack.c.l.b16 %v1271
        %v1338 = vunpack.c.h.b16 %v1271
        %v1339 = vunpack.c.l.b16 %v1272
        %v1340 = vunpack.c.h.b16 %v1272
        %v1341 = vunpack.c.l.b16 %v1273
        %v1342 = vunpack.c.h.b16 %v1273
        %v1343 = vunpack.c.l.b16 %v1274
        %v1344 = vunpack.c.h.b16 %v1274
        %v1345 = vunpack.c.l.b16 %v1275
        %v1346 = vunpack.c.h.b16 %v1275
        %v1347 = vunpack.c.l.b16 %v1276
        %v1348 = vunpack.c.h.b16 %v1276
        %v1349 = vunpack.c.l.b16 %v1277
        %v1350 = vunpack.c.h.b16 %v1277
        %v1351 = vunpack.c.l.b16 %v1278
        %v1352 = vunpack.c.h.b16 %v1278
        %v1353 = vunpack.c.l.b16 %v1279
        %v1354 = vunpack.c.h.b16 %v1279
        %v1355 = vunpack.c.l.b16 %v1280
        %v1356 = vunpack.c.h.b16 %v1280
        %v1357 = vunpack.c.l.b16 %v1281
        %v1358 = vunpack.c.h.b16 %v1281
        %v1359 = vunpack.c.l.b16 %v1282
        %v1360 = vunpack.c.h.b16 %v1282
        %v1361 = vunpack.c.l.b16 %v1283
        %v1362 = vunpack.c.h.b16 %v1283
        %v1363 = vunpack.c.l.b16 %v1284
        %v1364 = vunpack.c.h.b16 %v1284
        %v1365 = vunpack.c.l.b16 %v1285
        %v1366 = vunpack.c.h.b16 %v1285
        %v1367 = vunpack.c.l.b16 %v1286
        %v1368 = vunpack.c.h.b16 %v1286
        %v1369 = vunpack.c.l.b16 %v1287
        %v1370 = vunpack.c.h.b16 %v1287
        %v1371 = vunpack.c.l.b16 %v1288
        %v1372 = vunpack.c.h.b16 %v1288
        %v1373 = vunpack.c.l.b16 %v1289
        %v1374 = vunpack.c.h.b16 %v1289
        %v1375 = vunpack.c.l.b16 %v1290
        %v1376 = vunpack.c.h.b16 %v1290
        %v1377 = vunpack.c.l.b16 %v1291
        %v1378 = vunpack.c.h.b16 %v1291
        %v1379 = vunpack.c.l.b16 %v1292
        %v1380 = vunpack.c.h.b16 %v1292
        %v1381 = vunpack.c.l.b16 %v1293
        %v1382 = vunpack.c.h.b16 %v1293
        %v1383 = vunpack.c.l.b16 %v1294
        %v1384 = vunpack.c.h.b16 %v1294
        %v1385 = vunpack.c.l.b16 %v1295
        %v1386 = vunpack.c.h.b16 %v1295
        %v1387 = vunpack.c.l.b16 %v1296
        %v1388 = vunpack.c.h.b16 %v1296
        %v1389 = vunpack.c.l.b16 %v1297
        %v1390 = vunpack.c.h.b16 %v1297
        %v1391 = vunpack.c.l.b16 %v1298
        %v1392 = vunpack.c.h.b16 %v1298
        %v1393 = vunpack.c.l.b16 %v1299
        %v1394 = vunpack.c.h.b16 %v1299
        %v1395 = vunpack.c.l.b16 %v1300
        %v1396 = vunpack.c.h.b16 %v1300
        %v1397 = vpack.c.b16 %v1337, %v1333
        %v1398 = vpack.c.b16 %v1338, %v1334
        %v1399 = vpack.c.b16 %v1339, %v1335
        %v1400 = vpack.c.b16 %v1340, %v1336
        %v1401 = vpack.c.b16 %v1345, %v1341
        %v1402 = vpack.c.b16 %v1346, %v1342
        %v1403 = vpack.c.b16 %v1347, %v1343
        %v1404 = vpack.c.b16 %v1348, %v1344
        %v1405 = vpack.c.b16 %v1353, %v1349
        %v1406 = vpack.c.b16 %v1354, %v1350
        %v1407 = vpack.c.b16 %v1355, %v1351
        %v1408 = vpack.c.b16 %v1356, %v1352
        %v1409 = vpack.c.b16 %v1361, %v1357
        %v1410 = vpack.c.b16 %v1362, %v1358
        %v1411 = vpack.c.b16 %v1363, %v1359
        %v1412 = vpack.c.b16 %v1364, %v1360
        %v1413 = vpack.c.b16 %v1369, %v1365
        %v1414 = vpack.c.b16 %v1370, %v1366
        %v1415 = vpack.c.b16 %v1371, %v1367
        %v1416 = vpack.c.b16 %v1372, %v1368
        %v1417 = vpack.c.b16 %v1377, %v1373
        %v1418 = vpack.c.b16 %v1378, %v1374
        %v1419 = vpack.c.b16 %v1379, %v1375
        %v1420 = vpack.c.b16 %v1380, %v1376
        %v1421 = vpack.c.b16 %v1385, %v1381
        %v1422 = vpack.c.b16 %v1386, %v1382
        %v1423 = vpack.c.b16 %v1387, %v1383
        %v1424 = vpack.c.b16 %v1388, %v1384
        %v1425 = vpack.c.b16 %v1393, %v1389
        %v1426 = vpack.c.b16 %v1394, %v1390
        %v1427 = vpack.c.b16 %v1395, %v1391
        %v1428 = vpack.c.b16 %v1396, %v1392
        %1461 = vmatprep.subr.bf16.mxu0 %v1398
        %1462 = vmatpush1.bf16.msra.mxu0 %v1397
        %1463 = vmatprep.subr.bf16.mxu0 %v1402
        %1464 = vmatpush1.bf16.msra.mxu0 %v1401
        %1465 = vmatprep.subr.bf16.mxu0 %v1406
        %1466 = vmatpush1.bf16.msra.mxu0 %v1405
        %1467 = vmatprep.subr.bf16.mxu0 %v1410
        %1468 = vmatpush1.bf16.msra.mxu0 %v1409
        %1469 = vmatprep.subr.bf16.mxu0 %v1414
        %1470 = vmatpush1.bf16.msra.mxu0 %v1413
        %1471 = vmatprep.subr.bf16.mxu0 %v1418
        %1472 = vmatpush1.bf16.msra.mxu0 %v1417
        %1473 = vmatprep.subr.bf16.mxu0 %v1422
        %1474 = vmatpush1.bf16.msra.mxu0 %v1421
        %1475 = vmatprep.subr.bf16.mxu0 %v1426
        %1476 = vmatpush1.bf16.msra.mxu0 %v1425
        %1477 = vmatprep.subr.bf16.mxu0 0
        %1478 = vmatpush1.bf16.msra.mxu0 0
        %1479 = vmatprep.subr.bf16.mxu0 0
        %1480 = vmatpush1.bf16.msra.mxu0 0
        %1481 = vmatprep.subr.bf16.mxu0 0
        %1482 = vmatpush1.bf16.msra.mxu0 0
        %1483 = vmatprep.subr.bf16.mxu0 0
        %1484 = vmatpush1.bf16.msra.mxu0 0
        %1485 = vmatprep.subr.bf16.mxu0 0
        %1486 = vmatpush1.bf16.msra.mxu0 0
        %1487 = vmatprep.subr.bf16.mxu0 0
        %1488 = vmatpush1.bf16.msra.mxu0 0
        %1489 = vmatprep.subr.bf16.mxu0 0
        %1490 = vmatpush1.bf16.msra.mxu0 0
        %1491 = vmatprep.subr.bf16.mxu0 0
        %1492 = vmatpush1.bf16.msra.mxu0 0
        %1493 = vmatprep.mubr.bf16.mxu0 0
        %1494 = vmatmul.mubr.bf16.gmra.mrb[0].mxu0 %v662
        %v1495 = vpop.f32.mrb[0].mxu0
        %v1496 = vadd.f32 0.0, %v1495
        %v1497 = vpop.f32.mrb[0].mxu0
        %v1498 = vadd.f32 0.0, %v1497
        %v1499 = vpop.f32.mrb[0].mxu0
        %v1500 = vpop.f32.mrb[0].mxu0
        %1501 = vdwg.mxu0
        %1502 = vmatprep.subr.bf16.mxu0 %v1400
        %1503 = vmatpush1.bf16.msra.mxu0 %v1399
        %1504 = vmatprep.subr.bf16.mxu0 %v1404
        %1505 = vmatpush1.bf16.msra.mxu0 %v1403
        %1506 = vmatprep.subr.bf16.mxu0 %v1408
        %1507 = vmatpush1.bf16.msra.mxu0 %v1407
        %1508 = vmatprep.subr.bf16.mxu0 %v1412
        %1509 = vmatpush1.bf16.msra.mxu0 %v1411
        %1510 = vmatprep.subr.bf16.mxu0 %v1416
        %1511 = vmatpush1.bf16.msra.mxu0 %v1415
        %1512 = vmatprep.subr.bf16.mxu0 %v1420
        %1513 = vmatpush1.bf16.msra.mxu0 %v1419
        %1514 = vmatprep.subr.bf16.mxu0 %v1424
        %1515 = vmatpush1.bf16.msra.mxu0 %v1423
        %1516 = vmatprep.subr.bf16.mxu0 %v1428
        %1517 = vmatpush1.bf16.msra.mxu0 %v1427
        %1518 = vmatprep.subr.bf16.mxu0 0
        %1519 = vmatpush1.bf16.msra.mxu0 0
        %1520 = vmatprep.subr.bf16.mxu0 0
        %1521 = vmatpush1.bf16.msra.mxu0 0
        %1522 = vmatprep.subr.bf16.mxu0 0
        %1523 = vmatpush1.bf16.msra.mxu0 0
        %1524 = vmatprep.subr.bf16.mxu0 0
        %1525 = vmatpush1.bf16.msra.mxu0 0
        %1526 = vmatprep.subr.bf16.mxu0 0
        %1527 = vmatpush1.bf16.msra.mxu0 0
        %1528 = vmatprep.subr.bf16.mxu0 0
        %1529 = vmatpush1.bf16.msra.mxu0 0
        %1530 = vmatprep.subr.bf16.mxu0 0
        %1531 = vmatpush1.bf16.msra.mxu0 0
        %1532 = vmatprep.subr.bf16.mxu0 0
        %1533 = vmatpush1.bf16.msra.mxu0 0
        %1534 = vmatprep.mubr.bf16.mxu0 0
        %1535 = vmatmul.mubr.bf16.gmra.mrb[0].mxu0 %v662
        %v1536 = vpop.f32.mrb[0].mxu0
        %v1537 = vadd.f32 0.0, %v1536
        %v1538 = vpop.f32.mrb[0].mxu0
        %v1539 = vadd.f32 0.0, %v1538
        %v1540 = vpop.f32.mrb[0].mxu0
        %v1541 = vpop.f32.mrb[0].mxu0
        %1542 = vdwg.mxu0
        %v1543 = vadd.f32 %v1265, %v1496
        %v1544 = vadd.f32 %v1266, %v1498
        %v1545 = vadd.f32 %v1267, %v1537
        %v1546 = vadd.f32 %v1268, %v1539
        %v1547 = vxor.u32 %v1543, 2147483648
        %v1548 = vmul.f32 %v1547, 1.442695
        %v1549 = vpow.pop %v1548
        %v1550 = vadd.f32 %v1549, 1.0
        %v1551 = vrcp.pop %v1550
        %v1552 = vmul.f32 1.0, %v1551
        %v1553 = vxor.u32 %v1544, 2147483648
        %v1554 = vmul.f32 %v1553, 1.442695
        %v1555 = vpow.pop %v1554
        %v1556 = vadd.f32 %v1555, 1.0
        %v1557 = vrcp.pop %v1556
        %v1558 = vmul.f32 1.0, %v1557
        %v1559 = vtanh.pop %v1545
        %v1560 = vxor.u32 %v1546, 2147483648
        %v1561 = vmul.f32 %v1560, 1.442695
        %v1562 = vpow.pop %v1561
        %v1563 = vadd.f32 %v1562, 1.0
        %v1564 = vrcp.pop %v1563
        %v1565 = vmul.f32 1.0, %v1564
        %v1566 = vmul.f32 %v1558, %v659
        %v1567 = vmul.f32 %v1552, %v1559
        %v1568 = vadd.f32 %v1566, %v1567
        %v1569 = vtanh.pop %v1568
        %v1570 = vmul.f32 %v1565, %v1569
        %v1571 = vpack.c.bf16 %v1570, %v1570
        %v1572 = vld [vmem:[%s4] sm:$0xff]
        %v1573 = vld [vmem:[%s4 + $0x8] sm:$0xff]
        %v1574 = vld [vmem:[%s4 + $0x10] sm:$0xff]
        %v1575 = vld [vmem:[%s4 + $0x18] sm:$0xff]
        %v1576 = vld [vmem:[%s4 + $0x20] sm:$0xff]
        %v1577 = vld [vmem:[%s4 + $0x28] sm:$0xff]
        %v1578 = vld [vmem:[%s4 + $0x30] sm:$0xff]
        %v1579 = vld [vmem:[%s4 + $0x38] sm:$0xff]
        %v1580 = vld [vmem:[%s4 + $0x40] sm:$0xff]
        %v1581 = vld [vmem:[%s4 + $0x48] sm:$0xff]
        %v1582 = vld [vmem:[%s4 + $0x50] sm:$0xff]
        %v1583 = vld [vmem:[%s4 + $0x58] sm:$0xff]
        %v1584 = vld [vmem:[%s4 + $0x60] sm:$0xff]
        %v1585 = vld [vmem:[%s4 + $0x68] sm:$0xff]
        %v1586 = vld [vmem:[%s4 + $0x70] sm:$0xff]
        %v1587 = vld [vmem:[%s4 + $0x78] sm:$0xff]
        %v1588 = vld [vmem:[%s4 + $0x80] sm:$0xff]
        %v1589 = vld [vmem:[%s4 + $0x88] sm:$0xff]
        %v1590 = vld [vmem:[%s4 + $0x90] sm:$0xff]
        %v1591 = vld [vmem:[%s4 + $0x98] sm:$0xff]
        %v1592 = vld [vmem:[%s4 + $0xa0] sm:$0xff]
        %v1593 = vld [vmem:[%s4 + $0xa8] sm:$0xff]
        %v1594 = vld [vmem:[%s4 + $0xb0] sm:$0xff]
        %v1595 = vld [vmem:[%s4 + $0xb8] sm:$0xff]
        %v1596 = vld [vmem:[%s4 + $0xc0] sm:$0xff]
        %v1597 = vld [vmem:[%s4 + $0xc8] sm:$0xff]
        %v1598 = vld [vmem:[%s4 + $0xd0] sm:$0xff]
        %v1599 = vld [vmem:[%s4 + $0xd8] sm:$0xff]
        %v1600 = vld [vmem:[%s4 + $0xe0] sm:$0xff]
        %v1601 = vld [vmem:[%s4 + $0xe8] sm:$0xff]
        %v1602 = vld [vmem:[%s4 + $0xf0] sm:$0xff]
        %v1603 = vld [vmem:[%s4 + $0xf8] sm:$0xff]
        %v1604 = vld [vmem:[%s5] sm:$0xff]
        %v1605 = vld [vmem:[%s5 + $0x8] sm:$0xff]
        %v1606 = vld [vmem:[%s5 + $0x10] sm:$0xff]
        %v1607 = vld [vmem:[%s5 + $0x18] sm:$0xff]
        %v1608 = vld [vmem:[%s5 + $0x20] sm:$0xff]
        %v1609 = vld [vmem:[%s5 + $0x28] sm:$0xff]
        %v1610 = vld [vmem:[%s5 + $0x30] sm:$0xff]
        %v1611 = vld [vmem:[%s5 + $0x38] sm:$0xff]
        %v1612 = vld [vmem:[%s5 + $0x40] sm:$0xff]
        %v1613 = vld [vmem:[%s5 + $0x48] sm:$0xff]
        %v1614 = vld [vmem:[%s5 + $0x50] sm:$0xff]
        %v1615 = vld [vmem:[%s5 + $0x58] sm:$0xff]
        %v1616 = vld [vmem:[%s5 + $0x60] sm:$0xff]
        %v1617 = vld [vmem:[%s5 + $0x68] sm:$0xff]
        %v1618 = vld [vmem:[%s5 + $0x70] sm:$0xff]
        %v1619 = vld [vmem:[%s5 + $0x78] sm:$0xff]
        %v1620 = vld [vmem:[%s5 + $0x80] sm:$0xff]
        %v1621 = vld [vmem:[%s5 + $0x88] sm:$0xff]
        %v1622 = vld [vmem:[%s5 + $0x90] sm:$0xff]
        %v1623 = vld [vmem:[%s5 + $0x98] sm:$0xff]
        %v1624 = vld [vmem:[%s5 + $0xa0] sm:$0xff]
        %v1625 = vld [vmem:[%s5 + $0xa8] sm:$0xff]
        %v1626 = vld [vmem:[%s5 + $0xb0] sm:$0xff]
        %v1627 = vld [vmem:[%s5 + $0xb8] sm:$0xff]
        %v1628 = vld [vmem:[%s5 + $0xc0] sm:$0xff]
        %v1629 = vld [vmem:[%s5 + $0xc8] sm:$0xff]
        %v1630 = vld [vmem:[%s5 + $0xd0] sm:$0xff]
        %v1631 = vld [vmem:[%s5 + $0xd8] sm:$0xff]
        %v1632 = vld [vmem:[%s5 + $0xe0] sm:$0xff]
        %v1633 = vld [vmem:[%s5 + $0xe8] sm:$0xff]
        %v1634 = vld [vmem:[%s5 + $0xf0] sm:$0xff]
        %v1635 = vld [vmem:[%s5 + $0xf8] sm:$0xff]
        %v1668 = vunpack.c.l.b16 %v1604
        %v1669 = vunpack.c.h.b16 %v1604
        %v1670 = vunpack.c.l.b16 %v1605
        %v1671 = vunpack.c.h.b16 %v1605
        %v1672 = vunpack.c.l.b16 %v1606
        %v1673 = vunpack.c.h.b16 %v1606
        %v1674 = vunpack.c.l.b16 %v1607
        %v1675 = vunpack.c.h.b16 %v1607
        %v1676 = vunpack.c.l.b16 %v1608
        %v1677 = vunpack.c.h.b16 %v1608
        %v1678 = vunpack.c.l.b16 %v1609
        %v1679 = vunpack.c.h.b16 %v1609
        %v1680 = vunpack.c.l.b16 %v1610
        %v1681 = vunpack.c.h.b16 %v1610
        %v1682 = vunpack.c.l.b16 %v1611
        %v1683 = vunpack.c.h.b16 %v1611
        %v1684 = vunpack.c.l.b16 %v1612
        %v1685 = vunpack.c.h.b16 %v1612
        %v1686 = vunpack.c.l.b16 %v1613
        %v1687 = vunpack.c.h.b16 %v1613
        %v1688 = vunpack.c.l.b16 %v1614
        %v1689 = vunpack.c.h.b16 %v1614
        %v1690 = vunpack.c.l.b16 %v1615
        %v1691 = vunpack.c.h.b16 %v1615
        %v1692 = vunpack.c.l.b16 %v1616
        %v1693 = vunpack.c.h.b16 %v1616
        %v1694 = vunpack.c.l.b16 %v1617
        %v1695 = vunpack.c.h.b16 %v1617
        %v1696 = vunpack.c.l.b16 %v1618
        %v1697 = vunpack.c.h.b16 %v1618
        %v1698 = vunpack.c.l.b16 %v1619
        %v1699 = vunpack.c.h.b16 %v1619
        %v1700 = vunpack.c.l.b16 %v1620
        %v1701 = vunpack.c.h.b16 %v1620
        %v1702 = vunpack.c.l.b16 %v1621
        %v1703 = vunpack.c.h.b16 %v1621
        %v1704 = vunpack.c.l.b16 %v1622
        %v1705 = vunpack.c.h.b16 %v1622
        %v1706 = vunpack.c.l.b16 %v1623
        %v1707 = vunpack.c.h.b16 %v1623
        %v1708 = vunpack.c.l.b16 %v1624
        %v1709 = vunpack.c.h.b16 %v1624
        %v1710 = vunpack.c.l.b16 %v1625
        %v1711 = vunpack.c.h.b16 %v1625
        %v1712 = vunpack.c.l.b16 %v1626
        %v1713 = vunpack.c.h.b16 %v1626
        %v1714 = vunpack.c.l.b16 %v1627
        %v1715 = vunpack.c.h.b16 %v1627
        %v1716 = vunpack.c.l.b16 %v1628
        %v1717 = vunpack.c.h.b16 %v1628
        %v1718 = vunpack.c.l.b16 %v1629
        %v1719 = vunpack.c.h.b16 %v1629
        %v1720 = vunpack.c.l.b16 %v1630
        %v1721 = vunpack.c.h.b16 %v1630
        %v1722 = vunpack.c.l.b16 %v1631
        %v1723 = vunpack.c.h.b16 %v1631
        %v1724 = vunpack.c.l.b16 %v1632
        %v1725 = vunpack.c.h.b16 %v1632
        %v1726 = vunpack.c.l.b16 %v1633
        %v1727 = vunpack.c.h.b16 %v1633
        %v1728 = vunpack.c.l.b16 %v1634
        %v1729 = vunpack.c.h.b16 %v1634
        %v1730 = vunpack.c.l.b16 %v1635
        %v1731 = vunpack.c.h.b16 %v1635
        %v1732 = vpack.c.b16 %v1672, %v1668
        %v1733 = vpack.c.b16 %v1673, %v1669
        %v1734 = vpack.c.b16 %v1674, %v1670
        %v1735 = vpack.c.b16 %v1675, %v1671
        %v1736 = vpack.c.b16 %v1680, %v1676
        %v1737 = vpack.c.b16 %v1681, %v1677
        %v1738 = vpack.c.b16 %v1682, %v1678
        %v1739 = vpack.c.b16 %v1683, %v1679
        %v1740 = vpack.c.b16 %v1688, %v1684
        %v1741 = vpack.c.b16 %v1689, %v1685
        %v1742 = vpack.c.b16 %v1690, %v1686
        %v1743 = vpack.c.b16 %v1691, %v1687
        %v1744 = vpack.c.b16 %v1696, %v1692
        %v1745 = vpack.c.b16 %v1697, %v1693
        %v1746 = vpack.c.b16 %v1698, %v1694
        %v1747 = vpack.c.b16 %v1699, %v1695
        %v1748 = vpack.c.b16 %v1704, %v1700
        %v1749 = vpack.c.b16 %v1705, %v1701
        %v1750 = vpack.c.b16 %v1706, %v1702
        %v1751 = vpack.c.b16 %v1707, %v1703
        %v1752 = vpack.c.b16 %v1712, %v1708
        %v1753 = vpack.c.b16 %v1713, %v1709
        %v1754 = vpack.c.b16 %v1714, %v1710
        %v1755 = vpack.c.b16 %v1715, %v1711
        %v1756 = vpack.c.b16 %v1720, %v1716
        %v1757 = vpack.c.b16 %v1721, %v1717
        %v1758 = vpack.c.b16 %v1722, %v1718
        %v1759 = vpack.c.b16 %v1723, %v1719
        %v1760 = vpack.c.b16 %v1728, %v1724
        %v1761 = vpack.c.b16 %v1729, %v1725
        %v1762 = vpack.c.b16 %v1730, %v1726
        %v1763 = vpack.c.b16 %v1731, %v1727
        %1796 = vmatprep.subr.bf16.mxu0 %v1733
        %1797 = vmatpush1.bf16.msra.mxu0 %v1732
        %1798 = vmatprep.subr.bf16.mxu0 %v1737
        %1799 = vmatpush1.bf16.msra.mxu0 %v1736
        %1800 = vmatprep.subr.bf16.mxu0 %v1741
        %1801 = vmatpush1.bf16.msra.mxu0 %v1740
        %1802 = vmatprep.subr.bf16.mxu0 %v1745
        %1803 = vmatpush1.bf16.msra.mxu0 %v1744
        %1804 = vmatprep.subr.bf16.mxu0 %v1749
        %1805 = vmatpush1.bf16.msra.mxu0 %v1748
        %1806 = vmatprep.subr.bf16.mxu0 %v1753
        %1807 = vmatpush1.bf16.msra.mxu0 %v1752
        %1808 = vmatprep.subr.bf16.mxu0 %v1757
        %1809 = vmatpush1.bf16.msra.mxu0 %v1756
        %1810 = vmatprep.subr.bf16.mxu0 %v1761
        %1811 = vmatpush1.bf16.msra.mxu0 %v1760
        %1812 = vmatprep.subr.bf16.mxu0 0
        %1813 = vmatpush1.bf16.msra.mxu0 0
        %1814 = vmatprep.subr.bf16.mxu0 0
        %1815 = vmatpush1.bf16.msra.mxu0 0
        %1816 = vmatprep.subr.bf16.mxu0 0
        %1817 = vmatpush1.bf16.msra.mxu0 0
        %1818 = vmatprep.subr.bf16.mxu0 0
        %1819 = vmatpush1.bf16.msra.mxu0 0
        %1820 = vmatprep.subr.bf16.mxu0 0
        %1821 = vmatpush1.bf16.msra.mxu0 0
        %1822 = vmatprep.subr.bf16.mxu0 0
        %1823 = vmatpush1.bf16.msra.mxu0 0
        %1824 = vmatprep.subr.bf16.mxu0 0
        %1825 = vmatpush1.bf16.msra.mxu0 0
        %1826 = vmatprep.subr.bf16.mxu0 0
        %1827 = vmatpush1.bf16.msra.mxu0 0
        %1828 = vmatprep.mubr.bf16.mxu0 0
        %1829 = vmatmul.mubr.bf16.gmra.mrb[0].mxu0 %v1262
        %v1830 = vpop.f32.mrb[0].mxu0
        %v1831 = vadd.f32 0.0, %v1830
        %v1832 = vpop.f32.mrb[0].mxu0
        %v1833 = vadd.f32 0.0, %v1832
        %v1834 = vpop.f32.mrb[0].mxu0
        %v1835 = vpop.f32.mrb[0].mxu0
        %1836 = vdwg.mxu0
        %1837 = vmatprep.subr.bf16.mxu0 %v1735
        %1838 = vmatpush1.bf16.msra.mxu0 %v1734
        %1839 = vmatprep.subr.bf16.mxu0 %v1739
        %1840 = vmatpush1.bf16.msra.mxu0 %v1738
        %1841 = vmatprep.subr.bf16.mxu0 %v1743
        %1842 = vmatpush1.bf16.msra.mxu0 %v1742
        %1843 = vmatprep.subr.bf16.mxu0 %v1747
        %1844 = vmatpush1.bf16.msra.mxu0 %v1746
        %1845 = vmatprep.subr.bf16.mxu0 %v1751
        %1846 = vmatpush1.bf16.msra.mxu0 %v1750
        %1847 = vmatprep.subr.bf16.mxu0 %v1755
        %1848 = vmatpush1.bf16.msra.mxu0 %v1754
        %1849 = vmatprep.subr.bf16.mxu0 %v1759
        %1850 = vmatpush1.bf16.msra.mxu0 %v1758
        %1851 = vmatprep.subr.bf16.mxu0 %v1763
        %1852 = vmatpush1.bf16.msra.mxu0 %v1762
        %1853 = vmatprep.subr.bf16.mxu0 0
        %1854 = vmatpush1.bf16.msra.mxu0 0
        %1855 = vmatprep.subr.bf16.mxu0 0
        %1856 = vmatpush1.bf16.msra.mxu0 0
        %1857 = vmatprep.subr.bf16.mxu0 0
        %1858 = vmatpush1.bf16.msra.mxu0 0
        %1859 = vmatprep.subr.bf16.mxu0 0
        %1860 = vmatpush1.bf16.msra.mxu0 0
        %1861 = vmatprep.subr.bf16.mxu0 0
        %1862 = vmatpush1.bf16.msra.mxu0 0
        %1863 = vmatprep.subr.bf16.mxu0 0
        %1864 = vmatpush1.bf16.msra.mxu0 0
        %1865 = vmatprep.subr.bf16.mxu0 0
        %1866 = vmatpush1.bf16.msra.mxu0 0
        %1867 = vmatprep.subr.bf16.mxu0 0
        %1868 = vmatpush1.bf16.msra.mxu0 0
        %1869 = vmatprep.mubr.bf16.mxu0 0
        %1870 = vmatmul.mubr.bf16.gmra.mrb[0].mxu0 %v1262
        %v1871 = vpop.f32.mrb[0].mxu0
        %v1872 = vadd.f32 0.0, %v1871
        %v1873 = vpop.f32.mrb[0].mxu0
        %v1874 = vadd.f32 0.0, %v1873
        %v1875 = vpop.f32.mrb[0].mxu0
        %v1876 = vpop.f32.mrb[0].mxu0
        %1877 = vdwg.mxu0
        %v1910 = vunpack.c.l.b16 %v1572
        %v1911 = vunpack.c.h.b16 %v1572
        %v1912 = vunpack.c.l.b16 %v1573
        %v1913 = vunpack.c.h.b16 %v1573
        %v1914 = vunpack.c.l.b16 %v1574
        %v1915 = vunpack.c.h.b16 %v1574
        %v1916 = vunpack.c.l.b16 %v1575
        %v1917 = vunpack.c.h.b16 %v1575
        %v1918 = vunpack.c.l.b16 %v1576
        %v1919 = vunpack.c.h.b16 %v1576
        %v1920 = vunpack.c.l.b16 %v1577
        %v1921 = vunpack.c.h.b16 %v1577
        %v1922 = vunpack.c.l.b16 %v1578
        %v1923 = vunpack.c.h.b16 %v1578
        %v1924 = vunpack.c.l.b16 %v1579
        %v1925 = vunpack.c.h.b16 %v1579
        %v1926 = vunpack.c.l.b16 %v1580
        %v1927 = vunpack.c.h.b16 %v1580
        %v1928 = vunpack.c.l.b16 %v1581
        %v1929 = vunpack.c.h.b16 %v1581
        %v1930 = vunpack.c.l.b16 %v1582
        %v1931 = vunpack.c.h.b16 %v1582
        %v1932 = vunpack.c.l.b16 %v1583
        %v1933 = vunpack.c.h.b16 %v1583
        %v1934 = vunpack.c.l.b16 %v1584
        %v1935 = vunpack.c.h.b16 %v1584
        %v1936 = vunpack.c.l.b16 %v1585
        %v1937 = vunpack.c.h.b16 %v1585
        %v1938 = vunpack.c.l.b16 %v1586
        %v1939 = vunpack.c.h.b16 %v1586
        %v1940 = vunpack.c.l.b16 %v1587
        %v1941 = vunpack.c.h.b16 %v1587
        %v1942 = vunpack.c.l.b16 %v1588
        %v1943 = vunpack.c.h.b16 %v1588
        %v1944 = vunpack.c.l.b16 %v1589
        %v1945 = vunpack.c.h.b16 %v1589
        %v1946 = vunpack.c.l.b16 %v1590
        %v1947 = vunpack.c.h.b16 %v1590
        %v1948 = vunpack.c.l.b16 %v1591
        %v1949 = vunpack.c.h.b16 %v1591
        %v1950 = vunpack.c.l.b16 %v1592
        %v1951 = vunpack.c.h.b16 %v1592
        %v1952 = vunpack.c.l.b16 %v1593
        %v1953 = vunpack.c.h.b16 %v1593
        %v1954 = vunpack.c.l.b16 %v1594
        %v1955 = vunpack.c.h.b16 %v1594
        %v1956 = vunpack.c.l.b16 %v1595
        %v1957 = vunpack.c.h.b16 %v1595
        %v1958 = vunpack.c.l.b16 %v1596
        %v1959 = vunpack.c.h.b16 %v1596
        %v1960 = vunpack.c.l.b16 %v1597
        %v1961 = vunpack.c.h.b16 %v1597
        %v1962 = vunpack.c.l.b16 %v1598
        %v1963 = vunpack.c.h.b16 %v1598
        %v1964 = vunpack.c.l.b16 %v1599
        %v1965 = vunpack.c.h.b16 %v1599
        %v1966 = vunpack.c.l.b16 %v1600
        %v1967 = vunpack.c.h.b16 %v1600
        %v1968 = vunpack.c.l.b16 %v1601
        %v1969 = vunpack.c.h.b16 %v1601
        %v1970 = vunpack.c.l.b16 %v1602
        %v1971 = vunpack.c.h.b16 %v1602
        %v1972 = vunpack.c.l.b16 %v1603
        %v1973 = vunpack.c.h.b16 %v1603
        %v1974 = vpack.c.b16 %v1914, %v1910
        %v1975 = vpack.c.b16 %v1915, %v1911
        %v1976 = vpack.c.b16 %v1916, %v1912
        %v1977 = vpack.c.b16 %v1917, %v1913
        %v1978 = vpack.c.b16 %v1922, %v1918
        %v1979 = vpack.c.b16 %v1923, %v1919
        %v1980 = vpack.c.b16 %v1924, %v1920
        %v1981 = vpack.c.b16 %v1925, %v1921
        %v1982 = vpack.c.b16 %v1930, %v1926
        %v1983 = vpack.c.b16 %v1931, %v1927
        %v1984 = vpack.c.b16 %v1932, %v1928
        %v1985 = vpack.c.b16 %v1933, %v1929
        %v1986 = vpack.c.b16 %v1938, %v1934
        %v1987 = vpack.c.b16 %v1939, %v1935
        %v1988 = vpack.c.b16 %v1940, %v1936
        %v1989 = vpack.c.b16 %v1941, %v1937
        %v1990 = vpack.c.b16 %v1946, %v1942
        %v1991 = vpack.c.b16 %v1947, %v1943
        %v1992 = vpack.c.b16 %v1948, %v1944
        %v1993 = vpack.c.b16 %v1949, %v1945
        %v1994 = vpack.c.b16 %v1954, %v1950
        %v1995 = vpack.c.b16 %v1955, %v1951
        %v1996 = vpack.c.b16 %v1956, %v1952
        %v1997 = vpack.c.b16 %v1957, %v1953
        %v1998 = vpack.c.b16 %v1962, %v1958
        %v1999 = vpack.c.b16 %v1963, %v1959
        %v2000 = vpack.c.b16 %v1964, %v1960
        %v2001 = vpack.c.b16 %v1965, %v1961
        %v2002 = vpack.c.b16 %v1970, %v1966
        %v2003 = vpack.c.b16 %v1971, %v1967
        %v2004 = vpack.c.b16 %v1972, %v1968
        %v2005 = vpack.c.b16 %v1973, %v1969
        %2038 = vmatprep.subr.bf16.mxu0 %v1975
        %2039 = vmatpush1.bf16.msra.mxu0 %v1974
        %2040 = vmatprep.subr.bf16.mxu0 %v1979
        %2041 = vmatpush1.bf16.msra.mxu0 %v1978
        %2042 = vmatprep.subr.bf16.mxu0 %v1983
        %2043 = vmatpush1.bf16.msra.mxu0 %v1982
        %2044 = vmatprep.subr.bf16.mxu0 %v1987
        %2045 = vmatpush1.bf16.msra.mxu0 %v1986
        %2046 = vmatprep.subr.bf16.mxu0 %v1991
        %2047 = vmatpush1.bf16.msra.mxu0 %v1990
        %2048 = vmatprep.subr.bf16.mxu0 %v1995
        %2049 = vmatpush1.bf16.msra.mxu0 %v1994
        %2050 = vmatprep.subr.bf16.mxu0 %v1999
        %2051 = vmatpush1.bf16.msra.mxu0 %v1998
        %2052 = vmatprep.subr.bf16.mxu0 %v2003
        %2053 = vmatpush1.bf16.msra.mxu0 %v2002
        %2054 = vmatprep.subr.bf16.mxu0 0
        %2055 = vmatpush1.bf16.msra.mxu0 0
        %2056 = vmatprep.subr.bf16.mxu0 0
        %2057 = vmatpush1.bf16.msra.mxu0 0
        %2058 = vmatprep.subr.bf16.mxu0 0
        %2059 = vmatpush1.bf16.msra.mxu0 0
        %2060 = vmatprep.subr.bf16.mxu0 0
        %2061 = vmatpush1.bf16.msra.mxu0 0
        %2062 = vmatprep.subr.bf16.mxu0 0
        %2063 = vmatpush1.bf16.msra.mxu0 0
        %2064 = vmatprep.subr.bf16.mxu0 0
        %2065 = vmatpush1.bf16.msra.mxu0 0
        %2066 = vmatprep.subr.bf16.mxu0 0
        %2067 = vmatpush1.bf16.msra.mxu0 0
        %2068 = vmatprep.subr.bf16.mxu0 0
        %2069 = vmatpush1.bf16.msra.mxu0 0
        %2070 = vmatprep.mubr.bf16.mxu0 0
        %2071 = vmatmul.mubr.bf16.gmra.mrb[0].mxu0 %v1571
        %v2072 = vpop.f32.mrb[0].mxu0
        %v2073 = vadd.f32 %v1831, %v2072
        %v2074 = vpop.f32.mrb[0].mxu0
        %v2075 = vadd.f32 %v1833, %v2074
        %v2076 = vpop.f32.mrb[0].mxu0
        %v2077 = vpop.f32.mrb[0].mxu0
        %2078 = vdwg.mxu0
        %2079 = vmatprep.subr.bf16.mxu0 %v1977
        %2080 = vmatpush1.bf16.msra.mxu0 %v1976
        %2081 = vmatprep.subr.bf16.mxu0 %v1981
        %2082 = vmatpush1.bf16.msra.mxu0 %v1980
        %2083 = vmatprep.subr.bf16.mxu0 %v1985
        %2084 = vmatpush1.bf16.msra.mxu0 %v1984
        %2085 = vmatprep.subr.bf16.mxu0 %v1989
        %2086 = vmatpush1.bf16.msra.mxu0 %v1988
        %2087 = vmatprep.subr.bf16.mxu0 %v1993
        %2088 = vmatpush1.bf16.msra.mxu0 %v1992
        %2089 = vmatprep.subr.bf16.mxu0 %v1997
        %2090 = vmatpush1.bf16.msra.mxu0 %v1996
        %2091 = vmatprep.subr.bf16.mxu0 %v2001
        %2092 = vmatpush1.bf16.msra.mxu0 %v2000
        %2093 = vmatprep.subr.bf16.mxu0 %v2005
        %2094 = vmatpush1.bf16.msra.mxu0 %v2004
        %2095 = vmatprep.subr.bf16.mxu0 0
        %2096 = vmatpush1.bf16.msra.mxu0 0
        %2097 = vmatprep.subr.bf16.mxu0 0
        %2098 = vmatpush1.bf16.msra.mxu0 0
        %2099 = vmatprep.subr.bf16.mxu0 0
        %2100 = vmatpush1.bf16.msra.mxu0 0
        %2101 = vmatprep.subr.bf16.mxu0 0
        %2102 = vmatpush1.bf16.msra.mxu0 0
        %2103 = vmatprep.subr.bf16.mxu0 0
        %2104 = vmatpush1.bf16.msra.mxu0 0
        %2105 = vmatprep.subr.bf16.mxu0 0
        %2106 = vmatpush1.bf16.msra.mxu0 0
        %2107 = vmatprep.subr.bf16.mxu0 0
        %2108 = vmatpush1.bf16.msra.mxu0 0
        %2109 = vmatprep.subr.bf16.mxu0 0
        %2110 = vmatpush1.bf16.msra.mxu0 0
        %2111 = vmatprep.mubr.bf16.mxu0 0
        %2112 = vmatmul.mubr.bf16.gmra.mrb[0].mxu0 %v1571
        %v2113 = vpop.f32.mrb[0].mxu0
        %v2114 = vadd.f32 %v1872, %v2113
        %v2115 = vpop.f32.mrb[0].mxu0
        %v2116 = vadd.f32 %v1874, %v2115
        %v2117 = vpop.f32.mrb[0].mxu0
        %v2118 = vpop.f32.mrb[0].mxu0
        %2119 = vdwg.mxu0
        %v2120 = vld [vmem:[%s6] sm:$0xf]
        %v2122 = vlaneseq
        %v2123 = vshrl.u32 %v2122, 7
        %v2124 = vsub.s32 0, %v2123
        %v2125 = vrot.slane %v2120, %v2124
        %v2126 = vlaneseq
        %v2127 = vshrl.u32 %v2126, 7
        %v2128 = vsub.s32 1, %v2127
        %v2129 = vrot.slane %v2120, %v2128
        %v2130 = vlaneseq
        %v2131 = vshrl.u32 %v2130, 7
        %v2132 = vsub.s32 2, %v2131
        %v2133 = vrot.slane %v2120, %v2132
        %v2134 = vlaneseq
        %v2135 = vshrl.u32 %v2134, 7
        %v2136 = vsub.s32 3, %v2135
        %v2137 = vrot.slane %v2120, %v2136
        %v2142 = vadd.f32 %v2073, %v2125
        %v2143 = vadd.f32 %v2075, %v2129
        %v2144 = vadd.f32 %v2114, %v2133
        %v2145 = vadd.f32 %v2116, %v2137
        %v2146 = vxor.u32 %v2142, 2147483648
        %v2147 = vmul.f32 %v2146, 1.442695
        %v2148 = vpow.pop %v2147
        %v2149 = vadd.f32 %v2148, 1.0
        %v2150 = vrcp.pop %v2149
        %v2151 = vmul.f32 1.0, %v2150
        %v2152 = vxor.u32 %v2143, 2147483648
        %v2153 = vmul.f32 %v2152, 1.442695
        %v2154 = vpow.pop %v2153
        %v2155 = vadd.f32 %v2154, 1.0
        %v2156 = vrcp.pop %v2155
        %v2157 = vmul.f32 1.0, %v2156
        %v2158 = vtanh.pop %v2144
        %v2159 = vxor.u32 %v2145, 2147483648
        %v2160 = vmul.f32 %v2159, 1.442695
        %v2161 = vpow.pop %v2160
        %v2162 = vadd.f32 %v2161, 1.0
        %v2163 = vrcp.pop %v2162
        %v2164 = vmul.f32 1.0, %v2163
        %v2165 = vmul.f32 %v2157, %v1259
        %v2166 = vmul.f32 %v2151, %v2158
        %v2167 = vadd.f32 %v2165, %v2166
        %v2168 = vtanh.pop %v2167
        %v2169 = vmul.f32 %v2164, %v2168
        %v2170 = vpack.c.bf16 %v2169, %v2169
        %s2171 = scalar_lea.vmem %s334, 4
        %2172 = vst [vmem:[%s2171] sm:$0xf] %v2170
        %s2173 = scalar_lea.vmem %s328, 64
        %v2174 = vld [vmem:[%s2173] sm:$0xff]
        %v2175 = vld [vmem:[%s2173 + $0x8] sm:$0xff]
        %v2176 = vld [vmem:[%s2173 + $0x10] sm:$0xff]
        %v2177 = vld [vmem:[%s2173 + $0x18] sm:$0xff]
        %v2178 = vld [vmem:[%s3] sm:$0xff]
        %v2179 = vld [vmem:[%s3 + $0x8] sm:$0xff]
        %v2180 = vld [vmem:[%s3 + $0x10] sm:$0xff]
        %v2181 = vld [vmem:[%s3 + $0x18] sm:$0xff]
        %v2182 = vld [vmem:[%s3 + $0x20] sm:$0xff]
        %v2183 = vld [vmem:[%s3 + $0x28] sm:$0xff]
        %v2184 = vld [vmem:[%s3 + $0x30] sm:$0xff]
        %v2185 = vld [vmem:[%s3 + $0x38] sm:$0xff]
        %v2186 = vld [vmem:[%s3 + $0x40] sm:$0xff]
        %v2187 = vld [vmem:[%s3 + $0x48] sm:$0xff]
        %v2188 = vld [vmem:[%s3 + $0x50] sm:$0xff]
        %v2189 = vld [vmem:[%s3 + $0x58] sm:$0xff]
        %v2190 = vld [vmem:[%s3 + $0x60] sm:$0xff]
        %v2191 = vld [vmem:[%s3 + $0x68] sm:$0xff]
        %v2192 = vld [vmem:[%s3 + $0x70] sm:$0xff]
        %v2193 = vld [vmem:[%s3 + $0x78] sm:$0xff]
        %v2194 = vld [vmem:[%s3 + $0x80] sm:$0xff]
        %v2195 = vld [vmem:[%s3 + $0x88] sm:$0xff]
        %v2196 = vld [vmem:[%s3 + $0x90] sm:$0xff]
        %v2197 = vld [vmem:[%s3 + $0x98] sm:$0xff]
        %v2198 = vld [vmem:[%s3 + $0xa0] sm:$0xff]
        %v2199 = vld [vmem:[%s3 + $0xa8] sm:$0xff]
        %v2200 = vld [vmem:[%s3 + $0xb0] sm:$0xff]
        %v2201 = vld [vmem:[%s3 + $0xb8] sm:$0xff]
        %v2202 = vld [vmem:[%s3 + $0xc0] sm:$0xff]
        %v2203 = vld [vmem:[%s3 + $0xc8] sm:$0xff]
        %v2204 = vld [vmem:[%s3 + $0xd0] sm:$0xff]
        %v2205 = vld [vmem:[%s3 + $0xd8] sm:$0xff]
        %v2206 = vld [vmem:[%s3 + $0xe0] sm:$0xff]
        %v2207 = vld [vmem:[%s3 + $0xe8] sm:$0xff]
        %v2208 = vld [vmem:[%s3 + $0xf0] sm:$0xff]
        %v2209 = vld [vmem:[%s3 + $0xf8] sm:$0xff]
        %v2242 = vunpack.c.l.b16 %v2178
        %v2243 = vunpack.c.h.b16 %v2178
        %v2244 = vunpack.c.l.b16 %v2179
        %v2245 = vunpack.c.h.b16 %v2179
        %v2246 = vunpack.c.l.b16 %v2180
        %v2247 = vunpack.c.h.b16 %v2180
        %v2248 = vunpack.c.l.b16 %v2181
        %v2249 = vunpack.c.h.b16 %v2181
        %v2250 = vunpack.c.l.b16 %v2182
        %v2251 = vunpack.c.h.b16 %v2182
        %v2252 = vunpack.c.l.b16 %v2183
        %v2253 = vunpack.c.h.b16 %v2183
        %v2254 = vunpack.c.l.b16 %v2184
        %v2255 = vunpack.c.h.b16 %v2184
        %v2256 = vunpack.c.l.b16 %v2185
        %v2257 = vunpack.c.h.b16 %v2185
        %v2258 = vunpack.c.l.b16 %v2186
        %v2259 = vunpack.c.h.b16 %v2186
        %v2260 = vunpack.c.l.b16 %v2187
        %v2261 = vunpack.c.h.b16 %v2187
        %v2262 = vunpack.c.l.b16 %v2188
        %v2263 = vunpack.c.h.b16 %v2188
        %v2264 = vunpack.c.l.b16 %v2189
        %v2265 = vunpack.c.h.b16 %v2189
        %v2266 = vunpack.c.l.b16 %v2190
        %v2267 = vunpack.c.h.b16 %v2190
        %v2268 = vunpack.c.l.b16 %v2191
        %v2269 = vunpack.c.h.b16 %v2191
        %v2270 = vunpack.c.l.b16 %v2192
        %v2271 = vunpack.c.h.b16 %v2192
        %v2272 = vunpack.c.l.b16 %v2193
        %v2273 = vunpack.c.h.b16 %v2193
        %v2274 = vunpack.c.l.b16 %v2194
        %v2275 = vunpack.c.h.b16 %v2194
        %v2276 = vunpack.c.l.b16 %v2195
        %v2277 = vunpack.c.h.b16 %v2195
        %v2278 = vunpack.c.l.b16 %v2196
        %v2279 = vunpack.c.h.b16 %v2196
        %v2280 = vunpack.c.l.b16 %v2197
        %v2281 = vunpack.c.h.b16 %v2197
        %v2282 = vunpack.c.l.b16 %v2198
        %v2283 = vunpack.c.h.b16 %v2198
        %v2284 = vunpack.c.l.b16 %v2199
        %v2285 = vunpack.c.h.b16 %v2199
        %v2286 = vunpack.c.l.b16 %v2200
        %v2287 = vunpack.c.h.b16 %v2200
        %v2288 = vunpack.c.l.b16 %v2201
        %v2289 = vunpack.c.h.b16 %v2201
        %v2290 = vunpack.c.l.b16 %v2202
        %v2291 = vunpack.c.h.b16 %v2202
        %v2292 = vunpack.c.l.b16 %v2203
        %v2293 = vunpack.c.h.b16 %v2203
        %v2294 = vunpack.c.l.b16 %v2204
        %v2295 = vunpack.c.h.b16 %v2204
        %v2296 = vunpack.c.l.b16 %v2205
        %v2297 = vunpack.c.h.b16 %v2205
        %v2298 = vunpack.c.l.b16 %v2206
        %v2299 = vunpack.c.h.b16 %v2206
        %v2300 = vunpack.c.l.b16 %v2207
        %v2301 = vunpack.c.h.b16 %v2207
        %v2302 = vunpack.c.l.b16 %v2208
        %v2303 = vunpack.c.h.b16 %v2208
        %v2304 = vunpack.c.l.b16 %v2209
        %v2305 = vunpack.c.h.b16 %v2209
        %v2306 = vpack.c.b16 %v2246, %v2242
        %v2307 = vpack.c.b16 %v2247, %v2243
        %v2308 = vpack.c.b16 %v2248, %v2244
        %v2309 = vpack.c.b16 %v2249, %v2245
        %v2310 = vpack.c.b16 %v2254, %v2250
        %v2311 = vpack.c.b16 %v2255, %v2251
        %v2312 = vpack.c.b16 %v2256, %v2252
        %v2313 = vpack.c.b16 %v2257, %v2253
        %v2314 = vpack.c.b16 %v2262, %v2258
        %v2315 = vpack.c.b16 %v2263, %v2259
        %v2316 = vpack.c.b16 %v2264, %v2260
        %v2317 = vpack.c.b16 %v2265, %v2261
        %v2318 = vpack.c.b16 %v2270, %v2266
        %v2319 = vpack.c.b16 %v2271, %v2267
        %v2320 = vpack.c.b16 %v2272, %v2268
        %v2321 = vpack.c.b16 %v2273, %v2269
        %v2322 = vpack.c.b16 %v2278, %v2274
        %v2323 = vpack.c.b16 %v2279, %v2275
        %v2324 = vpack.c.b16 %v2280, %v2276
        %v2325 = vpack.c.b16 %v2281, %v2277
        %v2326 = vpack.c.b16 %v2286, %v2282
        %v2327 = vpack.c.b16 %v2287, %v2283
        %v2328 = vpack.c.b16 %v2288, %v2284
        %v2329 = vpack.c.b16 %v2289, %v2285
        %v2330 = vpack.c.b16 %v2294, %v2290
        %v2331 = vpack.c.b16 %v2295, %v2291
        %v2332 = vpack.c.b16 %v2296, %v2292
        %v2333 = vpack.c.b16 %v2297, %v2293
        %v2334 = vpack.c.b16 %v2302, %v2298
        %v2335 = vpack.c.b16 %v2303, %v2299
        %v2336 = vpack.c.b16 %v2304, %v2300
        %v2337 = vpack.c.b16 %v2305, %v2301
        %2370 = vmatprep.subr.bf16.mxu0 %v2307
        %2371 = vmatpush1.bf16.msra.mxu0 %v2306
        %2372 = vmatprep.subr.bf16.mxu0 %v2311
        %2373 = vmatpush1.bf16.msra.mxu0 %v2310
        %2374 = vmatprep.subr.bf16.mxu0 %v2315
        %2375 = vmatpush1.bf16.msra.mxu0 %v2314
        %2376 = vmatprep.subr.bf16.mxu0 %v2319
        %2377 = vmatpush1.bf16.msra.mxu0 %v2318
        %2378 = vmatprep.subr.bf16.mxu0 %v2323
        %2379 = vmatpush1.bf16.msra.mxu0 %v2322
        %2380 = vmatprep.subr.bf16.mxu0 %v2327
        %2381 = vmatpush1.bf16.msra.mxu0 %v2326
        %2382 = vmatprep.subr.bf16.mxu0 %v2331
        %2383 = vmatpush1.bf16.msra.mxu0 %v2330
        %2384 = vmatprep.subr.bf16.mxu0 %v2335
        %2385 = vmatpush1.bf16.msra.mxu0 %v2334
        %2386 = vmatprep.subr.bf16.mxu0 0
        %2387 = vmatpush1.bf16.msra.mxu0 0
        %2388 = vmatprep.subr.bf16.mxu0 0
        %2389 = vmatpush1.bf16.msra.mxu0 0
        %2390 = vmatprep.subr.bf16.mxu0 0
        %2391 = vmatpush1.bf16.msra.mxu0 0
        %2392 = vmatprep.subr.bf16.mxu0 0
        %2393 = vmatpush1.bf16.msra.mxu0 0
        %2394 = vmatprep.subr.bf16.mxu0 0
        %2395 = vmatpush1.bf16.msra.mxu0 0
        %2396 = vmatprep.subr.bf16.mxu0 0
        %2397 = vmatpush1.bf16.msra.mxu0 0
        %2398 = vmatprep.subr.bf16.mxu0 0
        %2399 = vmatpush1.bf16.msra.mxu0 0
        %2400 = vmatprep.subr.bf16.mxu0 0
        %2401 = vmatpush1.bf16.msra.mxu0 0
        %2402 = vmatprep.mubr.bf16.mxu0 0
        %2403 = vmatmul.mubr.bf16.gmra.mrb[0].mxu0 %v1571
        %v2404 = vpop.f32.mrb[0].mxu0
        %v2405 = vadd.f32 0.0, %v2404
        %v2406 = vpop.f32.mrb[0].mxu0
        %v2407 = vadd.f32 0.0, %v2406
        %v2408 = vpop.f32.mrb[0].mxu0
        %v2409 = vpop.f32.mrb[0].mxu0
        %2410 = vdwg.mxu0
        %2411 = vmatprep.subr.bf16.mxu0 %v2309
        %2412 = vmatpush1.bf16.msra.mxu0 %v2308
        %2413 = vmatprep.subr.bf16.mxu0 %v2313
        %2414 = vmatpush1.bf16.msra.mxu0 %v2312
        %2415 = vmatprep.subr.bf16.mxu0 %v2317
        %2416 = vmatpush1.bf16.msra.mxu0 %v2316
        %2417 = vmatprep.subr.bf16.mxu0 %v2321
        %2418 = vmatpush1.bf16.msra.mxu0 %v2320
        %2419 = vmatprep.subr.bf16.mxu0 %v2325
        %2420 = vmatpush1.bf16.msra.mxu0 %v2324
        %2421 = vmatprep.subr.bf16.mxu0 %v2329
        %2422 = vmatpush1.bf16.msra.mxu0 %v2328
        %2423 = vmatprep.subr.bf16.mxu0 %v2333
        %2424 = vmatpush1.bf16.msra.mxu0 %v2332
        %2425 = vmatprep.subr.bf16.mxu0 %v2337
        %2426 = vmatpush1.bf16.msra.mxu0 %v2336
        %2427 = vmatprep.subr.bf16.mxu0 0
        %2428 = vmatpush1.bf16.msra.mxu0 0
        %2429 = vmatprep.subr.bf16.mxu0 0
        %2430 = vmatpush1.bf16.msra.mxu0 0
        %2431 = vmatprep.subr.bf16.mxu0 0
        %2432 = vmatpush1.bf16.msra.mxu0 0
        %2433 = vmatprep.subr.bf16.mxu0 0
        %2434 = vmatpush1.bf16.msra.mxu0 0
        %2435 = vmatprep.subr.bf16.mxu0 0
        %2436 = vmatpush1.bf16.msra.mxu0 0
        %2437 = vmatprep.subr.bf16.mxu0 0
        %2438 = vmatpush1.bf16.msra.mxu0 0
        %2439 = vmatprep.subr.bf16.mxu0 0
        %2440 = vmatpush1.bf16.msra.mxu0 0
        %2441 = vmatprep.subr.bf16.mxu0 0
        %2442 = vmatpush1.bf16.msra.mxu0 0
        %2443 = vmatprep.mubr.bf16.mxu0 0
        %2444 = vmatmul.mubr.bf16.gmra.mrb[0].mxu0 %v1571
        %v2445 = vpop.f32.mrb[0].mxu0
        %v2446 = vadd.f32 0.0, %v2445
        %v2447 = vpop.f32.mrb[0].mxu0
        %v2448 = vadd.f32 0.0, %v2447
        %v2449 = vpop.f32.mrb[0].mxu0
        %v2450 = vpop.f32.mrb[0].mxu0
        %2451 = vdwg.mxu0
        %v2452 = vadd.f32 %v2174, %v2405
        %v2453 = vadd.f32 %v2175, %v2407
        %v2454 = vadd.f32 %v2176, %v2446
        %v2455 = vadd.f32 %v2177, %v2448
        %v2456 = vxor.u32 %v2452, 2147483648
        %v2457 = vmul.f32 %v2456, 1.442695
        %v2458 = vpow.pop %v2457
        %v2459 = vadd.f32 %v2458, 1.0
        %v2460 = vrcp.pop %v2459
        %v2461 = vmul.f32 1.0, %v2460
        %v2462 = vxor.u32 %v2453, 2147483648
        %v2463 = vmul.f32 %v2462, 1.442695
        %v2464 = vpow.pop %v2463
        %v2465 = vadd.f32 %v2464, 1.0
        %v2466 = vrcp.pop %v2465
        %v2467 = vmul.f32 1.0, %v2466
        %v2468 = vtanh.pop %v2454
        %v2469 = vxor.u32 %v2455, 2147483648
        %v2470 = vmul.f32 %v2469, 1.442695
        %v2471 = vpow.pop %v2470
        %v2472 = vadd.f32 %v2471, 1.0
        %v2473 = vrcp.pop %v2472
        %v2474 = vmul.f32 1.0, %v2473
        %v2475 = vmul.f32 %v2467, %v1568
        %v2476 = vmul.f32 %v2461, %v2468
        %v2477 = vadd.f32 %v2475, %v2476
        %v2478 = vtanh.pop %v2477
        %v2479 = vmul.f32 %v2474, %v2478
        %v2480 = vpack.c.bf16 %v2479, %v2479
        %v2481 = vld [vmem:[%s4] sm:$0xff]
        %v2482 = vld [vmem:[%s4 + $0x8] sm:$0xff]
        %v2483 = vld [vmem:[%s4 + $0x10] sm:$0xff]
        %v2484 = vld [vmem:[%s4 + $0x18] sm:$0xff]
        %v2485 = vld [vmem:[%s4 + $0x20] sm:$0xff]
        %v2486 = vld [vmem:[%s4 + $0x28] sm:$0xff]
        %v2487 = vld [vmem:[%s4 + $0x30] sm:$0xff]
        %v2488 = vld [vmem:[%s4 + $0x38] sm:$0xff]
        %v2489 = vld [vmem:[%s4 + $0x40] sm:$0xff]
        %v2490 = vld [vmem:[%s4 + $0x48] sm:$0xff]
        %v2491 = vld [vmem:[%s4 + $0x50] sm:$0xff]
        %v2492 = vld [vmem:[%s4 + $0x58] sm:$0xff]
        %v2493 = vld [vmem:[%s4 + $0x60] sm:$0xff]
        %v2494 = vld [vmem:[%s4 + $0x68] sm:$0xff]
        %v2495 = vld [vmem:[%s4 + $0x70] sm:$0xff]
        %v2496 = vld [vmem:[%s4 + $0x78] sm:$0xff]
        %v2497 = vld [vmem:[%s4 + $0x80] sm:$0xff]
        %v2498 = vld [vmem:[%s4 + $0x88] sm:$0xff]
        %v2499 = vld [vmem:[%s4 + $0x90] sm:$0xff]
        %v2500 = vld [vmem:[%s4 + $0x98] sm:$0xff]
        %v2501 = vld [vmem:[%s4 + $0xa0] sm:$0xff]
        %v2502 = vld [vmem:[%s4 + $0xa8] sm:$0xff]
        %v2503 = vld [vmem:[%s4 + $0xb0] sm:$0xff]
        %v2504 = vld [vmem:[%s4 + $0xb8] sm:$0xff]
        %v2505 = vld [vmem:[%s4 + $0xc0] sm:$0xff]
        %v2506 = vld [vmem:[%s4 + $0xc8] sm:$0xff]
        %v2507 = vld [vmem:[%s4 + $0xd0] sm:$0xff]
        %v2508 = vld [vmem:[%s4 + $0xd8] sm:$0xff]
        %v2509 = vld [vmem:[%s4 + $0xe0] sm:$0xff]
        %v2510 = vld [vmem:[%s4 + $0xe8] sm:$0xff]
        %v2511 = vld [vmem:[%s4 + $0xf0] sm:$0xff]
        %v2512 = vld [vmem:[%s4 + $0xf8] sm:$0xff]
        %v2513 = vld [vmem:[%s5] sm:$0xff]
        %v2514 = vld [vmem:[%s5 + $0x8] sm:$0xff]
        %v2515 = vld [vmem:[%s5 + $0x10] sm:$0xff]
        %v2516 = vld [vmem:[%s5 + $0x18] sm:$0xff]
        %v2517 = vld [vmem:[%s5 + $0x20] sm:$0xff]
        %v2518 = vld [vmem:[%s5 + $0x28] sm:$0xff]
        %v2519 = vld [vmem:[%s5 + $0x30] sm:$0xff]
        %v2520 = vld [vmem:[%s5 + $0x38] sm:$0xff]
        %v2521 = vld [vmem:[%s5 + $0x40] sm:$0xff]
        %v2522 = vld [vmem:[%s5 + $0x48] sm:$0xff]
        %v2523 = vld [vmem:[%s5 + $0x50] sm:$0xff]
        %v2524 = vld [vmem:[%s5 + $0x58] sm:$0xff]
        %v2525 = vld [vmem:[%s5 + $0x60] sm:$0xff]
        %v2526 = vld [vmem:[%s5 + $0x68] sm:$0xff]
        %v2527 = vld [vmem:[%s5 + $0x70] sm:$0xff]
        %v2528 = vld [vmem:[%s5 + $0x78] sm:$0xff]
        %v2529 = vld [vmem:[%s5 + $0x80] sm:$0xff]
        %v2530 = vld [vmem:[%s5 + $0x88] sm:$0xff]
        %v2531 = vld [vmem:[%s5 + $0x90] sm:$0xff]
        %v2532 = vld [vmem:[%s5 + $0x98] sm:$0xff]
        %v2533 = vld [vmem:[%s5 + $0xa0] sm:$0xff]
        %v2534 = vld [vmem:[%s5 + $0xa8] sm:$0xff]
        %v2535 = vld [vmem:[%s5 + $0xb0] sm:$0xff]
        %v2536 = vld [vmem:[%s5 + $0xb8] sm:$0xff]
        %v2537 = vld [vmem:[%s5 + $0xc0] sm:$0xff]
        %v2538 = vld [vmem:[%s5 + $0xc8] sm:$0xff]
        %v2539 = vld [vmem:[%s5 + $0xd0] sm:$0xff]
        %v2540 = vld [vmem:[%s5 + $0xd8] sm:$0xff]
        %v2541 = vld [vmem:[%s5 + $0xe0] sm:$0xff]
        %v2542 = vld [vmem:[%s5 + $0xe8] sm:$0xff]
        %v2543 = vld [vmem:[%s5 + $0xf0] sm:$0xff]
        %v2544 = vld [vmem:[%s5 + $0xf8] sm:$0xff]
        %v2577 = vunpack.c.l.b16 %v2513
        %v2578 = vunpack.c.h.b16 %v2513
        %v2579 = vunpack.c.l.b16 %v2514
        %v2580 = vunpack.c.h.b16 %v2514
        %v2581 = vunpack.c.l.b16 %v2515
        %v2582 = vunpack.c.h.b16 %v2515
        %v2583 = vunpack.c.l.b16 %v2516
        %v2584 = vunpack.c.h.b16 %v2516
        %v2585 = vunpack.c.l.b16 %v2517
        %v2586 = vunpack.c.h.b16 %v2517
        %v2587 = vunpack.c.l.b16 %v2518
        %v2588 = vunpack.c.h.b16 %v2518
        %v2589 = vunpack.c.l.b16 %v2519
        %v2590 = vunpack.c.h.b16 %v2519
        %v2591 = vunpack.c.l.b16 %v2520
        %v2592 = vunpack.c.h.b16 %v2520
        %v2593 = vunpack.c.l.b16 %v2521
        %v2594 = vunpack.c.h.b16 %v2521
        %v2595 = vunpack.c.l.b16 %v2522
        %v2596 = vunpack.c.h.b16 %v2522
        %v2597 = vunpack.c.l.b16 %v2523
        %v2598 = vunpack.c.h.b16 %v2523
        %v2599 = vunpack.c.l.b16 %v2524
        %v2600 = vunpack.c.h.b16 %v2524
        %v2601 = vunpack.c.l.b16 %v2525
        %v2602 = vunpack.c.h.b16 %v2525
        %v2603 = vunpack.c.l.b16 %v2526
        %v2604 = vunpack.c.h.b16 %v2526
        %v2605 = vunpack.c.l.b16 %v2527
        %v2606 = vunpack.c.h.b16 %v2527
        %v2607 = vunpack.c.l.b16 %v2528
        %v2608 = vunpack.c.h.b16 %v2528
        %v2609 = vunpack.c.l.b16 %v2529
        %v2610 = vunpack.c.h.b16 %v2529
        %v2611 = vunpack.c.l.b16 %v2530
        %v2612 = vunpack.c.h.b16 %v2530
        %v2613 = vunpack.c.l.b16 %v2531
        %v2614 = vunpack.c.h.b16 %v2531
        %v2615 = vunpack.c.l.b16 %v2532
        %v2616 = vunpack.c.h.b16 %v2532
        %v2617 = vunpack.c.l.b16 %v2533
        %v2618 = vunpack.c.h.b16 %v2533
        %v2619 = vunpack.c.l.b16 %v2534
        %v2620 = vunpack.c.h.b16 %v2534
        %v2621 = vunpack.c.l.b16 %v2535
        %v2622 = vunpack.c.h.b16 %v2535
        %v2623 = vunpack.c.l.b16 %v2536
        %v2624 = vunpack.c.h.b16 %v2536
        %v2625 = vunpack.c.l.b16 %v2537
        %v2626 = vunpack.c.h.b16 %v2537
        %v2627 = vunpack.c.l.b16 %v2538
        %v2628 = vunpack.c.h.b16 %v2538
        %v2629 = vunpack.c.l.b16 %v2539
        %v2630 = vunpack.c.h.b16 %v2539
        %v2631 = vunpack.c.l.b16 %v2540
        %v2632 = vunpack.c.h.b16 %v2540
        %v2633 = vunpack.c.l.b16 %v2541
        %v2634 = vunpack.c.h.b16 %v2541
        %v2635 = vunpack.c.l.b16 %v2542
        %v2636 = vunpack.c.h.b16 %v2542
        %v2637 = vunpack.c.l.b16 %v2543
        %v2638 = vunpack.c.h.b16 %v2543
        %v2639 = vunpack.c.l.b16 %v2544
        %v2640 = vunpack.c.h.b16 %v2544
        %v2641 = vpack.c.b16 %v2581, %v2577
        %v2642 = vpack.c.b16 %v2582, %v2578
        %v2643 = vpack.c.b16 %v2583, %v2579
        %v2644 = vpack.c.b16 %v2584, %v2580
        %v2645 = vpack.c.b16 %v2589, %v2585
        %v2646 = vpack.c.b16 %v2590, %v2586
        %v2647 = vpack.c.b16 %v2591, %v2587
        %v2648 = vpack.c.b16 %v2592, %v2588
        %v2649 = vpack.c.b16 %v2597, %v2593
        %v2650 = vpack.c.b16 %v2598, %v2594
        %v2651 = vpack.c.b16 %v2599, %v2595
        %v2652 = vpack.c.b16 %v2600, %v2596
        %v2653 = vpack.c.b16 %v2605, %v2601
        %v2654 = vpack.c.b16 %v2606, %v2602
        %v2655 = vpack.c.b16 %v2607, %v2603
        %v2656 = vpack.c.b16 %v2608, %v2604
        %v2657 = vpack.c.b16 %v2613, %v2609
        %v2658 = vpack.c.b16 %v2614, %v2610
        %v2659 = vpack.c.b16 %v2615, %v2611
        %v2660 = vpack.c.b16 %v2616, %v2612
        %v2661 = vpack.c.b16 %v2621, %v2617
        %v2662 = vpack.c.b16 %v2622, %v2618
        %v2663 = vpack.c.b16 %v2623, %v2619
        %v2664 = vpack.c.b16 %v2624, %v2620
        %v2665 = vpack.c.b16 %v2629, %v2625
        %v2666 = vpack.c.b16 %v2630, %v2626
        %v2667 = vpack.c.b16 %v2631, %v2627
        %v2668 = vpack.c.b16 %v2632, %v2628
        %v2669 = vpack.c.b16 %v2637, %v2633
        %v2670 = vpack.c.b16 %v2638, %v2634
        %v2671 = vpack.c.b16 %v2639, %v2635
        %v2672 = vpack.c.b16 %v2640, %v2636
        %2705 = vmatprep.subr.bf16.mxu0 %v2642
        %2706 = vmatpush1.bf16.msra.mxu0 %v2641
        %2707 = vmatprep.subr.bf16.mxu0 %v2646
        %2708 = vmatpush1.bf16.msra.mxu0 %v2645
        %2709 = vmatprep.subr.bf16.mxu0 %v2650
        %2710 = vmatpush1.bf16.msra.mxu0 %v2649
        %2711 = vmatprep.subr.bf16.mxu0 %v2654
        %2712 = vmatpush1.bf16.msra.mxu0 %v2653
        %2713 = vmatprep.subr.bf16.mxu0 %v2658
        %2714 = vmatpush1.bf16.msra.mxu0 %v2657
        %2715 = vmatprep.subr.bf16.mxu0 %v2662
        %2716 = vmatpush1.bf16.msra.mxu0 %v2661
        %2717 = vmatprep.subr.bf16.mxu0 %v2666
        %2718 = vmatpush1.bf16.msra.mxu0 %v2665
        %2719 = vmatprep.subr.bf16.mxu0 %v2670
        %2720 = vmatpush1.bf16.msra.mxu0 %v2669
        %2721 = vmatprep.subr.bf16.mxu0 0
        %2722 = vmatpush1.bf16.msra.mxu0 0
        %2723 = vmatprep.subr.bf16.mxu0 0
        %2724 = vmatpush1.bf16.msra.mxu0 0
        %2725 = vmatprep.subr.bf16.mxu0 0
        %2726 = vmatpush1.bf16.msra.mxu0 0
        %2727 = vmatprep.subr.bf16.mxu0 0
        %2728 = vmatpush1.bf16.msra.mxu0 0
        %2729 = vmatprep.subr.bf16.mxu0 0
        %2730 = vmatpush1.bf16.msra.mxu0 0
        %2731 = vmatprep.subr.bf16.mxu0 0
        %2732 = vmatpush1.bf16.msra.mxu0 0
        %2733 = vmatprep.subr.bf16.mxu0 0
        %2734 = vmatpush1.bf16.msra.mxu0 0
        %2735 = vmatprep.subr.bf16.mxu0 0
        %2736 = vmatpush1.bf16.msra.mxu0 0
        %2737 = vmatprep.mubr.bf16.mxu0 0
        %2738 = vmatmul.mubr.bf16.gmra.mrb[0].mxu0 %v2170
        %v2739 = vpop.f32.mrb[0].mxu0
        %v2740 = vadd.f32 0.0, %v2739
        %v2741 = vpop.f32.mrb[0].mxu0
        %v2742 = vadd.f32 0.0, %v2741
        %v2743 = vpop.f32.mrb[0].mxu0
        %v2744 = vpop.f32.mrb[0].mxu0
        %2745 = vdwg.mxu0
        %2746 = vmatprep.subr.bf16.mxu0 %v2644
        %2747 = vmatpush1.bf16.msra.mxu0 %v2643
        %2748 = vmatprep.subr.bf16.mxu0 %v2648
        %2749 = vmatpush1.bf16.msra.mxu0 %v2647
        %2750 = vmatprep.subr.bf16.mxu0 %v2652
        %2751 = vmatpush1.bf16.msra.mxu0 %v2651
        %2752 = vmatprep.subr.bf16.mxu0 %v2656
        %2753 = vmatpush1.bf16.msra.mxu0 %v2655
        %2754 = vmatprep.subr.bf16.mxu0 %v2660
        %2755 = vmatpush1.bf16.msra.mxu0 %v2659
        %2756 = vmatprep.subr.bf16.mxu0 %v2664
        %2757 = vmatpush1.bf16.msra.mxu0 %v2663
        %2758 = vmatprep.subr.bf16.mxu0 %v2668
        %2759 = vmatpush1.bf16.msra.mxu0 %v2667
        %2760 = vmatprep.subr.bf16.mxu0 %v2672
        %2761 = vmatpush1.bf16.msra.mxu0 %v2671
        %2762 = vmatprep.subr.bf16.mxu0 0
        %2763 = vmatpush1.bf16.msra.mxu0 0
        %2764 = vmatprep.subr.bf16.mxu0 0
        %2765 = vmatpush1.bf16.msra.mxu0 0
        %2766 = vmatprep.subr.bf16.mxu0 0
        %2767 = vmatpush1.bf16.msra.mxu0 0
        %2768 = vmatprep.subr.bf16.mxu0 0
        %2769 = vmatpush1.bf16.msra.mxu0 0
        %2770 = vmatprep.subr.bf16.mxu0 0
        %2771 = vmatpush1.bf16.msra.mxu0 0
        %2772 = vmatprep.subr.bf16.mxu0 0
        %2773 = vmatpush1.bf16.msra.mxu0 0
        %2774 = vmatprep.subr.bf16.mxu0 0
        %2775 = vmatpush1.bf16.msra.mxu0 0
        %2776 = vmatprep.subr.bf16.mxu0 0
        %2777 = vmatpush1.bf16.msra.mxu0 0
        %2778 = vmatprep.mubr.bf16.mxu0 0
        %2779 = vmatmul.mubr.bf16.gmra.mrb[0].mxu0 %v2170
        %v2780 = vpop.f32.mrb[0].mxu0
        %v2781 = vadd.f32 0.0, %v2780
        %v2782 = vpop.f32.mrb[0].mxu0
        %v2783 = vadd.f32 0.0, %v2782
        %v2784 = vpop.f32.mrb[0].mxu0
        %v2785 = vpop.f32.mrb[0].mxu0
        %2786 = vdwg.mxu0
        %v2819 = vunpack.c.l.b16 %v2481
        %v2820 = vunpack.c.h.b16 %v2481
        %v2821 = vunpack.c.l.b16 %v2482
        %v2822 = vunpack.c.h.b16 %v2482
        %v2823 = vunpack.c.l.b16 %v2483
        %v2824 = vunpack.c.h.b16 %v2483
        %v2825 = vunpack.c.l.b16 %v2484
        %v2826 = vunpack.c.h.b16 %v2484
        %v2827 = vunpack.c.l.b16 %v2485
        %v2828 = vunpack.c.h.b16 %v2485
        %v2829 = vunpack.c.l.b16 %v2486
        %v2830 = vunpack.c.h.b16 %v2486
        %v2831 = vunpack.c.l.b16 %v2487
        %v2832 = vunpack.c.h.b16 %v2487
        %v2833 = vunpack.c.l.b16 %v2488
        %v2834 = vunpack.c.h.b16 %v2488
        %v2835 = vunpack.c.l.b16 %v2489
        %v2836 = vunpack.c.h.b16 %v2489
        %v2837 = vunpack.c.l.b16 %v2490
        %v2838 = vunpack.c.h.b16 %v2490
        %v2839 = vunpack.c.l.b16 %v2491
        %v2840 = vunpack.c.h.b16 %v2491
        %v2841 = vunpack.c.l.b16 %v2492
        %v2842 = vunpack.c.h.b16 %v2492
        %v2843 = vunpack.c.l.b16 %v2493
        %v2844 = vunpack.c.h.b16 %v2493
        %v2845 = vunpack.c.l.b16 %v2494
        %v2846 = vunpack.c.h.b16 %v2494
        %v2847 = vunpack.c.l.b16 %v2495
        %v2848 = vunpack.c.h.b16 %v2495
        %v2849 = vunpack.c.l.b16 %v2496
        %v2850 = vunpack.c.h.b16 %v2496
        %v2851 = vunpack.c.l.b16 %v2497
        %v2852 = vunpack.c.h.b16 %v2497
        %v2853 = vunpack.c.l.b16 %v2498
        %v2854 = vunpack.c.h.b16 %v2498
        %v2855 = vunpack.c.l.b16 %v2499
        %v2856 = vunpack.c.h.b16 %v2499
        %v2857 = vunpack.c.l.b16 %v2500
        %v2858 = vunpack.c.h.b16 %v2500
        %v2859 = vunpack.c.l.b16 %v2501
        %v2860 = vunpack.c.h.b16 %v2501
        %v2861 = vunpack.c.l.b16 %v2502
        %v2862 = vunpack.c.h.b16 %v2502
        %v2863 = vunpack.c.l.b16 %v2503
        %v2864 = vunpack.c.h.b16 %v2503
        %v2865 = vunpack.c.l.b16 %v2504
        %v2866 = vunpack.c.h.b16 %v2504
        %v2867 = vunpack.c.l.b16 %v2505
        %v2868 = vunpack.c.h.b16 %v2505
        %v2869 = vunpack.c.l.b16 %v2506
        %v2870 = vunpack.c.h.b16 %v2506
        %v2871 = vunpack.c.l.b16 %v2507
        %v2872 = vunpack.c.h.b16 %v2507
        %v2873 = vunpack.c.l.b16 %v2508
        %v2874 = vunpack.c.h.b16 %v2508
        %v2875 = vunpack.c.l.b16 %v2509
        %v2876 = vunpack.c.h.b16 %v2509
        %v2877 = vunpack.c.l.b16 %v2510
        %v2878 = vunpack.c.h.b16 %v2510
        %v2879 = vunpack.c.l.b16 %v2511
        %v2880 = vunpack.c.h.b16 %v2511
        %v2881 = vunpack.c.l.b16 %v2512
        %v2882 = vunpack.c.h.b16 %v2512
        %v2883 = vpack.c.b16 %v2823, %v2819
        %v2884 = vpack.c.b16 %v2824, %v2820
        %v2885 = vpack.c.b16 %v2825, %v2821
        %v2886 = vpack.c.b16 %v2826, %v2822
        %v2887 = vpack.c.b16 %v2831, %v2827
        %v2888 = vpack.c.b16 %v2832, %v2828
        %v2889 = vpack.c.b16 %v2833, %v2829
        %v2890 = vpack.c.b16 %v2834, %v2830
        %v2891 = vpack.c.b16 %v2839, %v2835
        %v2892 = vpack.c.b16 %v2840, %v2836
        %v2893 = vpack.c.b16 %v2841, %v2837
        %v2894 = vpack.c.b16 %v2842, %v2838
        %v2895 = vpack.c.b16 %v2847, %v2843
        %v2896 = vpack.c.b16 %v2848, %v2844
        %v2897 = vpack.c.b16 %v2849, %v2845
        %v2898 = vpack.c.b16 %v2850, %v2846
        %v2899 = vpack.c.b16 %v2855, %v2851
        %v2900 = vpack.c.b16 %v2856, %v2852
        %v2901 = vpack.c.b16 %v2857, %v2853
        %v2902 = vpack.c.b16 %v2858, %v2854
        %v2903 = vpack.c.b16 %v2863, %v2859
        %v2904 = vpack.c.b16 %v2864, %v2860
        %v2905 = vpack.c.b16 %v2865, %v2861
        %v2906 = vpack.c.b16 %v2866, %v2862
        %v2907 = vpack.c.b16 %v2871, %v2867
        %v2908 = vpack.c.b16 %v2872, %v2868
        %v2909 = vpack.c.b16 %v2873, %v2869
        %v2910 = vpack.c.b16 %v2874, %v2870
        %v2911 = vpack.c.b16 %v2879, %v2875
        %v2912 = vpack.c.b16 %v2880, %v2876
        %v2913 = vpack.c.b16 %v2881, %v2877
        %v2914 = vpack.c.b16 %v2882, %v2878
        %2947 = vmatprep.subr.bf16.mxu0 %v2884
        %2948 = vmatpush1.bf16.msra.mxu0 %v2883
        %2949 = vmatprep.subr.bf16.mxu0 %v2888
        %2950 = vmatpush1.bf16.msra.mxu0 %v2887
        %2951 = vmatprep.subr.bf16.mxu0 %v2892
        %2952 = vmatpush1.bf16.msra.mxu0 %v2891
        %2953 = vmatprep.subr.bf16.mxu0 %v2896
        %2954 = vmatpush1.bf16.msra.mxu0 %v2895
        %2955 = vmatprep.subr.bf16.mxu0 %v2900
        %2956 = vmatpush1.bf16.msra.mxu0 %v2899
        %2957 = vmatprep.subr.bf16.mxu0 %v2904
        %2958 = vmatpush1.bf16.msra.mxu0 %v2903
        %2959 = vmatprep.subr.bf16.mxu0 %v2908
        %2960 = vmatpush1.bf16.msra.mxu0 %v2907
        %2961 = vmatprep.subr.bf16.mxu0 %v2912
        %2962 = vmatpush1.bf16.msra.mxu0 %v2911
        %2963 = vmatprep.subr.bf16.mxu0 0
        %2964 = vmatpush1.bf16.msra.mxu0 0
        %2965 = vmatprep.subr.bf16.mxu0 0
        %2966 = vmatpush1.bf16.msra.mxu0 0
        %2967 = vmatprep.subr.bf16.mxu0 0
        %2968 = vmatpush1.bf16.msra.mxu0 0
        %2969 = vmatprep.subr.bf16.mxu0 0
        %2970 = vmatpush1.bf16.msra.mxu0 0
        %2971 = vmatprep.subr.bf16.mxu0 0
        %2972 = vmatpush1.bf16.msra.mxu0 0
        %2973 = vmatprep.subr.bf16.mxu0 0
        %2974 = vmatpush1.bf16.msra.mxu0 0
        %2975 = vmatprep.subr.bf16.mxu0 0
        %2976 = vmatpush1.bf16.msra.mxu0 0
        %2977 = vmatprep.subr.bf16.mxu0 0
        %2978 = vmatpush1.bf16.msra.mxu0 0
        %2979 = vmatprep.mubr.bf16.mxu0 0
        %2980 = vmatmul.mubr.bf16.gmra.mrb[0].mxu0 %v2480
        %v2981 = vpop.f32.mrb[0].mxu0
        %v2982 = vadd.f32 %v2740, %v2981
        %v2983 = vpop.f32.mrb[0].mxu0
        %v2984 = vadd.f32 %v2742, %v2983
        %v2985 = vpop.f32.mrb[0].mxu0
        %v2986 = vpop.f32.mrb[0].mxu0
        %2987 = vdwg.mxu0
        %2988 = vmatprep.subr.bf16.mxu0 %v2886
        %2989 = vmatpush1.bf16.msra.mxu0 %v2885
        %2990 = vmatprep.subr.bf16.mxu0 %v2890
        %2991 = vmatpush1.bf16.msra.mxu0 %v2889
        %2992 = vmatprep.subr.bf16.mxu0 %v2894
        %2993 = vmatpush1.bf16.msra.mxu0 %v2893
        %2994 = vmatprep.subr.bf16.mxu0 %v2898
        %2995 = vmatpush1.bf16.msra.mxu0 %v2897
        %2996 = vmatprep.subr.bf16.mxu0 %v2902
        %2997 = vmatpush1.bf16.msra.mxu0 %v2901
        %2998 = vmatprep.subr.bf16.mxu0 %v2906
        %2999 = vmatpush1.bf16.msra.mxu0 %v2905
        %3000 = vmatprep.subr.bf16.mxu0 %v2910
        %3001 = vmatpush1.bf16.msra.mxu0 %v2909
        %3002 = vmatprep.subr.bf16.mxu0 %v2914
        %3003 = vmatpush1.bf16.msra.mxu0 %v2913
        %3004 = vmatprep.subr.bf16.mxu0 0
        %3005 = vmatpush1.bf16.msra.mxu0 0
        %3006 = vmatprep.subr.bf16.mxu0 0
        %3007 = vmatpush1.bf16.msra.mxu0 0
        %3008 = vmatprep.subr.bf16.mxu0 0
        %3009 = vmatpush1.bf16.msra.mxu0 0
        %3010 = vmatprep.subr.bf16.mxu0 0
        %3011 = vmatpush1.bf16.msra.mxu0 0
        %3012 = vmatprep.subr.bf16.mxu0 0
        %3013 = vmatpush1.bf16.msra.mxu0 0
        %3014 = vmatprep.subr.bf16.mxu0 0
        %3015 = vmatpush1.bf16.msra.mxu0 0
        %3016 = vmatprep.subr.bf16.mxu0 0
        %3017 = vmatpush1.bf16.msra.mxu0 0
        %3018 = vmatprep.subr.bf16.mxu0 0
        %3019 = vmatpush1.bf16.msra.mxu0 0
        %3020 = vmatprep.mubr.bf16.mxu0 0
        %3021 = vmatmul.mubr.bf16.gmra.mrb[0].mxu0 %v2480
        %v3022 = vpop.f32.mrb[0].mxu0
        %v3023 = vadd.f32 %v2781, %v3022
        %v3024 = vpop.f32.mrb[0].mxu0
        %v3025 = vadd.f32 %v2783, %v3024
        %v3026 = vpop.f32.mrb[0].mxu0
        %v3027 = vpop.f32.mrb[0].mxu0
        %3028 = vdwg.mxu0
        %v3029 = vld [vmem:[%s6] sm:$0xf]
        %v3031 = vlaneseq
        %v3032 = vshrl.u32 %v3031, 7
        %v3033 = vsub.s32 0, %v3032
        %v3034 = vrot.slane %v3029, %v3033
        %v3035 = vlaneseq
        %v3036 = vshrl.u32 %v3035, 7
        %v3037 = vsub.s32 1, %v3036
        %v3038 = vrot.slane %v3029, %v3037
        %v3039 = vlaneseq
        %v3040 = vshrl.u32 %v3039, 7
        %v3041 = vsub.s32 2, %v3040
        %v3042 = vrot.slane %v3029, %v3041
        %v3043 = vlaneseq
        %v3044 = vshrl.u32 %v3043, 7
        %v3045 = vsub.s32 3, %v3044
        %v3046 = vrot.slane %v3029, %v3045
        %v3051 = vadd.f32 %v2982, %v3034
        %v3052 = vadd.f32 %v2984, %v3038
        %v3053 = vadd.f32 %v3023, %v3042
        %v3054 = vadd.f32 %v3025, %v3046
        %v3055 = vxor.u32 %v3051, 2147483648
        %v3056 = vmul.f32 %v3055, 1.442695
        %v3057 = vpow.pop %v3056
        %v3058 = vadd.f32 %v3057, 1.0
        %v3059 = vrcp.pop %v3058
        %v3060 = vmul.f32 1.0, %v3059
        %v3061 = vxor.u32 %v3052, 2147483648
        %v3062 = vmul.f32 %v3061, 1.442695
        %v3063 = vpow.pop %v3062
        %v3064 = vadd.f32 %v3063, 1.0
        %v3065 = vrcp.pop %v3064
        %v3066 = vmul.f32 1.0, %v3065
        %v3067 = vtanh.pop %v3053
        %v3068 = vxor.u32 %v3054, 2147483648
        %v3069 = vmul.f32 %v3068, 1.442695
        %v3070 = vpow.pop %v3069
        %v3071 = vadd.f32 %v3070, 1.0
        %v3072 = vrcp.pop %v3071
        %v3073 = vmul.f32 1.0, %v3072
        %v3074 = vmul.f32 %v3066, %v2167
        %v3075 = vmul.f32 %v3060, %v3067
        %v3076 = vadd.f32 %v3074, %v3075
        %v3077 = vtanh.pop %v3076
        %v3078 = vmul.f32 %v3073, %v3077
        %v3079 = vpack.c.bf16 %v3078, %v3078
        %s3080 = scalar_lea.vmem %s334, 8
        %3081 = vst [vmem:[%s3080] sm:$0xf] %v3079
        %s3082 = scalar_lea.vmem %s328, 96
        %v3083 = vld [vmem:[%s3082] sm:$0xff]
        %v3084 = vld [vmem:[%s3082 + $0x8] sm:$0xff]
        %v3085 = vld [vmem:[%s3082 + $0x10] sm:$0xff]
        %v3086 = vld [vmem:[%s3082 + $0x18] sm:$0xff]
        %v3087 = vld [vmem:[%s3] sm:$0xff]
        %v3088 = vld [vmem:[%s3 + $0x8] sm:$0xff]
        %v3089 = vld [vmem:[%s3 + $0x10] sm:$0xff]
        %v3090 = vld [vmem:[%s3 + $0x18] sm:$0xff]
        %v3091 = vld [vmem:[%s3 + $0x20] sm:$0xff]
        %v3092 = vld [vmem:[%s3 + $0x28] sm:$0xff]
        %v3093 = vld [vmem:[%s3 + $0x30] sm:$0xff]
        %v3094 = vld [vmem:[%s3 + $0x38] sm:$0xff]
        %v3095 = vld [vmem:[%s3 + $0x40] sm:$0xff]
        %v3096 = vld [vmem:[%s3 + $0x48] sm:$0xff]
        %v3097 = vld [vmem:[%s3 + $0x50] sm:$0xff]
        %v3098 = vld [vmem:[%s3 + $0x58] sm:$0xff]
        %v3099 = vld [vmem:[%s3 + $0x60] sm:$0xff]
        %v3100 = vld [vmem:[%s3 + $0x68] sm:$0xff]
        %v3101 = vld [vmem:[%s3 + $0x70] sm:$0xff]
        %v3102 = vld [vmem:[%s3 + $0x78] sm:$0xff]
        %v3103 = vld [vmem:[%s3 + $0x80] sm:$0xff]
        %v3104 = vld [vmem:[%s3 + $0x88] sm:$0xff]
        %v3105 = vld [vmem:[%s3 + $0x90] sm:$0xff]
        %v3106 = vld [vmem:[%s3 + $0x98] sm:$0xff]
        %v3107 = vld [vmem:[%s3 + $0xa0] sm:$0xff]
        %v3108 = vld [vmem:[%s3 + $0xa8] sm:$0xff]
        %v3109 = vld [vmem:[%s3 + $0xb0] sm:$0xff]
        %v3110 = vld [vmem:[%s3 + $0xb8] sm:$0xff]
        %v3111 = vld [vmem:[%s3 + $0xc0] sm:$0xff]
        %v3112 = vld [vmem:[%s3 + $0xc8] sm:$0xff]
        %v3113 = vld [vmem:[%s3 + $0xd0] sm:$0xff]
        %v3114 = vld [vmem:[%s3 + $0xd8] sm:$0xff]
        %v3115 = vld [vmem:[%s3 + $0xe0] sm:$0xff]
        %v3116 = vld [vmem:[%s3 + $0xe8] sm:$0xff]
        %v3117 = vld [vmem:[%s3 + $0xf0] sm:$0xff]
        %v3118 = vld [vmem:[%s3 + $0xf8] sm:$0xff]
        %v3151 = vunpack.c.l.b16 %v3087
        %v3152 = vunpack.c.h.b16 %v3087
        %v3153 = vunpack.c.l.b16 %v3088
        %v3154 = vunpack.c.h.b16 %v3088
        %v3155 = vunpack.c.l.b16 %v3089
        %v3156 = vunpack.c.h.b16 %v3089
        %v3157 = vunpack.c.l.b16 %v3090
        %v3158 = vunpack.c.h.b16 %v3090
        %v3159 = vunpack.c.l.b16 %v3091
        %v3160 = vunpack.c.h.b16 %v3091
        %v3161 = vunpack.c.l.b16 %v3092
        %v3162 = vunpack.c.h.b16 %v3092
        %v3163 = vunpack.c.l.b16 %v3093
        %v3164 = vunpack.c.h.b16 %v3093
        %v3165 = vunpack.c.l.b16 %v3094
        %v3166 = vunpack.c.h.b16 %v3094
        %v3167 = vunpack.c.l.b16 %v3095
        %v3168 = vunpack.c.h.b16 %v3095
        %v3169 = vunpack.c.l.b16 %v3096
        %v3170 = vunpack.c.h.b16 %v3096
        %v3171 = vunpack.c.l.b16 %v3097
        %v3172 = vunpack.c.h.b16 %v3097
        %v3173 = vunpack.c.l.b16 %v3098
        %v3174 = vunpack.c.h.b16 %v3098
        %v3175 = vunpack.c.l.b16 %v3099
        %v3176 = vunpack.c.h.b16 %v3099
        %v3177 = vunpack.c.l.b16 %v3100
        %v3178 = vunpack.c.h.b16 %v3100
        %v3179 = vunpack.c.l.b16 %v3101
        %v3180 = vunpack.c.h.b16 %v3101
        %v3181 = vunpack.c.l.b16 %v3102
        %v3182 = vunpack.c.h.b16 %v3102
        %v3183 = vunpack.c.l.b16 %v3103
        %v3184 = vunpack.c.h.b16 %v3103
        %v3185 = vunpack.c.l.b16 %v3104
        %v3186 = vunpack.c.h.b16 %v3104
        %v3187 = vunpack.c.l.b16 %v3105
        %v3188 = vunpack.c.h.b16 %v3105
        %v3189 = vunpack.c.l.b16 %v3106
        %v3190 = vunpack.c.h.b16 %v3106
        %v3191 = vunpack.c.l.b16 %v3107
        %v3192 = vunpack.c.h.b16 %v3107
        %v3193 = vunpack.c.l.b16 %v3108
        %v3194 = vunpack.c.h.b16 %v3108
        %v3195 = vunpack.c.l.b16 %v3109
        %v3196 = vunpack.c.h.b16 %v3109
        %v3197 = vunpack.c.l.b16 %v3110
        %v3198 = vunpack.c.h.b16 %v3110
        %v3199 = vunpack.c.l.b16 %v3111
        %v3200 = vunpack.c.h.b16 %v3111
        %v3201 = vunpack.c.l.b16 %v3112
        %v3202 = vunpack.c.h.b16 %v3112
        %v3203 = vunpack.c.l.b16 %v3113
        %v3204 = vunpack.c.h.b16 %v3113
        %v3205 = vunpack.c.l.b16 %v3114
        %v3206 = vunpack.c.h.b16 %v3114
        %v3207 = vunpack.c.l.b16 %v3115
        %v3208 = vunpack.c.h.b16 %v3115
        %v3209 = vunpack.c.l.b16 %v3116
        %v3210 = vunpack.c.h.b16 %v3116
        %v3211 = vunpack.c.l.b16 %v3117
        %v3212 = vunpack.c.h.b16 %v3117
        %v3213 = vunpack.c.l.b16 %v3118
        %v3214 = vunpack.c.h.b16 %v3118
        %v3215 = vpack.c.b16 %v3155, %v3151
        %v3216 = vpack.c.b16 %v3156, %v3152
        %v3217 = vpack.c.b16 %v3157, %v3153
        %v3218 = vpack.c.b16 %v3158, %v3154
        %v3219 = vpack.c.b16 %v3163, %v3159
        %v3220 = vpack.c.b16 %v3164, %v3160
        %v3221 = vpack.c.b16 %v3165, %v3161
        %v3222 = vpack.c.b16 %v3166, %v3162
        %v3223 = vpack.c.b16 %v3171, %v3167
        %v3224 = vpack.c.b16 %v3172, %v3168
        %v3225 = vpack.c.b16 %v3173, %v3169
        %v3226 = vpack.c.b16 %v3174, %v3170
        %v3227 = vpack.c.b16 %v3179, %v3175
        %v3228 = vpack.c.b16 %v3180, %v3176
        %v3229 = vpack.c.b16 %v3181, %v3177
        %v3230 = vpack.c.b16 %v3182, %v3178
        %v3231 = vpack.c.b16 %v3187, %v3183
        %v3232 = vpack.c.b16 %v3188, %v3184
        %v3233 = vpack.c.b16 %v3189, %v3185
        %v3234 = vpack.c.b16 %v3190, %v3186
        %v3235 = vpack.c.b16 %v3195, %v3191
        %v3236 = vpack.c.b16 %v3196, %v3192
        %v3237 = vpack.c.b16 %v3197, %v3193
        %v3238 = vpack.c.b16 %v3198, %v3194
        %v3239 = vpack.c.b16 %v3203, %v3199
        %v3240 = vpack.c.b16 %v3204, %v3200
        %v3241 = vpack.c.b16 %v3205, %v3201
        %v3242 = vpack.c.b16 %v3206, %v3202
        %v3243 = vpack.c.b16 %v3211, %v3207
        %v3244 = vpack.c.b16 %v3212, %v3208
        %v3245 = vpack.c.b16 %v3213, %v3209
        %v3246 = vpack.c.b16 %v3214, %v3210
        %3279 = vmatprep.subr.bf16.mxu0 %v3216
        %3280 = vmatpush1.bf16.msra.mxu0 %v3215
        %3281 = vmatprep.subr.bf16.mxu0 %v3220
        %3282 = vmatpush1.bf16.msra.mxu0 %v3219
        %3283 = vmatprep.subr.bf16.mxu0 %v3224
        %3284 = vmatpush1.bf16.msra.mxu0 %v3223
        %3285 = vmatprep.subr.bf16.mxu0 %v3228
        %3286 = vmatpush1.bf16.msra.mxu0 %v3227
        %3287 = vmatprep.subr.bf16.mxu0 %v3232
        %3288 = vmatpush1.bf16.msra.mxu0 %v3231
        %3289 = vmatprep.subr.bf16.mxu0 %v3236
        %3290 = vmatpush1.bf16.msra.mxu0 %v3235
        %3291 = vmatprep.subr.bf16.mxu0 %v3240
        %3292 = vmatpush1.bf16.msra.mxu0 %v3239
        %3293 = vmatprep.subr.bf16.mxu0 %v3244
        %3294 = vmatpush1.bf16.msra.mxu0 %v3243
        %3295 = vmatprep.subr.bf16.mxu0 0
        %3296 = vmatpush1.bf16.msra.mxu0 0
        %3297 = vmatprep.subr.bf16.mxu0 0
        %3298 = vmatpush1.bf16.msra.mxu0 0
        %3299 = vmatprep.subr.bf16.mxu0 0
        %3300 = vmatpush1.bf16.msra.mxu0 0
        %3301 = vmatprep.subr.bf16.mxu0 0
        %3302 = vmatpush1.bf16.msra.mxu0 0
        %3303 = vmatprep.subr.bf16.mxu0 0
        %3304 = vmatpush1.bf16.msra.mxu0 0
        %3305 = vmatprep.subr.bf16.mxu0 0
        %3306 = vmatpush1.bf16.msra.mxu0 0
        %3307 = vmatprep.subr.bf16.mxu0 0
        %3308 = vmatpush1.bf16.msra.mxu0 0
        %3309 = vmatprep.subr.bf16.mxu0 0
        %3310 = vmatpush1.bf16.msra.mxu0 0
        %3311 = vmatprep.mubr.bf16.mxu0 0
        %3312 = vmatmul.mubr.bf16.gmra.mrb[0].mxu0 %v2480
        %v3313 = vpop.f32.mrb[0].mxu0
        %v3314 = vadd.f32 0.0, %v3313
        %v3315 = vpop.f32.mrb[0].mxu0
        %v3316 = vadd.f32 0.0, %v3315
        %v3317 = vpop.f32.mrb[0].mxu0
        %v3318 = vpop.f32.mrb[0].mxu0
        %3319 = vdwg.mxu0
        %3320 = vmatprep.subr.bf16.mxu0 %v3218
        %3321 = vmatpush1.bf16.msra.mxu0 %v3217
        %3322 = vmatprep.subr.bf16.mxu0 %v3222
        %3323 = vmatpush1.bf16.msra.mxu0 %v3221
        %3324 = vmatprep.subr.bf16.mxu0 %v3226
        %3325 = vmatpush1.bf16.msra.mxu0 %v3225
        %3326 = vmatprep.subr.bf16.mxu0 %v3230
        %3327 = vmatpush1.bf16.msra.mxu0 %v3229
        %3328 = vmatprep.subr.bf16.mxu0 %v3234
        %3329 = vmatpush1.bf16.msra.mxu0 %v3233
        %3330 = vmatprep.subr.bf16.mxu0 %v3238
        %3331 = vmatpush1.bf16.msra.mxu0 %v3237
        %3332 = vmatprep.subr.bf16.mxu0 %v3242
        %3333 = vmatpush1.bf16.msra.mxu0 %v3241
        %3334 = vmatprep.subr.bf16.mxu0 %v3246
        %3335 = vmatpush1.bf16.msra.mxu0 %v3245
        %3336 = vmatprep.subr.bf16.mxu0 0
        %3337 = vmatpush1.bf16.msra.mxu0 0
        %3338 = vmatprep.subr.bf16.mxu0 0
        %3339 = vmatpush1.bf16.msra.mxu0 0
        %3340 = vmatprep.subr.bf16.mxu0 0
        %3341 = vmatpush1.bf16.msra.mxu0 0
        %3342 = vmatprep.subr.bf16.mxu0 0
        %3343 = vmatpush1.bf16.msra.mxu0 0
        %3344 = vmatprep.subr.bf16.mxu0 0
        %3345 = vmatpush1.bf16.msra.mxu0 0
        %3346 = vmatprep.subr.bf16.mxu0 0
        %3347 = vmatpush1.bf16.msra.mxu0 0
        %3348 = vmatprep.subr.bf16.mxu0 0
        %3349 = vmatpush1.bf16.msra.mxu0 0
        %3350 = vmatprep.subr.bf16.mxu0 0
        %3351 = vmatpush1.bf16.msra.mxu0 0
        %3352 = vmatprep.mubr.bf16.mxu0 0
        %3353 = vmatmul.mubr.bf16.gmra.mrb[0].mxu0 %v2480
        %v3354 = vpop.f32.mrb[0].mxu0
        %v3355 = vadd.f32 0.0, %v3354
        %v3356 = vpop.f32.mrb[0].mxu0
        %v3357 = vadd.f32 0.0, %v3356
        %v3358 = vpop.f32.mrb[0].mxu0
        %v3359 = vpop.f32.mrb[0].mxu0
        %3360 = vdwg.mxu0
        %v3361 = vadd.f32 %v3083, %v3314
        %v3362 = vadd.f32 %v3084, %v3316
        %v3363 = vadd.f32 %v3085, %v3355
        %v3364 = vadd.f32 %v3086, %v3357
        %v3365 = vxor.u32 %v3361, 2147483648
        %v3366 = vmul.f32 %v3365, 1.442695
        %v3367 = vpow.pop %v3366
        %v3368 = vadd.f32 %v3367, 1.0
        %v3369 = vrcp.pop %v3368
        %v3370 = vmul.f32 1.0, %v3369
        %v3371 = vxor.u32 %v3362, 2147483648
        %v3372 = vmul.f32 %v3371, 1.442695
        %v3373 = vpow.pop %v3372
        %v3374 = vadd.f32 %v3373, 1.0
        %v3375 = vrcp.pop %v3374
        %v3376 = vmul.f32 1.0, %v3375
        %v3377 = vtanh.pop %v3363
        %v3378 = vxor.u32 %v3364, 2147483648
        %v3379 = vmul.f32 %v3378, 1.442695
        %v3380 = vpow.pop %v3379
        %v3381 = vadd.f32 %v3380, 1.0
        %v3382 = vrcp.pop %v3381
        %v3383 = vmul.f32 1.0, %v3382
        %v3384 = vmul.f32 %v3376, %v2477
        %v3385 = vmul.f32 %v3370, %v3377
        %v3386 = vadd.f32 %v3384, %v3385
        %v3387 = vtanh.pop %v3386
        %v3388 = vmul.f32 %v3383, %v3387
        %v3389 = vpack.c.bf16 %v3388, %v3388
        %v3390 = vld [vmem:[%s4] sm:$0xff]
        %v3391 = vld [vmem:[%s4 + $0x8] sm:$0xff]
        %v3392 = vld [vmem:[%s4 + $0x10] sm:$0xff]
        %v3393 = vld [vmem:[%s4 + $0x18] sm:$0xff]
        %v3394 = vld [vmem:[%s4 + $0x20] sm:$0xff]
        %v3395 = vld [vmem:[%s4 + $0x28] sm:$0xff]
        %v3396 = vld [vmem:[%s4 + $0x30] sm:$0xff]
        %v3397 = vld [vmem:[%s4 + $0x38] sm:$0xff]
        %v3398 = vld [vmem:[%s4 + $0x40] sm:$0xff]
        %v3399 = vld [vmem:[%s4 + $0x48] sm:$0xff]
        %v3400 = vld [vmem:[%s4 + $0x50] sm:$0xff]
        %v3401 = vld [vmem:[%s4 + $0x58] sm:$0xff]
        %v3402 = vld [vmem:[%s4 + $0x60] sm:$0xff]
        %v3403 = vld [vmem:[%s4 + $0x68] sm:$0xff]
        %v3404 = vld [vmem:[%s4 + $0x70] sm:$0xff]
        %v3405 = vld [vmem:[%s4 + $0x78] sm:$0xff]
        %v3406 = vld [vmem:[%s4 + $0x80] sm:$0xff]
        %v3407 = vld [vmem:[%s4 + $0x88] sm:$0xff]
        %v3408 = vld [vmem:[%s4 + $0x90] sm:$0xff]
        %v3409 = vld [vmem:[%s4 + $0x98] sm:$0xff]
        %v3410 = vld [vmem:[%s4 + $0xa0] sm:$0xff]
        %v3411 = vld [vmem:[%s4 + $0xa8] sm:$0xff]
        %v3412 = vld [vmem:[%s4 + $0xb0] sm:$0xff]
        %v3413 = vld [vmem:[%s4 + $0xb8] sm:$0xff]
        %v3414 = vld [vmem:[%s4 + $0xc0] sm:$0xff]
        %v3415 = vld [vmem:[%s4 + $0xc8] sm:$0xff]
        %v3416 = vld [vmem:[%s4 + $0xd0] sm:$0xff]
        %v3417 = vld [vmem:[%s4 + $0xd8] sm:$0xff]
        %v3418 = vld [vmem:[%s4 + $0xe0] sm:$0xff]
        %v3419 = vld [vmem:[%s4 + $0xe8] sm:$0xff]
        %v3420 = vld [vmem:[%s4 + $0xf0] sm:$0xff]
        %v3421 = vld [vmem:[%s4 + $0xf8] sm:$0xff]
        %v3422 = vld [vmem:[%s5] sm:$0xff]
        %v3423 = vld [vmem:[%s5 + $0x8] sm:$0xff]
        %v3424 = vld [vmem:[%s5 + $0x10] sm:$0xff]
        %v3425 = vld [vmem:[%s5 + $0x18] sm:$0xff]
        %v3426 = vld [vmem:[%s5 + $0x20] sm:$0xff]
        %v3427 = vld [vmem:[%s5 + $0x28] sm:$0xff]
        %v3428 = vld [vmem:[%s5 + $0x30] sm:$0xff]
        %v3429 = vld [vmem:[%s5 + $0x38] sm:$0xff]
        %v3430 = vld [vmem:[%s5 + $0x40] sm:$0xff]
        %v3431 = vld [vmem:[%s5 + $0x48] sm:$0xff]
        %v3432 = vld [vmem:[%s5 + $0x50] sm:$0xff]
        %v3433 = vld [vmem:[%s5 + $0x58] sm:$0xff]
        %v3434 = vld [vmem:[%s5 + $0x60] sm:$0xff]
        %v3435 = vld [vmem:[%s5 + $0x68] sm:$0xff]
        %v3436 = vld [vmem:[%s5 + $0x70] sm:$0xff]
        %v3437 = vld [vmem:[%s5 + $0x78] sm:$0xff]
        %v3438 = vld [vmem:[%s5 + $0x80] sm:$0xff]
        %v3439 = vld [vmem:[%s5 + $0x88] sm:$0xff]
        %v3440 = vld [vmem:[%s5 + $0x90] sm:$0xff]
        %v3441 = vld [vmem:[%s5 + $0x98] sm:$0xff]
        %v3442 = vld [vmem:[%s5 + $0xa0] sm:$0xff]
        %v3443 = vld [vmem:[%s5 + $0xa8] sm:$0xff]
        %v3444 = vld [vmem:[%s5 + $0xb0] sm:$0xff]
        %v3445 = vld [vmem:[%s5 + $0xb8] sm:$0xff]
        %v3446 = vld [vmem:[%s5 + $0xc0] sm:$0xff]
        %v3447 = vld [vmem:[%s5 + $0xc8] sm:$0xff]
        %v3448 = vld [vmem:[%s5 + $0xd0] sm:$0xff]
        %v3449 = vld [vmem:[%s5 + $0xd8] sm:$0xff]
        %v3450 = vld [vmem:[%s5 + $0xe0] sm:$0xff]
        %v3451 = vld [vmem:[%s5 + $0xe8] sm:$0xff]
        %v3452 = vld [vmem:[%s5 + $0xf0] sm:$0xff]
        %v3453 = vld [vmem:[%s5 + $0xf8] sm:$0xff]
        %v3486 = vunpack.c.l.b16 %v3422
        %v3487 = vunpack.c.h.b16 %v3422
        %v3488 = vunpack.c.l.b16 %v3423
        %v3489 = vunpack.c.h.b16 %v3423
        %v3490 = vunpack.c.l.b16 %v3424
        %v3491 = vunpack.c.h.b16 %v3424
        %v3492 = vunpack.c.l.b16 %v3425
        %v3493 = vunpack.c.h.b16 %v3425
        %v3494 = vunpack.c.l.b16 %v3426
        %v3495 = vunpack.c.h.b16 %v3426
        %v3496 = vunpack.c.l.b16 %v3427
        %v3497 = vunpack.c.h.b16 %v3427
        %v3498 = vunpack.c.l.b16 %v3428
        %v3499 = vunpack.c.h.b16 %v3428
        %v3500 = vunpack.c.l.b16 %v3429
        %v3501 = vunpack.c.h.b16 %v3429
        %v3502 = vunpack.c.l.b16 %v3430
        %v3503 = vunpack.c.h.b16 %v3430
        %v3504 = vunpack.c.l.b16 %v3431
        %v3505 = vunpack.c.h.b16 %v3431
        %v3506 = vunpack.c.l.b16 %v3432
        %v3507 = vunpack.c.h.b16 %v3432
        %v3508 = vunpack.c.l.b16 %v3433
        %v3509 = vunpack.c.h.b16 %v3433
        %v3510 = vunpack.c.l.b16 %v3434
        %v3511 = vunpack.c.h.b16 %v3434
        %v3512 = vunpack.c.l.b16 %v3435
        %v3513 = vunpack.c.h.b16 %v3435
        %v3514 = vunpack.c.l.b16 %v3436
        %v3515 = vunpack.c.h.b16 %v3436
        %v3516 = vunpack.c.l.b16 %v3437
        %v3517 = vunpack.c.h.b16 %v3437
        %v3518 = vunpack.c.l.b16 %v3438
        %v3519 = vunpack.c.h.b16 %v3438
        %v3520 = vunpack.c.l.b16 %v3439
        %v3521 = vunpack.c.h.b16 %v3439
        %v3522 = vunpack.c.l.b16 %v3440
        %v3523 = vunpack.c.h.b16 %v3440
        %v3524 = vunpack.c.l.b16 %v3441
        %v3525 = vunpack.c.h.b16 %v3441
        %v3526 = vunpack.c.l.b16 %v3442
        %v3527 = vunpack.c.h.b16 %v3442
        %v3528 = vunpack.c.l.b16 %v3443
        %v3529 = vunpack.c.h.b16 %v3443
        %v3530 = vunpack.c.l.b16 %v3444
        %v3531 = vunpack.c.h.b16 %v3444
        %v3532 = vunpack.c.l.b16 %v3445
        %v3533 = vunpack.c.h.b16 %v3445
        %v3534 = vunpack.c.l.b16 %v3446
        %v3535 = vunpack.c.h.b16 %v3446
        %v3536 = vunpack.c.l.b16 %v3447
        %v3537 = vunpack.c.h.b16 %v3447
        %v3538 = vunpack.c.l.b16 %v3448
        %v3539 = vunpack.c.h.b16 %v3448
        %v3540 = vunpack.c.l.b16 %v3449
        %v3541 = vunpack.c.h.b16 %v3449
        %v3542 = vunpack.c.l.b16 %v3450
        %v3543 = vunpack.c.h.b16 %v3450
        %v3544 = vunpack.c.l.b16 %v3451
        %v3545 = vunpack.c.h.b16 %v3451
        %v3546 = vunpack.c.l.b16 %v3452
        %v3547 = vunpack.c.h.b16 %v3452
        %v3548 = vunpack.c.l.b16 %v3453
        %v3549 = vunpack.c.h.b16 %v3453
        %v3550 = vpack.c.b16 %v3490, %v3486
        %v3551 = vpack.c.b16 %v3491, %v3487
        %v3552 = vpack.c.b16 %v3492, %v3488
        %v3553 = vpack.c.b16 %v3493, %v3489
        %v3554 = vpack.c.b16 %v3498, %v3494
        %v3555 = vpack.c.b16 %v3499, %v3495
        %v3556 = vpack.c.b16 %v3500, %v3496
        %v3557 = vpack.c.b16 %v3501, %v3497
        %v3558 = vpack.c.b16 %v3506, %v3502
        %v3559 = vpack.c.b16 %v3507, %v3503
        %v3560 = vpack.c.b16 %v3508, %v3504
        %v3561 = vpack.c.b16 %v3509, %v3505
        %v3562 = vpack.c.b16 %v3514, %v3510
        %v3563 = vpack.c.b16 %v3515, %v3511
        %v3564 = vpack.c.b16 %v3516, %v3512
        %v3565 = vpack.c.b16 %v3517, %v3513
        %v3566 = vpack.c.b16 %v3522, %v3518
        %v3567 = vpack.c.b16 %v3523, %v3519
        %v3568 = vpack.c.b16 %v3524, %v3520
        %v3569 = vpack.c.b16 %v3525, %v3521
        %v3570 = vpack.c.b16 %v3530, %v3526
        %v3571 = vpack.c.b16 %v3531, %v3527
        %v3572 = vpack.c.b16 %v3532, %v3528
        %v3573 = vpack.c.b16 %v3533, %v3529
        %v3574 = vpack.c.b16 %v3538, %v3534
        %v3575 = vpack.c.b16 %v3539, %v3535
        %v3576 = vpack.c.b16 %v3540, %v3536
        %v3577 = vpack.c.b16 %v3541, %v3537
        %v3578 = vpack.c.b16 %v3546, %v3542
        %v3579 = vpack.c.b16 %v3547, %v3543
        %v3580 = vpack.c.b16 %v3548, %v3544
        %v3581 = vpack.c.b16 %v3549, %v3545
        %3614 = vmatprep.subr.bf16.mxu0 %v3551
        %3615 = vmatpush1.bf16.msra.mxu0 %v3550
        %3616 = vmatprep.subr.bf16.mxu0 %v3555
        %3617 = vmatpush1.bf16.msra.mxu0 %v3554
        %3618 = vmatprep.subr.bf16.mxu0 %v3559
        %3619 = vmatpush1.bf16.msra.mxu0 %v3558
        %3620 = vmatprep.subr.bf16.mxu0 %v3563
        %3621 = vmatpush1.bf16.msra.mxu0 %v3562
        %3622 = vmatprep.subr.bf16.mxu0 %v3567
        %3623 = vmatpush1.bf16.msra.mxu0 %v3566
        %3624 = vmatprep.subr.bf16.mxu0 %v3571
        %3625 = vmatpush1.bf16.msra.mxu0 %v3570
        %3626 = vmatprep.subr.bf16.mxu0 %v3575
        %3627 = vmatpush1.bf16.msra.mxu0 %v3574
        %3628 = vmatprep.subr.bf16.mxu0 %v3579
        %3629 = vmatpush1.bf16.msra.mxu0 %v3578
        %3630 = vmatprep.subr.bf16.mxu0 0
        %3631 = vmatpush1.bf16.msra.mxu0 0
        %3632 = vmatprep.subr.bf16.mxu0 0
        %3633 = vmatpush1.bf16.msra.mxu0 0
        %3634 = vmatprep.subr.bf16.mxu0 0
        %3635 = vmatpush1.bf16.msra.mxu0 0
        %3636 = vmatprep.subr.bf16.mxu0 0
        %3637 = vmatpush1.bf16.msra.mxu0 0
        %3638 = vmatprep.subr.bf16.mxu0 0
        %3639 = vmatpush1.bf16.msra.mxu0 0
        %3640 = vmatprep.subr.bf16.mxu0 0
        %3641 = vmatpush1.bf16.msra.mxu0 0
        %3642 = vmatprep.subr.bf16.mxu0 0
        %3643 = vmatpush1.bf16.msra.mxu0 0
        %3644 = vmatprep.subr.bf16.mxu0 0
        %3645 = vmatpush1.bf16.msra.mxu0 0
        %3646 = vmatprep.mubr.bf16.mxu0 0
        %3647 = vmatmul.mubr.bf16.gmra.mrb[0].mxu0 %v3079
        %v3648 = vpop.f32.mrb[0].mxu0
        %v3649 = vadd.f32 0.0, %v3648
        %v3650 = vpop.f32.mrb[0].mxu0
        %v3651 = vadd.f32 0.0, %v3650
        %v3652 = vpop.f32.mrb[0].mxu0
        %v3653 = vpop.f32.mrb[0].mxu0
        %3654 = vdwg.mxu0
        %3655 = vmatprep.subr.bf16.mxu0 %v3553
        %3656 = vmatpush1.bf16.msra.mxu0 %v3552
        %3657 = vmatprep.subr.bf16.mxu0 %v3557
        %3658 = vmatpush1.bf16.msra.mxu0 %v3556
        %3659 = vmatprep.subr.bf16.mxu0 %v3561
        %3660 = vmatpush1.bf16.msra.mxu0 %v3560
        %3661 = vmatprep.subr.bf16.mxu0 %v3565
        %3662 = vmatpush1.bf16.msra.mxu0 %v3564
        %3663 = vmatprep.subr.bf16.mxu0 %v3569
        %3664 = vmatpush1.bf16.msra.mxu0 %v3568
        %3665 = vmatprep.subr.bf16.mxu0 %v3573
        %3666 = vmatpush1.bf16.msra.mxu0 %v3572
        %3667 = vmatprep.subr.bf16.mxu0 %v3577
        %3668 = vmatpush1.bf16.msra.mxu0 %v3576
        %3669 = vmatprep.subr.bf16.mxu0 %v3581
        %3670 = vmatpush1.bf16.msra.mxu0 %v3580
        %3671 = vmatprep.subr.bf16.mxu0 0
        %3672 = vmatpush1.bf16.msra.mxu0 0
        %3673 = vmatprep.subr.bf16.mxu0 0
        %3674 = vmatpush1.bf16.msra.mxu0 0
        %3675 = vmatprep.subr.bf16.mxu0 0
        %3676 = vmatpush1.bf16.msra.mxu0 0
        %3677 = vmatprep.subr.bf16.mxu0 0
        %3678 = vmatpush1.bf16.msra.mxu0 0
        %3679 = vmatprep.subr.bf16.mxu0 0
        %3680 = vmatpush1.bf16.msra.mxu0 0
        %3681 = vmatprep.subr.bf16.mxu0 0
        %3682 = vmatpush1.bf16.msra.mxu0 0
        %3683 = vmatprep.subr.bf16.mxu0 0
        %3684 = vmatpush1.bf16.msra.mxu0 0
        %3685 = vmatprep.subr.bf16.mxu0 0
        %3686 = vmatpush1.bf16.msra.mxu0 0
        %3687 = vmatprep.mubr.bf16.mxu0 0
        %3688 = vmatmul.mubr.bf16.gmra.mrb[0].mxu0 %v3079
        %v3689 = vpop.f32.mrb[0].mxu0
        %v3690 = vadd.f32 0.0, %v3689
        %v3691 = vpop.f32.mrb[0].mxu0
        %v3692 = vadd.f32 0.0, %v3691
        %v3693 = vpop.f32.mrb[0].mxu0
        %v3694 = vpop.f32.mrb[0].mxu0
        %3695 = vdwg.mxu0
        %v3728 = vunpack.c.l.b16 %v3390
        %v3729 = vunpack.c.h.b16 %v3390
        %v3730 = vunpack.c.l.b16 %v3391
        %v3731 = vunpack.c.h.b16 %v3391
        %v3732 = vunpack.c.l.b16 %v3392
        %v3733 = vunpack.c.h.b16 %v3392
        %v3734 = vunpack.c.l.b16 %v3393
        %v3735 = vunpack.c.h.b16 %v3393
        %v3736 = vunpack.c.l.b16 %v3394
        %v3737 = vunpack.c.h.b16 %v3394
        %v3738 = vunpack.c.l.b16 %v3395
        %v3739 = vunpack.c.h.b16 %v3395
        %v3740 = vunpack.c.l.b16 %v3396
        %v3741 = vunpack.c.h.b16 %v3396
        %v3742 = vunpack.c.l.b16 %v3397
        %v3743 = vunpack.c.h.b16 %v3397
        %v3744 = vunpack.c.l.b16 %v3398
        %v3745 = vunpack.c.h.b16 %v3398
        %v3746 = vunpack.c.l.b16 %v3399
        %v3747 = vunpack.c.h.b16 %v3399
        %v3748 = vunpack.c.l.b16 %v3400
        %v3749 = vunpack.c.h.b16 %v3400
        %v3750 = vunpack.c.l.b16 %v3401
        %v3751 = vunpack.c.h.b16 %v3401
        %v3752 = vunpack.c.l.b16 %v3402
        %v3753 = vunpack.c.h.b16 %v3402
        %v3754 = vunpack.c.l.b16 %v3403
        %v3755 = vunpack.c.h.b16 %v3403
        %v3756 = vunpack.c.l.b16 %v3404
        %v3757 = vunpack.c.h.b16 %v3404
        %v3758 = vunpack.c.l.b16 %v3405
        %v3759 = vunpack.c.h.b16 %v3405
        %v3760 = vunpack.c.l.b16 %v3406
        %v3761 = vunpack.c.h.b16 %v3406
        %v3762 = vunpack.c.l.b16 %v3407
        %v3763 = vunpack.c.h.b16 %v3407
        %v3764 = vunpack.c.l.b16 %v3408
        %v3765 = vunpack.c.h.b16 %v3408
        %v3766 = vunpack.c.l.b16 %v3409
        %v3767 = vunpack.c.h.b16 %v3409
        %v3768 = vunpack.c.l.b16 %v3410
        %v3769 = vunpack.c.h.b16 %v3410
        %v3770 = vunpack.c.l.b16 %v3411
        %v3771 = vunpack.c.h.b16 %v3411
        %v3772 = vunpack.c.l.b16 %v3412
        %v3773 = vunpack.c.h.b16 %v3412
        %v3774 = vunpack.c.l.b16 %v3413
        %v3775 = vunpack.c.h.b16 %v3413
        %v3776 = vunpack.c.l.b16 %v3414
        %v3777 = vunpack.c.h.b16 %v3414
        %v3778 = vunpack.c.l.b16 %v3415
        %v3779 = vunpack.c.h.b16 %v3415
        %v3780 = vunpack.c.l.b16 %v3416
        %v3781 = vunpack.c.h.b16 %v3416
        %v3782 = vunpack.c.l.b16 %v3417
        %v3783 = vunpack.c.h.b16 %v3417
        %v3784 = vunpack.c.l.b16 %v3418
        %v3785 = vunpack.c.h.b16 %v3418
        %v3786 = vunpack.c.l.b16 %v3419
        %v3787 = vunpack.c.h.b16 %v3419
        %v3788 = vunpack.c.l.b16 %v3420
        %v3789 = vunpack.c.h.b16 %v3420
        %v3790 = vunpack.c.l.b16 %v3421
        %v3791 = vunpack.c.h.b16 %v3421
        %v3792 = vpack.c.b16 %v3732, %v3728
        %v3793 = vpack.c.b16 %v3733, %v3729
        %v3794 = vpack.c.b16 %v3734, %v3730
        %v3795 = vpack.c.b16 %v3735, %v3731
        %v3796 = vpack.c.b16 %v3740, %v3736
        %v3797 = vpack.c.b16 %v3741, %v3737
        %v3798 = vpack.c.b16 %v3742, %v3738
        %v3799 = vpack.c.b16 %v3743, %v3739
        %v3800 = vpack.c.b16 %v3748, %v3744
        %v3801 = vpack.c.b16 %v3749, %v3745
        %v3802 = vpack.c.b16 %v3750, %v3746
        %v3803 = vpack.c.b16 %v3751, %v3747
        %v3804 = vpack.c.b16 %v3756, %v3752
        %v3805 = vpack.c.b16 %v3757, %v3753
        %v3806 = vpack.c.b16 %v3758, %v3754
        %v3807 = vpack.c.b16 %v3759, %v3755
        %v3808 = vpack.c.b16 %v3764, %v3760
        %v3809 = vpack.c.b16 %v3765, %v3761
        %v3810 = vpack.c.b16 %v3766, %v3762
        %v3811 = vpack.c.b16 %v3767, %v3763
        %v3812 = vpack.c.b16 %v3772, %v3768
        %v3813 = vpack.c.b16 %v3773, %v3769
        %v3814 = vpack.c.b16 %v3774, %v3770
        %v3815 = vpack.c.b16 %v3775, %v3771
        %v3816 = vpack.c.b16 %v3780, %v3776
        %v3817 = vpack.c.b16 %v3781, %v3777
        %v3818 = vpack.c.b16 %v3782, %v3778
        %v3819 = vpack.c.b16 %v3783, %v3779
        %v3820 = vpack.c.b16 %v3788, %v3784
        %v3821 = vpack.c.b16 %v3789, %v3785
        %v3822 = vpack.c.b16 %v3790, %v3786
        %v3823 = vpack.c.b16 %v3791, %v3787
        %3856 = vmatprep.subr.bf16.mxu0 %v3793
        %3857 = vmatpush1.bf16.msra.mxu0 %v3792
        %3858 = vmatprep.subr.bf16.mxu0 %v3797
        %3859 = vmatpush1.bf16.msra.mxu0 %v3796
        %3860 = vmatprep.subr.bf16.mxu0 %v3801
        %3861 = vmatpush1.bf16.msra.mxu0 %v3800
        %3862 = vmatprep.subr.bf16.mxu0 %v3805
        %3863 = vmatpush1.bf16.msra.mxu0 %v3804
        %3864 = vmatprep.subr.bf16.mxu0 %v3809
        %3865 = vmatpush1.bf16.msra.mxu0 %v3808
        %3866 = vmatprep.subr.bf16.mxu0 %v3813
        %3867 = vmatpush1.bf16.msra.mxu0 %v3812
        %3868 = vmatprep.subr.bf16.mxu0 %v3817
        %3869 = vmatpush1.bf16.msra.mxu0 %v3816
        %3870 = vmatprep.subr.bf16.mxu0 %v3821
        %3871 = vmatpush1.bf16.msra.mxu0 %v3820
        %3872 = vmatprep.subr.bf16.mxu0 0
        %3873 = vmatpush1.bf16.msra.mxu0 0
        %3874 = vmatprep.subr.bf16.mxu0 0
        %3875 = vmatpush1.bf16.msra.mxu0 0
        %3876 = vmatprep.subr.bf16.mxu0 0
        %3877 = vmatpush1.bf16.msra.mxu0 0
        %3878 = vmatprep.subr.bf16.mxu0 0
        %3879 = vmatpush1.bf16.msra.mxu0 0
        %3880 = vmatprep.subr.bf16.mxu0 0
        %3881 = vmatpush1.bf16.msra.mxu0 0
        %3882 = vmatprep.subr.bf16.mxu0 0
        %3883 = vmatpush1.bf16.msra.mxu0 0
        %3884 = vmatprep.subr.bf16.mxu0 0
        %3885 = vmatpush1.bf16.msra.mxu0 0
        %3886 = vmatprep.subr.bf16.mxu0 0
        %3887 = vmatpush1.bf16.msra.mxu0 0
        %3888 = vmatprep.mubr.bf16.mxu0 0
        %3889 = vmatmul.mubr.bf16.gmra.mrb[0].mxu0 %v3389
        %v3890 = vpop.f32.mrb[0].mxu0
        %v3891 = vadd.f32 %v3649, %v3890
        %v3892 = vpop.f32.mrb[0].mxu0
        %v3893 = vadd.f32 %v3651, %v3892
        %v3894 = vpop.f32.mrb[0].mxu0
        %v3895 = vpop.f32.mrb[0].mxu0
        %3896 = vdwg.mxu0
        %3897 = vmatprep.subr.bf16.mxu0 %v3795
        %3898 = vmatpush1.bf16.msra.mxu0 %v3794
        %3899 = vmatprep.subr.bf16.mxu0 %v3799
        %3900 = vmatpush1.bf16.msra.mxu0 %v3798
        %3901 = vmatprep.subr.bf16.mxu0 %v3803
        %3902 = vmatpush1.bf16.msra.mxu0 %v3802
        %3903 = vmatprep.subr.bf16.mxu0 %v3807
        %3904 = vmatpush1.bf16.msra.mxu0 %v3806
        %3905 = vmatprep.subr.bf16.mxu0 %v3811
        %3906 = vmatpush1.bf16.msra.mxu0 %v3810
        %3907 = vmatprep.subr.bf16.mxu0 %v3815
        %3908 = vmatpush1.bf16.msra.mxu0 %v3814
        %3909 = vmatprep.subr.bf16.mxu0 %v3819
        %3910 = vmatpush1.bf16.msra.mxu0 %v3818
        %3911 = vmatprep.subr.bf16.mxu0 %v3823
        %3912 = vmatpush1.bf16.msra.mxu0 %v3822
        %3913 = vmatprep.subr.bf16.mxu0 0
        %3914 = vmatpush1.bf16.msra.mxu0 0
        %3915 = vmatprep.subr.bf16.mxu0 0
        %3916 = vmatpush1.bf16.msra.mxu0 0
        %3917 = vmatprep.subr.bf16.mxu0 0
        %3918 = vmatpush1.bf16.msra.mxu0 0
        %3919 = vmatprep.subr.bf16.mxu0 0
        %3920 = vmatpush1.bf16.msra.mxu0 0
        %3921 = vmatprep.subr.bf16.mxu0 0
        %3922 = vmatpush1.bf16.msra.mxu0 0
        %3923 = vmatprep.subr.bf16.mxu0 0
        %3924 = vmatpush1.bf16.msra.mxu0 0
        %3925 = vmatprep.subr.bf16.mxu0 0
        %3926 = vmatpush1.bf16.msra.mxu0 0
        %3927 = vmatprep.subr.bf16.mxu0 0
        %3928 = vmatpush1.bf16.msra.mxu0 0
        %3929 = vmatprep.mubr.bf16.mxu0 0
        %3930 = vmatmul.mubr.bf16.gmra.mrb[0].mxu0 %v3389
        %v3931 = vpop.f32.mrb[0].mxu0
        %v3932 = vadd.f32 %v3690, %v3931
        %v3933 = vpop.f32.mrb[0].mxu0
        %v3934 = vadd.f32 %v3692, %v3933
        %v3935 = vpop.f32.mrb[0].mxu0
        %v3936 = vpop.f32.mrb[0].mxu0
        %3937 = vdwg.mxu0
        %v3938 = vld [vmem:[%s6] sm:$0xf]
        %v3940 = vlaneseq
        %v3941 = vshrl.u32 %v3940, 7
        %v3942 = vsub.s32 0, %v3941
        %v3943 = vrot.slane %v3938, %v3942
        %v3944 = vlaneseq
        %v3945 = vshrl.u32 %v3944, 7
        %v3946 = vsub.s32 1, %v3945
        %v3947 = vrot.slane %v3938, %v3946
        %v3948 = vlaneseq
        %v3949 = vshrl.u32 %v3948, 7
        %v3950 = vsub.s32 2, %v3949
        %v3951 = vrot.slane %v3938, %v3950
        %v3952 = vlaneseq
        %v3953 = vshrl.u32 %v3952, 7
        %v3954 = vsub.s32 3, %v3953
        %v3955 = vrot.slane %v3938, %v3954
        %v3960 = vadd.f32 %v3891, %v3943
        %v3961 = vadd.f32 %v3893, %v3947
        %v3962 = vadd.f32 %v3932, %v3951
        %v3963 = vadd.f32 %v3934, %v3955
        %v3964 = vxor.u32 %v3960, 2147483648
        %v3965 = vmul.f32 %v3964, 1.442695
        %v3966 = vpow.pop %v3965
        %v3967 = vadd.f32 %v3966, 1.0
        %v3968 = vrcp.pop %v3967
        %v3969 = vmul.f32 1.0, %v3968
        %v3970 = vxor.u32 %v3961, 2147483648
        %v3971 = vmul.f32 %v3970, 1.442695
        %v3972 = vpow.pop %v3971
        %v3973 = vadd.f32 %v3972, 1.0
        %v3974 = vrcp.pop %v3973
        %v3975 = vmul.f32 1.0, %v3974
        %v3976 = vtanh.pop %v3962
        %v3977 = vxor.u32 %v3963, 2147483648
        %v3978 = vmul.f32 %v3977, 1.442695
        %v3979 = vpow.pop %v3978
        %v3980 = vadd.f32 %v3979, 1.0
        %v3981 = vrcp.pop %v3980
        %v3982 = vmul.f32 1.0, %v3981
        %v3983 = vmul.f32 %v3975, %v3076
        %v3984 = vmul.f32 %v3969, %v3976
        %v3985 = vadd.f32 %v3983, %v3984
        %v3986 = vtanh.pop %v3985
        %v3987 = vmul.f32 %v3982, %v3986
        %v3988 = vpack.c.bf16 %v3987, %v3987
        %s3989 = scalar_lea.vmem %s334, 12
        %3990 = vst [vmem:[%s3989] sm:$0xf] %v3988
        %s3991 = scalar_lea.vmem %s328, 128
        %v3992 = vld [vmem:[%s3991] sm:$0xff]
        %v3993 = vld [vmem:[%s3991 + $0x8] sm:$0xff]
        %v3994 = vld [vmem:[%s3991 + $0x10] sm:$0xff]
        %v3995 = vld [vmem:[%s3991 + $0x18] sm:$0xff]
        %v3996 = vld [vmem:[%s3] sm:$0xff]
        %v3997 = vld [vmem:[%s3 + $0x8] sm:$0xff]
        %v3998 = vld [vmem:[%s3 + $0x10] sm:$0xff]
        %v3999 = vld [vmem:[%s3 + $0x18] sm:$0xff]
        %v4000 = vld [vmem:[%s3 + $0x20] sm:$0xff]
        %v4001 = vld [vmem:[%s3 + $0x28] sm:$0xff]
        %v4002 = vld [vmem:[%s3 + $0x30] sm:$0xff]
        %v4003 = vld [vmem:[%s3 + $0x38] sm:$0xff]
        %v4004 = vld [vmem:[%s3 + $0x40] sm:$0xff]
        %v4005 = vld [vmem:[%s3 + $0x48] sm:$0xff]
        %v4006 = vld [vmem:[%s3 + $0x50] sm:$0xff]
        %v4007 = vld [vmem:[%s3 + $0x58] sm:$0xff]
        %v4008 = vld [vmem:[%s3 + $0x60] sm:$0xff]
        %v4009 = vld [vmem:[%s3 + $0x68] sm:$0xff]
        %v4010 = vld [vmem:[%s3 + $0x70] sm:$0xff]
        %v4011 = vld [vmem:[%s3 + $0x78] sm:$0xff]
        %v4012 = vld [vmem:[%s3 + $0x80] sm:$0xff]
        %v4013 = vld [vmem:[%s3 + $0x88] sm:$0xff]
        %v4014 = vld [vmem:[%s3 + $0x90] sm:$0xff]
        %v4015 = vld [vmem:[%s3 + $0x98] sm:$0xff]
        %v4016 = vld [vmem:[%s3 + $0xa0] sm:$0xff]
        %v4017 = vld [vmem:[%s3 + $0xa8] sm:$0xff]
        %v4018 = vld [vmem:[%s3 + $0xb0] sm:$0xff]
        %v4019 = vld [vmem:[%s3 + $0xb8] sm:$0xff]
        %v4020 = vld [vmem:[%s3 + $0xc0] sm:$0xff]
        %v4021 = vld [vmem:[%s3 + $0xc8] sm:$0xff]
        %v4022 = vld [vmem:[%s3 + $0xd0] sm:$0xff]
        %v4023 = vld [vmem:[%s3 + $0xd8] sm:$0xff]
        %v4024 = vld [vmem:[%s3 + $0xe0] sm:$0xff]
        %v4025 = vld [vmem:[%s3 + $0xe8] sm:$0xff]
        %v4026 = vld [vmem:[%s3 + $0xf0] sm:$0xff]
        %v4027 = vld [vmem:[%s3 + $0xf8] sm:$0xff]
        %v4060 = vunpack.c.l.b16 %v3996
        %v4061 = vunpack.c.h.b16 %v3996
        %v4062 = vunpack.c.l.b16 %v3997
        %v4063 = vunpack.c.h.b16 %v3997
        %v4064 = vunpack.c.l.b16 %v3998
        %v4065 = vunpack.c.h.b16 %v3998
        %v4066 = vunpack.c.l.b16 %v3999
        %v4067 = vunpack.c.h.b16 %v3999
        %v4068 = vunpack.c.l.b16 %v4000
        %v4069 = vunpack.c.h.b16 %v4000
        %v4070 = vunpack.c.l.b16 %v4001
        %v4071 = vunpack.c.h.b16 %v4001
        %v4072 = vunpack.c.l.b16 %v4002
        %v4073 = vunpack.c.h.b16 %v4002
        %v4074 = vunpack.c.l.b16 %v4003
        %v4075 = vunpack.c.h.b16 %v4003
        %v4076 = vunpack.c.l.b16 %v4004
        %v4077 = vunpack.c.h.b16 %v4004
        %v4078 = vunpack.c.l.b16 %v4005
        %v4079 = vunpack.c.h.b16 %v4005
        %v4080 = vunpack.c.l.b16 %v4006
        %v4081 = vunpack.c.h.b16 %v4006
        %v4082 = vunpack.c.l.b16 %v4007
        %v4083 = vunpack.c.h.b16 %v4007
        %v4084 = vunpack.c.l.b16 %v4008
        %v4085 = vunpack.c.h.b16 %v4008
        %v4086 = vunpack.c.l.b16 %v4009
        %v4087 = vunpack.c.h.b16 %v4009
        %v4088 = vunpack.c.l.b16 %v4010
        %v4089 = vunpack.c.h.b16 %v4010
        %v4090 = vunpack.c.l.b16 %v4011
        %v4091 = vunpack.c.h.b16 %v4011
        %v4092 = vunpack.c.l.b16 %v4012
        %v4093 = vunpack.c.h.b16 %v4012
        %v4094 = vunpack.c.l.b16 %v4013
        %v4095 = vunpack.c.h.b16 %v4013
        %v4096 = vunpack.c.l.b16 %v4014
        %v4097 = vunpack.c.h.b16 %v4014
        %v4098 = vunpack.c.l.b16 %v4015
        %v4099 = vunpack.c.h.b16 %v4015
        %v4100 = vunpack.c.l.b16 %v4016
        %v4101 = vunpack.c.h.b16 %v4016
        %v4102 = vunpack.c.l.b16 %v4017
        %v4103 = vunpack.c.h.b16 %v4017
        %v4104 = vunpack.c.l.b16 %v4018
        %v4105 = vunpack.c.h.b16 %v4018
        %v4106 = vunpack.c.l.b16 %v4019
        %v4107 = vunpack.c.h.b16 %v4019
        %v4108 = vunpack.c.l.b16 %v4020
        %v4109 = vunpack.c.h.b16 %v4020
        %v4110 = vunpack.c.l.b16 %v4021
        %v4111 = vunpack.c.h.b16 %v4021
        %v4112 = vunpack.c.l.b16 %v4022
        %v4113 = vunpack.c.h.b16 %v4022
        %v4114 = vunpack.c.l.b16 %v4023
        %v4115 = vunpack.c.h.b16 %v4023
        %v4116 = vunpack.c.l.b16 %v4024
        %v4117 = vunpack.c.h.b16 %v4024
        %v4118 = vunpack.c.l.b16 %v4025
        %v4119 = vunpack.c.h.b16 %v4025
        %v4120 = vunpack.c.l.b16 %v4026
        %v4121 = vunpack.c.h.b16 %v4026
        %v4122 = vunpack.c.l.b16 %v4027
        %v4123 = vunpack.c.h.b16 %v4027
        %v4124 = vpack.c.b16 %v4064, %v4060
        %v4125 = vpack.c.b16 %v4065, %v4061
        %v4126 = vpack.c.b16 %v4066, %v4062
        %v4127 = vpack.c.b16 %v4067, %v4063
        %v4128 = vpack.c.b16 %v4072, %v4068
        %v4129 = vpack.c.b16 %v4073, %v4069
        %v4130 = vpack.c.b16 %v4074, %v4070
        %v4131 = vpack.c.b16 %v4075, %v4071
        %v4132 = vpack.c.b16 %v4080, %v4076
        %v4133 = vpack.c.b16 %v4081, %v4077
        %v4134 = vpack.c.b16 %v4082, %v4078
        %v4135 = vpack.c.b16 %v4083, %v4079
        %v4136 = vpack.c.b16 %v4088, %v4084
        %v4137 = vpack.c.b16 %v4089, %v4085
        %v4138 = vpack.c.b16 %v4090, %v4086
        %v4139 = vpack.c.b16 %v4091, %v4087
        %v4140 = vpack.c.b16 %v4096, %v4092
        %v4141 = vpack.c.b16 %v4097, %v4093
        %v4142 = vpack.c.b16 %v4098, %v4094
        %v4143 = vpack.c.b16 %v4099, %v4095
        %v4144 = vpack.c.b16 %v4104, %v4100
        %v4145 = vpack.c.b16 %v4105, %v4101
        %v4146 = vpack.c.b16 %v4106, %v4102
        %v4147 = vpack.c.b16 %v4107, %v4103
        %v4148 = vpack.c.b16 %v4112, %v4108
        %v4149 = vpack.c.b16 %v4113, %v4109
        %v4150 = vpack.c.b16 %v4114, %v4110
        %v4151 = vpack.c.b16 %v4115, %v4111
        %v4152 = vpack.c.b16 %v4120, %v4116
        %v4153 = vpack.c.b16 %v4121, %v4117
        %v4154 = vpack.c.b16 %v4122, %v4118
        %v4155 = vpack.c.b16 %v4123, %v4119
        %4188 = vmatprep.subr.bf16.mxu0 %v4125
        %4189 = vmatpush1.bf16.msra.mxu0 %v4124
        %4190 = vmatprep.subr.bf16.mxu0 %v4129
        %4191 = vmatpush1.bf16.msra.mxu0 %v4128
        %4192 = vmatprep.subr.bf16.mxu0 %v4133
        %4193 = vmatpush1.bf16.msra.mxu0 %v4132
        %4194 = vmatprep.subr.bf16.mxu0 %v4137
        %4195 = vmatpush1.bf16.msra.mxu0 %v4136
        %4196 = vmatprep.subr.bf16.mxu0 %v4141
        %4197 = vmatpush1.bf16.msra.mxu0 %v4140
        %4198 = vmatprep.subr.bf16.mxu0 %v4145
        %4199 = vmatpush1.bf16.msra.mxu0 %v4144
        %4200 = vmatprep.subr.bf16.mxu0 %v4149
        %4201 = vmatpush1.bf16.msra.mxu0 %v4148
        %4202 = vmatprep.subr.bf16.mxu0 %v4153
        %4203 = vmatpush1.bf16.msra.mxu0 %v4152
        %4204 = vmatprep.subr.bf16.mxu0 0
        %4205 = vmatpush1.bf16.msra.mxu0 0
        %4206 = vmatprep.subr.bf16.mxu0 0
        %4207 = vmatpush1.bf16.msra.mxu0 0
        %4208 = vmatprep.subr.bf16.mxu0 0
        %4209 = vmatpush1.bf16.msra.mxu0 0
        %4210 = vmatprep.subr.bf16.mxu0 0
        %4211 = vmatpush1.bf16.msra.mxu0 0
        %4212 = vmatprep.subr.bf16.mxu0 0
        %4213 = vmatpush1.bf16.msra.mxu0 0
        %4214 = vmatprep.subr.bf16.mxu0 0
        %4215 = vmatpush1.bf16.msra.mxu0 0
        %4216 = vmatprep.subr.bf16.mxu0 0
        %4217 = vmatpush1.bf16.msra.mxu0 0
        %4218 = vmatprep.subr.bf16.mxu0 0
        %4219 = vmatpush1.bf16.msra.mxu0 0
        %4220 = vmatprep.mubr.bf16.mxu0 0
        %4221 = vmatmul.mubr.bf16.gmra.mrb[0].mxu0 %v3389
        %v4222 = vpop.f32.mrb[0].mxu0
        %v4223 = vadd.f32 0.0, %v4222
        %v4224 = vpop.f32.mrb[0].mxu0
        %v4225 = vadd.f32 0.0, %v4224
        %v4226 = vpop.f32.mrb[0].mxu0
        %v4227 = vpop.f32.mrb[0].mxu0
        %4228 = vdwg.mxu0
        %4229 = vmatprep.subr.bf16.mxu0 %v4127
        %4230 = vmatpush1.bf16.msra.mxu0 %v4126
        %4231 = vmatprep.subr.bf16.mxu0 %v4131
        %4232 = vmatpush1.bf16.msra.mxu0 %v4130
        %4233 = vmatprep.subr.bf16.mxu0 %v4135
        %4234 = vmatpush1.bf16.msra.mxu0 %v4134
        %4235 = vmatprep.subr.bf16.mxu0 %v4139
        %4236 = vmatpush1.bf16.msra.mxu0 %v4138
        %4237 = vmatprep.subr.bf16.mxu0 %v4143
        %4238 = vmatpush1.bf16.msra.mxu0 %v4142
        %4239 = vmatprep.subr.bf16.mxu0 %v4147
        %4240 = vmatpush1.bf16.msra.mxu0 %v4146
        %4241 = vmatprep.subr.bf16.mxu0 %v4151
        %4242 = vmatpush1.bf16.msra.mxu0 %v4150
        %4243 = vmatprep.subr.bf16.mxu0 %v4155
        %4244 = vmatpush1.bf16.msra.mxu0 %v4154
        %4245 = vmatprep.subr.bf16.mxu0 0
        %4246 = vmatpush1.bf16.msra.mxu0 0
        %4247 = vmatprep.subr.bf16.mxu0 0
        %4248 = vmatpush1.bf16.msra.mxu0 0
        %4249 = vmatprep.subr.bf16.mxu0 0
        %4250 = vmatpush1.bf16.msra.mxu0 0
        %4251 = vmatprep.subr.bf16.mxu0 0
        %4252 = vmatpush1.bf16.msra.mxu0 0
        %4253 = vmatprep.subr.bf16.mxu0 0
        %4254 = vmatpush1.bf16.msra.mxu0 0
        %4255 = vmatprep.subr.bf16.mxu0 0
        %4256 = vmatpush1.bf16.msra.mxu0 0
        %4257 = vmatprep.subr.bf16.mxu0 0
        %4258 = vmatpush1.bf16.msra.mxu0 0
        %4259 = vmatprep.subr.bf16.mxu0 0
        %4260 = vmatpush1.bf16.msra.mxu0 0
        %4261 = vmatprep.mubr.bf16.mxu0 0
        %4262 = vmatmul.mubr.bf16.gmra.mrb[0].mxu0 %v3389
        %v4263 = vpop.f32.mrb[0].mxu0
        %v4264 = vadd.f32 0.0, %v4263
        %v4265 = vpop.f32.mrb[0].mxu0
        %v4266 = vadd.f32 0.0, %v4265
        %v4267 = vpop.f32.mrb[0].mxu0
        %v4268 = vpop.f32.mrb[0].mxu0
        %4269 = vdwg.mxu0
        %v4270 = vadd.f32 %v3992, %v4223
        %v4271 = vadd.f32 %v3993, %v4225
        %v4272 = vadd.f32 %v3994, %v4264
        %v4273 = vadd.f32 %v3995, %v4266
        %v4274 = vxor.u32 %v4270, 2147483648
        %v4275 = vmul.f32 %v4274, 1.442695
        %v4276 = vpow.pop %v4275
        %v4277 = vadd.f32 %v4276, 1.0
        %v4278 = vrcp.pop %v4277
        %v4279 = vmul.f32 1.0, %v4278
        %v4280 = vxor.u32 %v4271, 2147483648
        %v4281 = vmul.f32 %v4280, 1.442695
        %v4282 = vpow.pop %v4281
        %v4283 = vadd.f32 %v4282, 1.0
        %v4284 = vrcp.pop %v4283
        %v4285 = vmul.f32 1.0, %v4284
        %v4286 = vtanh.pop %v4272
        %v4287 = vxor.u32 %v4273, 2147483648
        %v4288 = vmul.f32 %v4287, 1.442695
        %v4289 = vpow.pop %v4288
        %v4290 = vadd.f32 %v4289, 1.0
        %v4291 = vrcp.pop %v4290
        %v4292 = vmul.f32 1.0, %v4291
        %v4293 = vmul.f32 %v4285, %v3386
        %v4294 = vmul.f32 %v4279, %v4286
        %v4295 = vadd.f32 %v4293, %v4294
        %v4296 = vtanh.pop %v4295
        %v4297 = vmul.f32 %v4292, %v4296
        %v4298 = vpack.c.bf16 %v4297, %v4297
        %v4299 = vld [vmem:[%s4] sm:$0xff]
        %v4300 = vld [vmem:[%s4 + $0x8] sm:$0xff]
        %v4301 = vld [vmem:[%s4 + $0x10] sm:$0xff]
        %v4302 = vld [vmem:[%s4 + $0x18] sm:$0xff]
        %v4303 = vld [vmem:[%s4 + $0x20] sm:$0xff]
        %v4304 = vld [vmem:[%s4 + $0x28] sm:$0xff]
        %v4305 = vld [vmem:[%s4 + $0x30] sm:$0xff]
        %v4306 = vld [vmem:[%s4 + $0x38] sm:$0xff]
        %v4307 = vld [vmem:[%s4 + $0x40] sm:$0xff]
        %v4308 = vld [vmem:[%s4 + $0x48] sm:$0xff]
        %v4309 = vld [vmem:[%s4 + $0x50] sm:$0xff]
        %v4310 = vld [vmem:[%s4 + $0x58] sm:$0xff]
        %v4311 = vld [vmem:[%s4 + $0x60] sm:$0xff]
        %v4312 = vld [vmem:[%s4 + $0x68] sm:$0xff]
        %v4313 = vld [vmem:[%s4 + $0x70] sm:$0xff]
        %v4314 = vld [vmem:[%s4 + $0x78] sm:$0xff]
        %v4315 = vld [vmem:[%s4 + $0x80] sm:$0xff]
        %v4316 = vld [vmem:[%s4 + $0x88] sm:$0xff]
        %v4317 = vld [vmem:[%s4 + $0x90] sm:$0xff]
        %v4318 = vld [vmem:[%s4 + $0x98] sm:$0xff]
        %v4319 = vld [vmem:[%s4 + $0xa0] sm:$0xff]
        %v4320 = vld [vmem:[%s4 + $0xa8] sm:$0xff]
        %v4321 = vld [vmem:[%s4 + $0xb0] sm:$0xff]
        %v4322 = vld [vmem:[%s4 + $0xb8] sm:$0xff]
        %v4323 = vld [vmem:[%s4 + $0xc0] sm:$0xff]
        %v4324 = vld [vmem:[%s4 + $0xc8] sm:$0xff]
        %v4325 = vld [vmem:[%s4 + $0xd0] sm:$0xff]
        %v4326 = vld [vmem:[%s4 + $0xd8] sm:$0xff]
        %v4327 = vld [vmem:[%s4 + $0xe0] sm:$0xff]
        %v4328 = vld [vmem:[%s4 + $0xe8] sm:$0xff]
        %v4329 = vld [vmem:[%s4 + $0xf0] sm:$0xff]
        %v4330 = vld [vmem:[%s4 + $0xf8] sm:$0xff]
        %v4331 = vld [vmem:[%s5] sm:$0xff]
        %v4332 = vld [vmem:[%s5 + $0x8] sm:$0xff]
        %v4333 = vld [vmem:[%s5 + $0x10] sm:$0xff]
        %v4334 = vld [vmem:[%s5 + $0x18] sm:$0xff]
        %v4335 = vld [vmem:[%s5 + $0x20] sm:$0xff]
        %v4336 = vld [vmem:[%s5 + $0x28] sm:$0xff]
        %v4337 = vld [vmem:[%s5 + $0x30] sm:$0xff]
        %v4338 = vld [vmem:[%s5 + $0x38] sm:$0xff]
        %v4339 = vld [vmem:[%s5 + $0x40] sm:$0xff]
        %v4340 = vld [vmem:[%s5 + $0x48] sm:$0xff]
        %v4341 = vld [vmem:[%s5 + $0x50] sm:$0xff]
        %v4342 = vld [vmem:[%s5 + $0x58] sm:$0xff]
        %v4343 = vld [vmem:[%s5 + $0x60] sm:$0xff]
        %v4344 = vld [vmem:[%s5 + $0x68] sm:$0xff]
        %v4345 = vld [vmem:[%s5 + $0x70] sm:$0xff]
        %v4346 = vld [vmem:[%s5 + $0x78] sm:$0xff]
        %v4347 = vld [vmem:[%s5 + $0x80] sm:$0xff]
        %v4348 = vld [vmem:[%s5 + $0x88] sm:$0xff]
        %v4349 = vld [vmem:[%s5 + $0x90] sm:$0xff]
        %v4350 = vld [vmem:[%s5 + $0x98] sm:$0xff]
        %v4351 = vld [vmem:[%s5 + $0xa0] sm:$0xff]
        %v4352 = vld [vmem:[%s5 + $0xa8] sm:$0xff]
        %v4353 = vld [vmem:[%s5 + $0xb0] sm:$0xff]
        %v4354 = vld [vmem:[%s5 + $0xb8] sm:$0xff]
        %v4355 = vld [vmem:[%s5 + $0xc0] sm:$0xff]
        %v4356 = vld [vmem:[%s5 + $0xc8] sm:$0xff]
        %v4357 = vld [vmem:[%s5 + $0xd0] sm:$0xff]
        %v4358 = vld [vmem:[%s5 + $0xd8] sm:$0xff]
        %v4359 = vld [vmem:[%s5 + $0xe0] sm:$0xff]
        %v4360 = vld [vmem:[%s5 + $0xe8] sm:$0xff]
        %v4361 = vld [vmem:[%s5 + $0xf0] sm:$0xff]
        %v4362 = vld [vmem:[%s5 + $0xf8] sm:$0xff]
        %v4395 = vunpack.c.l.b16 %v4331
        %v4396 = vunpack.c.h.b16 %v4331
        %v4397 = vunpack.c.l.b16 %v4332
        %v4398 = vunpack.c.h.b16 %v4332
        %v4399 = vunpack.c.l.b16 %v4333
        %v4400 = vunpack.c.h.b16 %v4333
        %v4401 = vunpack.c.l.b16 %v4334
        %v4402 = vunpack.c.h.b16 %v4334
        %v4403 = vunpack.c.l.b16 %v4335
        %v4404 = vunpack.c.h.b16 %v4335
        %v4405 = vunpack.c.l.b16 %v4336
        %v4406 = vunpack.c.h.b16 %v4336
        %v4407 = vunpack.c.l.b16 %v4337
        %v4408 = vunpack.c.h.b16 %v4337
        %v4409 = vunpack.c.l.b16 %v4338
        %v4410 = vunpack.c.h.b16 %v4338
        %v4411 = vunpack.c.l.b16 %v4339
        %v4412 = vunpack.c.h.b16 %v4339
        %v4413 = vunpack.c.l.b16 %v4340
        %v4414 = vunpack.c.h.b16 %v4340
        %v4415 = vunpack.c.l.b16 %v4341
        %v4416 = vunpack.c.h.b16 %v4341
        %v4417 = vunpack.c.l.b16 %v4342
        %v4418 = vunpack.c.h.b16 %v4342
        %v4419 = vunpack.c.l.b16 %v4343
        %v4420 = vunpack.c.h.b16 %v4343
        %v4421 = vunpack.c.l.b16 %v4344
        %v4422 = vunpack.c.h.b16 %v4344
        %v4423 = vunpack.c.l.b16 %v4345
        %v4424 = vunpack.c.h.b16 %v4345
        %v4425 = vunpack.c.l.b16 %v4346
        %v4426 = vunpack.c.h.b16 %v4346
        %v4427 = vunpack.c.l.b16 %v4347
        %v4428 = vunpack.c.h.b16 %v4347
        %v4429 = vunpack.c.l.b16 %v4348
        %v4430 = vunpack.c.h.b16 %v4348
        %v4431 = vunpack.c.l.b16 %v4349
        %v4432 = vunpack.c.h.b16 %v4349
        %v4433 = vunpack.c.l.b16 %v4350
        %v4434 = vunpack.c.h.b16 %v4350
        %v4435 = vunpack.c.l.b16 %v4351
        %v4436 = vunpack.c.h.b16 %v4351
        %v4437 = vunpack.c.l.b16 %v4352
        %v4438 = vunpack.c.h.b16 %v4352
        %v4439 = vunpack.c.l.b16 %v4353
        %v4440 = vunpack.c.h.b16 %v4353
        %v4441 = vunpack.c.l.b16 %v4354
        %v4442 = vunpack.c.h.b16 %v4354
        %v4443 = vunpack.c.l.b16 %v4355
        %v4444 = vunpack.c.h.b16 %v4355
        %v4445 = vunpack.c.l.b16 %v4356
        %v4446 = vunpack.c.h.b16 %v4356
        %v4447 = vunpack.c.l.b16 %v4357
        %v4448 = vunpack.c.h.b16 %v4357
        %v4449 = vunpack.c.l.b16 %v4358
        %v4450 = vunpack.c.h.b16 %v4358
        %v4451 = vunpack.c.l.b16 %v4359
        %v4452 = vunpack.c.h.b16 %v4359
        %v4453 = vunpack.c.l.b16 %v4360
        %v4454 = vunpack.c.h.b16 %v4360
        %v4455 = vunpack.c.l.b16 %v4361
        %v4456 = vunpack.c.h.b16 %v4361
        %v4457 = vunpack.c.l.b16 %v4362
        %v4458 = vunpack.c.h.b16 %v4362
        %v4459 = vpack.c.b16 %v4399, %v4395
        %v4460 = vpack.c.b16 %v4400, %v4396
        %v4461 = vpack.c.b16 %v4401, %v4397
        %v4462 = vpack.c.b16 %v4402, %v4398
        %v4463 = vpack.c.b16 %v4407, %v4403
        %v4464 = vpack.c.b16 %v4408, %v4404
        %v4465 = vpack.c.b16 %v4409, %v4405
        %v4466 = vpack.c.b16 %v4410, %v4406
        %v4467 = vpack.c.b16 %v4415, %v4411
        %v4468 = vpack.c.b16 %v4416, %v4412
        %v4469 = vpack.c.b16 %v4417, %v4413
        %v4470 = vpack.c.b16 %v4418, %v4414
        %v4471 = vpack.c.b16 %v4423, %v4419
        %v4472 = vpack.c.b16 %v4424, %v4420
        %v4473 = vpack.c.b16 %v4425, %v4421
        %v4474 = vpack.c.b16 %v4426, %v4422
        %v4475 = vpack.c.b16 %v4431, %v4427
        %v4476 = vpack.c.b16 %v4432, %v4428
        %v4477 = vpack.c.b16 %v4433, %v4429
        %v4478 = vpack.c.b16 %v4434, %v4430
        %v4479 = vpack.c.b16 %v4439, %v4435
        %v4480 = vpack.c.b16 %v4440, %v4436
        %v4481 = vpack.c.b16 %v4441, %v4437
        %v4482 = vpack.c.b16 %v4442, %v4438
        %v4483 = vpack.c.b16 %v4447, %v4443
        %v4484 = vpack.c.b16 %v4448, %v4444
        %v4485 = vpack.c.b16 %v4449, %v4445
        %v4486 = vpack.c.b16 %v4450, %v4446
        %v4487 = vpack.c.b16 %v4455, %v4451
        %v4488 = vpack.c.b16 %v4456, %v4452
        %v4489 = vpack.c.b16 %v4457, %v4453
        %v4490 = vpack.c.b16 %v4458, %v4454
        %4523 = vmatprep.subr.bf16.mxu0 %v4460
        %4524 = vmatpush1.bf16.msra.mxu0 %v4459
        %4525 = vmatprep.subr.bf16.mxu0 %v4464
        %4526 = vmatpush1.bf16.msra.mxu0 %v4463
        %4527 = vmatprep.subr.bf16.mxu0 %v4468
        %4528 = vmatpush1.bf16.msra.mxu0 %v4467
        %4529 = vmatprep.subr.bf16.mxu0 %v4472
        %4530 = vmatpush1.bf16.msra.mxu0 %v4471
        %4531 = vmatprep.subr.bf16.mxu0 %v4476
        %4532 = vmatpush1.bf16.msra.mxu0 %v4475
        %4533 = vmatprep.subr.bf16.mxu0 %v4480
        %4534 = vmatpush1.bf16.msra.mxu0 %v4479
        %4535 = vmatprep.subr.bf16.mxu0 %v4484
        %4536 = vmatpush1.bf16.msra.mxu0 %v4483
        %4537 = vmatprep.subr.bf16.mxu0 %v4488
        %4538 = vmatpush1.bf16.msra.mxu0 %v4487
        %4539 = vmatprep.subr.bf16.mxu0 0
        %4540 = vmatpush1.bf16.msra.mxu0 0
        %4541 = vmatprep.subr.bf16.mxu0 0
        %4542 = vmatpush1.bf16.msra.mxu0 0
        %4543 = vmatprep.subr.bf16.mxu0 0
        %4544 = vmatpush1.bf16.msra.mxu0 0
        %4545 = vmatprep.subr.bf16.mxu0 0
        %4546 = vmatpush1.bf16.msra.mxu0 0
        %4547 = vmatprep.subr.bf16.mxu0 0
        %4548 = vmatpush1.bf16.msra.mxu0 0
        %4549 = vmatprep.subr.bf16.mxu0 0
        %4550 = vmatpush1.bf16.msra.mxu0 0
        %4551 = vmatprep.subr.bf16.mxu0 0
        %4552 = vmatpush1.bf16.msra.mxu0 0
        %4553 = vmatprep.subr.bf16.mxu0 0
        %4554 = vmatpush1.bf16.msra.mxu0 0
        %4555 = vmatprep.mubr.bf16.mxu0 0
        %4556 = vmatmul.mubr.bf16.gmra.mrb[0].mxu0 %v3988
        %v4557 = vpop.f32.mrb[0].mxu0
        %v4558 = vadd.f32 0.0, %v4557
        %v4559 = vpop.f32.mrb[0].mxu0
        %v4560 = vadd.f32 0.0, %v4559
        %v4561 = vpop.f32.mrb[0].mxu0
        %v4562 = vpop.f32.mrb[0].mxu0
        %4563 = vdwg.mxu0
        %4564 = vmatprep.subr.bf16.mxu0 %v4462
        %4565 = vmatpush1.bf16.msra.mxu0 %v4461
        %4566 = vmatprep.subr.bf16.mxu0 %v4466
        %4567 = vmatpush1.bf16.msra.mxu0 %v4465
        %4568 = vmatprep.subr.bf16.mxu0 %v4470
        %4569 = vmatpush1.bf16.msra.mxu0 %v4469
        %4570 = vmatprep.subr.bf16.mxu0 %v4474
        %4571 = vmatpush1.bf16.msra.mxu0 %v4473
        %4572 = vmatprep.subr.bf16.mxu0 %v4478
        %4573 = vmatpush1.bf16.msra.mxu0 %v4477
        %4574 = vmatprep.subr.bf16.mxu0 %v4482
        %4575 = vmatpush1.bf16.msra.mxu0 %v4481
        %4576 = vmatprep.subr.bf16.mxu0 %v4486
        %4577 = vmatpush1.bf16.msra.mxu0 %v4485
        %4578 = vmatprep.subr.bf16.mxu0 %v4490
        %4579 = vmatpush1.bf16.msra.mxu0 %v4489
        %4580 = vmatprep.subr.bf16.mxu0 0
        %4581 = vmatpush1.bf16.msra.mxu0 0
        %4582 = vmatprep.subr.bf16.mxu0 0
        %4583 = vmatpush1.bf16.msra.mxu0 0
        %4584 = vmatprep.subr.bf16.mxu0 0
        %4585 = vmatpush1.bf16.msra.mxu0 0
        %4586 = vmatprep.subr.bf16.mxu0 0
        %4587 = vmatpush1.bf16.msra.mxu0 0
        %4588 = vmatprep.subr.bf16.mxu0 0
        %4589 = vmatpush1.bf16.msra.mxu0 0
        %4590 = vmatprep.subr.bf16.mxu0 0
        %4591 = vmatpush1.bf16.msra.mxu0 0
        %4592 = vmatprep.subr.bf16.mxu0 0
        %4593 = vmatpush1.bf16.msra.mxu0 0
        %4594 = vmatprep.subr.bf16.mxu0 0
        %4595 = vmatpush1.bf16.msra.mxu0 0
        %4596 = vmatprep.mubr.bf16.mxu0 0
        %4597 = vmatmul.mubr.bf16.gmra.mrb[0].mxu0 %v3988
        %v4598 = vpop.f32.mrb[0].mxu0
        %v4599 = vadd.f32 0.0, %v4598
        %v4600 = vpop.f32.mrb[0].mxu0
        %v4601 = vadd.f32 0.0, %v4600
        %v4602 = vpop.f32.mrb[0].mxu0
        %v4603 = vpop.f32.mrb[0].mxu0
        %4604 = vdwg.mxu0
        %v4637 = vunpack.c.l.b16 %v4299
        %v4638 = vunpack.c.h.b16 %v4299
        %v4639 = vunpack.c.l.b16 %v4300
        %v4640 = vunpack.c.h.b16 %v4300
        %v4641 = vunpack.c.l.b16 %v4301
        %v4642 = vunpack.c.h.b16 %v4301
        %v4643 = vunpack.c.l.b16 %v4302
        %v4644 = vunpack.c.h.b16 %v4302
        %v4645 = vunpack.c.l.b16 %v4303
        %v4646 = vunpack.c.h.b16 %v4303
        %v4647 = vunpack.c.l.b16 %v4304
        %v4648 = vunpack.c.h.b16 %v4304
        %v4649 = vunpack.c.l.b16 %v4305
        %v4650 = vunpack.c.h.b16 %v4305
        %v4651 = vunpack.c.l.b16 %v4306
        %v4652 = vunpack.c.h.b16 %v4306
        %v4653 = vunpack.c.l.b16 %v4307
        %v4654 = vunpack.c.h.b16 %v4307
        %v4655 = vunpack.c.l.b16 %v4308
        %v4656 = vunpack.c.h.b16 %v4308
        %v4657 = vunpack.c.l.b16 %v4309
        %v4658 = vunpack.c.h.b16 %v4309
        %v4659 = vunpack.c.l.b16 %v4310
        %v4660 = vunpack.c.h.b16 %v4310
        %v4661 = vunpack.c.l.b16 %v4311
        %v4662 = vunpack.c.h.b16 %v4311
        %v4663 = vunpack.c.l.b16 %v4312
        %v4664 = vunpack.c.h.b16 %v4312
        %v4665 = vunpack.c.l.b16 %v4313
        %v4666 = vunpack.c.h.b16 %v4313
        %v4667 = vunpack.c.l.b16 %v4314
        %v4668 = vunpack.c.h.b16 %v4314
        %v4669 = vunpack.c.l.b16 %v4315
        %v4670 = vunpack.c.h.b16 %v4315
        %v4671 = vunpack.c.l.b16 %v4316
        %v4672 = vunpack.c.h.b16 %v4316
        %v4673 = vunpack.c.l.b16 %v4317
        %v4674 = vunpack.c.h.b16 %v4317
        %v4675 = vunpack.c.l.b16 %v4318
        %v4676 = vunpack.c.h.b16 %v4318
        %v4677 = vunpack.c.l.b16 %v4319
        %v4678 = vunpack.c.h.b16 %v4319
        %v4679 = vunpack.c.l.b16 %v4320
        %v4680 = vunpack.c.h.b16 %v4320
        %v4681 = vunpack.c.l.b16 %v4321
        %v4682 = vunpack.c.h.b16 %v4321
        %v4683 = vunpack.c.l.b16 %v4322
        %v4684 = vunpack.c.h.b16 %v4322
        %v4685 = vunpack.c.l.b16 %v4323
        %v4686 = vunpack.c.h.b16 %v4323
        %v4687 = vunpack.c.l.b16 %v4324
        %v4688 = vunpack.c.h.b16 %v4324
        %v4689 = vunpack.c.l.b16 %v4325
        %v4690 = vunpack.c.h.b16 %v4325
        %v4691 = vunpack.c.l.b16 %v4326
        %v4692 = vunpack.c.h.b16 %v4326
        %v4693 = vunpack.c.l.b16 %v4327
        %v4694 = vunpack.c.h.b16 %v4327
        %v4695 = vunpack.c.l.b16 %v4328
        %v4696 = vunpack.c.h.b16 %v4328
        %v4697 = vunpack.c.l.b16 %v4329
        %v4698 = vunpack.c.h.b16 %v4329
        %v4699 = vunpack.c.l.b16 %v4330
        %v4700 = vunpack.c.h.b16 %v4330
        %v4701 = vpack.c.b16 %v4641, %v4637
        %v4702 = vpack.c.b16 %v4642, %v4638
        %v4703 = vpack.c.b16 %v4643, %v4639
        %v4704 = vpack.c.b16 %v4644, %v4640
        %v4705 = vpack.c.b16 %v4649, %v4645
        %v4706 = vpack.c.b16 %v4650, %v4646
        %v4707 = vpack.c.b16 %v4651, %v4647
        %v4708 = vpack.c.b16 %v4652, %v4648
        %v4709 = vpack.c.b16 %v4657, %v4653
        %v4710 = vpack.c.b16 %v4658, %v4654
        %v4711 = vpack.c.b16 %v4659, %v4655
        %v4712 = vpack.c.b16 %v4660, %v4656
        %v4713 = vpack.c.b16 %v4665, %v4661
        %v4714 = vpack.c.b16 %v4666, %v4662
        %v4715 = vpack.c.b16 %v4667, %v4663
        %v4716 = vpack.c.b16 %v4668, %v4664
        %v4717 = vpack.c.b16 %v4673, %v4669
        %v4718 = vpack.c.b16 %v4674, %v4670
        %v4719 = vpack.c.b16 %v4675, %v4671
        %v4720 = vpack.c.b16 %v4676, %v4672
        %v4721 = vpack.c.b16 %v4681, %v4677
        %v4722 = vpack.c.b16 %v4682, %v4678
        %v4723 = vpack.c.b16 %v4683, %v4679
        %v4724 = vpack.c.b16 %v4684, %v4680
        %v4725 = vpack.c.b16 %v4689, %v4685
        %v4726 = vpack.c.b16 %v4690, %v4686
        %v4727 = vpack.c.b16 %v4691, %v4687
        %v4728 = vpack.c.b16 %v4692, %v4688
        %v4729 = vpack.c.b16 %v4697, %v4693
        %v4730 = vpack.c.b16 %v4698, %v4694
        %v4731 = vpack.c.b16 %v4699, %v4695
        %v4732 = vpack.c.b16 %v4700, %v4696
        %4765 = vmatprep.subr.bf16.mxu0 %v4702
        %4766 = vmatpush1.bf16.msra.mxu0 %v4701
        %4767 = vmatprep.subr.bf16.mxu0 %v4706
        %4768 = vmatpush1.bf16.msra.mxu0 %v4705
        %4769 = vmatprep.subr.bf16.mxu0 %v4710
        %4770 = vmatpush1.bf16.msra.mxu0 %v4709
        %4771 = vmatprep.subr.bf16.mxu0 %v4714
        %4772 = vmatpush1.bf16.msra.mxu0 %v4713
        %4773 = vmatprep.subr.bf16.mxu0 %v4718
        %4774 = vmatpush1.bf16.msra.mxu0 %v4717
        %4775 = vmatprep.subr.bf16.mxu0 %v4722
        %4776 = vmatpush1.bf16.msra.mxu0 %v4721
        %4777 = vmatprep.subr.bf16.mxu0 %v4726
        %4778 = vmatpush1.bf16.msra.mxu0 %v4725
        %4779 = vmatprep.subr.bf16.mxu0 %v4730
        %4780 = vmatpush1.bf16.msra.mxu0 %v4729
        %4781 = vmatprep.subr.bf16.mxu0 0
        %4782 = vmatpush1.bf16.msra.mxu0 0
        %4783 = vmatprep.subr.bf16.mxu0 0
        %4784 = vmatpush1.bf16.msra.mxu0 0
        %4785 = vmatprep.subr.bf16.mxu0 0
        %4786 = vmatpush1.bf16.msra.mxu0 0
        %4787 = vmatprep.subr.bf16.mxu0 0
        %4788 = vmatpush1.bf16.msra.mxu0 0
        %4789 = vmatprep.subr.bf16.mxu0 0
        %4790 = vmatpush1.bf16.msra.mxu0 0
        %4791 = vmatprep.subr.bf16.mxu0 0
        %4792 = vmatpush1.bf16.msra.mxu0 0
        %4793 = vmatprep.subr.bf16.mxu0 0
        %4794 = vmatpush1.bf16.msra.mxu0 0
        %4795 = vmatprep.subr.bf16.mxu0 0
        %4796 = vmatpush1.bf16.msra.mxu0 0
        %4797 = vmatprep.mubr.bf16.mxu0 0
        %4798 = vmatmul.mubr.bf16.gmra.mrb[0].mxu0 %v4298
        %v4799 = vpop.f32.mrb[0].mxu0
        %v4800 = vadd.f32 %v4558, %v4799
        %v4801 = vpop.f32.mrb[0].mxu0
        %v4802 = vadd.f32 %v4560, %v4801
        %v4803 = vpop.f32.mrb[0].mxu0
        %v4804 = vpop.f32.mrb[0].mxu0
        %4805 = vdwg.mxu0
        %4806 = vmatprep.subr.bf16.mxu0 %v4704
        %4807 = vmatpush1.bf16.msra.mxu0 %v4703
        %4808 = vmatprep.subr.bf16.mxu0 %v4708
        %4809 = vmatpush1.bf16.msra.mxu0 %v4707
        %4810 = vmatprep.subr.bf16.mxu0 %v4712
        %4811 = vmatpush1.bf16.msra.mxu0 %v4711
        %4812 = vmatprep.subr.bf16.mxu0 %v4716
        %4813 = vmatpush1.bf16.msra.mxu0 %v4715
        %4814 = vmatprep.subr.bf16.mxu0 %v4720
        %4815 = vmatpush1.bf16.msra.mxu0 %v4719
        %4816 = vmatprep.subr.bf16.mxu0 %v4724
        %4817 = vmatpush1.bf16.msra.mxu0 %v4723
        %4818 = vmatprep.subr.bf16.mxu0 %v4728
        %4819 = vmatpush1.bf16.msra.mxu0 %v4727
        %4820 = vmatprep.subr.bf16.mxu0 %v4732
        %4821 = vmatpush1.bf16.msra.mxu0 %v4731
        %4822 = vmatprep.subr.bf16.mxu0 0
        %4823 = vmatpush1.bf16.msra.mxu0 0
        %4824 = vmatprep.subr.bf16.mxu0 0
        %4825 = vmatpush1.bf16.msra.mxu0 0
        %4826 = vmatprep.subr.bf16.mxu0 0
        %4827 = vmatpush1.bf16.msra.mxu0 0
        %4828 = vmatprep.subr.bf16.mxu0 0
        %4829 = vmatpush1.bf16.msra.mxu0 0
        %4830 = vmatprep.subr.bf16.mxu0 0
        %4831 = vmatpush1.bf16.msra.mxu0 0
        %4832 = vmatprep.subr.bf16.mxu0 0
        %4833 = vmatpush1.bf16.msra.mxu0 0
        %4834 = vmatprep.subr.bf16.mxu0 0
        %4835 = vmatpush1.bf16.msra.mxu0 0
        %4836 = vmatprep.subr.bf16.mxu0 0
        %4837 = vmatpush1.bf16.msra.mxu0 0
        %4838 = vmatprep.mubr.bf16.mxu0 0
        %4839 = vmatmul.mubr.bf16.gmra.mrb[0].mxu0 %v4298
        %v4840 = vpop.f32.mrb[0].mxu0
        %v4841 = vadd.f32 %v4599, %v4840
        %v4842 = vpop.f32.mrb[0].mxu0
        %v4843 = vadd.f32 %v4601, %v4842
        %v4844 = vpop.f32.mrb[0].mxu0
        %v4845 = vpop.f32.mrb[0].mxu0
        %4846 = vdwg.mxu0
        %v4847 = vld [vmem:[%s6] sm:$0xf]
        %v4849 = vlaneseq
        %v4850 = vshrl.u32 %v4849, 7
        %v4851 = vsub.s32 0, %v4850
        %v4852 = vrot.slane %v4847, %v4851
        %v4853 = vlaneseq
        %v4854 = vshrl.u32 %v4853, 7
        %v4855 = vsub.s32 1, %v4854
        %v4856 = vrot.slane %v4847, %v4855
        %v4857 = vlaneseq
        %v4858 = vshrl.u32 %v4857, 7
        %v4859 = vsub.s32 2, %v4858
        %v4860 = vrot.slane %v4847, %v4859
        %v4861 = vlaneseq
        %v4862 = vshrl.u32 %v4861, 7
        %v4863 = vsub.s32 3, %v4862
        %v4864 = vrot.slane %v4847, %v4863
        %v4869 = vadd.f32 %v4800, %v4852
        %v4870 = vadd.f32 %v4802, %v4856
        %v4871 = vadd.f32 %v4841, %v4860
        %v4872 = vadd.f32 %v4843, %v4864
        %v4873 = vxor.u32 %v4869, 2147483648
        %v4874 = vmul.f32 %v4873, 1.442695
        %v4875 = vpow.pop %v4874
        %v4876 = vadd.f32 %v4875, 1.0
        %v4877 = vrcp.pop %v4876
        %v4878 = vmul.f32 1.0, %v4877
        %v4879 = vxor.u32 %v4870, 2147483648
        %v4880 = vmul.f32 %v4879, 1.442695
        %v4881 = vpow.pop %v4880
        %v4882 = vadd.f32 %v4881, 1.0
        %v4883 = vrcp.pop %v4882
        %v4884 = vmul.f32 1.0, %v4883
        %v4885 = vtanh.pop %v4871
        %v4886 = vxor.u32 %v4872, 2147483648
        %v4887 = vmul.f32 %v4886, 1.442695
        %v4888 = vpow.pop %v4887
        %v4889 = vadd.f32 %v4888, 1.0
        %v4890 = vrcp.pop %v4889
        %v4891 = vmul.f32 1.0, %v4890
        %v4892 = vmul.f32 %v4884, %v3985
        %v4893 = vmul.f32 %v4878, %v4885
        %v4894 = vadd.f32 %v4892, %v4893
        %v4895 = vtanh.pop %v4894
        %v4896 = vmul.f32 %v4891, %v4895
        %v4897 = vpack.c.bf16 %v4896, %v4896
        %s4898 = scalar_lea.vmem %s334, 16
        %4899 = vst [vmem:[%s4898] sm:$0xf] %v4897
        %s4900 = scalar_lea.vmem %s328, 160
        %v4901 = vld [vmem:[%s4900] sm:$0xff]
        %v4902 = vld [vmem:[%s4900 + $0x8] sm:$0xff]
        %v4903 = vld [vmem:[%s4900 + $0x10] sm:$0xff]
        %v4904 = vld [vmem:[%s4900 + $0x18] sm:$0xff]
        %v4905 = vld [vmem:[%s3] sm:$0xff]
        %v4906 = vld [vmem:[%s3 + $0x8] sm:$0xff]
        %v4907 = vld [vmem:[%s3 + $0x10] sm:$0xff]
        %v4908 = vld [vmem:[%s3 + $0x18] sm:$0xff]
        %v4909 = vld [vmem:[%s3 + $0x20] sm:$0xff]
        %v4910 = vld [vmem:[%s3 + $0x28] sm:$0xff]
        %v4911 = vld [vmem:[%s3 + $0x30] sm:$0xff]
        %v4912 = vld [vmem:[%s3 + $0x38] sm:$0xff]
        %v4913 = vld [vmem:[%s3 + $0x40] sm:$0xff]
        %v4914 = vld [vmem:[%s3 + $0x48] sm:$0xff]
        %v4915 = vld [vmem:[%s3 + $0x50] sm:$0xff]
        %v4916 = vld [vmem:[%s3 + $0x58] sm:$0xff]
        %v4917 = vld [vmem:[%s3 + $0x60] sm:$0xff]
        %v4918 = vld [vmem:[%s3 + $0x68] sm:$0xff]
        %v4919 = vld [vmem:[%s3 + $0x70] sm:$0xff]
        %v4920 = vld [vmem:[%s3 + $0x78] sm:$0xff]
        %v4921 = vld [vmem:[%s3 + $0x80] sm:$0xff]
        %v4922 = vld [vmem:[%s3 + $0x88] sm:$0xff]
        %v4923 = vld [vmem:[%s3 + $0x90] sm:$0xff]
        %v4924 = vld [vmem:[%s3 + $0x98] sm:$0xff]
        %v4925 = vld [vmem:[%s3 + $0xa0] sm:$0xff]
        %v4926 = vld [vmem:[%s3 + $0xa8] sm:$0xff]
        %v4927 = vld [vmem:[%s3 + $0xb0] sm:$0xff]
        %v4928 = vld [vmem:[%s3 + $0xb8] sm:$0xff]
        %v4929 = vld [vmem:[%s3 + $0xc0] sm:$0xff]
        %v4930 = vld [vmem:[%s3 + $0xc8] sm:$0xff]
        %v4931 = vld [vmem:[%s3 + $0xd0] sm:$0xff]
        %v4932 = vld [vmem:[%s3 + $0xd8] sm:$0xff]
        %v4933 = vld [vmem:[%s3 + $0xe0] sm:$0xff]
        %v4934 = vld [vmem:[%s3 + $0xe8] sm:$0xff]
        %v4935 = vld [vmem:[%s3 + $0xf0] sm:$0xff]
        %v4936 = vld [vmem:[%s3 + $0xf8] sm:$0xff]
        %v4969 = vunpack.c.l.b16 %v4905
        %v4970 = vunpack.c.h.b16 %v4905
        %v4971 = vunpack.c.l.b16 %v4906
        %v4972 = vunpack.c.h.b16 %v4906
        %v4973 = vunpack.c.l.b16 %v4907
        %v4974 = vunpack.c.h.b16 %v4907
        %v4975 = vunpack.c.l.b16 %v4908
        %v4976 = vunpack.c.h.b16 %v4908
        %v4977 = vunpack.c.l.b16 %v4909
        %v4978 = vunpack.c.h.b16 %v4909
        %v4979 = vunpack.c.l.b16 %v4910
        %v4980 = vunpack.c.h.b16 %v4910
        %v4981 = vunpack.c.l.b16 %v4911
        %v4982 = vunpack.c.h.b16 %v4911
        %v4983 = vunpack.c.l.b16 %v4912
        %v4984 = vunpack.c.h.b16 %v4912
        %v4985 = vunpack.c.l.b16 %v4913
        %v4986 = vunpack.c.h.b16 %v4913
        %v4987 = vunpack.c.l.b16 %v4914
        %v4988 = vunpack.c.h.b16 %v4914
        %v4989 = vunpack.c.l.b16 %v4915
        %v4990 = vunpack.c.h.b16 %v4915
        %v4991 = vunpack.c.l.b16 %v4916
        %v4992 = vunpack.c.h.b16 %v4916
        %v4993 = vunpack.c.l.b16 %v4917
        %v4994 = vunpack.c.h.b16 %v4917
        %v4995 = vunpack.c.l.b16 %v4918
        %v4996 = vunpack.c.h.b16 %v4918
        %v4997 = vunpack.c.l.b16 %v4919
        %v4998 = vunpack.c.h.b16 %v4919
        %v4999 = vunpack.c.l.b16 %v4920
        %v5000 = vunpack.c.h.b16 %v4920
        %v5001 = vunpack.c.l.b16 %v4921
        %v5002 = vunpack.c.h.b16 %v4921
        %v5003 = vunpack.c.l.b16 %v4922
        %v5004 = vunpack.c.h.b16 %v4922
        %v5005 = vunpack.c.l.b16 %v4923
        %v5006 = vunpack.c.h.b16 %v4923
        %v5007 = vunpack.c.l.b16 %v4924
        %v5008 = vunpack.c.h.b16 %v4924
        %v5009 = vunpack.c.l.b16 %v4925
        %v5010 = vunpack.c.h.b16 %v4925
        %v5011 = vunpack.c.l.b16 %v4926
        %v5012 = vunpack.c.h.b16 %v4926
        %v5013 = vunpack.c.l.b16 %v4927
        %v5014 = vunpack.c.h.b16 %v4927
        %v5015 = vunpack.c.l.b16 %v4928
        %v5016 = vunpack.c.h.b16 %v4928
        %v5017 = vunpack.c.l.b16 %v4929
        %v5018 = vunpack.c.h.b16 %v4929
        %v5019 = vunpack.c.l.b16 %v4930
        %v5020 = vunpack.c.h.b16 %v4930
        %v5021 = vunpack.c.l.b16 %v4931
        %v5022 = vunpack.c.h.b16 %v4931
        %v5023 = vunpack.c.l.b16 %v4932
        %v5024 = vunpack.c.h.b16 %v4932
        %v5025 = vunpack.c.l.b16 %v4933
        %v5026 = vunpack.c.h.b16 %v4933
        %v5027 = vunpack.c.l.b16 %v4934
        %v5028 = vunpack.c.h.b16 %v4934
        %v5029 = vunpack.c.l.b16 %v4935
        %v5030 = vunpack.c.h.b16 %v4935
        %v5031 = vunpack.c.l.b16 %v4936
        %v5032 = vunpack.c.h.b16 %v4936
        %v5033 = vpack.c.b16 %v4973, %v4969
        %v5034 = vpack.c.b16 %v4974, %v4970
        %v5035 = vpack.c.b16 %v4975, %v4971
        %v5036 = vpack.c.b16 %v4976, %v4972
        %v5037 = vpack.c.b16 %v4981, %v4977
        %v5038 = vpack.c.b16 %v4982, %v4978
        %v5039 = vpack.c.b16 %v4983, %v4979
        %v5040 = vpack.c.b16 %v4984, %v4980
        %v5041 = vpack.c.b16 %v4989, %v4985
        %v5042 = vpack.c.b16 %v4990, %v4986
        %v5043 = vpack.c.b16 %v4991, %v4987
        %v5044 = vpack.c.b16 %v4992, %v4988
        %v5045 = vpack.c.b16 %v4997, %v4993
        %v5046 = vpack.c.b16 %v4998, %v4994
        %v5047 = vpack.c.b16 %v4999, %v4995
        %v5048 = vpack.c.b16 %v5000, %v4996
        %v5049 = vpack.c.b16 %v5005, %v5001
        %v5050 = vpack.c.b16 %v5006, %v5002
        %v5051 = vpack.c.b16 %v5007, %v5003
        %v5052 = vpack.c.b16 %v5008, %v5004
        %v5053 = vpack.c.b16 %v5013, %v5009
        %v5054 = vpack.c.b16 %v5014, %v5010
        %v5055 = vpack.c.b16 %v5015, %v5011
        %v5056 = vpack.c.b16 %v5016, %v5012
        %v5057 = vpack.c.b16 %v5021, %v5017
        %v5058 = vpack.c.b16 %v5022, %v5018
        %v5059 = vpack.c.b16 %v5023, %v5019
        %v5060 = vpack.c.b16 %v5024, %v5020
        %v5061 = vpack.c.b16 %v5029, %v5025
        %v5062 = vpack.c.b16 %v5030, %v5026
        %v5063 = vpack.c.b16 %v5031, %v5027
        %v5064 = vpack.c.b16 %v5032, %v5028
        %5097 = vmatprep.subr.bf16.mxu0 %v5034
        %5098 = vmatpush1.bf16.msra.mxu0 %v5033
        %5099 = vmatprep.subr.bf16.mxu0 %v5038
        %5100 = vmatpush1.bf16.msra.mxu0 %v5037
        %5101 = vmatprep.subr.bf16.mxu0 %v5042
        %5102 = vmatpush1.bf16.msra.mxu0 %v5041
        %5103 = vmatprep.subr.bf16.mxu0 %v5046
        %5104 = vmatpush1.bf16.msra.mxu0 %v5045
        %5105 = vmatprep.subr.bf16.mxu0 %v5050
        %5106 = vmatpush1.bf16.msra.mxu0 %v5049
        %5107 = vmatprep.subr.bf16.mxu0 %v5054
        %5108 = vmatpush1.bf16.msra.mxu0 %v5053
        %5109 = vmatprep.subr.bf16.mxu0 %v5058
        %5110 = vmatpush1.bf16.msra.mxu0 %v5057
        %5111 = vmatprep.subr.bf16.mxu0 %v5062
        %5112 = vmatpush1.bf16.msra.mxu0 %v5061
        %5113 = vmatprep.subr.bf16.mxu0 0
        %5114 = vmatpush1.bf16.msra.mxu0 0
        %5115 = vmatprep.subr.bf16.mxu0 0
        %5116 = vmatpush1.bf16.msra.mxu0 0
        %5117 = vmatprep.subr.bf16.mxu0 0
        %5118 = vmatpush1.bf16.msra.mxu0 0
        %5119 = vmatprep.subr.bf16.mxu0 0
        %5120 = vmatpush1.bf16.msra.mxu0 0
        %5121 = vmatprep.subr.bf16.mxu0 0
        %5122 = vmatpush1.bf16.msra.mxu0 0
        %5123 = vmatprep.subr.bf16.mxu0 0
        %5124 = vmatpush1.bf16.msra.mxu0 0
        %5125 = vmatprep.subr.bf16.mxu0 0
        %5126 = vmatpush1.bf16.msra.mxu0 0
        %5127 = vmatprep.subr.bf16.mxu0 0
        %5128 = vmatpush1.bf16.msra.mxu0 0
        %5129 = vmatprep.mubr.bf16.mxu0 0
        %5130 = vmatmul.mubr.bf16.gmra.mrb[0].mxu0 %v4298
        %v5131 = vpop.f32.mrb[0].mxu0
        %v5132 = vadd.f32 0.0, %v5131
        %v5133 = vpop.f32.mrb[0].mxu0
        %v5134 = vadd.f32 0.0, %v5133
        %v5135 = vpop.f32.mrb[0].mxu0
        %v5136 = vpop.f32.mrb[0].mxu0
        %5137 = vdwg.mxu0
        %5138 = vmatprep.subr.bf16.mxu0 %v5036
        %5139 = vmatpush1.bf16.msra.mxu0 %v5035
        %5140 = vmatprep.subr.bf16.mxu0 %v5040
        %5141 = vmatpush1.bf16.msra.mxu0 %v5039
        %5142 = vmatprep.subr.bf16.mxu0 %v5044
        %5143 = vmatpush1.bf16.msra.mxu0 %v5043
        %5144 = vmatprep.subr.bf16.mxu0 %v5048
        %5145 = vmatpush1.bf16.msra.mxu0 %v5047
        %5146 = vmatprep.subr.bf16.mxu0 %v5052
        %5147 = vmatpush1.bf16.msra.mxu0 %v5051
        %5148 = vmatprep.subr.bf16.mxu0 %v5056
        %5149 = vmatpush1.bf16.msra.mxu0 %v5055
        %5150 = vmatprep.subr.bf16.mxu0 %v5060
        %5151 = vmatpush1.bf16.msra.mxu0 %v5059
        %5152 = vmatprep.subr.bf16.mxu0 %v5064
        %5153 = vmatpush1.bf16.msra.mxu0 %v5063
        %5154 = vmatprep.subr.bf16.mxu0 0
        %5155 = vmatpush1.bf16.msra.mxu0 0
        %5156 = vmatprep.subr.bf16.mxu0 0
        %5157 = vmatpush1.bf16.msra.mxu0 0
        %5158 = vmatprep.subr.bf16.mxu0 0
        %5159 = vmatpush1.bf16.msra.mxu0 0
        %5160 = vmatprep.subr.bf16.mxu0 0
        %5161 = vmatpush1.bf16.msra.mxu0 0
        %5162 = vmatprep.subr.bf16.mxu0 0
        %5163 = vmatpush1.bf16.msra.mxu0 0
        %5164 = vmatprep.subr.bf16.mxu0 0
        %5165 = vmatpush1.bf16.msra.mxu0 0
        %5166 = vmatprep.subr.bf16.mxu0 0
        %5167 = vmatpush1.bf16.msra.mxu0 0
        %5168 = vmatprep.subr.bf16.mxu0 0
        %5169 = vmatpush1.bf16.msra.mxu0 0
        %5170 = vmatprep.mubr.bf16.mxu0 0
        %5171 = vmatmul.mubr.bf16.gmra.mrb[0].mxu0 %v4298
        %v5172 = vpop.f32.mrb[0].mxu0
        %v5173 = vadd.f32 0.0, %v5172
        %v5174 = vpop.f32.mrb[0].mxu0
        %v5175 = vadd.f32 0.0, %v5174
        %v5176 = vpop.f32.mrb[0].mxu0
        %v5177 = vpop.f32.mrb[0].mxu0
        %5178 = vdwg.mxu0
        %v5179 = vadd.f32 %v4901, %v5132
        %v5180 = vadd.f32 %v4902, %v5134
        %v5181 = vadd.f32 %v4903, %v5173
        %v5182 = vadd.f32 %v4904, %v5175
        %v5183 = vxor.u32 %v5179, 2147483648
        %v5184 = vmul.f32 %v5183, 1.442695
        %v5185 = vpow.pop %v5184
        %v5186 = vadd.f32 %v5185, 1.0
        %v5187 = vrcp.pop %v5186
        %v5188 = vmul.f32 1.0, %v5187
        %v5189 = vxor.u32 %v5180, 2147483648
        %v5190 = vmul.f32 %v5189, 1.442695
        %v5191 = vpow.pop %v5190
        %v5192 = vadd.f32 %v5191, 1.0
        %v5193 = vrcp.pop %v5192
        %v5194 = vmul.f32 1.0, %v5193
        %v5195 = vtanh.pop %v5181
        %v5196 = vxor.u32 %v5182, 2147483648
        %v5197 = vmul.f32 %v5196, 1.442695
        %v5198 = vpow.pop %v5197
        %v5199 = vadd.f32 %v5198, 1.0
        %v5200 = vrcp.pop %v5199
        %v5201 = vmul.f32 1.0, %v5200
        %v5202 = vmul.f32 %v5194, %v4295
        %v5203 = vmul.f32 %v5188, %v5195
        %v5204 = vadd.f32 %v5202, %v5203
        %v5205 = vtanh.pop %v5204
        %v5206 = vmul.f32 %v5201, %v5205
        %v5207 = vpack.c.bf16 %v5206, %v5206
        %v5208 = vld [vmem:[%s4] sm:$0xff]
        %v5209 = vld [vmem:[%s4 + $0x8] sm:$0xff]
        %v5210 = vld [vmem:[%s4 + $0x10] sm:$0xff]
        %v5211 = vld [vmem:[%s4 + $0x18] sm:$0xff]
        %v5212 = vld [vmem:[%s4 + $0x20] sm:$0xff]
        %v5213 = vld [vmem:[%s4 + $0x28] sm:$0xff]
        %v5214 = vld [vmem:[%s4 + $0x30] sm:$0xff]
        %v5215 = vld [vmem:[%s4 + $0x38] sm:$0xff]
        %v5216 = vld [vmem:[%s4 + $0x40] sm:$0xff]
        %v5217 = vld [vmem:[%s4 + $0x48] sm:$0xff]
        %v5218 = vld [vmem:[%s4 + $0x50] sm:$0xff]
        %v5219 = vld [vmem:[%s4 + $0x58] sm:$0xff]
        %v5220 = vld [vmem:[%s4 + $0x60] sm:$0xff]
        %v5221 = vld [vmem:[%s4 + $0x68] sm:$0xff]
        %v5222 = vld [vmem:[%s4 + $0x70] sm:$0xff]
        %v5223 = vld [vmem:[%s4 + $0x78] sm:$0xff]
        %v5224 = vld [vmem:[%s4 + $0x80] sm:$0xff]
        %v5225 = vld [vmem:[%s4 + $0x88] sm:$0xff]
        %v5226 = vld [vmem:[%s4 + $0x90] sm:$0xff]
        %v5227 = vld [vmem:[%s4 + $0x98] sm:$0xff]
        %v5228 = vld [vmem:[%s4 + $0xa0] sm:$0xff]
        %v5229 = vld [vmem:[%s4 + $0xa8] sm:$0xff]
        %v5230 = vld [vmem:[%s4 + $0xb0] sm:$0xff]
        %v5231 = vld [vmem:[%s4 + $0xb8] sm:$0xff]
        %v5232 = vld [vmem:[%s4 + $0xc0] sm:$0xff]
        %v5233 = vld [vmem:[%s4 + $0xc8] sm:$0xff]
        %v5234 = vld [vmem:[%s4 + $0xd0] sm:$0xff]
        %v5235 = vld [vmem:[%s4 + $0xd8] sm:$0xff]
        %v5236 = vld [vmem:[%s4 + $0xe0] sm:$0xff]
        %v5237 = vld [vmem:[%s4 + $0xe8] sm:$0xff]
        %v5238 = vld [vmem:[%s4 + $0xf0] sm:$0xff]
        %v5239 = vld [vmem:[%s4 + $0xf8] sm:$0xff]
        %v5240 = vld [vmem:[%s5] sm:$0xff]
        %v5241 = vld [vmem:[%s5 + $0x8] sm:$0xff]
        %v5242 = vld [vmem:[%s5 + $0x10] sm:$0xff]
        %v5243 = vld [vmem:[%s5 + $0x18] sm:$0xff]
        %v5244 = vld [vmem:[%s5 + $0x20] sm:$0xff]
        %v5245 = vld [vmem:[%s5 + $0x28] sm:$0xff]
        %v5246 = vld [vmem:[%s5 + $0x30] sm:$0xff]
        %v5247 = vld [vmem:[%s5 + $0x38] sm:$0xff]
        %v5248 = vld [vmem:[%s5 + $0x40] sm:$0xff]
        %v5249 = vld [vmem:[%s5 + $0x48] sm:$0xff]
        %v5250 = vld [vmem:[%s5 + $0x50] sm:$0xff]
        %v5251 = vld [vmem:[%s5 + $0x58] sm:$0xff]
        %v5252 = vld [vmem:[%s5 + $0x60] sm:$0xff]
        %v5253 = vld [vmem:[%s5 + $0x68] sm:$0xff]
        %v5254 = vld [vmem:[%s5 + $0x70] sm:$0xff]
        %v5255 = vld [vmem:[%s5 + $0x78] sm:$0xff]
        %v5256 = vld [vmem:[%s5 + $0x80] sm:$0xff]
        %v5257 = vld [vmem:[%s5 + $0x88] sm:$0xff]
        %v5258 = vld [vmem:[%s5 + $0x90] sm:$0xff]
        %v5259 = vld [vmem:[%s5 + $0x98] sm:$0xff]
        %v5260 = vld [vmem:[%s5 + $0xa0] sm:$0xff]
        %v5261 = vld [vmem:[%s5 + $0xa8] sm:$0xff]
        %v5262 = vld [vmem:[%s5 + $0xb0] sm:$0xff]
        %v5263 = vld [vmem:[%s5 + $0xb8] sm:$0xff]
        %v5264 = vld [vmem:[%s5 + $0xc0] sm:$0xff]
        %v5265 = vld [vmem:[%s5 + $0xc8] sm:$0xff]
        %v5266 = vld [vmem:[%s5 + $0xd0] sm:$0xff]
        %v5267 = vld [vmem:[%s5 + $0xd8] sm:$0xff]
        %v5268 = vld [vmem:[%s5 + $0xe0] sm:$0xff]
        %v5269 = vld [vmem:[%s5 + $0xe8] sm:$0xff]
        %v5270 = vld [vmem:[%s5 + $0xf0] sm:$0xff]
        %v5271 = vld [vmem:[%s5 + $0xf8] sm:$0xff]
        %v5304 = vunpack.c.l.b16 %v5240
        %v5305 = vunpack.c.h.b16 %v5240
        %v5306 = vunpack.c.l.b16 %v5241
        %v5307 = vunpack.c.h.b16 %v5241
        %v5308 = vunpack.c.l.b16 %v5242
        %v5309 = vunpack.c.h.b16 %v5242
        %v5310 = vunpack.c.l.b16 %v5243
        %v5311 = vunpack.c.h.b16 %v5243
        %v5312 = vunpack.c.l.b16 %v5244
        %v5313 = vunpack.c.h.b16 %v5244
        %v5314 = vunpack.c.l.b16 %v5245
        %v5315 = vunpack.c.h.b16 %v5245
        %v5316 = vunpack.c.l.b16 %v5246
        %v5317 = vunpack.c.h.b16 %v5246
        %v5318 = vunpack.c.l.b16 %v5247
        %v5319 = vunpack.c.h.b16 %v5247
        %v5320 = vunpack.c.l.b16 %v5248
        %v5321 = vunpack.c.h.b16 %v5248
        %v5322 = vunpack.c.l.b16 %v5249
        %v5323 = vunpack.c.h.b16 %v5249
        %v5324 = vunpack.c.l.b16 %v5250
        %v5325 = vunpack.c.h.b16 %v5250
        %v5326 = vunpack.c.l.b16 %v5251
        %v5327 = vunpack.c.h.b16 %v5251
        %v5328 = vunpack.c.l.b16 %v5252
        %v5329 = vunpack.c.h.b16 %v5252
        %v5330 = vunpack.c.l.b16 %v5253
        %v5331 = vunpack.c.h.b16 %v5253
        %v5332 = vunpack.c.l.b16 %v5254
        %v5333 = vunpack.c.h.b16 %v5254
        %v5334 = vunpack.c.l.b16 %v5255
        %v5335 = vunpack.c.h.b16 %v5255
        %v5336 = vunpack.c.l.b16 %v5256
        %v5337 = vunpack.c.h.b16 %v5256
        %v5338 = vunpack.c.l.b16 %v5257
        %v5339 = vunpack.c.h.b16 %v5257
        %v5340 = vunpack.c.l.b16 %v5258
        %v5341 = vunpack.c.h.b16 %v5258
        %v5342 = vunpack.c.l.b16 %v5259
        %v5343 = vunpack.c.h.b16 %v5259
        %v5344 = vunpack.c.l.b16 %v5260
        %v5345 = vunpack.c.h.b16 %v5260
        %v5346 = vunpack.c.l.b16 %v5261
        %v5347 = vunpack.c.h.b16 %v5261
        %v5348 = vunpack.c.l.b16 %v5262
        %v5349 = vunpack.c.h.b16 %v5262
        %v5350 = vunpack.c.l.b16 %v5263
        %v5351 = vunpack.c.h.b16 %v5263
        %v5352 = vunpack.c.l.b16 %v5264
        %v5353 = vunpack.c.h.b16 %v5264
        %v5354 = vunpack.c.l.b16 %v5265
        %v5355 = vunpack.c.h.b16 %v5265
        %v5356 = vunpack.c.l.b16 %v5266
        %v5357 = vunpack.c.h.b16 %v5266
        %v5358 = vunpack.c.l.b16 %v5267
        %v5359 = vunpack.c.h.b16 %v5267
        %v5360 = vunpack.c.l.b16 %v5268
        %v5361 = vunpack.c.h.b16 %v5268
        %v5362 = vunpack.c.l.b16 %v5269
        %v5363 = vunpack.c.h.b16 %v5269
        %v5364 = vunpack.c.l.b16 %v5270
        %v5365 = vunpack.c.h.b16 %v5270
        %v5366 = vunpack.c.l.b16 %v5271
        %v5367 = vunpack.c.h.b16 %v5271
        %v5368 = vpack.c.b16 %v5308, %v5304
        %v5369 = vpack.c.b16 %v5309, %v5305
        %v5370 = vpack.c.b16 %v5310, %v5306
        %v5371 = vpack.c.b16 %v5311, %v5307
        %v5372 = vpack.c.b16 %v5316, %v5312
        %v5373 = vpack.c.b16 %v5317, %v5313
        %v5374 = vpack.c.b16 %v5318, %v5314
        %v5375 = vpack.c.b16 %v5319, %v5315
        %v5376 = vpack.c.b16 %v5324, %v5320
        %v5377 = vpack.c.b16 %v5325, %v5321
        %v5378 = vpack.c.b16 %v5326, %v5322
        %v5379 = vpack.c.b16 %v5327, %v5323
        %v5380 = vpack.c.b16 %v5332, %v5328
        %v5381 = vpack.c.b16 %v5333, %v5329
        %v5382 = vpack.c.b16 %v5334, %v5330
        %v5383 = vpack.c.b16 %v5335, %v5331
        %v5384 = vpack.c.b16 %v5340, %v5336
        %v5385 = vpack.c.b16 %v5341, %v5337
        %v5386 = vpack.c.b16 %v5342, %v5338
        %v5387 = vpack.c.b16 %v5343, %v5339
        %v5388 = vpack.c.b16 %v5348, %v5344
        %v5389 = vpack.c.b16 %v5349, %v5345
        %v5390 = vpack.c.b16 %v5350, %v5346
        %v5391 = vpack.c.b16 %v5351, %v5347
        %v5392 = vpack.c.b16 %v5356, %v5352
        %v5393 = vpack.c.b16 %v5357, %v5353
        %v5394 = vpack.c.b16 %v5358, %v5354
        %v5395 = vpack.c.b16 %v5359, %v5355
        %v5396 = vpack.c.b16 %v5364, %v5360
        %v5397 = vpack.c.b16 %v5365, %v5361
        %v5398 = vpack.c.b16 %v5366, %v5362
        %v5399 = vpack.c.b16 %v5367, %v5363
        %5432 = vmatprep.subr.bf16.mxu0 %v5369
        %5433 = vmatpush1.bf16.msra.mxu0 %v5368
        %5434 = vmatprep.subr.bf16.mxu0 %v5373
        %5435 = vmatpush1.bf16.msra.mxu0 %v5372
        %5436 = vmatprep.subr.bf16.mxu0 %v5377
        %5437 = vmatpush1.bf16.msra.mxu0 %v5376
        %5438 = vmatprep.subr.bf16.mxu0 %v5381
        %5439 = vmatpush1.bf16.msra.mxu0 %v5380
        %5440 = vmatprep.subr.bf16.mxu0 %v5385
        %5441 = vmatpush1.bf16.msra.mxu0 %v5384
        %5442 = vmatprep.subr.bf16.mxu0 %v5389
        %5443 = vmatpush1.bf16.msra.mxu0 %v5388
        %5444 = vmatprep.subr.bf16.mxu0 %v5393
        %5445 = vmatpush1.bf16.msra.mxu0 %v5392
        %5446 = vmatprep.subr.bf16.mxu0 %v5397
        %5447 = vmatpush1.bf16.msra.mxu0 %v5396
        %5448 = vmatprep.subr.bf16.mxu0 0
        %5449 = vmatpush1.bf16.msra.mxu0 0
        %5450 = vmatprep.subr.bf16.mxu0 0
        %5451 = vmatpush1.bf16.msra.mxu0 0
        %5452 = vmatprep.subr.bf16.mxu0 0
        %5453 = vmatpush1.bf16.msra.mxu0 0
        %5454 = vmatprep.subr.bf16.mxu0 0
        %5455 = vmatpush1.bf16.msra.mxu0 0
        %5456 = vmatprep.subr.bf16.mxu0 0
        %5457 = vmatpush1.bf16.msra.mxu0 0
        %5458 = vmatprep.subr.bf16.mxu0 0
        %5459 = vmatpush1.bf16.msra.mxu0 0
        %5460 = vmatprep.subr.bf16.mxu0 0
        %5461 = vmatpush1.bf16.msra.mxu0 0
        %5462 = vmatprep.subr.bf16.mxu0 0
        %5463 = vmatpush1.bf16.msra.mxu0 0
        %5464 = vmatprep.mubr.bf16.mxu0 0
        %5465 = vmatmul.mubr.bf16.gmra.mrb[0].mxu0 %v4897
        %v5466 = vpop.f32.mrb[0].mxu0
        %v5467 = vadd.f32 0.0, %v5466
        %v5468 = vpop.f32.mrb[0].mxu0
        %v5469 = vadd.f32 0.0, %v5468
        %v5470 = vpop.f32.mrb[0].mxu0
        %v5471 = vpop.f32.mrb[0].mxu0
        %5472 = vdwg.mxu0
        %5473 = vmatprep.subr.bf16.mxu0 %v5371
        %5474 = vmatpush1.bf16.msra.mxu0 %v5370
        %5475 = vmatprep.subr.bf16.mxu0 %v5375
        %5476 = vmatpush1.bf16.msra.mxu0 %v5374
        %5477 = vmatprep.subr.bf16.mxu0 %v5379
        %5478 = vmatpush1.bf16.msra.mxu0 %v5378
        %5479 = vmatprep.subr.bf16.mxu0 %v5383
        %5480 = vmatpush1.bf16.msra.mxu0 %v5382
        %5481 = vmatprep.subr.bf16.mxu0 %v5387
        %5482 = vmatpush1.bf16.msra.mxu0 %v5386
        %5483 = vmatprep.subr.bf16.mxu0 %v5391
        %5484 = vmatpush1.bf16.msra.mxu0 %v5390
        %5485 = vmatprep.subr.bf16.mxu0 %v5395
        %5486 = vmatpush1.bf16.msra.mxu0 %v5394
        %5487 = vmatprep.subr.bf16.mxu0 %v5399
        %5488 = vmatpush1.bf16.msra.mxu0 %v5398
        %5489 = vmatprep.subr.bf16.mxu0 0
        %5490 = vmatpush1.bf16.msra.mxu0 0
        %5491 = vmatprep.subr.bf16.mxu0 0
        %5492 = vmatpush1.bf16.msra.mxu0 0
        %5493 = vmatprep.subr.bf16.mxu0 0
        %5494 = vmatpush1.bf16.msra.mxu0 0
        %5495 = vmatprep.subr.bf16.mxu0 0
        %5496 = vmatpush1.bf16.msra.mxu0 0
        %5497 = vmatprep.subr.bf16.mxu0 0
        %5498 = vmatpush1.bf16.msra.mxu0 0
        %5499 = vmatprep.subr.bf16.mxu0 0
        %5500 = vmatpush1.bf16.msra.mxu0 0
        %5501 = vmatprep.subr.bf16.mxu0 0
        %5502 = vmatpush1.bf16.msra.mxu0 0
        %5503 = vmatprep.subr.bf16.mxu0 0
        %5504 = vmatpush1.bf16.msra.mxu0 0
        %5505 = vmatprep.mubr.bf16.mxu0 0
        %5506 = vmatmul.mubr.bf16.gmra.mrb[0].mxu0 %v4897
        %v5507 = vpop.f32.mrb[0].mxu0
        %v5508 = vadd.f32 0.0, %v5507
        %v5509 = vpop.f32.mrb[0].mxu0
        %v5510 = vadd.f32 0.0, %v5509
        %v5511 = vpop.f32.mrb[0].mxu0
        %v5512 = vpop.f32.mrb[0].mxu0
        %5513 = vdwg.mxu0
        %v5546 = vunpack.c.l.b16 %v5208
        %v5547 = vunpack.c.h.b16 %v5208
        %v5548 = vunpack.c.l.b16 %v5209
        %v5549 = vunpack.c.h.b16 %v5209
        %v5550 = vunpack.c.l.b16 %v5210
        %v5551 = vunpack.c.h.b16 %v5210
        %v5552 = vunpack.c.l.b16 %v5211
        %v5553 = vunpack.c.h.b16 %v5211
        %v5554 = vunpack.c.l.b16 %v5212
        %v5555 = vunpack.c.h.b16 %v5212
        %v5556 = vunpack.c.l.b16 %v5213
        %v5557 = vunpack.c.h.b16 %v5213
        %v5558 = vunpack.c.l.b16 %v5214
        %v5559 = vunpack.c.h.b16 %v5214
        %v5560 = vunpack.c.l.b16 %v5215
        %v5561 = vunpack.c.h.b16 %v5215
        %v5562 = vunpack.c.l.b16 %v5216
        %v5563 = vunpack.c.h.b16 %v5216
        %v5564 = vunpack.c.l.b16 %v5217
        %v5565 = vunpack.c.h.b16 %v5217
        %v5566 = vunpack.c.l.b16 %v5218
        %v5567 = vunpack.c.h.b16 %v5218
        %v5568 = vunpack.c.l.b16 %v5219
        %v5569 = vunpack.c.h.b16 %v5219
        %v5570 = vunpack.c.l.b16 %v5220
        %v5571 = vunpack.c.h.b16 %v5220
        %v5572 = vunpack.c.l.b16 %v5221
        %v5573 = vunpack.c.h.b16 %v5221
        %v5574 = vunpack.c.l.b16 %v5222
        %v5575 = vunpack.c.h.b16 %v5222
        %v5576 = vunpack.c.l.b16 %v5223
        %v5577 = vunpack.c.h.b16 %v5223
        %v5578 = vunpack.c.l.b16 %v5224
        %v5579 = vunpack.c.h.b16 %v5224
        %v5580 = vunpack.c.l.b16 %v5225
        %v5581 = vunpack.c.h.b16 %v5225
        %v5582 = vunpack.c.l.b16 %v5226
        %v5583 = vunpack.c.h.b16 %v5226
        %v5584 = vunpack.c.l.b16 %v5227
        %v5585 = vunpack.c.h.b16 %v5227
        %v5586 = vunpack.c.l.b16 %v5228
        %v5587 = vunpack.c.h.b16 %v5228
        %v5588 = vunpack.c.l.b16 %v5229
        %v5589 = vunpack.c.h.b16 %v5229
        %v5590 = vunpack.c.l.b16 %v5230
        %v5591 = vunpack.c.h.b16 %v5230
        %v5592 = vunpack.c.l.b16 %v5231
        %v5593 = vunpack.c.h.b16 %v5231
        %v5594 = vunpack.c.l.b16 %v5232
        %v5595 = vunpack.c.h.b16 %v5232
        %v5596 = vunpack.c.l.b16 %v5233
        %v5597 = vunpack.c.h.b16 %v5233
        %v5598 = vunpack.c.l.b16 %v5234
        %v5599 = vunpack.c.h.b16 %v5234
        %v5600 = vunpack.c.l.b16 %v5235
        %v5601 = vunpack.c.h.b16 %v5235
        %v5602 = vunpack.c.l.b16 %v5236
        %v5603 = vunpack.c.h.b16 %v5236
        %v5604 = vunpack.c.l.b16 %v5237
        %v5605 = vunpack.c.h.b16 %v5237
        %v5606 = vunpack.c.l.b16 %v5238
        %v5607 = vunpack.c.h.b16 %v5238
        %v5608 = vunpack.c.l.b16 %v5239
        %v5609 = vunpack.c.h.b16 %v5239
        %v5610 = vpack.c.b16 %v5550, %v5546
        %v5611 = vpack.c.b16 %v5551, %v5547
        %v5612 = vpack.c.b16 %v5552, %v5548
        %v5613 = vpack.c.b16 %v5553, %v5549
        %v5614 = vpack.c.b16 %v5558, %v5554
        %v5615 = vpack.c.b16 %v5559, %v5555
        %v5616 = vpack.c.b16 %v5560, %v5556
        %v5617 = vpack.c.b16 %v5561, %v5557
        %v5618 = vpack.c.b16 %v5566, %v5562
        %v5619 = vpack.c.b16 %v5567, %v5563
        %v5620 = vpack.c.b16 %v5568, %v5564
        %v5621 = vpack.c.b16 %v5569, %v5565
        %v5622 = vpack.c.b16 %v5574, %v5570
        %v5623 = vpack.c.b16 %v5575, %v5571
        %v5624 = vpack.c.b16 %v5576, %v5572
        %v5625 = vpack.c.b16 %v5577, %v5573
        %v5626 = vpack.c.b16 %v5582, %v5578
        %v5627 = vpack.c.b16 %v5583, %v5579
        %v5628 = vpack.c.b16 %v5584, %v5580
        %v5629 = vpack.c.b16 %v5585, %v5581
        %v5630 = vpack.c.b16 %v5590, %v5586
        %v5631 = vpack.c.b16 %v5591, %v5587
        %v5632 = vpack.c.b16 %v5592, %v5588
        %v5633 = vpack.c.b16 %v5593, %v5589
        %v5634 = vpack.c.b16 %v5598, %v5594
        %v5635 = vpack.c.b16 %v5599, %v5595
        %v5636 = vpack.c.b16 %v5600, %v5596
        %v5637 = vpack.c.b16 %v5601, %v5597
        %v5638 = vpack.c.b16 %v5606, %v5602
        %v5639 = vpack.c.b16 %v5607, %v5603
        %v5640 = vpack.c.b16 %v5608, %v5604
        %v5641 = vpack.c.b16 %v5609, %v5605
        %5674 = vmatprep.subr.bf16.mxu0 %v5611
        %5675 = vmatpush1.bf16.msra.mxu0 %v5610
        %5676 = vmatprep.subr.bf16.mxu0 %v5615
        %5677 = vmatpush1.bf16.msra.mxu0 %v5614
        %5678 = vmatprep.subr.bf16.mxu0 %v5619
        %5679 = vmatpush1.bf16.msra.mxu0 %v5618
        %5680 = vmatprep.subr.bf16.mxu0 %v5623
        %5681 = vmatpush1.bf16.msra.mxu0 %v5622
        %5682 = vmatprep.subr.bf16.mxu0 %v5627
        %5683 = vmatpush1.bf16.msra.mxu0 %v5626
        %5684 = vmatprep.subr.bf16.mxu0 %v5631
        %5685 = vmatpush1.bf16.msra.mxu0 %v5630
        %5686 = vmatprep.subr.bf16.mxu0 %v5635
        %5687 = vmatpush1.bf16.msra.mxu0 %v5634
        %5688 = vmatprep.subr.bf16.mxu0 %v5639
        %5689 = vmatpush1.bf16.msra.mxu0 %v5638
        %5690 = vmatprep.subr.bf16.mxu0 0
        %5691 = vmatpush1.bf16.msra.mxu0 0
        %5692 = vmatprep.subr.bf16.mxu0 0
        %5693 = vmatpush1.bf16.msra.mxu0 0
        %5694 = vmatprep.subr.bf16.mxu0 0
        %5695 = vmatpush1.bf16.msra.mxu0 0
        %5696 = vmatprep.subr.bf16.mxu0 0
        %5697 = vmatpush1.bf16.msra.mxu0 0
        %5698 = vmatprep.subr.bf16.mxu0 0
        %5699 = vmatpush1.bf16.msra.mxu0 0
        %5700 = vmatprep.subr.bf16.mxu0 0
        %5701 = vmatpush1.bf16.msra.mxu0 0
        %5702 = vmatprep.subr.bf16.mxu0 0
        %5703 = vmatpush1.bf16.msra.mxu0 0
        %5704 = vmatprep.subr.bf16.mxu0 0
        %5705 = vmatpush1.bf16.msra.mxu0 0
        %5706 = vmatprep.mubr.bf16.mxu0 0
        %5707 = vmatmul.mubr.bf16.gmra.mrb[0].mxu0 %v5207
        %v5708 = vpop.f32.mrb[0].mxu0
        %v5709 = vadd.f32 %v5467, %v5708
        %v5710 = vpop.f32.mrb[0].mxu0
        %v5711 = vadd.f32 %v5469, %v5710
        %v5712 = vpop.f32.mrb[0].mxu0
        %v5713 = vpop.f32.mrb[0].mxu0
        %5714 = vdwg.mxu0
        %5715 = vmatprep.subr.bf16.mxu0 %v5613
        %5716 = vmatpush1.bf16.msra.mxu0 %v5612
        %5717 = vmatprep.subr.bf16.mxu0 %v5617
        %5718 = vmatpush1.bf16.msra.mxu0 %v5616
        %5719 = vmatprep.subr.bf16.mxu0 %v5621
        %5720 = vmatpush1.bf16.msra.mxu0 %v5620
        %5721 = vmatprep.subr.bf16.mxu0 %v5625
        %5722 = vmatpush1.bf16.msra.mxu0 %v5624
        %5723 = vmatprep.subr.bf16.mxu0 %v5629
        %5724 = vmatpush1.bf16.msra.mxu0 %v5628
        %5725 = vmatprep.subr.bf16.mxu0 %v5633
        %5726 = vmatpush1.bf16.msra.mxu0 %v5632
        %5727 = vmatprep.subr.bf16.mxu0 %v5637
        %5728 = vmatpush1.bf16.msra.mxu0 %v5636
        %5729 = vmatprep.subr.bf16.mxu0 %v5641
        %5730 = vmatpush1.bf16.msra.mxu0 %v5640
        %5731 = vmatprep.subr.bf16.mxu0 0
        %5732 = vmatpush1.bf16.msra.mxu0 0
        %5733 = vmatprep.subr.bf16.mxu0 0
        %5734 = vmatpush1.bf16.msra.mxu0 0
        %5735 = vmatprep.subr.bf16.mxu0 0
        %5736 = vmatpush1.bf16.msra.mxu0 0
        %5737 = vmatprep.subr.bf16.mxu0 0
        %5738 = vmatpush1.bf16.msra.mxu0 0
        %5739 = vmatprep.subr.bf16.mxu0 0
        %5740 = vmatpush1.bf16.msra.mxu0 0
        %5741 = vmatprep.subr.bf16.mxu0 0
        %5742 = vmatpush1.bf16.msra.mxu0 0
        %5743 = vmatprep.subr.bf16.mxu0 0
        %5744 = vmatpush1.bf16.msra.mxu0 0
        %5745 = vmatprep.subr.bf16.mxu0 0
        %5746 = vmatpush1.bf16.msra.mxu0 0
        %5747 = vmatprep.mubr.bf16.mxu0 0
        %5748 = vmatmul.mubr.bf16.gmra.mrb[0].mxu0 %v5207
        %v5749 = vpop.f32.mrb[0].mxu0
        %v5750 = vadd.f32 %v5508, %v5749
        %v5751 = vpop.f32.mrb[0].mxu0
        %v5752 = vadd.f32 %v5510, %v5751
        %v5753 = vpop.f32.mrb[0].mxu0
        %v5754 = vpop.f32.mrb[0].mxu0
        %5755 = vdwg.mxu0
        %v5756 = vld [vmem:[%s6] sm:$0xf]
        %v5758 = vlaneseq
        %v5759 = vshrl.u32 %v5758, 7
        %v5760 = vsub.s32 0, %v5759
        %v5761 = vrot.slane %v5756, %v5760
        %v5762 = vlaneseq
        %v5763 = vshrl.u32 %v5762, 7
        %v5764 = vsub.s32 1, %v5763
        %v5765 = vrot.slane %v5756, %v5764
        %v5766 = vlaneseq
        %v5767 = vshrl.u32 %v5766, 7
        %v5768 = vsub.s32 2, %v5767
        %v5769 = vrot.slane %v5756, %v5768
        %v5770 = vlaneseq
        %v5771 = vshrl.u32 %v5770, 7
        %v5772 = vsub.s32 3, %v5771
        %v5773 = vrot.slane %v5756, %v5772
        %v5778 = vadd.f32 %v5709, %v5761
        %v5779 = vadd.f32 %v5711, %v5765
        %v5780 = vadd.f32 %v5750, %v5769
        %v5781 = vadd.f32 %v5752, %v5773
        %v5782 = vxor.u32 %v5778, 2147483648
        %v5783 = vmul.f32 %v5782, 1.442695
        %v5784 = vpow.pop %v5783
        %v5785 = vadd.f32 %v5784, 1.0
        %v5786 = vrcp.pop %v5785
        %v5787 = vmul.f32 1.0, %v5786
        %v5788 = vxor.u32 %v5779, 2147483648
        %v5789 = vmul.f32 %v5788, 1.442695
        %v5790 = vpow.pop %v5789
        %v5791 = vadd.f32 %v5790, 1.0
        %v5792 = vrcp.pop %v5791
        %v5793 = vmul.f32 1.0, %v5792
        %v5794 = vtanh.pop %v5780
        %v5795 = vxor.u32 %v5781, 2147483648
        %v5796 = vmul.f32 %v5795, 1.442695
        %v5797 = vpow.pop %v5796
        %v5798 = vadd.f32 %v5797, 1.0
        %v5799 = vrcp.pop %v5798
        %v5800 = vmul.f32 1.0, %v5799
        %v5801 = vmul.f32 %v5793, %v4894
        %v5802 = vmul.f32 %v5787, %v5794
        %v5803 = vadd.f32 %v5801, %v5802
        %v5804 = vtanh.pop %v5803
        %v5805 = vmul.f32 %v5800, %v5804
        %v5806 = vpack.c.bf16 %v5805, %v5805
        %s5807 = scalar_lea.vmem %s334, 20
        %5808 = vst [vmem:[%s5807] sm:$0xf] %v5806
        %s5809 = scalar_lea.vmem %s328, 192
        %v5810 = vld [vmem:[%s5809] sm:$0xff]
        %v5811 = vld [vmem:[%s5809 + $0x8] sm:$0xff]
        %v5812 = vld [vmem:[%s5809 + $0x10] sm:$0xff]
        %v5813 = vld [vmem:[%s5809 + $0x18] sm:$0xff]
        %v5814 = vld [vmem:[%s3] sm:$0xff]
        %v5815 = vld [vmem:[%s3 + $0x8] sm:$0xff]
        %v5816 = vld [vmem:[%s3 + $0x10] sm:$0xff]
        %v5817 = vld [vmem:[%s3 + $0x18] sm:$0xff]
        %v5818 = vld [vmem:[%s3 + $0x20] sm:$0xff]
        %v5819 = vld [vmem:[%s3 + $0x28] sm:$0xff]
        %v5820 = vld [vmem:[%s3 + $0x30] sm:$0xff]
        %v5821 = vld [vmem:[%s3 + $0x38] sm:$0xff]
        %v5822 = vld [vmem:[%s3 + $0x40] sm:$0xff]
        %v5823 = vld [vmem:[%s3 + $0x48] sm:$0xff]
        %v5824 = vld [vmem:[%s3 + $0x50] sm:$0xff]
        %v5825 = vld [vmem:[%s3 + $0x58] sm:$0xff]
        %v5826 = vld [vmem:[%s3 + $0x60] sm:$0xff]
        %v5827 = vld [vmem:[%s3 + $0x68] sm:$0xff]
        %v5828 = vld [vmem:[%s3 + $0x70] sm:$0xff]
        %v5829 = vld [vmem:[%s3 + $0x78] sm:$0xff]
        %v5830 = vld [vmem:[%s3 + $0x80] sm:$0xff]
        %v5831 = vld [vmem:[%s3 + $0x88] sm:$0xff]
        %v5832 = vld [vmem:[%s3 + $0x90] sm:$0xff]
        %v5833 = vld [vmem:[%s3 + $0x98] sm:$0xff]
        %v5834 = vld [vmem:[%s3 + $0xa0] sm:$0xff]
        %v5835 = vld [vmem:[%s3 + $0xa8] sm:$0xff]
        %v5836 = vld [vmem:[%s3 + $0xb0] sm:$0xff]
        %v5837 = vld [vmem:[%s3 + $0xb8] sm:$0xff]
        %v5838 = vld [vmem:[%s3 + $0xc0] sm:$0xff]
        %v5839 = vld [vmem:[%s3 + $0xc8] sm:$0xff]
        %v5840 = vld [vmem:[%s3 + $0xd0] sm:$0xff]
        %v5841 = vld [vmem:[%s3 + $0xd8] sm:$0xff]
        %v5842 = vld [vmem:[%s3 + $0xe0] sm:$0xff]
        %v5843 = vld [vmem:[%s3 + $0xe8] sm:$0xff]
        %v5844 = vld [vmem:[%s3 + $0xf0] sm:$0xff]
        %v5845 = vld [vmem:[%s3 + $0xf8] sm:$0xff]
        %v5878 = vunpack.c.l.b16 %v5814
        %v5879 = vunpack.c.h.b16 %v5814
        %v5880 = vunpack.c.l.b16 %v5815
        %v5881 = vunpack.c.h.b16 %v5815
        %v5882 = vunpack.c.l.b16 %v5816
        %v5883 = vunpack.c.h.b16 %v5816
        %v5884 = vunpack.c.l.b16 %v5817
        %v5885 = vunpack.c.h.b16 %v5817
        %v5886 = vunpack.c.l.b16 %v5818
        %v5887 = vunpack.c.h.b16 %v5818
        %v5888 = vunpack.c.l.b16 %v5819
        %v5889 = vunpack.c.h.b16 %v5819
        %v5890 = vunpack.c.l.b16 %v5820
        %v5891 = vunpack.c.h.b16 %v5820
        %v5892 = vunpack.c.l.b16 %v5821
        %v5893 = vunpack.c.h.b16 %v5821
        %v5894 = vunpack.c.l.b16 %v5822
        %v5895 = vunpack.c.h.b16 %v5822
        %v5896 = vunpack.c.l.b16 %v5823
        %v5897 = vunpack.c.h.b16 %v5823
        %v5898 = vunpack.c.l.b16 %v5824
        %v5899 = vunpack.c.h.b16 %v5824
        %v5900 = vunpack.c.l.b16 %v5825
        %v5901 = vunpack.c.h.b16 %v5825
        %v5902 = vunpack.c.l.b16 %v5826
        %v5903 = vunpack.c.h.b16 %v5826
        %v5904 = vunpack.c.l.b16 %v5827
        %v5905 = vunpack.c.h.b16 %v5827
        %v5906 = vunpack.c.l.b16 %v5828
        %v5907 = vunpack.c.h.b16 %v5828
        %v5908 = vunpack.c.l.b16 %v5829
        %v5909 = vunpack.c.h.b16 %v5829
        %v5910 = vunpack.c.l.b16 %v5830
        %v5911 = vunpack.c.h.b16 %v5830
        %v5912 = vunpack.c.l.b16 %v5831
        %v5913 = vunpack.c.h.b16 %v5831
        %v5914 = vunpack.c.l.b16 %v5832
        %v5915 = vunpack.c.h.b16 %v5832
        %v5916 = vunpack.c.l.b16 %v5833
        %v5917 = vunpack.c.h.b16 %v5833
        %v5918 = vunpack.c.l.b16 %v5834
        %v5919 = vunpack.c.h.b16 %v5834
        %v5920 = vunpack.c.l.b16 %v5835
        %v5921 = vunpack.c.h.b16 %v5835
        %v5922 = vunpack.c.l.b16 %v5836
        %v5923 = vunpack.c.h.b16 %v5836
        %v5924 = vunpack.c.l.b16 %v5837
        %v5925 = vunpack.c.h.b16 %v5837
        %v5926 = vunpack.c.l.b16 %v5838
        %v5927 = vunpack.c.h.b16 %v5838
        %v5928 = vunpack.c.l.b16 %v5839
        %v5929 = vunpack.c.h.b16 %v5839
        %v5930 = vunpack.c.l.b16 %v5840
        %v5931 = vunpack.c.h.b16 %v5840
        %v5932 = vunpack.c.l.b16 %v5841
        %v5933 = vunpack.c.h.b16 %v5841
        %v5934 = vunpack.c.l.b16 %v5842
        %v5935 = vunpack.c.h.b16 %v5842
        %v5936 = vunpack.c.l.b16 %v5843
        %v5937 = vunpack.c.h.b16 %v5843
        %v5938 = vunpack.c.l.b16 %v5844
        %v5939 = vunpack.c.h.b16 %v5844
        %v5940 = vunpack.c.l.b16 %v5845
        %v5941 = vunpack.c.h.b16 %v5845
        %v5942 = vpack.c.b16 %v5882, %v5878
        %v5943 = vpack.c.b16 %v5883, %v5879
        %v5944 = vpack.c.b16 %v5884, %v5880
        %v5945 = vpack.c.b16 %v5885, %v5881
        %v5946 = vpack.c.b16 %v5890, %v5886
        %v5947 = vpack.c.b16 %v5891, %v5887
        %v5948 = vpack.c.b16 %v5892, %v5888
        %v5949 = vpack.c.b16 %v5893, %v5889
        %v5950 = vpack.c.b16 %v5898, %v5894
        %v5951 = vpack.c.b16 %v5899, %v5895
        %v5952 = vpack.c.b16 %v5900, %v5896
        %v5953 = vpack.c.b16 %v5901, %v5897
        %v5954 = vpack.c.b16 %v5906, %v5902
        %v5955 = vpack.c.b16 %v5907, %v5903
        %v5956 = vpack.c.b16 %v5908, %v5904
        %v5957 = vpack.c.b16 %v5909, %v5905
        %v5958 = vpack.c.b16 %v5914, %v5910
        %v5959 = vpack.c.b16 %v5915, %v5911
        %v5960 = vpack.c.b16 %v5916, %v5912
        %v5961 = vpack.c.b16 %v5917, %v5913
        %v5962 = vpack.c.b16 %v5922, %v5918
        %v5963 = vpack.c.b16 %v5923, %v5919
        %v5964 = vpack.c.b16 %v5924, %v5920
        %v5965 = vpack.c.b16 %v5925, %v5921
        %v5966 = vpack.c.b16 %v5930, %v5926
        %v5967 = vpack.c.b16 %v5931, %v5927
        %v5968 = vpack.c.b16 %v5932, %v5928
        %v5969 = vpack.c.b16 %v5933, %v5929
        %v5970 = vpack.c.b16 %v5938, %v5934
        %v5971 = vpack.c.b16 %v5939, %v5935
        %v5972 = vpack.c.b16 %v5940, %v5936
        %v5973 = vpack.c.b16 %v5941, %v5937
        %6006 = vmatprep.subr.bf16.mxu0 %v5943
        %6007 = vmatpush1.bf16.msra.mxu0 %v5942
        %6008 = vmatprep.subr.bf16.mxu0 %v5947
        %6009 = vmatpush1.bf16.msra.mxu0 %v5946
        %6010 = vmatprep.subr.bf16.mxu0 %v5951
        %6011 = vmatpush1.bf16.msra.mxu0 %v5950
        %6012 = vmatprep.subr.bf16.mxu0 %v5955
        %6013 = vmatpush1.bf16.msra.mxu0 %v5954
        %6014 = vmatprep.subr.bf16.mxu0 %v5959
        %6015 = vmatpush1.bf16.msra.mxu0 %v5958
        %6016 = vmatprep.subr.bf16.mxu0 %v5963
        %6017 = vmatpush1.bf16.msra.mxu0 %v5962
        %6018 = vmatprep.subr.bf16.mxu0 %v5967
        %6019 = vmatpush1.bf16.msra.mxu0 %v5966
        %6020 = vmatprep.subr.bf16.mxu0 %v5971
        %6021 = vmatpush1.bf16.msra.mxu0 %v5970
        %6022 = vmatprep.subr.bf16.mxu0 0
        %6023 = vmatpush1.bf16.msra.mxu0 0
        %6024 = vmatprep.subr.bf16.mxu0 0
        %6025 = vmatpush1.bf16.msra.mxu0 0
        %6026 = vmatprep.subr.bf16.mxu0 0
        %6027 = vmatpush1.bf16.msra.mxu0 0
        %6028 = vmatprep.subr.bf16.mxu0 0
        %6029 = vmatpush1.bf16.msra.mxu0 0
        %6030 = vmatprep.subr.bf16.mxu0 0
        %6031 = vmatpush1.bf16.msra.mxu0 0
        %6032 = vmatprep.subr.bf16.mxu0 0
        %6033 = vmatpush1.bf16.msra.mxu0 0
        %6034 = vmatprep.subr.bf16.mxu0 0
        %6035 = vmatpush1.bf16.msra.mxu0 0
        %6036 = vmatprep.subr.bf16.mxu0 0
        %6037 = vmatpush1.bf16.msra.mxu0 0
        %6038 = vmatprep.mubr.bf16.mxu0 0
        %6039 = vmatmul.mubr.bf16.gmra.mrb[0].mxu0 %v5207
        %v6040 = vpop.f32.mrb[0].mxu0
        %v6041 = vadd.f32 0.0, %v6040
        %v6042 = vpop.f32.mrb[0].mxu0
        %v6043 = vadd.f32 0.0, %v6042
        %v6044 = vpop.f32.mrb[0].mxu0
        %v6045 = vpop.f32.mrb[0].mxu0
        %6046 = vdwg.mxu0
        %6047 = vmatprep.subr.bf16.mxu0 %v5945
        %6048 = vmatpush1.bf16.msra.mxu0 %v5944
        %6049 = vmatprep.subr.bf16.mxu0 %v5949
        %6050 = vmatpush1.bf16.msra.mxu0 %v5948
        %6051 = vmatprep.subr.bf16.mxu0 %v5953
        %6052 = vmatpush1.bf16.msra.mxu0 %v5952
        %6053 = vmatprep.subr.bf16.mxu0 %v5957
        %6054 = vmatpush1.bf16.msra.mxu0 %v5956
        %6055 = vmatprep.subr.bf16.mxu0 %v5961
        %6056 = vmatpush1.bf16.msra.mxu0 %v5960
        %6057 = vmatprep.subr.bf16.mxu0 %v5965
        %6058 = vmatpush1.bf16.msra.mxu0 %v5964
        %6059 = vmatprep.subr.bf16.mxu0 %v5969
        %6060 = vmatpush1.bf16.msra.mxu0 %v5968
        %6061 = vmatprep.subr.bf16.mxu0 %v5973
        %6062 = vmatpush1.bf16.msra.mxu0 %v5972
        %6063 = vmatprep.subr.bf16.mxu0 0
        %6064 = vmatpush1.bf16.msra.mxu0 0
        %6065 = vmatprep.subr.bf16.mxu0 0
        %6066 = vmatpush1.bf16.msra.mxu0 0
        %6067 = vmatprep.subr.bf16.mxu0 0
        %6068 = vmatpush1.bf16.msra.mxu0 0
        %6069 = vmatprep.subr.bf16.mxu0 0
        %6070 = vmatpush1.bf16.msra.mxu0 0
        %6071 = vmatprep.subr.bf16.mxu0 0
        %6072 = vmatpush1.bf16.msra.mxu0 0
        %6073 = vmatprep.subr.bf16.mxu0 0
        %6074 = vmatpush1.bf16.msra.mxu0 0
        %6075 = vmatprep.subr.bf16.mxu0 0
        %6076 = vmatpush1.bf16.msra.mxu0 0
        %6077 = vmatprep.subr.bf16.mxu0 0
        %6078 = vmatpush1.bf16.msra.mxu0 0
        %6079 = vmatprep.mubr.bf16.mxu0 0
        %6080 = vmatmul.mubr.bf16.gmra.mrb[0].mxu0 %v5207
        %v6081 = vpop.f32.mrb[0].mxu0
        %v6082 = vadd.f32 0.0, %v6081
        %v6083 = vpop.f32.mrb[0].mxu0
        %v6084 = vadd.f32 0.0, %v6083
        %v6085 = vpop.f32.mrb[0].mxu0
        %v6086 = vpop.f32.mrb[0].mxu0
        %6087 = vdwg.mxu0
        %v6088 = vadd.f32 %v5810, %v6041
        %v6089 = vadd.f32 %v5811, %v6043
        %v6090 = vadd.f32 %v5812, %v6082
        %v6091 = vadd.f32 %v5813, %v6084
        %v6092 = vxor.u32 %v6088, 2147483648
        %v6093 = vmul.f32 %v6092, 1.442695
        %v6094 = vpow.pop %v6093
        %v6095 = vadd.f32 %v6094, 1.0
        %v6096 = vrcp.pop %v6095
        %v6097 = vmul.f32 1.0, %v6096
        %v6098 = vxor.u32 %v6089, 2147483648
        %v6099 = vmul.f32 %v6098, 1.442695
        %v6100 = vpow.pop %v6099
        %v6101 = vadd.f32 %v6100, 1.0
        %v6102 = vrcp.pop %v6101
        %v6103 = vmul.f32 1.0, %v6102
        %v6104 = vtanh.pop %v6090
        %v6105 = vxor.u32 %v6091, 2147483648
        %v6106 = vmul.f32 %v6105, 1.442695
        %v6107 = vpow.pop %v6106
        %v6108 = vadd.f32 %v6107, 1.0
        %v6109 = vrcp.pop %v6108
        %v6110 = vmul.f32 1.0, %v6109
        %v6111 = vmul.f32 %v6103, %v5204
        %v6112 = vmul.f32 %v6097, %v6104
        %v6113 = vadd.f32 %v6111, %v6112
        %v6114 = vtanh.pop %v6113
        %v6115 = vmul.f32 %v6110, %v6114
        %v6116 = vpack.c.bf16 %v6115, %v6115
        %v6117 = vld [vmem:[%s4] sm:$0xff]
        %v6118 = vld [vmem:[%s4 + $0x8] sm:$0xff]
        %v6119 = vld [vmem:[%s4 + $0x10] sm:$0xff]
        %v6120 = vld [vmem:[%s4 + $0x18] sm:$0xff]
        %v6121 = vld [vmem:[%s4 + $0x20] sm:$0xff]
        %v6122 = vld [vmem:[%s4 + $0x28] sm:$0xff]
        %v6123 = vld [vmem:[%s4 + $0x30] sm:$0xff]
        %v6124 = vld [vmem:[%s4 + $0x38] sm:$0xff]
        %v6125 = vld [vmem:[%s4 + $0x40] sm:$0xff]
        %v6126 = vld [vmem:[%s4 + $0x48] sm:$0xff]
        %v6127 = vld [vmem:[%s4 + $0x50] sm:$0xff]
        %v6128 = vld [vmem:[%s4 + $0x58] sm:$0xff]
        %v6129 = vld [vmem:[%s4 + $0x60] sm:$0xff]
        %v6130 = vld [vmem:[%s4 + $0x68] sm:$0xff]
        %v6131 = vld [vmem:[%s4 + $0x70] sm:$0xff]
        %v6132 = vld [vmem:[%s4 + $0x78] sm:$0xff]
        %v6133 = vld [vmem:[%s4 + $0x80] sm:$0xff]
        %v6134 = vld [vmem:[%s4 + $0x88] sm:$0xff]
        %v6135 = vld [vmem:[%s4 + $0x90] sm:$0xff]
        %v6136 = vld [vmem:[%s4 + $0x98] sm:$0xff]
        %v6137 = vld [vmem:[%s4 + $0xa0] sm:$0xff]
        %v6138 = vld [vmem:[%s4 + $0xa8] sm:$0xff]
        %v6139 = vld [vmem:[%s4 + $0xb0] sm:$0xff]
        %v6140 = vld [vmem:[%s4 + $0xb8] sm:$0xff]
        %v6141 = vld [vmem:[%s4 + $0xc0] sm:$0xff]
        %v6142 = vld [vmem:[%s4 + $0xc8] sm:$0xff]
        %v6143 = vld [vmem:[%s4 + $0xd0] sm:$0xff]
        %v6144 = vld [vmem:[%s4 + $0xd8] sm:$0xff]
        %v6145 = vld [vmem:[%s4 + $0xe0] sm:$0xff]
        %v6146 = vld [vmem:[%s4 + $0xe8] sm:$0xff]
        %v6147 = vld [vmem:[%s4 + $0xf0] sm:$0xff]
        %v6148 = vld [vmem:[%s4 + $0xf8] sm:$0xff]
        %v6149 = vld [vmem:[%s5] sm:$0xff]
        %v6150 = vld [vmem:[%s5 + $0x8] sm:$0xff]
        %v6151 = vld [vmem:[%s5 + $0x10] sm:$0xff]
        %v6152 = vld [vmem:[%s5 + $0x18] sm:$0xff]
        %v6153 = vld [vmem:[%s5 + $0x20] sm:$0xff]
        %v6154 = vld [vmem:[%s5 + $0x28] sm:$0xff]
        %v6155 = vld [vmem:[%s5 + $0x30] sm:$0xff]
        %v6156 = vld [vmem:[%s5 + $0x38] sm:$0xff]
        %v6157 = vld [vmem:[%s5 + $0x40] sm:$0xff]
        %v6158 = vld [vmem:[%s5 + $0x48] sm:$0xff]
        %v6159 = vld [vmem:[%s5 + $0x50] sm:$0xff]
        %v6160 = vld [vmem:[%s5 + $0x58] sm:$0xff]
        %v6161 = vld [vmem:[%s5 + $0x60] sm:$0xff]
        %v6162 = vld [vmem:[%s5 + $0x68] sm:$0xff]
        %v6163 = vld [vmem:[%s5 + $0x70] sm:$0xff]
        %v6164 = vld [vmem:[%s5 + $0x78] sm:$0xff]
        %v6165 = vld [vmem:[%s5 + $0x80] sm:$0xff]
        %v6166 = vld [vmem:[%s5 + $0x88] sm:$0xff]
        %v6167 = vld [vmem:[%s5 + $0x90] sm:$0xff]
        %v6168 = vld [vmem:[%s5 + $0x98] sm:$0xff]
        %v6169 = vld [vmem:[%s5 + $0xa0] sm:$0xff]
        %v6170 = vld [vmem:[%s5 + $0xa8] sm:$0xff]
        %v6171 = vld [vmem:[%s5 + $0xb0] sm:$0xff]
        %v6172 = vld [vmem:[%s5 + $0xb8] sm:$0xff]
        %v6173 = vld [vmem:[%s5 + $0xc0] sm:$0xff]
        %v6174 = vld [vmem:[%s5 + $0xc8] sm:$0xff]
        %v6175 = vld [vmem:[%s5 + $0xd0] sm:$0xff]
        %v6176 = vld [vmem:[%s5 + $0xd8] sm:$0xff]
        %v6177 = vld [vmem:[%s5 + $0xe0] sm:$0xff]
        %v6178 = vld [vmem:[%s5 + $0xe8] sm:$0xff]
        %v6179 = vld [vmem:[%s5 + $0xf0] sm:$0xff]
        %v6180 = vld [vmem:[%s5 + $0xf8] sm:$0xff]
        %v6213 = vunpack.c.l.b16 %v6149
        %v6214 = vunpack.c.h.b16 %v6149
        %v6215 = vunpack.c.l.b16 %v6150
        %v6216 = vunpack.c.h.b16 %v6150
        %v6217 = vunpack.c.l.b16 %v6151
        %v6218 = vunpack.c.h.b16 %v6151
        %v6219 = vunpack.c.l.b16 %v6152
        %v6220 = vunpack.c.h.b16 %v6152
        %v6221 = vunpack.c.l.b16 %v6153
        %v6222 = vunpack.c.h.b16 %v6153
        %v6223 = vunpack.c.l.b16 %v6154
        %v6224 = vunpack.c.h.b16 %v6154
        %v6225 = vunpack.c.l.b16 %v6155
        %v6226 = vunpack.c.h.b16 %v6155
        %v6227 = vunpack.c.l.b16 %v6156
        %v6228 = vunpack.c.h.b16 %v6156
        %v6229 = vunpack.c.l.b16 %v6157
        %v6230 = vunpack.c.h.b16 %v6157
        %v6231 = vunpack.c.l.b16 %v6158
        %v6232 = vunpack.c.h.b16 %v6158
        %v6233 = vunpack.c.l.b16 %v6159
        %v6234 = vunpack.c.h.b16 %v6159
        %v6235 = vunpack.c.l.b16 %v6160
        %v6236 = vunpack.c.h.b16 %v6160
        %v6237 = vunpack.c.l.b16 %v6161
        %v6238 = vunpack.c.h.b16 %v6161
        %v6239 = vunpack.c.l.b16 %v6162
        %v6240 = vunpack.c.h.b16 %v6162
        %v6241 = vunpack.c.l.b16 %v6163
        %v6242 = vunpack.c.h.b16 %v6163
        %v6243 = vunpack.c.l.b16 %v6164
        %v6244 = vunpack.c.h.b16 %v6164
        %v6245 = vunpack.c.l.b16 %v6165
        %v6246 = vunpack.c.h.b16 %v6165
        %v6247 = vunpack.c.l.b16 %v6166
        %v6248 = vunpack.c.h.b16 %v6166
        %v6249 = vunpack.c.l.b16 %v6167
        %v6250 = vunpack.c.h.b16 %v6167
        %v6251 = vunpack.c.l.b16 %v6168
        %v6252 = vunpack.c.h.b16 %v6168
        %v6253 = vunpack.c.l.b16 %v6169
        %v6254 = vunpack.c.h.b16 %v6169
        %v6255 = vunpack.c.l.b16 %v6170
        %v6256 = vunpack.c.h.b16 %v6170
        %v6257 = vunpack.c.l.b16 %v6171
        %v6258 = vunpack.c.h.b16 %v6171
        %v6259 = vunpack.c.l.b16 %v6172
        %v6260 = vunpack.c.h.b16 %v6172
        %v6261 = vunpack.c.l.b16 %v6173
        %v6262 = vunpack.c.h.b16 %v6173
        %v6263 = vunpack.c.l.b16 %v6174
        %v6264 = vunpack.c.h.b16 %v6174
        %v6265 = vunpack.c.l.b16 %v6175
        %v6266 = vunpack.c.h.b16 %v6175
        %v6267 = vunpack.c.l.b16 %v6176
        %v6268 = vunpack.c.h.b16 %v6176
        %v6269 = vunpack.c.l.b16 %v6177
        %v6270 = vunpack.c.h.b16 %v6177
        %v6271 = vunpack.c.l.b16 %v6178
        %v6272 = vunpack.c.h.b16 %v6178
        %v6273 = vunpack.c.l.b16 %v6179
        %v6274 = vunpack.c.h.b16 %v6179
        %v6275 = vunpack.c.l.b16 %v6180
        %v6276 = vunpack.c.h.b16 %v6180
        %v6277 = vpack.c.b16 %v6217, %v6213
        %v6278 = vpack.c.b16 %v6218, %v6214
        %v6279 = vpack.c.b16 %v6219, %v6215
        %v6280 = vpack.c.b16 %v6220, %v6216
        %v6281 = vpack.c.b16 %v6225, %v6221
        %v6282 = vpack.c.b16 %v6226, %v6222
        %v6283 = vpack.c.b16 %v6227, %v6223
        %v6284 = vpack.c.b16 %v6228, %v6224
        %v6285 = vpack.c.b16 %v6233, %v6229
        %v6286 = vpack.c.b16 %v6234, %v6230
        %v6287 = vpack.c.b16 %v6235, %v6231
        %v6288 = vpack.c.b16 %v6236, %v6232
        %v6289 = vpack.c.b16 %v6241, %v6237
        %v6290 = vpack.c.b16 %v6242, %v6238
        %v6291 = vpack.c.b16 %v6243, %v6239
        %v6292 = vpack.c.b16 %v6244, %v6240
        %v6293 = vpack.c.b16 %v6249, %v6245
        %v6294 = vpack.c.b16 %v6250, %v6246
        %v6295 = vpack.c.b16 %v6251, %v6247
        %v6296 = vpack.c.b16 %v6252, %v6248
        %v6297 = vpack.c.b16 %v6257, %v6253
        %v6298 = vpack.c.b16 %v6258, %v6254
        %v6299 = vpack.c.b16 %v6259, %v6255
        %v6300 = vpack.c.b16 %v6260, %v6256
        %v6301 = vpack.c.b16 %v6265, %v6261
        %v6302 = vpack.c.b16 %v6266, %v6262
        %v6303 = vpack.c.b16 %v6267, %v6263
        %v6304 = vpack.c.b16 %v6268, %v6264
        %v6305 = vpack.c.b16 %v6273, %v6269
        %v6306 = vpack.c.b16 %v6274, %v6270
        %v6307 = vpack.c.b16 %v6275, %v6271
        %v6308 = vpack.c.b16 %v6276, %v6272
        %6341 = vmatprep.subr.bf16.mxu0 %v6278
        %6342 = vmatpush1.bf16.msra.mxu0 %v6277
        %6343 = vmatprep.subr.bf16.mxu0 %v6282
        %6344 = vmatpush1.bf16.msra.mxu0 %v6281
        %6345 = vmatprep.subr.bf16.mxu0 %v6286
        %6346 = vmatpush1.bf16.msra.mxu0 %v6285
        %6347 = vmatprep.subr.bf16.mxu0 %v6290
        %6348 = vmatpush1.bf16.msra.mxu0 %v6289
        %6349 = vmatprep.subr.bf16.mxu0 %v6294
        %6350 = vmatpush1.bf16.msra.mxu0 %v6293
        %6351 = vmatprep.subr.bf16.mxu0 %v6298
        %6352 = vmatpush1.bf16.msra.mxu0 %v6297
        %6353 = vmatprep.subr.bf16.mxu0 %v6302
        %6354 = vmatpush1.bf16.msra.mxu0 %v6301
        %6355 = vmatprep.subr.bf16.mxu0 %v6306
        %6356 = vmatpush1.bf16.msra.mxu0 %v6305
        %6357 = vmatprep.subr.bf16.mxu0 0
        %6358 = vmatpush1.bf16.msra.mxu0 0
        %6359 = vmatprep.subr.bf16.mxu0 0
        %6360 = vmatpush1.bf16.msra.mxu0 0
        %6361 = vmatprep.subr.bf16.mxu0 0
        %6362 = vmatpush1.bf16.msra.mxu0 0
        %6363 = vmatprep.subr.bf16.mxu0 0
        %6364 = vmatpush1.bf16.msra.mxu0 0
        %6365 = vmatprep.subr.bf16.mxu0 0
        %6366 = vmatpush1.bf16.msra.mxu0 0
        %6367 = vmatprep.subr.bf16.mxu0 0
        %6368 = vmatpush1.bf16.msra.mxu0 0
        %6369 = vmatprep.subr.bf16.mxu0 0
        %6370 = vmatpush1.bf16.msra.mxu0 0
        %6371 = vmatprep.subr.bf16.mxu0 0
        %6372 = vmatpush1.bf16.msra.mxu0 0
        %6373 = vmatprep.mubr.bf16.mxu0 0
        %6374 = vmatmul.mubr.bf16.gmra.mrb[0].mxu0 %v5806
        %v6375 = vpop.f32.mrb[0].mxu0
        %v6376 = vadd.f32 0.0, %v6375
        %v6377 = vpop.f32.mrb[0].mxu0
        %v6378 = vadd.f32 0.0, %v6377
        %v6379 = vpop.f32.mrb[0].mxu0
        %v6380 = vpop.f32.mrb[0].mxu0
        %6381 = vdwg.mxu0
        %6382 = vmatprep.subr.bf16.mxu0 %v6280
        %6383 = vmatpush1.bf16.msra.mxu0 %v6279
        %6384 = vmatprep.subr.bf16.mxu0 %v6284
        %6385 = vmatpush1.bf16.msra.mxu0 %v6283
        %6386 = vmatprep.subr.bf16.mxu0 %v6288
        %6387 = vmatpush1.bf16.msra.mxu0 %v6287
        %6388 = vmatprep.subr.bf16.mxu0 %v6292
        %6389 = vmatpush1.bf16.msra.mxu0 %v6291
        %6390 = vmatprep.subr.bf16.mxu0 %v6296
        %6391 = vmatpush1.bf16.msra.mxu0 %v6295
        %6392 = vmatprep.subr.bf16.mxu0 %v6300
        %6393 = vmatpush1.bf16.msra.mxu0 %v6299
        %6394 = vmatprep.subr.bf16.mxu0 %v6304
        %6395 = vmatpush1.bf16.msra.mxu0 %v6303
        %6396 = vmatprep.subr.bf16.mxu0 %v6308
        %6397 = vmatpush1.bf16.msra.mxu0 %v6307
        %6398 = vmatprep.subr.bf16.mxu0 0
        %6399 = vmatpush1.bf16.msra.mxu0 0
        %6400 = vmatprep.subr.bf16.mxu0 0
        %6401 = vmatpush1.bf16.msra.mxu0 0
        %6402 = vmatprep.subr.bf16.mxu0 0
        %6403 = vmatpush1.bf16.msra.mxu0 0
        %6404 = vmatprep.subr.bf16.mxu0 0
        %6405 = vmatpush1.bf16.msra.mxu0 0
        %6406 = vmatprep.subr.bf16.mxu0 0
        %6407 = vmatpush1.bf16.msra.mxu0 0
        %6408 = vmatprep.subr.bf16.mxu0 0
        %6409 = vmatpush1.bf16.msra.mxu0 0
        %6410 = vmatprep.subr.bf16.mxu0 0
        %6411 = vmatpush1.bf16.msra.mxu0 0
        %6412 = vmatprep.subr.bf16.mxu0 0
        %6413 = vmatpush1.bf16.msra.mxu0 0
        %6414 = vmatprep.mubr.bf16.mxu0 0
        %6415 = vmatmul.mubr.bf16.gmra.mrb[0].mxu0 %v5806
        %v6416 = vpop.f32.mrb[0].mxu0
        %v6417 = vadd.f32 0.0, %v6416
        %v6418 = vpop.f32.mrb[0].mxu0
        %v6419 = vadd.f32 0.0, %v6418
        %v6420 = vpop.f32.mrb[0].mxu0
        %v6421 = vpop.f32.mrb[0].mxu0
        %6422 = vdwg.mxu0
        %v6455 = vunpack.c.l.b16 %v6117
        %v6456 = vunpack.c.h.b16 %v6117
        %v6457 = vunpack.c.l.b16 %v6118
        %v6458 = vunpack.c.h.b16 %v6118
        %v6459 = vunpack.c.l.b16 %v6119
        %v6460 = vunpack.c.h.b16 %v6119
        %v6461 = vunpack.c.l.b16 %v6120
        %v6462 = vunpack.c.h.b16 %v6120
        %v6463 = vunpack.c.l.b16 %v6121
        %v6464 = vunpack.c.h.b16 %v6121
        %v6465 = vunpack.c.l.b16 %v6122
        %v6466 = vunpack.c.h.b16 %v6122
        %v6467 = vunpack.c.l.b16 %v6123
        %v6468 = vunpack.c.h.b16 %v6123
        %v6469 = vunpack.c.l.b16 %v6124
        %v6470 = vunpack.c.h.b16 %v6124
        %v6471 = vunpack.c.l.b16 %v6125
        %v6472 = vunpack.c.h.b16 %v6125
        %v6473 = vunpack.c.l.b16 %v6126
        %v6474 = vunpack.c.h.b16 %v6126
        %v6475 = vunpack.c.l.b16 %v6127
        %v6476 = vunpack.c.h.b16 %v6127
        %v6477 = vunpack.c.l.b16 %v6128
        %v6478 = vunpack.c.h.b16 %v6128
        %v6479 = vunpack.c.l.b16 %v6129
        %v6480 = vunpack.c.h.b16 %v6129
        %v6481 = vunpack.c.l.b16 %v6130
        %v6482 = vunpack.c.h.b16 %v6130
        %v6483 = vunpack.c.l.b16 %v6131
        %v6484 = vunpack.c.h.b16 %v6131
        %v6485 = vunpack.c.l.b16 %v6132
        %v6486 = vunpack.c.h.b16 %v6132
        %v6487 = vunpack.c.l.b16 %v6133
        %v6488 = vunpack.c.h.b16 %v6133
        %v6489 = vunpack.c.l.b16 %v6134
        %v6490 = vunpack.c.h.b16 %v6134
        %v6491 = vunpack.c.l.b16 %v6135
        %v6492 = vunpack.c.h.b16 %v6135
        %v6493 = vunpack.c.l.b16 %v6136
        %v6494 = vunpack.c.h.b16 %v6136
        %v6495 = vunpack.c.l.b16 %v6137
        %v6496 = vunpack.c.h.b16 %v6137
        %v6497 = vunpack.c.l.b16 %v6138
        %v6498 = vunpack.c.h.b16 %v6138
        %v6499 = vunpack.c.l.b16 %v6139
        %v6500 = vunpack.c.h.b16 %v6139
        %v6501 = vunpack.c.l.b16 %v6140
        %v6502 = vunpack.c.h.b16 %v6140
        %v6503 = vunpack.c.l.b16 %v6141
        %v6504 = vunpack.c.h.b16 %v6141
        %v6505 = vunpack.c.l.b16 %v6142
        %v6506 = vunpack.c.h.b16 %v6142
        %v6507 = vunpack.c.l.b16 %v6143
        %v6508 = vunpack.c.h.b16 %v6143
        %v6509 = vunpack.c.l.b16 %v6144
        %v6510 = vunpack.c.h.b16 %v6144
        %v6511 = vunpack.c.l.b16 %v6145
        %v6512 = vunpack.c.h.b16 %v6145
        %v6513 = vunpack.c.l.b16 %v6146
        %v6514 = vunpack.c.h.b16 %v6146
        %v6515 = vunpack.c.l.b16 %v6147
        %v6516 = vunpack.c.h.b16 %v6147
        %v6517 = vunpack.c.l.b16 %v6148
        %v6518 = vunpack.c.h.b16 %v6148
        %v6519 = vpack.c.b16 %v6459, %v6455
        %v6520 = vpack.c.b16 %v6460, %v6456
        %v6521 = vpack.c.b16 %v6461, %v6457
        %v6522 = vpack.c.b16 %v6462, %v6458
        %v6523 = vpack.c.b16 %v6467, %v6463
        %v6524 = vpack.c.b16 %v6468, %v6464
        %v6525 = vpack.c.b16 %v6469, %v6465
        %v6526 = vpack.c.b16 %v6470, %v6466
        %v6527 = vpack.c.b16 %v6475, %v6471
        %v6528 = vpack.c.b16 %v6476, %v6472
        %v6529 = vpack.c.b16 %v6477, %v6473
        %v6530 = vpack.c.b16 %v6478, %v6474
        %v6531 = vpack.c.b16 %v6483, %v6479
        %v6532 = vpack.c.b16 %v6484, %v6480
        %v6533 = vpack.c.b16 %v6485, %v6481
        %v6534 = vpack.c.b16 %v6486, %v6482
        %v6535 = vpack.c.b16 %v6491, %v6487
        %v6536 = vpack.c.b16 %v6492, %v6488
        %v6537 = vpack.c.b16 %v6493, %v6489
        %v6538 = vpack.c.b16 %v6494, %v6490
        %v6539 = vpack.c.b16 %v6499, %v6495
        %v6540 = vpack.c.b16 %v6500, %v6496
        %v6541 = vpack.c.b16 %v6501, %v6497
        %v6542 = vpack.c.b16 %v6502, %v6498
        %v6543 = vpack.c.b16 %v6507, %v6503
        %v6544 = vpack.c.b16 %v6508, %v6504
        %v6545 = vpack.c.b16 %v6509, %v6505
        %v6546 = vpack.c.b16 %v6510, %v6506
        %v6547 = vpack.c.b16 %v6515, %v6511
        %v6548 = vpack.c.b16 %v6516, %v6512
        %v6549 = vpack.c.b16 %v6517, %v6513
        %v6550 = vpack.c.b16 %v6518, %v6514
        %6583 = vmatprep.subr.bf16.mxu0 %v6520
        %6584 = vmatpush1.bf16.msra.mxu0 %v6519
        %6585 = vmatprep.subr.bf16.mxu0 %v6524
        %6586 = vmatpush1.bf16.msra.mxu0 %v6523
        %6587 = vmatprep.subr.bf16.mxu0 %v6528
        %6588 = vmatpush1.bf16.msra.mxu0 %v6527
        %6589 = vmatprep.subr.bf16.mxu0 %v6532
        %6590 = vmatpush1.bf16.msra.mxu0 %v6531
        %6591 = vmatprep.subr.bf16.mxu0 %v6536
        %6592 = vmatpush1.bf16.msra.mxu0 %v6535
        %6593 = vmatprep.subr.bf16.mxu0 %v6540
        %6594 = vmatpush1.bf16.msra.mxu0 %v6539
        %6595 = vmatprep.subr.bf16.mxu0 %v6544
        %6596 = vmatpush1.bf16.msra.mxu0 %v6543
        %6597 = vmatprep.subr.bf16.mxu0 %v6548
        %6598 = vmatpush1.bf16.msra.mxu0 %v6547
        %6599 = vmatprep.subr.bf16.mxu0 0
        %6600 = vmatpush1.bf16.msra.mxu0 0
        %6601 = vmatprep.subr.bf16.mxu0 0
        %6602 = vmatpush1.bf16.msra.mxu0 0
        %6603 = vmatprep.subr.bf16.mxu0 0
        %6604 = vmatpush1.bf16.msra.mxu0 0
        %6605 = vmatprep.subr.bf16.mxu0 0
        %6606 = vmatpush1.bf16.msra.mxu0 0
        %6607 = vmatprep.subr.bf16.mxu0 0
        %6608 = vmatpush1.bf16.msra.mxu0 0
        %6609 = vmatprep.subr.bf16.mxu0 0
        %6610 = vmatpush1.bf16.msra.mxu0 0
        %6611 = vmatprep.subr.bf16.mxu0 0
        %6612 = vmatpush1.bf16.msra.mxu0 0
        %6613 = vmatprep.subr.bf16.mxu0 0
        %6614 = vmatpush1.bf16.msra.mxu0 0
        %6615 = vmatprep.mubr.bf16.mxu0 0
        %6616 = vmatmul.mubr.bf16.gmra.mrb[0].mxu0 %v6116
        %v6617 = vpop.f32.mrb[0].mxu0
        %v6618 = vadd.f32 %v6376, %v6617
        %v6619 = vpop.f32.mrb[0].mxu0
        %v6620 = vadd.f32 %v6378, %v6619
        %v6621 = vpop.f32.mrb[0].mxu0
        %v6622 = vpop.f32.mrb[0].mxu0
        %6623 = vdwg.mxu0
        %6624 = vmatprep.subr.bf16.mxu0 %v6522
        %6625 = vmatpush1.bf16.msra.mxu0 %v6521
        %6626 = vmatprep.subr.bf16.mxu0 %v6526
        %6627 = vmatpush1.bf16.msra.mxu0 %v6525
        %6628 = vmatprep.subr.bf16.mxu0 %v6530
        %6629 = vmatpush1.bf16.msra.mxu0 %v6529
        %6630 = vmatprep.subr.bf16.mxu0 %v6534
        %6631 = vmatpush1.bf16.msra.mxu0 %v6533
        %6632 = vmatprep.subr.bf16.mxu0 %v6538
        %6633 = vmatpush1.bf16.msra.mxu0 %v6537
        %6634 = vmatprep.subr.bf16.mxu0 %v6542
        %6635 = vmatpush1.bf16.msra.mxu0 %v6541
        %6636 = vmatprep.subr.bf16.mxu0 %v6546
        %6637 = vmatpush1.bf16.msra.mxu0 %v6545
        %6638 = vmatprep.subr.bf16.mxu0 %v6550
        %6639 = vmatpush1.bf16.msra.mxu0 %v6549
        %6640 = vmatprep.subr.bf16.mxu0 0
        %6641 = vmatpush1.bf16.msra.mxu0 0
        %6642 = vmatprep.subr.bf16.mxu0 0
        %6643 = vmatpush1.bf16.msra.mxu0 0
        %6644 = vmatprep.subr.bf16.mxu0 0
        %6645 = vmatpush1.bf16.msra.mxu0 0
        %6646 = vmatprep.subr.bf16.mxu0 0
        %6647 = vmatpush1.bf16.msra.mxu0 0
        %6648 = vmatprep.subr.bf16.mxu0 0
        %6649 = vmatpush1.bf16.msra.mxu0 0
        %6650 = vmatprep.subr.bf16.mxu0 0
        %6651 = vmatpush1.bf16.msra.mxu0 0
        %6652 = vmatprep.subr.bf16.mxu0 0
        %6653 = vmatpush1.bf16.msra.mxu0 0
        %6654 = vmatprep.subr.bf16.mxu0 0
        %6655 = vmatpush1.bf16.msra.mxu0 0
        %6656 = vmatprep.mubr.bf16.mxu0 0
        %6657 = vmatmul.mubr.bf16.gmra.mrb[0].mxu0 %v6116
        %v6658 = vpop.f32.mrb[0].mxu0
        %v6659 = vadd.f32 %v6417, %v6658
        %v6660 = vpop.f32.mrb[0].mxu0
        %v6661 = vadd.f32 %v6419, %v6660
        %v6662 = vpop.f32.mrb[0].mxu0
        %v6663 = vpop.f32.mrb[0].mxu0
        %6664 = vdwg.mxu0
        %v6665 = vld [vmem:[%s6] sm:$0xf]
        %v6667 = vlaneseq
        %v6668 = vshrl.u32 %v6667, 7
        %v6669 = vsub.s32 0, %v6668
        %v6670 = vrot.slane %v6665, %v6669
        %v6671 = vlaneseq
        %v6672 = vshrl.u32 %v6671, 7
        %v6673 = vsub.s32 1, %v6672
        %v6674 = vrot.slane %v6665, %v6673
        %v6675 = vlaneseq
        %v6676 = vshrl.u32 %v6675, 7
        %v6677 = vsub.s32 2, %v6676
        %v6678 = vrot.slane %v6665, %v6677
        %v6679 = vlaneseq
        %v6680 = vshrl.u32 %v6679, 7
        %v6681 = vsub.s32 3, %v6680
        %v6682 = vrot.slane %v6665, %v6681
        %v6687 = vadd.f32 %v6618, %v6670
        %v6688 = vadd.f32 %v6620, %v6674
        %v6689 = vadd.f32 %v6659, %v6678
        %v6690 = vadd.f32 %v6661, %v6682
        %v6691 = vxor.u32 %v6687, 2147483648
        %v6692 = vmul.f32 %v6691, 1.442695
        %v6693 = vpow.pop %v6692
        %v6694 = vadd.f32 %v6693, 1.0
        %v6695 = vrcp.pop %v6694
        %v6696 = vmul.f32 1.0, %v6695
        %v6697 = vxor.u32 %v6688, 2147483648
        %v6698 = vmul.f32 %v6697, 1.442695
        %v6699 = vpow.pop %v6698
        %v6700 = vadd.f32 %v6699, 1.0
        %v6701 = vrcp.pop %v6700
        %v6702 = vmul.f32 1.0, %v6701
        %v6703 = vtanh.pop %v6689
        %v6704 = vxor.u32 %v6690, 2147483648
        %v6705 = vmul.f32 %v6704, 1.442695
        %v6706 = vpow.pop %v6705
        %v6707 = vadd.f32 %v6706, 1.0
        %v6708 = vrcp.pop %v6707
        %v6709 = vmul.f32 1.0, %v6708
        %v6710 = vmul.f32 %v6702, %v5803
        %v6711 = vmul.f32 %v6696, %v6703
        %v6712 = vadd.f32 %v6710, %v6711
        %v6713 = vtanh.pop %v6712
        %v6714 = vmul.f32 %v6709, %v6713
        %v6715 = vpack.c.bf16 %v6714, %v6714
        %s6716 = scalar_lea.vmem %s334, 24
        %6717 = vst [vmem:[%s6716] sm:$0xf] %v6715
        %s6718 = scalar_lea.vmem %s328, 224
        %v6719 = vld [vmem:[%s6718] sm:$0xff]
        %v6720 = vld [vmem:[%s6718 + $0x8] sm:$0xff]
        %v6721 = vld [vmem:[%s6718 + $0x10] sm:$0xff]
        %v6722 = vld [vmem:[%s6718 + $0x18] sm:$0xff]
        %v6723 = vld [vmem:[%s3] sm:$0xff]
        %v6724 = vld [vmem:[%s3 + $0x8] sm:$0xff]
        %v6725 = vld [vmem:[%s3 + $0x10] sm:$0xff]
        %v6726 = vld [vmem:[%s3 + $0x18] sm:$0xff]
        %v6727 = vld [vmem:[%s3 + $0x20] sm:$0xff]
        %v6728 = vld [vmem:[%s3 + $0x28] sm:$0xff]
        %v6729 = vld [vmem:[%s3 + $0x30] sm:$0xff]
        %v6730 = vld [vmem:[%s3 + $0x38] sm:$0xff]
        %v6731 = vld [vmem:[%s3 + $0x40] sm:$0xff]
        %v6732 = vld [vmem:[%s3 + $0x48] sm:$0xff]
        %v6733 = vld [vmem:[%s3 + $0x50] sm:$0xff]
        %v6734 = vld [vmem:[%s3 + $0x58] sm:$0xff]
        %v6735 = vld [vmem:[%s3 + $0x60] sm:$0xff]
        %v6736 = vld [vmem:[%s3 + $0x68] sm:$0xff]
        %v6737 = vld [vmem:[%s3 + $0x70] sm:$0xff]
        %v6738 = vld [vmem:[%s3 + $0x78] sm:$0xff]
        %v6739 = vld [vmem:[%s3 + $0x80] sm:$0xff]
        %v6740 = vld [vmem:[%s3 + $0x88] sm:$0xff]
        %v6741 = vld [vmem:[%s3 + $0x90] sm:$0xff]
        %v6742 = vld [vmem:[%s3 + $0x98] sm:$0xff]
        %v6743 = vld [vmem:[%s3 + $0xa0] sm:$0xff]
        %v6744 = vld [vmem:[%s3 + $0xa8] sm:$0xff]
        %v6745 = vld [vmem:[%s3 + $0xb0] sm:$0xff]
        %v6746 = vld [vmem:[%s3 + $0xb8] sm:$0xff]
        %v6747 = vld [vmem:[%s3 + $0xc0] sm:$0xff]
        %v6748 = vld [vmem:[%s3 + $0xc8] sm:$0xff]
        %v6749 = vld [vmem:[%s3 + $0xd0] sm:$0xff]
        %v6750 = vld [vmem:[%s3 + $0xd8] sm:$0xff]
        %v6751 = vld [vmem:[%s3 + $0xe0] sm:$0xff]
        %v6752 = vld [vmem:[%s3 + $0xe8] sm:$0xff]
        %v6753 = vld [vmem:[%s3 + $0xf0] sm:$0xff]
        %v6754 = vld [vmem:[%s3 + $0xf8] sm:$0xff]
        %v6787 = vunpack.c.l.b16 %v6723
        %v6788 = vunpack.c.h.b16 %v6723
        %v6789 = vunpack.c.l.b16 %v6724
        %v6790 = vunpack.c.h.b16 %v6724
        %v6791 = vunpack.c.l.b16 %v6725
        %v6792 = vunpack.c.h.b16 %v6725
        %v6793 = vunpack.c.l.b16 %v6726
        %v6794 = vunpack.c.h.b16 %v6726
        %v6795 = vunpack.c.l.b16 %v6727
        %v6796 = vunpack.c.h.b16 %v6727
        %v6797 = vunpack.c.l.b16 %v6728
        %v6798 = vunpack.c.h.b16 %v6728
        %v6799 = vunpack.c.l.b16 %v6729
        %v6800 = vunpack.c.h.b16 %v6729
        %v6801 = vunpack.c.l.b16 %v6730
        %v6802 = vunpack.c.h.b16 %v6730
        %v6803 = vunpack.c.l.b16 %v6731
        %v6804 = vunpack.c.h.b16 %v6731
        %v6805 = vunpack.c.l.b16 %v6732
        %v6806 = vunpack.c.h.b16 %v6732
        %v6807 = vunpack.c.l.b16 %v6733
        %v6808 = vunpack.c.h.b16 %v6733
        %v6809 = vunpack.c.l.b16 %v6734
        %v6810 = vunpack.c.h.b16 %v6734
        %v6811 = vunpack.c.l.b16 %v6735
        %v6812 = vunpack.c.h.b16 %v6735
        %v6813 = vunpack.c.l.b16 %v6736
        %v6814 = vunpack.c.h.b16 %v6736
        %v6815 = vunpack.c.l.b16 %v6737
        %v6816 = vunpack.c.h.b16 %v6737
        %v6817 = vunpack.c.l.b16 %v6738
        %v6818 = vunpack.c.h.b16 %v6738
        %v6819 = vunpack.c.l.b16 %v6739
        %v6820 = vunpack.c.h.b16 %v6739
        %v6821 = vunpack.c.l.b16 %v6740
        %v6822 = vunpack.c.h.b16 %v6740
        %v6823 = vunpack.c.l.b16 %v6741
        %v6824 = vunpack.c.h.b16 %v6741
        %v6825 = vunpack.c.l.b16 %v6742
        %v6826 = vunpack.c.h.b16 %v6742
        %v6827 = vunpack.c.l.b16 %v6743
        %v6828 = vunpack.c.h.b16 %v6743
        %v6829 = vunpack.c.l.b16 %v6744
        %v6830 = vunpack.c.h.b16 %v6744
        %v6831 = vunpack.c.l.b16 %v6745
        %v6832 = vunpack.c.h.b16 %v6745
        %v6833 = vunpack.c.l.b16 %v6746
        %v6834 = vunpack.c.h.b16 %v6746
        %v6835 = vunpack.c.l.b16 %v6747
        %v6836 = vunpack.c.h.b16 %v6747
        %v6837 = vunpack.c.l.b16 %v6748
        %v6838 = vunpack.c.h.b16 %v6748
        %v6839 = vunpack.c.l.b16 %v6749
        %v6840 = vunpack.c.h.b16 %v6749
        %v6841 = vunpack.c.l.b16 %v6750
        %v6842 = vunpack.c.h.b16 %v6750
        %v6843 = vunpack.c.l.b16 %v6751
        %v6844 = vunpack.c.h.b16 %v6751
        %v6845 = vunpack.c.l.b16 %v6752
        %v6846 = vunpack.c.h.b16 %v6752
        %v6847 = vunpack.c.l.b16 %v6753
        %v6848 = vunpack.c.h.b16 %v6753
        %v6849 = vunpack.c.l.b16 %v6754
        %v6850 = vunpack.c.h.b16 %v6754
        %v6851 = vpack.c.b16 %v6791, %v6787
        %v6852 = vpack.c.b16 %v6792, %v6788
        %v6853 = vpack.c.b16 %v6793, %v6789
        %v6854 = vpack.c.b16 %v6794, %v6790
        %v6855 = vpack.c.b16 %v6799, %v6795
        %v6856 = vpack.c.b16 %v6800, %v6796
        %v6857 = vpack.c.b16 %v6801, %v6797
        %v6858 = vpack.c.b16 %v6802, %v6798
        %v6859 = vpack.c.b16 %v6807, %v6803
        %v6860 = vpack.c.b16 %v6808, %v6804
        %v6861 = vpack.c.b16 %v6809, %v6805
        %v6862 = vpack.c.b16 %v6810, %v6806
        %v6863 = vpack.c.b16 %v6815, %v6811
        %v6864 = vpack.c.b16 %v6816, %v6812
        %v6865 = vpack.c.b16 %v6817, %v6813
        %v6866 = vpack.c.b16 %v6818, %v6814
        %v6867 = vpack.c.b16 %v6823, %v6819
        %v6868 = vpack.c.b16 %v6824, %v6820
        %v6869 = vpack.c.b16 %v6825, %v6821
        %v6870 = vpack.c.b16 %v6826, %v6822
        %v6871 = vpack.c.b16 %v6831, %v6827
        %v6872 = vpack.c.b16 %v6832, %v6828
        %v6873 = vpack.c.b16 %v6833, %v6829
        %v6874 = vpack.c.b16 %v6834, %v6830
        %v6875 = vpack.c.b16 %v6839, %v6835
        %v6876 = vpack.c.b16 %v6840, %v6836
        %v6877 = vpack.c.b16 %v6841, %v6837
        %v6878 = vpack.c.b16 %v6842, %v6838
        %v6879 = vpack.c.b16 %v6847, %v6843
        %v6880 = vpack.c.b16 %v6848, %v6844
        %v6881 = vpack.c.b16 %v6849, %v6845
        %v6882 = vpack.c.b16 %v6850, %v6846
        %6915 = vmatprep.subr.bf16.mxu0 %v6852
        %6916 = vmatpush1.bf16.msra.mxu0 %v6851
        %6917 = vmatprep.subr.bf16.mxu0 %v6856
        %6918 = vmatpush1.bf16.msra.mxu0 %v6855
        %6919 = vmatprep.subr.bf16.mxu0 %v6860
        %6920 = vmatpush1.bf16.msra.mxu0 %v6859
        %6921 = vmatprep.subr.bf16.mxu0 %v6864
        %6922 = vmatpush1.bf16.msra.mxu0 %v6863
        %6923 = vmatprep.subr.bf16.mxu0 %v6868
        %6924 = vmatpush1.bf16.msra.mxu0 %v6867
        %6925 = vmatprep.subr.bf16.mxu0 %v6872
        %6926 = vmatpush1.bf16.msra.mxu0 %v6871
        %6927 = vmatprep.subr.bf16.mxu0 %v6876
        %6928 = vmatpush1.bf16.msra.mxu0 %v6875
        %6929 = vmatprep.subr.bf16.mxu0 %v6880
        %6930 = vmatpush1.bf16.msra.mxu0 %v6879
        %6931 = vmatprep.subr.bf16.mxu0 0
        %6932 = vmatpush1.bf16.msra.mxu0 0
        %6933 = vmatprep.subr.bf16.mxu0 0
        %6934 = vmatpush1.bf16.msra.mxu0 0
        %6935 = vmatprep.subr.bf16.mxu0 0
        %6936 = vmatpush1.bf16.msra.mxu0 0
        %6937 = vmatprep.subr.bf16.mxu0 0
        %6938 = vmatpush1.bf16.msra.mxu0 0
        %6939 = vmatprep.subr.bf16.mxu0 0
        %6940 = vmatpush1.bf16.msra.mxu0 0
        %6941 = vmatprep.subr.bf16.mxu0 0
        %6942 = vmatpush1.bf16.msra.mxu0 0
        %6943 = vmatprep.subr.bf16.mxu0 0
        %6944 = vmatpush1.bf16.msra.mxu0 0
        %6945 = vmatprep.subr.bf16.mxu0 0
        %6946 = vmatpush1.bf16.msra.mxu0 0
        %6947 = vmatprep.mubr.bf16.mxu0 0
        %6948 = vmatmul.mubr.bf16.gmra.mrb[0].mxu0 %v6116
        %v6949 = vpop.f32.mrb[0].mxu0
        %v6950 = vadd.f32 0.0, %v6949
        %v6951 = vpop.f32.mrb[0].mxu0
        %v6952 = vadd.f32 0.0, %v6951
        %v6953 = vpop.f32.mrb[0].mxu0
        %v6954 = vpop.f32.mrb[0].mxu0
        %6955 = vdwg.mxu0
        %6956 = vmatprep.subr.bf16.mxu0 %v6854
        %6957 = vmatpush1.bf16.msra.mxu0 %v6853
        %6958 = vmatprep.subr.bf16.mxu0 %v6858
        %6959 = vmatpush1.bf16.msra.mxu0 %v6857
        %6960 = vmatprep.subr.bf16.mxu0 %v6862
        %6961 = vmatpush1.bf16.msra.mxu0 %v6861
        %6962 = vmatprep.subr.bf16.mxu0 %v6866
        %6963 = vmatpush1.bf16.msra.mxu0 %v6865
        %6964 = vmatprep.subr.bf16.mxu0 %v6870
        %6965 = vmatpush1.bf16.msra.mxu0 %v6869
        %6966 = vmatprep.subr.bf16.mxu0 %v6874
        %6967 = vmatpush1.bf16.msra.mxu0 %v6873
        %6968 = vmatprep.subr.bf16.mxu0 %v6878
        %6969 = vmatpush1.bf16.msra.mxu0 %v6877
        %6970 = vmatprep.subr.bf16.mxu0 %v6882
        %6971 = vmatpush1.bf16.msra.mxu0 %v6881
        %6972 = vmatprep.subr.bf16.mxu0 0
        %6973 = vmatpush1.bf16.msra.mxu0 0
        %6974 = vmatprep.subr.bf16.mxu0 0
        %6975 = vmatpush1.bf16.msra.mxu0 0
        %6976 = vmatprep.subr.bf16.mxu0 0
        %6977 = vmatpush1.bf16.msra.mxu0 0
        %6978 = vmatprep.subr.bf16.mxu0 0
        %6979 = vmatpush1.bf16.msra.mxu0 0
        %6980 = vmatprep.subr.bf16.mxu0 0
        %6981 = vmatpush1.bf16.msra.mxu0 0
        %6982 = vmatprep.subr.bf16.mxu0 0
        %6983 = vmatpush1.bf16.msra.mxu0 0
        %6984 = vmatprep.subr.bf16.mxu0 0
        %6985 = vmatpush1.bf16.msra.mxu0 0
        %6986 = vmatprep.subr.bf16.mxu0 0
        %6987 = vmatpush1.bf16.msra.mxu0 0
        %6988 = vmatprep.mubr.bf16.mxu0 0
        %6989 = vmatmul.mubr.bf16.gmra.mrb[0].mxu0 %v6116
        %v6990 = vpop.f32.mrb[0].mxu0
        %v6991 = vadd.f32 0.0, %v6990
        %v6992 = vpop.f32.mrb[0].mxu0
        %v6993 = vadd.f32 0.0, %v6992
        %v6994 = vpop.f32.mrb[0].mxu0
        %v6995 = vpop.f32.mrb[0].mxu0
        %6996 = vdwg.mxu0
        %v6997 = vadd.f32 %v6719, %v6950
        %v6998 = vadd.f32 %v6720, %v6952
        %v6999 = vadd.f32 %v6721, %v6991
        %v7000 = vadd.f32 %v6722, %v6993
        %v7001 = vxor.u32 %v6997, 2147483648
        %v7002 = vmul.f32 %v7001, 1.442695
        %v7003 = vpow.pop %v7002
        %v7004 = vadd.f32 %v7003, 1.0
        %v7005 = vrcp.pop %v7004
        %v7006 = vmul.f32 1.0, %v7005
        %v7007 = vxor.u32 %v6998, 2147483648
        %v7008 = vmul.f32 %v7007, 1.442695
        %v7009 = vpow.pop %v7008
        %v7010 = vadd.f32 %v7009, 1.0
        %v7011 = vrcp.pop %v7010
        %v7012 = vmul.f32 1.0, %v7011
        %v7013 = vtanh.pop %v6999
        %v7014 = vxor.u32 %v7000, 2147483648
        %v7015 = vmul.f32 %v7014, 1.442695
        %v7016 = vpow.pop %v7015
        %v7017 = vadd.f32 %v7016, 1.0
        %v7018 = vrcp.pop %v7017
        %v7019 = vmul.f32 1.0, %v7018
        %v7020 = vmul.f32 %v7012, %v6113
        %v7021 = vmul.f32 %v7006, %v7013
        %v7022 = vadd.f32 %v7020, %v7021
        %v7023 = vtanh.pop %v7022
        %v7024 = vmul.f32 %v7019, %v7023
        %v7025 = vpack.c.bf16 %v7024, %v7024
        %v7026 = vld [vmem:[%s4] sm:$0xff]
        %v7027 = vld [vmem:[%s4 + $0x8] sm:$0xff]
        %v7028 = vld [vmem:[%s4 + $0x10] sm:$0xff]
        %v7029 = vld [vmem:[%s4 + $0x18] sm:$0xff]
        %v7030 = vld [vmem:[%s4 + $0x20] sm:$0xff]
        %v7031 = vld [vmem:[%s4 + $0x28] sm:$0xff]
        %v7032 = vld [vmem:[%s4 + $0x30] sm:$0xff]
        %v7033 = vld [vmem:[%s4 + $0x38] sm:$0xff]
        %v7034 = vld [vmem:[%s4 + $0x40] sm:$0xff]
        %v7035 = vld [vmem:[%s4 + $0x48] sm:$0xff]
        %v7036 = vld [vmem:[%s4 + $0x50] sm:$0xff]
        %v7037 = vld [vmem:[%s4 + $0x58] sm:$0xff]
        %v7038 = vld [vmem:[%s4 + $0x60] sm:$0xff]
        %v7039 = vld [vmem:[%s4 + $0x68] sm:$0xff]
        %v7040 = vld [vmem:[%s4 + $0x70] sm:$0xff]
        %v7041 = vld [vmem:[%s4 + $0x78] sm:$0xff]
        %v7042 = vld [vmem:[%s4 + $0x80] sm:$0xff]
        %v7043 = vld [vmem:[%s4 + $0x88] sm:$0xff]
        %v7044 = vld [vmem:[%s4 + $0x90] sm:$0xff]
        %v7045 = vld [vmem:[%s4 + $0x98] sm:$0xff]
        %v7046 = vld [vmem:[%s4 + $0xa0] sm:$0xff]
        %v7047 = vld [vmem:[%s4 + $0xa8] sm:$0xff]
        %v7048 = vld [vmem:[%s4 + $0xb0] sm:$0xff]
        %v7049 = vld [vmem:[%s4 + $0xb8] sm:$0xff]
        %v7050 = vld [vmem:[%s4 + $0xc0] sm:$0xff]
        %v7051 = vld [vmem:[%s4 + $0xc8] sm:$0xff]
        %v7052 = vld [vmem:[%s4 + $0xd0] sm:$0xff]
        %v7053 = vld [vmem:[%s4 + $0xd8] sm:$0xff]
        %v7054 = vld [vmem:[%s4 + $0xe0] sm:$0xff]
        %v7055 = vld [vmem:[%s4 + $0xe8] sm:$0xff]
        %v7056 = vld [vmem:[%s4 + $0xf0] sm:$0xff]
        %v7057 = vld [vmem:[%s4 + $0xf8] sm:$0xff]
        %v7058 = vld [vmem:[%s5] sm:$0xff]
        %v7059 = vld [vmem:[%s5 + $0x8] sm:$0xff]
        %v7060 = vld [vmem:[%s5 + $0x10] sm:$0xff]
        %v7061 = vld [vmem:[%s5 + $0x18] sm:$0xff]
        %v7062 = vld [vmem:[%s5 + $0x20] sm:$0xff]
        %v7063 = vld [vmem:[%s5 + $0x28] sm:$0xff]
        %v7064 = vld [vmem:[%s5 + $0x30] sm:$0xff]
        %v7065 = vld [vmem:[%s5 + $0x38] sm:$0xff]
        %v7066 = vld [vmem:[%s5 + $0x40] sm:$0xff]
        %v7067 = vld [vmem:[%s5 + $0x48] sm:$0xff]
        %v7068 = vld [vmem:[%s5 + $0x50] sm:$0xff]
        %v7069 = vld [vmem:[%s5 + $0x58] sm:$0xff]
        %v7070 = vld [vmem:[%s5 + $0x60] sm:$0xff]
        %v7071 = vld [vmem:[%s5 + $0x68] sm:$0xff]
        %v7072 = vld [vmem:[%s5 + $0x70] sm:$0xff]
        %v7073 = vld [vmem:[%s5 + $0x78] sm:$0xff]
        %v7074 = vld [vmem:[%s5 + $0x80] sm:$0xff]
        %v7075 = vld [vmem:[%s5 + $0x88] sm:$0xff]
        %v7076 = vld [vmem:[%s5 + $0x90] sm:$0xff]
        %v7077 = vld [vmem:[%s5 + $0x98] sm:$0xff]
        %v7078 = vld [vmem:[%s5 + $0xa0] sm:$0xff]
        %v7079 = vld [vmem:[%s5 + $0xa8] sm:$0xff]
        %v7080 = vld [vmem:[%s5 + $0xb0] sm:$0xff]
        %v7081 = vld [vmem:[%s5 + $0xb8] sm:$0xff]
        %v7082 = vld [vmem:[%s5 + $0xc0] sm:$0xff]
        %v7083 = vld [vmem:[%s5 + $0xc8] sm:$0xff]
        %v7084 = vld [vmem:[%s5 + $0xd0] sm:$0xff]
        %v7085 = vld [vmem:[%s5 + $0xd8] sm:$0xff]
        %v7086 = vld [vmem:[%s5 + $0xe0] sm:$0xff]
        %v7087 = vld [vmem:[%s5 + $0xe8] sm:$0xff]
        %v7088 = vld [vmem:[%s5 + $0xf0] sm:$0xff]
        %v7089 = vld [vmem:[%s5 + $0xf8] sm:$0xff]
        %v7122 = vunpack.c.l.b16 %v7058
        %v7123 = vunpack.c.h.b16 %v7058
        %v7124 = vunpack.c.l.b16 %v7059
        %v7125 = vunpack.c.h.b16 %v7059
        %v7126 = vunpack.c.l.b16 %v7060
        %v7127 = vunpack.c.h.b16 %v7060
        %v7128 = vunpack.c.l.b16 %v7061
        %v7129 = vunpack.c.h.b16 %v7061
        %v7130 = vunpack.c.l.b16 %v7062
        %v7131 = vunpack.c.h.b16 %v7062
        %v7132 = vunpack.c.l.b16 %v7063
        %v7133 = vunpack.c.h.b16 %v7063
        %v7134 = vunpack.c.l.b16 %v7064
        %v7135 = vunpack.c.h.b16 %v7064
        %v7136 = vunpack.c.l.b16 %v7065
        %v7137 = vunpack.c.h.b16 %v7065
        %v7138 = vunpack.c.l.b16 %v7066
        %v7139 = vunpack.c.h.b16 %v7066
        %v7140 = vunpack.c.l.b16 %v7067
        %v7141 = vunpack.c.h.b16 %v7067
        %v7142 = vunpack.c.l.b16 %v7068
        %v7143 = vunpack.c.h.b16 %v7068
        %v7144 = vunpack.c.l.b16 %v7069
        %v7145 = vunpack.c.h.b16 %v7069
        %v7146 = vunpack.c.l.b16 %v7070
        %v7147 = vunpack.c.h.b16 %v7070
        %v7148 = vunpack.c.l.b16 %v7071
        %v7149 = vunpack.c.h.b16 %v7071
        %v7150 = vunpack.c.l.b16 %v7072
        %v7151 = vunpack.c.h.b16 %v7072
        %v7152 = vunpack.c.l.b16 %v7073
        %v7153 = vunpack.c.h.b16 %v7073
        %v7154 = vunpack.c.l.b16 %v7074
        %v7155 = vunpack.c.h.b16 %v7074
        %v7156 = vunpack.c.l.b16 %v7075
        %v7157 = vunpack.c.h.b16 %v7075
        %v7158 = vunpack.c.l.b16 %v7076
        %v7159 = vunpack.c.h.b16 %v7076
        %v7160 = vunpack.c.l.b16 %v7077
        %v7161 = vunpack.c.h.b16 %v7077
        %v7162 = vunpack.c.l.b16 %v7078
        %v7163 = vunpack.c.h.b16 %v7078
        %v7164 = vunpack.c.l.b16 %v7079
        %v7165 = vunpack.c.h.b16 %v7079
        %v7166 = vunpack.c.l.b16 %v7080
        %v7167 = vunpack.c.h.b16 %v7080
        %v7168 = vunpack.c.l.b16 %v7081
        %v7169 = vunpack.c.h.b16 %v7081
        %v7170 = vunpack.c.l.b16 %v7082
        %v7171 = vunpack.c.h.b16 %v7082
        %v7172 = vunpack.c.l.b16 %v7083
        %v7173 = vunpack.c.h.b16 %v7083
        %v7174 = vunpack.c.l.b16 %v7084
        %v7175 = vunpack.c.h.b16 %v7084
        %v7176 = vunpack.c.l.b16 %v7085
        %v7177 = vunpack.c.h.b16 %v7085
        %v7178 = vunpack.c.l.b16 %v7086
        %v7179 = vunpack.c.h.b16 %v7086
        %v7180 = vunpack.c.l.b16 %v7087
        %v7181 = vunpack.c.h.b16 %v7087
        %v7182 = vunpack.c.l.b16 %v7088
        %v7183 = vunpack.c.h.b16 %v7088
        %v7184 = vunpack.c.l.b16 %v7089
        %v7185 = vunpack.c.h.b16 %v7089
        %v7186 = vpack.c.b16 %v7126, %v7122
        %v7187 = vpack.c.b16 %v7127, %v7123
        %v7188 = vpack.c.b16 %v7128, %v7124
        %v7189 = vpack.c.b16 %v7129, %v7125
        %v7190 = vpack.c.b16 %v7134, %v7130
        %v7191 = vpack.c.b16 %v7135, %v7131
        %v7192 = vpack.c.b16 %v7136, %v7132
        %v7193 = vpack.c.b16 %v7137, %v7133
        %v7194 = vpack.c.b16 %v7142, %v7138
        %v7195 = vpack.c.b16 %v7143, %v7139
        %v7196 = vpack.c.b16 %v7144, %v7140
        %v7197 = vpack.c.b16 %v7145, %v7141
        %v7198 = vpack.c.b16 %v7150, %v7146
        %v7199 = vpack.c.b16 %v7151, %v7147
        %v7200 = vpack.c.b16 %v7152, %v7148
        %v7201 = vpack.c.b16 %v7153, %v7149
        %v7202 = vpack.c.b16 %v7158, %v7154
        %v7203 = vpack.c.b16 %v7159, %v7155
        %v7204 = vpack.c.b16 %v7160, %v7156
        %v7205 = vpack.c.b16 %v7161, %v7157
        %v7206 = vpack.c.b16 %v7166, %v7162
        %v7207 = vpack.c.b16 %v7167, %v7163
        %v7208 = vpack.c.b16 %v7168, %v7164
        %v7209 = vpack.c.b16 %v7169, %v7165
        %v7210 = vpack.c.b16 %v7174, %v7170
        %v7211 = vpack.c.b16 %v7175, %v7171
        %v7212 = vpack.c.b16 %v7176, %v7172
        %v7213 = vpack.c.b16 %v7177, %v7173
        %v7214 = vpack.c.b16 %v7182, %v7178
        %v7215 = vpack.c.b16 %v7183, %v7179
        %v7216 = vpack.c.b16 %v7184, %v7180
        %v7217 = vpack.c.b16 %v7185, %v7181
        %7250 = vmatprep.subr.bf16.mxu0 %v7187
        %7251 = vmatpush1.bf16.msra.mxu0 %v7186
        %7252 = vmatprep.subr.bf16.mxu0 %v7191
        %7253 = vmatpush1.bf16.msra.mxu0 %v7190
        %7254 = vmatprep.subr.bf16.mxu0 %v7195
        %7255 = vmatpush1.bf16.msra.mxu0 %v7194
        %7256 = vmatprep.subr.bf16.mxu0 %v7199
        %7257 = vmatpush1.bf16.msra.mxu0 %v7198
        %7258 = vmatprep.subr.bf16.mxu0 %v7203
        %7259 = vmatpush1.bf16.msra.mxu0 %v7202
        %7260 = vmatprep.subr.bf16.mxu0 %v7207
        %7261 = vmatpush1.bf16.msra.mxu0 %v7206
        %7262 = vmatprep.subr.bf16.mxu0 %v7211
        %7263 = vmatpush1.bf16.msra.mxu0 %v7210
        %7264 = vmatprep.subr.bf16.mxu0 %v7215
        %7265 = vmatpush1.bf16.msra.mxu0 %v7214
        %7266 = vmatprep.subr.bf16.mxu0 0
        %7267 = vmatpush1.bf16.msra.mxu0 0
        %7268 = vmatprep.subr.bf16.mxu0 0
        %7269 = vmatpush1.bf16.msra.mxu0 0
        %7270 = vmatprep.subr.bf16.mxu0 0
        %7271 = vmatpush1.bf16.msra.mxu0 0
        %7272 = vmatprep.subr.bf16.mxu0 0
        %7273 = vmatpush1.bf16.msra.mxu0 0
        %7274 = vmatprep.subr.bf16.mxu0 0
        %7275 = vmatpush1.bf16.msra.mxu0 0
        %7276 = vmatprep.subr.bf16.mxu0 0
        %7277 = vmatpush1.bf16.msra.mxu0 0
        %7278 = vmatprep.subr.bf16.mxu0 0
        %7279 = vmatpush1.bf16.msra.mxu0 0
        %7280 = vmatprep.subr.bf16.mxu0 0
        %7281 = vmatpush1.bf16.msra.mxu0 0
        %7282 = vmatprep.mubr.bf16.mxu0 0
        %7283 = vmatmul.mubr.bf16.gmra.mrb[0].mxu0 %v6715
        %v7284 = vpop.f32.mrb[0].mxu0
        %v7285 = vadd.f32 0.0, %v7284
        %v7286 = vpop.f32.mrb[0].mxu0
        %v7287 = vadd.f32 0.0, %v7286
        %v7288 = vpop.f32.mrb[0].mxu0
        %v7289 = vpop.f32.mrb[0].mxu0
        %7290 = vdwg.mxu0
        %7291 = vmatprep.subr.bf16.mxu0 %v7189
        %7292 = vmatpush1.bf16.msra.mxu0 %v7188
        %7293 = vmatprep.subr.bf16.mxu0 %v7193
        %7294 = vmatpush1.bf16.msra.mxu0 %v7192
        %7295 = vmatprep.subr.bf16.mxu0 %v7197
        %7296 = vmatpush1.bf16.msra.mxu0 %v7196
        %7297 = vmatprep.subr.bf16.mxu0 %v7201
        %7298 = vmatpush1.bf16.msra.mxu0 %v7200
        %7299 = vmatprep.subr.bf16.mxu0 %v7205
        %7300 = vmatpush1.bf16.msra.mxu0 %v7204
        %7301 = vmatprep.subr.bf16.mxu0 %v7209
        %7302 = vmatpush1.bf16.msra.mxu0 %v7208
        %7303 = vmatprep.subr.bf16.mxu0 %v7213
        %7304 = vmatpush1.bf16.msra.mxu0 %v7212
        %7305 = vmatprep.subr.bf16.mxu0 %v7217
        %7306 = vmatpush1.bf16.msra.mxu0 %v7216
        %7307 = vmatprep.subr.bf16.mxu0 0
        %7308 = vmatpush1.bf16.msra.mxu0 0
        %7309 = vmatprep.subr.bf16.mxu0 0
        %7310 = vmatpush1.bf16.msra.mxu0 0
        %7311 = vmatprep.subr.bf16.mxu0 0
        %7312 = vmatpush1.bf16.msra.mxu0 0
        %7313 = vmatprep.subr.bf16.mxu0 0
        %7314 = vmatpush1.bf16.msra.mxu0 0
        %7315 = vmatprep.subr.bf16.mxu0 0
        %7316 = vmatpush1.bf16.msra.mxu0 0
        %7317 = vmatprep.subr.bf16.mxu0 0
        %7318 = vmatpush1.bf16.msra.mxu0 0
        %7319 = vmatprep.subr.bf16.mxu0 0
        %7320 = vmatpush1.bf16.msra.mxu0 0
        %7321 = vmatprep.subr.bf16.mxu0 0
        %7322 = vmatpush1.bf16.msra.mxu0 0
        %7323 = vmatprep.mubr.bf16.mxu0 0
        %7324 = vmatmul.mubr.bf16.gmra.mrb[0].mxu0 %v6715
        %v7325 = vpop.f32.mrb[0].mxu0
        %v7326 = vadd.f32 0.0, %v7325
        %v7327 = vpop.f32.mrb[0].mxu0
        %v7328 = vadd.f32 0.0, %v7327
        %v7329 = vpop.f32.mrb[0].mxu0
        %v7330 = vpop.f32.mrb[0].mxu0
        %7331 = vdwg.mxu0
        %v7364 = vunpack.c.l.b16 %v7026
        %v7365 = vunpack.c.h.b16 %v7026
        %v7366 = vunpack.c.l.b16 %v7027
        %v7367 = vunpack.c.h.b16 %v7027
        %v7368 = vunpack.c.l.b16 %v7028
        %v7369 = vunpack.c.h.b16 %v7028
        %v7370 = vunpack.c.l.b16 %v7029
        %v7371 = vunpack.c.h.b16 %v7029
        %v7372 = vunpack.c.l.b16 %v7030
        %v7373 = vunpack.c.h.b16 %v7030
        %v7374 = vunpack.c.l.b16 %v7031
        %v7375 = vunpack.c.h.b16 %v7031
        %v7376 = vunpack.c.l.b16 %v7032
        %v7377 = vunpack.c.h.b16 %v7032
        %v7378 = vunpack.c.l.b16 %v7033
        %v7379 = vunpack.c.h.b16 %v7033
        %v7380 = vunpack.c.l.b16 %v7034
        %v7381 = vunpack.c.h.b16 %v7034
        %v7382 = vunpack.c.l.b16 %v7035
        %v7383 = vunpack.c.h.b16 %v7035
        %v7384 = vunpack.c.l.b16 %v7036
        %v7385 = vunpack.c.h.b16 %v7036
        %v7386 = vunpack.c.l.b16 %v7037
        %v7387 = vunpack.c.h.b16 %v7037
        %v7388 = vunpack.c.l.b16 %v7038
        %v7389 = vunpack.c.h.b16 %v7038
        %v7390 = vunpack.c.l.b16 %v7039
        %v7391 = vunpack.c.h.b16 %v7039
        %v7392 = vunpack.c.l.b16 %v7040
        %v7393 = vunpack.c.h.b16 %v7040
        %v7394 = vunpack.c.l.b16 %v7041
        %v7395 = vunpack.c.h.b16 %v7041
        %v7396 = vunpack.c.l.b16 %v7042
        %v7397 = vunpack.c.h.b16 %v7042
        %v7398 = vunpack.c.l.b16 %v7043
        %v7399 = vunpack.c.h.b16 %v7043
        %v7400 = vunpack.c.l.b16 %v7044
        %v7401 = vunpack.c.h.b16 %v7044
        %v7402 = vunpack.c.l.b16 %v7045
        %v7403 = vunpack.c.h.b16 %v7045
        %v7404 = vunpack.c.l.b16 %v7046
        %v7405 = vunpack.c.h.b16 %v7046
        %v7406 = vunpack.c.l.b16 %v7047
        %v7407 = vunpack.c.h.b16 %v7047
        %v7408 = vunpack.c.l.b16 %v7048
        %v7409 = vunpack.c.h.b16 %v7048
        %v7410 = vunpack.c.l.b16 %v7049
        %v7411 = vunpack.c.h.b16 %v7049
        %v7412 = vunpack.c.l.b16 %v7050
        %v7413 = vunpack.c.h.b16 %v7050
        %v7414 = vunpack.c.l.b16 %v7051
        %v7415 = vunpack.c.h.b16 %v7051
        %v7416 = vunpack.c.l.b16 %v7052
        %v7417 = vunpack.c.h.b16 %v7052
        %v7418 = vunpack.c.l.b16 %v7053
        %v7419 = vunpack.c.h.b16 %v7053
        %v7420 = vunpack.c.l.b16 %v7054
        %v7421 = vunpack.c.h.b16 %v7054
        %v7422 = vunpack.c.l.b16 %v7055
        %v7423 = vunpack.c.h.b16 %v7055
        %v7424 = vunpack.c.l.b16 %v7056
        %v7425 = vunpack.c.h.b16 %v7056
        %v7426 = vunpack.c.l.b16 %v7057
        %v7427 = vunpack.c.h.b16 %v7057
        %v7428 = vpack.c.b16 %v7368, %v7364
        %v7429 = vpack.c.b16 %v7369, %v7365
        %v7430 = vpack.c.b16 %v7370, %v7366
        %v7431 = vpack.c.b16 %v7371, %v7367
        %v7432 = vpack.c.b16 %v7376, %v7372
        %v7433 = vpack.c.b16 %v7377, %v7373
        %v7434 = vpack.c.b16 %v7378, %v7374
        %v7435 = vpack.c.b16 %v7379, %v7375
        %v7436 = vpack.c.b16 %v7384, %v7380
        %v7437 = vpack.c.b16 %v7385, %v7381
        %v7438 = vpack.c.b16 %v7386, %v7382
        %v7439 = vpack.c.b16 %v7387, %v7383
        %v7440 = vpack.c.b16 %v7392, %v7388
        %v7441 = vpack.c.b16 %v7393, %v7389
        %v7442 = vpack.c.b16 %v7394, %v7390
        %v7443 = vpack.c.b16 %v7395, %v7391
        %v7444 = vpack.c.b16 %v7400, %v7396
        %v7445 = vpack.c.b16 %v7401, %v7397
        %v7446 = vpack.c.b16 %v7402, %v7398
        %v7447 = vpack.c.b16 %v7403, %v7399
        %v7448 = vpack.c.b16 %v7408, %v7404
        %v7449 = vpack.c.b16 %v7409, %v7405
        %v7450 = vpack.c.b16 %v7410, %v7406
        %v7451 = vpack.c.b16 %v7411, %v7407
        %v7452 = vpack.c.b16 %v7416, %v7412
        %v7453 = vpack.c.b16 %v7417, %v7413
        %v7454 = vpack.c.b16 %v7418, %v7414
        %v7455 = vpack.c.b16 %v7419, %v7415
        %v7456 = vpack.c.b16 %v7424, %v7420
        %v7457 = vpack.c.b16 %v7425, %v7421
        %v7458 = vpack.c.b16 %v7426, %v7422
        %v7459 = vpack.c.b16 %v7427, %v7423
        %7492 = vmatprep.subr.bf16.mxu0 %v7429
        %7493 = vmatpush1.bf16.msra.mxu0 %v7428
        %7494 = vmatprep.subr.bf16.mxu0 %v7433
        %7495 = vmatpush1.bf16.msra.mxu0 %v7432
        %7496 = vmatprep.subr.bf16.mxu0 %v7437
        %7497 = vmatpush1.bf16.msra.mxu0 %v7436
        %7498 = vmatprep.subr.bf16.mxu0 %v7441
        %7499 = vmatpush1.bf16.msra.mxu0 %v7440
        %7500 = vmatprep.subr.bf16.mxu0 %v7445
        %7501 = vmatpush1.bf16.msra.mxu0 %v7444
        %7502 = vmatprep.subr.bf16.mxu0 %v7449
        %7503 = vmatpush1.bf16.msra.mxu0 %v7448
        %7504 = vmatprep.subr.bf16.mxu0 %v7453
        %7505 = vmatpush1.bf16.msra.mxu0 %v7452
        %7506 = vmatprep.subr.bf16.mxu0 %v7457
        %7507 = vmatpush1.bf16.msra.mxu0 %v7456
        %7508 = vmatprep.subr.bf16.mxu0 0
        %7509 = vmatpush1.bf16.msra.mxu0 0
        %7510 = vmatprep.subr.bf16.mxu0 0
        %7511 = vmatpush1.bf16.msra.mxu0 0
        %7512 = vmatprep.subr.bf16.mxu0 0
        %7513 = vmatpush1.bf16.msra.mxu0 0
        %7514 = vmatprep.subr.bf16.mxu0 0
        %7515 = vmatpush1.bf16.msra.mxu0 0
        %7516 = vmatprep.subr.bf16.mxu0 0
        %7517 = vmatpush1.bf16.msra.mxu0 0
        %7518 = vmatprep.subr.bf16.mxu0 0
        %7519 = vmatpush1.bf16.msra.mxu0 0
        %7520 = vmatprep.subr.bf16.mxu0 0
        %7521 = vmatpush1.bf16.msra.mxu0 0
        %7522 = vmatprep.subr.bf16.mxu0 0
        %7523 = vmatpush1.bf16.msra.mxu0 0
        %7524 = vmatprep.mubr.bf16.mxu0 0
        %7525 = vmatmul.mubr.bf16.gmra.mrb[0].mxu0 %v7025
        %v7526 = vpop.f32.mrb[0].mxu0
        %v7527 = vadd.f32 %v7285, %v7526
        %v7528 = vpop.f32.mrb[0].mxu0
        %v7529 = vadd.f32 %v7287, %v7528
        %v7530 = vpop.f32.mrb[0].mxu0
        %v7531 = vpop.f32.mrb[0].mxu0
        %7532 = vdwg.mxu0
        %7533 = vmatprep.subr.bf16.mxu0 %v7431
        %7534 = vmatpush1.bf16.msra.mxu0 %v7430
        %7535 = vmatprep.subr.bf16.mxu0 %v7435
        %7536 = vmatpush1.bf16.msra.mxu0 %v7434
        %7537 = vmatprep.subr.bf16.mxu0 %v7439
        %7538 = vmatpush1.bf16.msra.mxu0 %v7438
        %7539 = vmatprep.subr.bf16.mxu0 %v7443
        %7540 = vmatpush1.bf16.msra.mxu0 %v7442
        %7541 = vmatprep.subr.bf16.mxu0 %v7447
        %7542 = vmatpush1.bf16.msra.mxu0 %v7446
        %7543 = vmatprep.subr.bf16.mxu0 %v7451
        %7544 = vmatpush1.bf16.msra.mxu0 %v7450
        %7545 = vmatprep.subr.bf16.mxu0 %v7455
        %7546 = vmatpush1.bf16.msra.mxu0 %v7454
        %7547 = vmatprep.subr.bf16.mxu0 %v7459
        %7548 = vmatpush1.bf16.msra.mxu0 %v7458
        %7549 = vmatprep.subr.bf16.mxu0 0
        %7550 = vmatpush1.bf16.msra.mxu0 0
        %7551 = vmatprep.subr.bf16.mxu0 0
        %7552 = vmatpush1.bf16.msra.mxu0 0
        %7553 = vmatprep.subr.bf16.mxu0 0
        %7554 = vmatpush1.bf16.msra.mxu0 0
        %7555 = vmatprep.subr.bf16.mxu0 0
        %7556 = vmatpush1.bf16.msra.mxu0 0
        %7557 = vmatprep.subr.bf16.mxu0 0
        %7558 = vmatpush1.bf16.msra.mxu0 0
        %7559 = vmatprep.subr.bf16.mxu0 0
        %7560 = vmatpush1.bf16.msra.mxu0 0
        %7561 = vmatprep.subr.bf16.mxu0 0
        %7562 = vmatpush1.bf16.msra.mxu0 0
        %7563 = vmatprep.subr.bf16.mxu0 0
        %7564 = vmatpush1.bf16.msra.mxu0 0
        %7565 = vmatprep.mubr.bf16.mxu0 0
        %7566 = vmatmul.mubr.bf16.gmra.mrb[0].mxu0 %v7025
        %v7567 = vpop.f32.mrb[0].mxu0
        %v7568 = vadd.f32 %v7326, %v7567
        %v7569 = vpop.f32.mrb[0].mxu0
        %v7570 = vadd.f32 %v7328, %v7569
        %v7571 = vpop.f32.mrb[0].mxu0
        %v7572 = vpop.f32.mrb[0].mxu0
        %7573 = vdwg.mxu0
        %v7574 = vld [vmem:[%s6] sm:$0xf]
        %v7576 = vlaneseq
        %v7577 = vshrl.u32 %v7576, 7
        %v7578 = vsub.s32 0, %v7577
        %v7579 = vrot.slane %v7574, %v7578
        %v7580 = vlaneseq
        %v7581 = vshrl.u32 %v7580, 7
        %v7582 = vsub.s32 1, %v7581
        %v7583 = vrot.slane %v7574, %v7582
        %v7584 = vlaneseq
        %v7585 = vshrl.u32 %v7584, 7
        %v7586 = vsub.s32 2, %v7585
        %v7587 = vrot.slane %v7574, %v7586
        %v7588 = vlaneseq
        %v7589 = vshrl.u32 %v7588, 7
        %v7590 = vsub.s32 3, %v7589
        %v7591 = vrot.slane %v7574, %v7590
        %v7596 = vadd.f32 %v7527, %v7579
        %v7597 = vadd.f32 %v7529, %v7583
        %v7598 = vadd.f32 %v7568, %v7587
        %v7599 = vadd.f32 %v7570, %v7591
        %v7600 = vxor.u32 %v7596, 2147483648
        %v7601 = vmul.f32 %v7600, 1.442695
        %v7602 = vpow.pop %v7601
        %v7603 = vadd.f32 %v7602, 1.0
        %v7604 = vrcp.pop %v7603
        %v7605 = vmul.f32 1.0, %v7604
        %v7606 = vxor.u32 %v7597, 2147483648
        %v7607 = vmul.f32 %v7606, 1.442695
        %v7608 = vpow.pop %v7607
        %v7609 = vadd.f32 %v7608, 1.0
        %v7610 = vrcp.pop %v7609
        %v7611 = vmul.f32 1.0, %v7610
        %v7612 = vtanh.pop %v7598
        %v7613 = vxor.u32 %v7599, 2147483648
        %v7614 = vmul.f32 %v7613, 1.442695
        %v7615 = vpow.pop %v7614
        %v7616 = vadd.f32 %v7615, 1.0
        %v7617 = vrcp.pop %v7616
        %v7618 = vmul.f32 1.0, %v7617
        %v7619 = vmul.f32 %v7611, %v6712
        %v7620 = vmul.f32 %v7605, %v7612
        %v7621 = vadd.f32 %v7619, %v7620
        %v7622 = vtanh.pop %v7621
        %v7623 = vmul.f32 %v7618, %v7622
        %v7624 = vpack.c.bf16 %v7623, %v7623
        %s7625 = scalar_lea.vmem %s334, 28
        %7626 = vst [vmem:[%s7625] sm:$0xf] %v7624
        %7627 = vst [vmem:[#allocation2] sm:$0xff] %v7024
        %7628 = vst [vmem:[#allocation3] sm:$0xff] %v7022
        %7629 = vst [vmem:[#allocation4] sm:$0xff] %v7623
        %7630 = vst [vmem:[#allocation5] sm:$0xff] %v7621
        %p7631 = scmp.eq.s32.totalorder %s23, 1
        // Predicated region
        $region53: #{text_generation_forward.4} parent=47 // pred_check
          %p7632 = pneg %p7631
        $region54: #{text_generation_forward.4} parent=47 // pred_check_branch
          %7634 = sbr.rel (%p7632) target = $region56
        $region55: #{text_generation_forward.4} parent=47 // pred_region
          %7635 = vst [vmem:[#allocation6] sm:$0xff] %v7024
          %s7636 = scalar_lea.vmem [#allocation6], 8
          %7637 = vst [vmem:[%s7636] sm:$0xff] %v7623
          %7638 = vst [vmem:[#allocation8] sm:$0xff] %v7022
          %s7639 = scalar_lea.vmem [#allocation8], 8
          %7640 = vst [vmem:[%s7639] sm:$0xff] %v7621
        $region56: #{text_generation_forward.4} parent=47 // pred_fallthru
          _
        %s7641 = smul.u32 8, %s23
        %p7642 = scmp.lt.s32.totalorder %s7641, 15
        %s7643 = scalar_select %p7642, %s7641, 15
        %s7644 = smul.addr %s7643, 4
        %s7645 = scalar_lea.vmem %s7, %s7644
        // Predicated region
        $region57: #{text_generation_forward.4} parent=47 // pred_check
          %p7646 = pneg %p193
        $region58: #{text_generation_forward.4} parent=47 // pred_check_branch
          %7648 = sbr.rel (%p7646) target = $region60
        $region59: #{text_generation_forward.4} parent=47 // pred_region
          %s7649 = smul.u32 8, %s23
        $region60: #{text_generation_forward.4} parent=47 // pred_fallthru
          _
        // Predicated region
        $region61: #{text_generation_forward.4} parent=47 // pred_check
          %p7650 = pneg %p214
        $region62: #{text_generation_forward.4} parent=47 // pred_check_branch
          %7652 = sbr.rel (%p7650) target = $region64
        $region63: #{text_generation_forward.4} parent=47 // pred_region
          %s7654 = ssub.s32 256, 256
          %7655 = vsyncadd [#allocation7], %s7654
          %s7656 = sshll.u32 [#allocation6], 4
          %s7657 = int_to_ptr.vmem [resolvable:$true] %s7656
          %7662 = dma.vmem_to_hbm [thread:$0]  %s7657, 256, %s8, [#allocation7], 128, 128, 8
        $region64: #{text_generation_forward.4} parent=47 // pred_fallthru
          _
        // Predicated region
        $region65: #{text_generation_forward.4} parent=47 // pred_check
          %p7663 = pneg %p235
        $region66: #{text_generation_forward.4} parent=47 // pred_check_branch
          %7665 = sbr.rel (%p7663) target = $region68
        $region67: #{text_generation_forward.4} parent=47 // pred_region
          %s7667 = ssub.s32 256, 256
          %7668 = vsyncadd [#allocation9], %s7667
          %s7669 = sshll.u32 [#allocation8], 4
          %s7670 = int_to_ptr.vmem [resolvable:$true] %s7669
          %7675 = dma.vmem_to_hbm [thread:$0]  %s7670, 256, %s9, [#allocation9], 128, 128, 8
        $region68: #{text_generation_forward.4} parent=47 // pred_fallthru
          _
        // Predicated region
        $region69: #{text_generation_forward.4} parent=47 // pred_check
          %p7676 = pneg %p214
        $region70: #{text_generation_forward.4} parent=47 // pred_check_branch
          %7678 = sbr.rel (%p7676) target = $region72
        $region71: #{text_generation_forward.4} parent=47 // pred_region
          %7679 = dma.done [#allocation7], 256
        $region72: #{text_generation_forward.4} parent=47 // pred_fallthru
          _
        // Predicated region
        $region73: #{text_generation_forward.4} parent=47 // pred_check
          %p7680 = pneg %p235
        $region74: #{text_generation_forward.4} parent=47 // pred_check_branch
          %7682 = sbr.rel (%p7680) target = $region76
        $region75: #{text_generation_forward.4} parent=47 // pred_region
          %7683 = dma.done [#allocation9], 256
        $region76: #{text_generation_forward.4} parent=47 // pred_fallthru
          _
      $region48: #{text_generation_forward.4} parent=5 // pred_fallthru
        _
      %p7684 = scmp.le.s32.totalorder 2, %s18
      // Predicated region
      $region77: #{text_generation_forward.4} parent=5 // pred_check
        %p7685 = pneg %p7684
      $region78: #{text_generation_forward.4} parent=5 // pred_check_branch
        %7687 = sbr.rel (%p7685) target = $region80
      $region79: #{text_generation_forward.4} parent=5 // pred_region
        %s7688 = ssub.s32 %s18, 2
        // Predicated region
        $region81: #{text_generation_forward.4} parent=79 // pred_check
          %p7689 = pneg %p199
        $region82: #{text_generation_forward.4} parent=79 // pred_check_branch
          %7691 = sbr.rel (%p7689) target = $region84
        $region83: #{text_generation_forward.4} parent=79 // pred_region
          %s7692 = smul.u32 8, %s24
          %p7693 = scmp.lt.s32.totalorder %s7692, 15
          %s7694 = scalar_select %p7693, %s7692, 15
          %s7695 = smul.addr %s7694, 4
          %s7696 = scalar_lea.vmem %s7, %s7695
        $region84: #{text_generation_forward.4} parent=79 // pred_fallthru
          _
      $region80: #{text_generation_forward.4} parent=5 // pred_fallthru
        _
    $region6: #{text_generation_forward.4} parent=1 // loop_footer
      %s22 = sadd.s32 1, %s18
    $region7: #{text_generation_forward.4} parent=1 // loop_footer_branch
      %17 = sbr.rel target = $region3
    $region8: #{text_generation_forward.4} parent=1 // loop_exit
      _
    %7697 = vsyncpa [#allocation7], 1
    %s7698 = scalar_lea.sflag [#allocation7], 1
    %7699 = vsyncpa %s7698, 1
    %7700 = vsyncpa [#allocation9], 1

</llo_original>
